<compile_context>
chip_gen: v7x
topology: tpu7x:2x2x1
jax: 0.10.0
libtpu: 0.0.40
codegen_flags: <defaults>
</compile_context>

<pallas_src>
import numpy as np
import jax
import jax.numpy as jnp
from jax import lax
from jax.experimental import pallas as pl
from jax.experimental.pallas import tpu as pltpu

LRELU_SLOPE = 0.2
BN_EPS = 1e-5


def _round_up(x, m):
    return (x + m - 1) // m * m


def _conv_out(size, k, stride, pad):
    return (size + 2 * pad - k) // stride + 1


# ----------------------------- fused Pallas kernel ---------------------------

def _encoder_kernel(p1_ref, w1_ref, g1_ref, b1_ref,
                    w2_ref, g2_ref, b2_ref, G2_ref,
                    w3_ref, g3_ref, b3_ref, G3_ref,
                    w4_ref, G4_ref, o_ref):
    """Whole encoder in one VMEM-resident pass.

    Activations are kept as [C, N*H*W] values (columns ordered (n, h, w)).
    Layers 2-4 build their im2col patch matrices in-VMEM via per-tap 0/1
    gather matmuls (exact selection; bf16 values, f32 accumulation).
    """

    def bn_lrelu(y, g, b):
        m = y.shape[1]                       # exact N*Ho*Wo, no padded columns
        inv_m = 1.0 / m
        mean = jnp.sum(y, axis=1, keepdims=True) * inv_m
        d = y - mean
        var = jnp.sum(d * d, axis=1, keepdims=True) * inv_m    # two-pass var
        z = d * (g * lax.rsqrt(var + BN_EPS)) + b
        return jnp.where(z >= 0, z, LRELU_SLOPE * z)

    def gathered_conv(a_bf16, w_ref, G_ref):
        # P[(tap, cin), m_out] = a[cin, gathered m_in]  via 0/1 selection matmuls.
        kk = G_ref.shape[0]
        taps = [jnp.dot(a_bf16, G_ref[t], preferred_element_type=jnp.float32)
                for t in range(kk)]
        patches = jnp.concatenate(taps, axis=0).astype(jnp.bfloat16)
        return jnp.dot(w_ref[...], patches, preferred_element_type=jnp.float32)

    # Layer 1: patch slab precomputed outside (single XLA conv op).
    a = jnp.dot(w1_ref[...], p1_ref[...], preferred_element_type=jnp.float32)
    a = bn_lrelu(a, g1_ref[...], b1_ref[...]).astype(jnp.bfloat16)
    # Layer 2
    a = gathered_conv(a, w2_ref, G2_ref)
    a = bn_lrelu(a, g2_ref[...], b2_ref[...]).astype(jnp.bfloat16)
    # Layer 3
    a = gathered_conv(a, w3_ref, G3_ref)
    a = bn_lrelu(a, g3_ref[...], b3_ref[...]).astype(jnp.bfloat16)
    # Layer 4 (no BN / activation)
    o_ref[...] = gathered_conv(a, w4_ref, G4_ref)       # [dim_z, N*Ho4*Wo4]


# --------------------------- one-time parameter packing ----------------------

def _gather_mats(n, h, w, k, stride, pad):
    """0/1 selection matrices G[t, (n,h,w), (n,ho,wo)] for tap t = kh*k + kw."""
    ho, wo = _conv_out(h, k, stride, pad), _conv_out(w, k, stride, pad)
    g = np.zeros((k * k, n * h * w, n * ho * wo), np.float32)
    for kh in range(k):
        for kw in range(k):
            t = kh * k + kw
            for b in range(n):
                for oh in range(ho):
                    ih = stride * oh + kh - pad
                    if not 0 <= ih < h:
                        continue
                    for ow in range(wo):
                        iw = stride * ow + kw - pad
                        if 0 <= iw < w:
                            g[t, (b * h + ih) * w + iw,
                                 (b * ho + oh) * wo + ow] = 1.0
    return jnp.asarray(g, jnp.bfloat16), ho, wo


def pack_params(params, n, h, w):
    """Called ONCE outside jit: pack weights/BN vectors and build gather mats."""
    packed = {}

    # Layer 1 weight: [Cout, Cin*K*K] (cin-major — matches
    # conv_general_dilated_patches' output-feature ordering).
    w1 = params["w1"]
    cout1, cin1, k1, _ = w1.shape
    kd1 = cin1 * k1 * k1
    kd1p = _round_up(kd1, 128)
    packed["w1"] = jnp.pad(w1.reshape(cout1, kd1),
                           ((0, 0), (0, kd1p - kd1))).astype(jnp.bfloat16)
    packed["g1"] = params["g1"].reshape(-1, 1).astype(jnp.float32)
    packed["b1"] = params["b1"].reshape(-1, 1).astype(jnp.float32)
    h1, w1s = _conv_out(h, k1, 4, 4), _conv_out(w, k1, 4, 4)

    def pack_w_tapmajor(wt):          # [Cout, Cin, K, K] -> [Cout, K*K*Cin]
        return jnp.transpose(wt, (0, 2, 3, 1)).reshape(
            wt.shape[0], -1).astype(jnp.bfloat16)

    packed["G2"], h2, w2s = _gather_mats(n, h1, w1s, 4, 2, 1)
    packed["w2"] = pack_w_tapmajor(params["w2"])
    packed["g2"] = params["g2"].reshape(-1, 1).astype(jnp.float32)
    packed["b2"] = params["b2"].reshape(-1, 1).astype(jnp.float32)

    packed["G3"], h3, w3s = _gather_mats(n, h2, w2s, 4, 2, 1)
    packed["w3"] = pack_w_tapmajor(params["w3"])
    packed["g3"] = params["g3"].reshape(-1, 1).astype(jnp.float32)
    packed["b3"] = params["b3"].reshape(-1, 1).astype(jnp.float32)

    packed["G4"], _h4, _w4 = _gather_mats(n, h3, w3s, 4, 1, 0)
    packed["w4"] = pack_w_tapmajor(params["w4"])
    return packed


# --------------------------------- forward -----------------------------------

def _fullspec(shape):
    zero = (0,) * len(shape)
    return pl.BlockSpec(shape, lambda i, _z=zero: _z)


def encoder_forward(x, packed):
    n = x.shape[0]

    # ---- layer-1 im2col: ONE XLA op (conv against an identity kernel) -------
    p1 = lax.conv_general_dilated_patches(
        x, (11, 11), (4, 4), ((4, 4), (4, 4)),
        dimension_numbers=("NCHW", "OIHW", "NCHW"))      # [N, Cin*K*K, Ho, Wo]
    kd = p1.shape[1]
    m1 = n * p1.shape[2] * p1.shape[3]
    p1 = jnp.transpose(p1, (1, 0, 2, 3)).reshape(kd, m1)  # cols = (n, ho, wo)
    kdp = packed["w1"].shape[1]
    p1 = jnp.pad(p1, ((0, kdp - kd), (0, 0))).astype(jnp.bfloat16)

    dz = packed["w4"].shape[0]
    m4 = packed["G4"].shape[2]

    args = (p1, packed["w1"], packed["g1"], packed["b1"],
            packed["w2"], packed["g2"], packed["b2"], packed["G2"],
            packed["w3"], packed["g3"], packed["b3"], packed["G3"],
            packed["w4"], packed["G4"])

    # Advisory cost estimate so XLA overlaps the surrounding glue with the call.
    flops = 2 * packed["w1"].shape[0] * kdp * m1
    for wn, gn in (("w2", "G2"), ("w3", "G3"), ("w4", "G4")):
        wm, g = packed[wn], packed[gn]
        kk, m_in, m_out = g.shape
        cin = wm.shape[1] // kk
        flops += 2 * kk * cin * m_in * m_out + 2 * wm.shape[0] * wm.shape[1] * m_out
    bytes_accessed = int(p1.size) * 2 + int(dz * m4) * 4
    for v in packed.values():
        bytes_accessed += int(v.size) * v.dtype.itemsize

    out = pl.pallas_call(
        _encoder_kernel,
        out_shape=jax.ShapeDtypeStruct((dz, m4), jnp.float32),
        grid_spec=pltpu.PrefetchScalarGridSpec(
            num_scalar_prefetch=0,
            grid=(1,),                        # whole encoder is one VMEM block
            in_specs=[_fullspec(a.shape) for a in args],
            out_specs=_fullspec((dz, m4))),
        compiler_params=pltpu.CompilerParams(
            dimension_semantics=("arbitrary",),
            vmem_limit_bytes=32 * 1024 * 1024),
        cost_estimate=pl.CostEstimate(flops=int(flops), transcendentals=64,
                                      bytes_accessed=int(bytes_accessed)),
    )(*args)

    # [dim_z, (n, ho, wo)] -> torch's x.flatten(1) == [n, dim_z*ho*wo]
    s4 = m4 // n
    return jnp.transpose(out.reshape(dz, n, s4), (1, 0, 2)).reshape(n, dz * s4)


# --------------------------- pure-JAX reference ------------------------------

def encoder_reference(x, params):
    def conv(x, w, s, p):
        return lax.conv_general_dilated(
            x, w, (s, s), [(p, p), (p, p)],
            dimension_numbers=("NCHW", "OIHW", "NCHW"))

    def bn_lrelu(x, g, b):
        mean = jnp.mean(x, axis=(0, 2, 3), keepdims=True)
        var = jnp.var(x, axis=(0, 2, 3), keepdims=True)
        y = (x - mean) / jnp.sqrt(var + BN_EPS)
        y = y * g[None, :, None, None] + b[None, :, None, None]
        return jnp.where(y >= 0, y, LRELU_SLOPE * y)

    x = bn_lrelu(conv(x, params["w1"], 4, 4), params["g1"], params["b1"])
    x = bn_lrelu(conv(x, params["w2"], 2, 1), params["g2"], params["b2"])
    x = bn_lrelu(conv(x, params["w3"], 2, 1), params["g3"], params["b3"])
    x = conv(x, params["w4"], 1, 0)
    return x.reshape(x.shape[0], -1)


# --------------------------------- main ---------------------------------------

if __name__ == "__main__":
    dim_z, n_ch, n_maps = 16, 3, 8
    N, H, W = 2, 64, 64            # smallest spatial size the conv stack admits

    key = jax.random.PRNGKey(0)
    k = jax.random.split(key, 5)
    params = {
        "w1": jax.random.normal(k[0], (n_maps, n_ch, 11, 11), jnp.float32) * 0.05,
        "w2": jax.random.normal(k[1], (n_maps * 2, n_maps, 4, 4), jnp.float32) * 0.05,
        "w3": jax.random.normal(k[2], (n_maps * 4, n_maps * 2, 4, 4), jnp.float32) * 0.05,
        "w4": jax.random.normal(k[3], (dim_z, n_maps * 4, 4, 4), jnp.float32) * 0.05,
        "g1": jnp.ones((n_maps,), jnp.float32),
        "b1": jnp.zeros((n_maps,), jnp.float32),
        "g2": jnp.ones((n_maps * 2,), jnp.float32),
        "b2": jnp.zeros((n_maps * 2,), jnp.float32),
        "g3": jnp.ones((n_maps * 4,), jnp.float32),
        "b3": jnp.zeros((n_maps * 4,), jnp.float32),
    }
    x = jax.random.normal(k[4], (N, n_ch, H, W), jnp.float32)

    packed = pack_params(params, N, H, W)       # one-time packing, outside jit

    fwd = jax.jit(encoder_forward)
    ref_fn = jax.jit(encoder_reference)

    out = jax.block_until_ready(fwd(x, packed))
    ref = jax.block_until_ready(ref_fn(x, params))

    assert out.shape == (N, dim_z * 1 * 1), out.shape
    err = float(jnp.max(jnp.abs(out - ref)))
    ref_max = float(jnp.max(jnp.abs(ref)))
    tol = 1e-2 + 2e-2 * ref_max     # bf16 MXU inputs, f32 accumulation
    assert err <= tol, f"max abs err {err} (tol {tol})"
    print("KERNEL_OK")
</pallas_src>

<mosaic_0001>
module attributes {stable_mosaic.version = 11 : i64} {
  func.func @_encoder_kernel(%arg0: i32, %arg1: memref<384x512xbf16, #tpu.memory_space<vmem>>, %arg2: memref<8x384xbf16, #tpu.memory_space<vmem>>, %arg3: memref<8x1xf32, #tpu.memory_space<vmem>>, %arg4: memref<8x1xf32, #tpu.memory_space<vmem>>, %arg5: memref<16x128xbf16, #tpu.memory_space<vmem>>, %arg6: memref<16x1xf32, #tpu.memory_space<vmem>>, %arg7: memref<16x1xf32, #tpu.memory_space<vmem>>, %arg8: memref<16x512x128xbf16, #tpu.memory_space<vmem>>, %arg9: memref<32x256xbf16, #tpu.memory_space<vmem>>, %arg10: memref<32x1xf32, #tpu.memory_space<vmem>>, %arg11: memref<32x1xf32, #tpu.memory_space<vmem>>, %arg12: memref<16x128x32xbf16, #tpu.memory_space<vmem>>, %arg13: memref<16x512xbf16, #tpu.memory_space<vmem>>, %arg14: memref<16x32x2xbf16, #tpu.memory_space<vmem>>, %arg15: memref<16x2xf32, #tpu.memory_space<vmem>>) attributes {dimension_semantics = [#tpu.dimension_semantics<arbitrary>], iteration_bounds = array<i64: 1>, scalar_prefetch = 0 : i64, scratch_operands = 0 : i64, tpu.core_type = #tpu.core_type<tc>, window_params = [{pipeline_mode = #tpu.pipeline_mode<synchronous>, transform_indices = @transform_0, window_bounds = array<i64: 384, 512>}, {pipeline_mode = #tpu.pipeline_mode<synchronous>, transform_indices = @transform_1, window_bounds = array<i64: 8, 384>}, {pipeline_mode = #tpu.pipeline_mode<synchronous>, transform_indices = @transform_2, window_bounds = array<i64: 8, 1>}, {pipeline_mode = #tpu.pipeline_mode<synchronous>, transform_indices = @transform_3, window_bounds = array<i64: 8, 1>}, {pipeline_mode = #tpu.pipeline_mode<synchronous>, transform_indices = @transform_4, window_bounds = array<i64: 16, 128>}, {pipeline_mode = #tpu.pipeline_mode<synchronous>, transform_indices = @transform_5, window_bounds = array<i64: 16, 1>}, {pipeline_mode = #tpu.pipeline_mode<synchronous>, transform_indices = @transform_6, window_bounds = array<i64: 16, 1>}, {pipeline_mode = #tpu.pipeline_mode<synchronous>, transform_indices = @transform_7, window_bounds = array<i64: 16, 512, 128>}, {pipeline_mode = #tpu.pipeline_mode<synchronous>, transform_indices = @transform_8, window_bounds = array<i64: 32, 256>}, {pipeline_mode = #tpu.pipeline_mode<synchronous>, transform_indices = @transform_9, window_bounds = array<i64: 32, 1>}, {pipeline_mode = #tpu.pipeline_mode<synchronous>, transform_indices = @transform_10, window_bounds = array<i64: 32, 1>}, {pipeline_mode = #tpu.pipeline_mode<synchronous>, transform_indices = @transform_11, window_bounds = array<i64: 16, 128, 32>}, {pipeline_mode = #tpu.pipeline_mode<synchronous>, transform_indices = @transform_12, window_bounds = array<i64: 16, 512>}, {pipeline_mode = #tpu.pipeline_mode<synchronous>, transform_indices = @transform_13, window_bounds = array<i64: 16, 32, 2>}, {pipeline_mode = #tpu.pipeline_mode<synchronous>, transform_indices = @transform_14, window_bounds = array<i64: 16, 2>}]} {
    %c0 = arith.constant 0 : index
    %c0_0 = arith.constant 0 : index
    %0 = vector.load %arg2[%c0, %c0_0] : memref<8x384xbf16, #tpu.memory_space<vmem>>, vector<8x384xbf16>
    %c0_1 = arith.constant 0 : index
    %c0_2 = arith.constant 0 : index
    %1 = vector.load %arg1[%c0_1, %c0_2] : memref<384x512xbf16, #tpu.memory_space<vmem>>, vector<384x512xbf16>
    %cst = arith.constant dense<0.000000e+00> : vector<8x512xf32>
    %2 = tpu.matmul %0, %1, %cst {dimension_numbers = #tpu.dot_dimension_numbers<[1], [0], [0], [1], [0, 0, 1, 1], [], []>} : vector<8x384xbf16>, vector<384x512xbf16>, vector<8x512xf32> -> vector<8x512xf32>
    %c0_3 = arith.constant 0 : index
    %c0_4 = arith.constant 0 : index
    %3 = vector.load %arg3[%c0_3, %c0_4] : memref<8x1xf32, #tpu.memory_space<vmem>>, vector<8x1xf32>
    %c0_5 = arith.constant 0 : index
    %c0_6 = arith.constant 0 : index
    %4 = vector.load %arg4[%c0_5, %c0_6] : memref<8x1xf32, #tpu.memory_space<vmem>>, vector<8x1xf32>
    %cst_7 = arith.constant dense<0.000000e+00> : vector<8xf32>
    %5 = vector.multi_reduction <add>, %2, %cst_7 [1] : vector<8x512xf32> to vector<8xf32>
    %6 = vector.shape_cast %5 : vector<8xf32> to vector<8x1xf32>
    %cst_8 = arith.constant 0.001953125 : f32
    %7 = vector.broadcast %cst_8 : f32 to vector<8x1xf32>
    %8 = arith.mulf %6, %7 : vector<8x1xf32>
    %9 = vector.broadcast %8 : vector<8x1xf32> to vector<8x512xf32>
    %10 = arith.subf %2, %9 : vector<8x512xf32>
    %11 = arith.mulf %10, %10 : vector<8x512xf32>
    %cst_9 = arith.constant dense<0.000000e+00> : vector<8xf32>
    %12 = vector.multi_reduction <add>, %11, %cst_9 [1] : vector<8x512xf32> to vector<8xf32>
    %13 = vector.shape_cast %12 : vector<8xf32> to vector<8x1xf32>
    %cst_10 = arith.constant 0.001953125 : f32
    %14 = vector.broadcast %cst_10 : f32 to vector<8x1xf32>
    %15 = arith.mulf %13, %14 : vector<8x1xf32>
    %cst_11 = arith.constant 9.99999974E-6 : f32
    %16 = vector.broadcast %cst_11 : f32 to vector<8x1xf32>
    %17 = arith.addf %15, %16 : vector<8x1xf32>
    %18 = math.rsqrt %17 : vector<8x1xf32>
    %19 = arith.mulf %3, %18 : vector<8x1xf32>
    %20 = vector.broadcast %19 : vector<8x1xf32> to vector<8x512xf32>
    %21 = arith.mulf %10, %20 : vector<8x512xf32>
    %22 = vector.broadcast %4 : vector<8x1xf32> to vector<8x512xf32>
    %23 = arith.addf %21, %22 : vector<8x512xf32>
    %cst_12 = arith.constant 0.000000e+00 : f32
    %24 = vector.broadcast %cst_12 : f32 to vector<8x512xf32>
    %25 = arith.cmpf oge, %23, %24 : vector<8x512xf32>
    %cst_13 = arith.constant 2.000000e-01 : f32
    %26 = vector.broadcast %cst_13 : f32 to vector<8x512xf32>
    %27 = arith.mulf %26, %23 : vector<8x512xf32>
    %28 = arith.select %25, %23, %27 : vector<8x512xi1>, vector<8x512xf32>
    %29 = arith.truncf %28 : vector<8x512xf32> to vector<8x512xbf16>
    %c0_14 = arith.constant 0 : index
    %c0_15 = arith.constant 0 : index
    %c0_16 = arith.constant 0 : index
    %30 = vector.load %arg8[%c0_14, %c0_15, %c0_16] : memref<16x512x128xbf16, #tpu.memory_space<vmem>>, vector<1x512x128xbf16>
    %31 = vector.shape_cast %30 : vector<1x512x128xbf16> to vector<512x128xbf16>
    %cst_17 = arith.constant dense<0.000000e+00> : vector<8x128xf32>
    %32 = tpu.matmul %29, %31, %cst_17 {dimension_numbers = #tpu.dot_dimension_numbers<[1], [0], [0], [1], [0, 0, 1, 1], [], []>} : vector<8x512xbf16>, vector<512x128xbf16>, vector<8x128xf32> -> vector<8x128xf32>
    %c1 = arith.constant 1 : index
    %c0_18 = arith.constant 0 : index
    %c0_19 = arith.constant 0 : index
    %33 = vector.load %arg8[%c1, %c0_18, %c0_19] : memref<16x512x128xbf16, #tpu.memory_space<vmem>>, vector<1x512x128xbf16>
    %34 = vector.shape_cast %33 : vector<1x512x128xbf16> to vector<512x128xbf16>
    %cst_20 = arith.constant dense<0.000000e+00> : vector<8x128xf32>
    %35 = tpu.matmul %29, %34, %cst_20 {dimension_numbers = #tpu.dot_dimension_numbers<[1], [0], [0], [1], [0, 0, 1, 1], [], []>} : vector<8x512xbf16>, vector<512x128xbf16>, vector<8x128xf32> -> vector<8x128xf32>
    %c2 = arith.constant 2 : index
    %c0_21 = arith.constant 0 : index
    %c0_22 = arith.constant 0 : index
    %36 = vector.load %arg8[%c2, %c0_21, %c0_22] : memref<16x512x128xbf16, #tpu.memory_space<vmem>>, vector<1x512x128xbf16>
    %37 = vector.shape_cast %36 : vector<1x512x128xbf16> to vector<512x128xbf16>
    %cst_23 = arith.constant dense<0.000000e+00> : vector<8x128xf32>
    %38 = tpu.matmul %29, %37, %cst_23 {dimension_numbers = #tpu.dot_dimension_numbers<[1], [0], [0], [1], [0, 0, 1, 1], [], []>} : vector<8x512xbf16>, vector<512x128xbf16>, vector<8x128xf32> -> vector<8x128xf32>
    %c3 = arith.constant 3 : index
    %c0_24 = arith.constant 0 : index
    %c0_25 = arith.constant 0 : index
    %39 = vector.load %arg8[%c3, %c0_24, %c0_25] : memref<16x512x128xbf16, #tpu.memory_space<vmem>>, vector<1x512x128xbf16>
    %40 = vector.shape_cast %39 : vector<1x512x128xbf16> to vector<512x128xbf16>
    %cst_26 = arith.constant dense<0.000000e+00> : vector<8x128xf32>
    %41 = tpu.matmul %29, %40, %cst_26 {dimension_numbers = #tpu.dot_dimension_numbers<[1], [0], [0], [1], [0, 0, 1, 1], [], []>} : vector<8x512xbf16>, vector<512x128xbf16>, vector<8x128xf32> -> vector<8x128xf32>
    %c4 = arith.constant 4 : index
    %c0_27 = arith.constant 0 : index
    %c0_28 = arith.constant 0 : index
    %42 = vector.load %arg8[%c4, %c0_27, %c0_28] : memref<16x512x128xbf16, #tpu.memory_space<vmem>>, vector<1x512x128xbf16>
    %43 = vector.shape_cast %42 : vector<1x512x128xbf16> to vector<512x128xbf16>
    %cst_29 = arith.constant dense<0.000000e+00> : vector<8x128xf32>
    %44 = tpu.matmul %29, %43, %cst_29 {dimension_numbers = #tpu.dot_dimension_numbers<[1], [0], [0], [1], [0, 0, 1, 1], [], []>} : vector<8x512xbf16>, vector<512x128xbf16>, vector<8x128xf32> -> vector<8x128xf32>
    %c5 = arith.constant 5 : index
    %c0_30 = arith.constant 0 : index
    %c0_31 = arith.constant 0 : index
    %45 = vector.load %arg8[%c5, %c0_30, %c0_31] : memref<16x512x128xbf16, #tpu.memory_space<vmem>>, vector<1x512x128xbf16>
    %46 = vector.shape_cast %45 : vector<1x512x128xbf16> to vector<512x128xbf16>
    %cst_32 = arith.constant dense<0.000000e+00> : vector<8x128xf32>
    %47 = tpu.matmul %29, %46, %cst_32 {dimension_numbers = #tpu.dot_dimension_numbers<[1], [0], [0], [1], [0, 0, 1, 1], [], []>} : vector<8x512xbf16>, vector<512x128xbf16>, vector<8x128xf32> -> vector<8x128xf32>
    %c6 = arith.constant 6 : index
    %c0_33 = arith.constant 0 : index
    %c0_34 = arith.constant 0 : index
    %48 = vector.load %arg8[%c6, %c0_33, %c0_34] : memref<16x512x128xbf16, #tpu.memory_space<vmem>>, vector<1x512x128xbf16>
    %49 = vector.shape_cast %48 : vector<1x512x128xbf16> to vector<512x128xbf16>
    %cst_35 = arith.constant dense<0.000000e+00> : vector<8x128xf32>
    %50 = tpu.matmul %29, %49, %cst_35 {dimension_numbers = #tpu.dot_dimension_numbers<[1], [0], [0], [1], [0, 0, 1, 1], [], []>} : vector<8x512xbf16>, vector<512x128xbf16>, vector<8x128xf32> -> vector<8x128xf32>
    %c7 = arith.constant 7 : index
    %c0_36 = arith.constant 0 : index
    %c0_37 = arith.constant 0 : index
    %51 = vector.load %arg8[%c7, %c0_36, %c0_37] : memref<16x512x128xbf16, #tpu.memory_space<vmem>>, vector<1x512x128xbf16>
    %52 = vector.shape_cast %51 : vector<1x512x128xbf16> to vector<512x128xbf16>
    %cst_38 = arith.constant dense<0.000000e+00> : vector<8x128xf32>
    %53 = tpu.matmul %29, %52, %cst_38 {dimension_numbers = #tpu.dot_dimension_numbers<[1], [0], [0], [1], [0, 0, 1, 1], [], []>} : vector<8x512xbf16>, vector<512x128xbf16>, vector<8x128xf32> -> vector<8x128xf32>
    %c8 = arith.constant 8 : index
    %c0_39 = arith.constant 0 : index
    %c0_40 = arith.constant 0 : index
    %54 = vector.load %arg8[%c8, %c0_39, %c0_40] : memref<16x512x128xbf16, #tpu.memory_space<vmem>>, vector<1x512x128xbf16>
    %55 = vector.shape_cast %54 : vector<1x512x128xbf16> to vector<512x128xbf16>
    %cst_41 = arith.constant dense<0.000000e+00> : vector<8x128xf32>
    %56 = tpu.matmul %29, %55, %cst_41 {dimension_numbers = #tpu.dot_dimension_numbers<[1], [0], [0], [1], [0, 0, 1, 1], [], []>} : vector<8x512xbf16>, vector<512x128xbf16>, vector<8x128xf32> -> vector<8x128xf32>
    %c9 = arith.constant 9 : index
    %c0_42 = arith.constant 0 : index
    %c0_43 = arith.constant 0 : index
    %57 = vector.load %arg8[%c9, %c0_42, %c0_43] : memref<16x512x128xbf16, #tpu.memory_space<vmem>>, vector<1x512x128xbf16>
    %58 = vector.shape_cast %57 : vector<1x512x128xbf16> to vector<512x128xbf16>
    %cst_44 = arith.constant dense<0.000000e+00> : vector<8x128xf32>
    %59 = tpu.matmul %29, %58, %cst_44 {dimension_numbers = #tpu.dot_dimension_numbers<[1], [0], [0], [1], [0, 0, 1, 1], [], []>} : vector<8x512xbf16>, vector<512x128xbf16>, vector<8x128xf32> -> vector<8x128xf32>
    %c10 = arith.constant 10 : index
    %c0_45 = arith.constant 0 : index
    %c0_46 = arith.constant 0 : index
    %60 = vector.load %arg8[%c10, %c0_45, %c0_46] : memref<16x512x128xbf16, #tpu.memory_space<vmem>>, vector<1x512x128xbf16>
    %61 = vector.shape_cast %60 : vector<1x512x128xbf16> to vector<512x128xbf16>
    %cst_47 = arith.constant dense<0.000000e+00> : vector<8x128xf32>
    %62 = tpu.matmul %29, %61, %cst_47 {dimension_numbers = #tpu.dot_dimension_numbers<[1], [0], [0], [1], [0, 0, 1, 1], [], []>} : vector<8x512xbf16>, vector<512x128xbf16>, vector<8x128xf32> -> vector<8x128xf32>
    %c11 = arith.constant 11 : index
    %c0_48 = arith.constant 0 : index
    %c0_49 = arith.constant 0 : index
    %63 = vector.load %arg8[%c11, %c0_48, %c0_49] : memref<16x512x128xbf16, #tpu.memory_space<vmem>>, vector<1x512x128xbf16>
    %64 = vector.shape_cast %63 : vector<1x512x128xbf16> to vector<512x128xbf16>
    %cst_50 = arith.constant dense<0.000000e+00> : vector<8x128xf32>
    %65 = tpu.matmul %29, %64, %cst_50 {dimension_numbers = #tpu.dot_dimension_numbers<[1], [0], [0], [1], [0, 0, 1, 1], [], []>} : vector<8x512xbf16>, vector<512x128xbf16>, vector<8x128xf32> -> vector<8x128xf32>
    %c12 = arith.constant 12 : index
    %c0_51 = arith.constant 0 : index
    %c0_52 = arith.constant 0 : index
    %66 = vector.load %arg8[%c12, %c0_51, %c0_52] : memref<16x512x128xbf16, #tpu.memory_space<vmem>>, vector<1x512x128xbf16>
    %67 = vector.shape_cast %66 : vector<1x512x128xbf16> to vector<512x128xbf16>
    %cst_53 = arith.constant dense<0.000000e+00> : vector<8x128xf32>
    %68 = tpu.matmul %29, %67, %cst_53 {dimension_numbers = #tpu.dot_dimension_numbers<[1], [0], [0], [1], [0, 0, 1, 1], [], []>} : vector<8x512xbf16>, vector<512x128xbf16>, vector<8x128xf32> -> vector<8x128xf32>
    %c13 = arith.constant 13 : index
    %c0_54 = arith.constant 0 : index
    %c0_55 = arith.constant 0 : index
    %69 = vector.load %arg8[%c13, %c0_54, %c0_55] : memref<16x512x128xbf16, #tpu.memory_space<vmem>>, vector<1x512x128xbf16>
    %70 = vector.shape_cast %69 : vector<1x512x128xbf16> to vector<512x128xbf16>
    %cst_56 = arith.constant dense<0.000000e+00> : vector<8x128xf32>
    %71 = tpu.matmul %29, %70, %cst_56 {dimension_numbers = #tpu.dot_dimension_numbers<[1], [0], [0], [1], [0, 0, 1, 1], [], []>} : vector<8x512xbf16>, vector<512x128xbf16>, vector<8x128xf32> -> vector<8x128xf32>
    %c14 = arith.constant 14 : index
    %c0_57 = arith.constant 0 : index
    %c0_58 = arith.constant 0 : index
    %72 = vector.load %arg8[%c14, %c0_57, %c0_58] : memref<16x512x128xbf16, #tpu.memory_space<vmem>>, vector<1x512x128xbf16>
    %73 = vector.shape_cast %72 : vector<1x512x128xbf16> to vector<512x128xbf16>
    %cst_59 = arith.constant dense<0.000000e+00> : vector<8x128xf32>
    %74 = tpu.matmul %29, %73, %cst_59 {dimension_numbers = #tpu.dot_dimension_numbers<[1], [0], [0], [1], [0, 0, 1, 1], [], []>} : vector<8x512xbf16>, vector<512x128xbf16>, vector<8x128xf32> -> vector<8x128xf32>
    %c15 = arith.constant 15 : index
    %c0_60 = arith.constant 0 : index
    %c0_61 = arith.constant 0 : index
    %75 = vector.load %arg8[%c15, %c0_60, %c0_61] : memref<16x512x128xbf16, #tpu.memory_space<vmem>>, vector<1x512x128xbf16>
    %76 = vector.shape_cast %75 : vector<1x512x128xbf16> to vector<512x128xbf16>
    %cst_62 = arith.constant dense<0.000000e+00> : vector<8x128xf32>
    %77 = tpu.matmul %29, %76, %cst_62 {dimension_numbers = #tpu.dot_dimension_numbers<[1], [0], [0], [1], [0, 0, 1, 1], [], []>} : vector<8x512xbf16>, vector<512x128xbf16>, vector<8x128xf32> -> vector<8x128xf32>
    %78 = tpu.concatenate %32, %35, %38, %41, %44, %47, %50, %53, %56, %59, %62, %65, %68, %71, %74, %77 in 0 : vector<8x128xf32>, vector<8x128xf32>, vector<8x128xf32>, vector<8x128xf32>, vector<8x128xf32>, vector<8x128xf32>, vector<8x128xf32>, vector<8x128xf32>, vector<8x128xf32>, vector<8x128xf32>, vector<8x128xf32>, vector<8x128xf32>, vector<8x128xf32>, vector<8x128xf32>, vector<8x128xf32>, vector<8x128xf32> -> vector<128x128xf32>
    %79 = arith.truncf %78 : vector<128x128xf32> to vector<128x128xbf16>
    %c0_63 = arith.constant 0 : index
    %c0_64 = arith.constant 0 : index
    %80 = vector.load %arg5[%c0_63, %c0_64] : memref<16x128xbf16, #tpu.memory_space<vmem>>, vector<16x128xbf16>
    %cst_65 = arith.constant dense<0.000000e+00> : vector<16x128xf32>
    %81 = tpu.matmul %80, %79, %cst_65 {dimension_numbers = #tpu.dot_dimension_numbers<[1], [0], [0], [1], [0, 0, 1, 1], [], []>} : vector<16x128xbf16>, vector<128x128xbf16>, vector<16x128xf32> -> vector<16x128xf32>
    %c0_66 = arith.constant 0 : index
    %c0_67 = arith.constant 0 : index
    %82 = vector.load %arg6[%c0_66, %c0_67] : memref<16x1xf32, #tpu.memory_space<vmem>>, vector<16x1xf32>
    %c0_68 = arith.constant 0 : index
    %c0_69 = arith.constant 0 : index
    %83 = vector.load %arg7[%c0_68, %c0_69] : memref<16x1xf32, #tpu.memory_space<vmem>>, vector<16x1xf32>
    %cst_70 = arith.constant dense<0.000000e+00> : vector<16xf32>
    %84 = vector.multi_reduction <add>, %81, %cst_70 [1] : vector<16x128xf32> to vector<16xf32>
    %85 = vector.shape_cast %84 : vector<16xf32> to vector<16x1xf32>
    %cst_71 = arith.constant 7.812500e-03 : f32
    %86 = vector.broadcast %cst_71 : f32 to vector<16x1xf32>
    %87 = arith.mulf %85, %86 : vector<16x1xf32>
    %88 = vector.broadcast %87 : vector<16x1xf32> to vector<16x128xf32>
    %89 = arith.subf %81, %88 : vector<16x128xf32>
    %90 = arith.mulf %89, %89 : vector<16x128xf32>
    %cst_72 = arith.constant dense<0.000000e+00> : vector<16xf32>
    %91 = vector.multi_reduction <add>, %90, %cst_72 [1] : vector<16x128xf32> to vector<16xf32>
    %92 = vector.shape_cast %91 : vector<16xf32> to vector<16x1xf32>
    %cst_73 = arith.constant 7.812500e-03 : f32
    %93 = vector.broadcast %cst_73 : f32 to vector<16x1xf32>
    %94 = arith.mulf %92, %93 : vector<16x1xf32>
    %cst_74 = arith.constant 9.99999974E-6 : f32
    %95 = vector.broadcast %cst_74 : f32 to vector<16x1xf32>
    %96 = arith.addf %94, %95 : vector<16x1xf32>
    %97 = math.rsqrt %96 : vector<16x1xf32>
    %98 = arith.mulf %82, %97 : vector<16x1xf32>
    %99 = vector.broadcast %98 : vector<16x1xf32> to vector<16x128xf32>
    %100 = arith.mulf %89, %99 : vector<16x128xf32>
    %101 = vector.broadcast %83 : vector<16x1xf32> to vector<16x128xf32>
    %102 = arith.addf %100, %101 : vector<16x128xf32>
    %cst_75 = arith.constant 0.000000e+00 : f32
    %103 = vector.broadcast %cst_75 : f32 to vector<16x128xf32>
    %104 = arith.cmpf oge, %102, %103 : vector<16x128xf32>
    %cst_76 = arith.constant 2.000000e-01 : f32
    %105 = vector.broadcast %cst_76 : f32 to vector<16x128xf32>
    %106 = arith.mulf %105, %102 : vector<16x128xf32>
    %107 = arith.select %104, %102, %106 : vector<16x128xi1>, vector<16x128xf32>
    %108 = arith.truncf %107 : vector<16x128xf32> to vector<16x128xbf16>
    %c0_77 = arith.constant 0 : index
    %c0_78 = arith.constant 0 : index
    %c0_79 = arith.constant 0 : index
    %109 = vector.load %arg12[%c0_77, %c0_78, %c0_79] : memref<16x128x32xbf16, #tpu.memory_space<vmem>>, vector<1x128x32xbf16>
    %110 = vector.shape_cast %109 : vector<1x128x32xbf16> to vector<128x32xbf16>
    %cst_80 = arith.constant dense<0.000000e+00> : vector<16x32xf32>
    %111 = tpu.matmul %108, %110, %cst_80 {dimension_numbers = #tpu.dot_dimension_numbers<[1], [0], [0], [1], [0, 0, 1, 1], [], []>} : vector<16x128xbf16>, vector<128x32xbf16>, vector<16x32xf32> -> vector<16x32xf32>
    %c1_81 = arith.constant 1 : index
    %c0_82 = arith.constant 0 : index
    %c0_83 = arith.constant 0 : index
    %112 = vector.load %arg12[%c1_81, %c0_82, %c0_83] : memref<16x128x32xbf16, #tpu.memory_space<vmem>>, vector<1x128x32xbf16>
    %113 = vector.shape_cast %112 : vector<1x128x32xbf16> to vector<128x32xbf16>
    %cst_84 = arith.constant dense<0.000000e+00> : vector<16x32xf32>
    %114 = tpu.matmul %108, %113, %cst_84 {dimension_numbers = #tpu.dot_dimension_numbers<[1], [0], [0], [1], [0, 0, 1, 1], [], []>} : vector<16x128xbf16>, vector<128x32xbf16>, vector<16x32xf32> -> vector<16x32xf32>
    %c2_85 = arith.constant 2 : index
    %c0_86 = arith.constant 0 : index
    %c0_87 = arith.constant 0 : index
    %115 = vector.load %arg12[%c2_85, %c0_86, %c0_87] : memref<16x128x32xbf16, #tpu.memory_space<vmem>>, vector<1x128x32xbf16>
    %116 = vector.shape_cast %115 : vector<1x128x32xbf16> to vector<128x32xbf16>
    %cst_88 = arith.constant dense<0.000000e+00> : vector<16x32xf32>
    %117 = tpu.matmul %108, %116, %cst_88 {dimension_numbers = #tpu.dot_dimension_numbers<[1], [0], [0], [1], [0, 0, 1, 1], [], []>} : vector<16x128xbf16>, vector<128x32xbf16>, vector<16x32xf32> -> vector<16x32xf32>
    %c3_89 = arith.constant 3 : index
    %c0_90 = arith.constant 0 : index
    %c0_91 = arith.constant 0 : index
    %118 = vector.load %arg12[%c3_89, %c0_90, %c0_91] : memref<16x128x32xbf16, #tpu.memory_space<vmem>>, vector<1x128x32xbf16>
    %119 = vector.shape_cast %118 : vector<1x128x32xbf16> to vector<128x32xbf16>
    %cst_92 = arith.constant dense<0.000000e+00> : vector<16x32xf32>
    %120 = tpu.matmul %108, %119, %cst_92 {dimension_numbers = #tpu.dot_dimension_numbers<[1], [0], [0], [1], [0, 0, 1, 1], [], []>} : vector<16x128xbf16>, vector<128x32xbf16>, vector<16x32xf32> -> vector<16x32xf32>
    %c4_93 = arith.constant 4 : index
    %c0_94 = arith.constant 0 : index
    %c0_95 = arith.constant 0 : index
    %121 = vector.load %arg12[%c4_93, %c0_94, %c0_95] : memref<16x128x32xbf16, #tpu.memory_space<vmem>>, vector<1x128x32xbf16>
    %122 = vector.shape_cast %121 : vector<1x128x32xbf16> to vector<128x32xbf16>
    %cst_96 = arith.constant dense<0.000000e+00> : vector<16x32xf32>
    %123 = tpu.matmul %108, %122, %cst_96 {dimension_numbers = #tpu.dot_dimension_numbers<[1], [0], [0], [1], [0, 0, 1, 1], [], []>} : vector<16x128xbf16>, vector<128x32xbf16>, vector<16x32xf32> -> vector<16x32xf32>
    %c5_97 = arith.constant 5 : index
    %c0_98 = arith.constant 0 : index
    %c0_99 = arith.constant 0 : index
    %124 = vector.load %arg12[%c5_97, %c0_98, %c0_99] : memref<16x128x32xbf16, #tpu.memory_space<vmem>>, vector<1x128x32xbf16>
    %125 = vector.shape_cast %124 : vector<1x128x32xbf16> to vector<128x32xbf16>
    %cst_100 = arith.constant dense<0.000000e+00> : vector<16x32xf32>
    %126 = tpu.matmul %108, %125, %cst_100 {dimension_numbers = #tpu.dot_dimension_numbers<[1], [0], [0], [1], [0, 0, 1, 1], [], []>} : vector<16x128xbf16>, vector<128x32xbf16>, vector<16x32xf32> -> vector<16x32xf32>
    %c6_101 = arith.constant 6 : index
    %c0_102 = arith.constant 0 : index
    %c0_103 = arith.constant 0 : index
    %127 = vector.load %arg12[%c6_101, %c0_102, %c0_103] : memref<16x128x32xbf16, #tpu.memory_space<vmem>>, vector<1x128x32xbf16>
    %128 = vector.shape_cast %127 : vector<1x128x32xbf16> to vector<128x32xbf16>
    %cst_104 = arith.constant dense<0.000000e+00> : vector<16x32xf32>
    %129 = tpu.matmul %108, %128, %cst_104 {dimension_numbers = #tpu.dot_dimension_numbers<[1], [0], [0], [1], [0, 0, 1, 1], [], []>} : vector<16x128xbf16>, vector<128x32xbf16>, vector<16x32xf32> -> vector<16x32xf32>
    %c7_105 = arith.constant 7 : index
    %c0_106 = arith.constant 0 : index
    %c0_107 = arith.constant 0 : index
    %130 = vector.load %arg12[%c7_105, %c0_106, %c0_107] : memref<16x128x32xbf16, #tpu.memory_space<vmem>>, vector<1x128x32xbf16>
    %131 = vector.shape_cast %130 : vector<1x128x32xbf16> to vector<128x32xbf16>
    %cst_108 = arith.constant dense<0.000000e+00> : vector<16x32xf32>
    %132 = tpu.matmul %108, %131, %cst_108 {dimension_numbers = #tpu.dot_dimension_numbers<[1], [0], [0], [1], [0, 0, 1, 1], [], []>} : vector<16x128xbf16>, vector<128x32xbf16>, vector<16x32xf32> -> vector<16x32xf32>
    %c8_109 = arith.constant 8 : index
    %c0_110 = arith.constant 0 : index
    %c0_111 = arith.constant 0 : index
    %133 = vector.load %arg12[%c8_109, %c0_110, %c0_111] : memref<16x128x32xbf16, #tpu.memory_space<vmem>>, vector<1x128x32xbf16>
    %134 = vector.shape_cast %133 : vector<1x128x32xbf16> to vector<128x32xbf16>
    %cst_112 = arith.constant dense<0.000000e+00> : vector<16x32xf32>
    %135 = tpu.matmul %108, %134, %cst_112 {dimension_numbers = #tpu.dot_dimension_numbers<[1], [0], [0], [1], [0, 0, 1, 1], [], []>} : vector<16x128xbf16>, vector<128x32xbf16>, vector<16x32xf32> -> vector<16x32xf32>
    %c9_113 = arith.constant 9 : index
    %c0_114 = arith.constant 0 : index
    %c0_115 = arith.constant 0 : index
    %136 = vector.load %arg12[%c9_113, %c0_114, %c0_115] : memref<16x128x32xbf16, #tpu.memory_space<vmem>>, vector<1x128x32xbf16>
    %137 = vector.shape_cast %136 : vector<1x128x32xbf16> to vector<128x32xbf16>
    %cst_116 = arith.constant dense<0.000000e+00> : vector<16x32xf32>
    %138 = tpu.matmul %108, %137, %cst_116 {dimension_numbers = #tpu.dot_dimension_numbers<[1], [0], [0], [1], [0, 0, 1, 1], [], []>} : vector<16x128xbf16>, vector<128x32xbf16>, vector<16x32xf32> -> vector<16x32xf32>
    %c10_117 = arith.constant 10 : index
    %c0_118 = arith.constant 0 : index
    %c0_119 = arith.constant 0 : index
    %139 = vector.load %arg12[%c10_117, %c0_118, %c0_119] : memref<16x128x32xbf16, #tpu.memory_space<vmem>>, vector<1x128x32xbf16>
    %140 = vector.shape_cast %139 : vector<1x128x32xbf16> to vector<128x32xbf16>
    %cst_120 = arith.constant dense<0.000000e+00> : vector<16x32xf32>
    %141 = tpu.matmul %108, %140, %cst_120 {dimension_numbers = #tpu.dot_dimension_numbers<[1], [0], [0], [1], [0, 0, 1, 1], [], []>} : vector<16x128xbf16>, vector<128x32xbf16>, vector<16x32xf32> -> vector<16x32xf32>
    %c11_121 = arith.constant 11 : index
    %c0_122 = arith.constant 0 : index
    %c0_123 = arith.constant 0 : index
    %142 = vector.load %arg12[%c11_121, %c0_122, %c0_123] : memref<16x128x32xbf16, #tpu.memory_space<vmem>>, vector<1x128x32xbf16>
    %143 = vector.shape_cast %142 : vector<1x128x32xbf16> to vector<128x32xbf16>
    %cst_124 = arith.constant dense<0.000000e+00> : vector<16x32xf32>
    %144 = tpu.matmul %108, %143, %cst_124 {dimension_numbers = #tpu.dot_dimension_numbers<[1], [0], [0], [1], [0, 0, 1, 1], [], []>} : vector<16x128xbf16>, vector<128x32xbf16>, vector<16x32xf32> -> vector<16x32xf32>
    %c12_125 = arith.constant 12 : index
    %c0_126 = arith.constant 0 : index
    %c0_127 = arith.constant 0 : index
    %145 = vector.load %arg12[%c12_125, %c0_126, %c0_127] : memref<16x128x32xbf16, #tpu.memory_space<vmem>>, vector<1x128x32xbf16>
    %146 = vector.shape_cast %145 : vector<1x128x32xbf16> to vector<128x32xbf16>
    %cst_128 = arith.constant dense<0.000000e+00> : vector<16x32xf32>
    %147 = tpu.matmul %108, %146, %cst_128 {dimension_numbers = #tpu.dot_dimension_numbers<[1], [0], [0], [1], [0, 0, 1, 1], [], []>} : vector<16x128xbf16>, vector<128x32xbf16>, vector<16x32xf32> -> vector<16x32xf32>
    %c13_129 = arith.constant 13 : index
    %c0_130 = arith.constant 0 : index
    %c0_131 = arith.constant 0 : index
    %148 = vector.load %arg12[%c13_129, %c0_130, %c0_131] : memref<16x128x32xbf16, #tpu.memory_space<vmem>>, vector<1x128x32xbf16>
    %149 = vector.shape_cast %148 : vector<1x128x32xbf16> to vector<128x32xbf16>
    %cst_132 = arith.constant dense<0.000000e+00> : vector<16x32xf32>
    %150 = tpu.matmul %108, %149, %cst_132 {dimension_numbers = #tpu.dot_dimension_numbers<[1], [0], [0], [1], [0, 0, 1, 1], [], []>} : vector<16x128xbf16>, vector<128x32xbf16>, vector<16x32xf32> -> vector<16x32xf32>
    %c14_133 = arith.constant 14 : index
    %c0_134 = arith.constant 0 : index
    %c0_135 = arith.constant 0 : index
    %151 = vector.load %arg12[%c14_133, %c0_134, %c0_135] : memref<16x128x32xbf16, #tpu.memory_space<vmem>>, vector<1x128x32xbf16>
    %152 = vector.shape_cast %151 : vector<1x128x32xbf16> to vector<128x32xbf16>
    %cst_136 = arith.constant dense<0.000000e+00> : vector<16x32xf32>
    %153 = tpu.matmul %108, %152, %cst_136 {dimension_numbers = #tpu.dot_dimension_numbers<[1], [0], [0], [1], [0, 0, 1, 1], [], []>} : vector<16x128xbf16>, vector<128x32xbf16>, vector<16x32xf32> -> vector<16x32xf32>
    %c15_137 = arith.constant 15 : index
    %c0_138 = arith.constant 0 : index
    %c0_139 = arith.constant 0 : index
    %154 = vector.load %arg12[%c15_137, %c0_138, %c0_139] : memref<16x128x32xbf16, #tpu.memory_space<vmem>>, vector<1x128x32xbf16>
    %155 = vector.shape_cast %154 : vector<1x128x32xbf16> to vector<128x32xbf16>
    %cst_140 = arith.constant dense<0.000000e+00> : vector<16x32xf32>
    %156 = tpu.matmul %108, %155, %cst_140 {dimension_numbers = #tpu.dot_dimension_numbers<[1], [0], [0], [1], [0, 0, 1, 1], [], []>} : vector<16x128xbf16>, vector<128x32xbf16>, vector<16x32xf32> -> vector<16x32xf32>
    %157 = tpu.concatenate %111, %114, %117, %120, %123, %126, %129, %132, %135, %138, %141, %144, %147, %150, %153, %156 in 0 : vector<16x32xf32>, vector<16x32xf32>, vector<16x32xf32>, vector<16x32xf32>, vector<16x32xf32>, vector<16x32xf32>, vector<16x32xf32>, vector<16x32xf32>, vector<16x32xf32>, vector<16x32xf32>, vector<16x32xf32>, vector<16x32xf32>, vector<16x32xf32>, vector<16x32xf32>, vector<16x32xf32>, vector<16x32xf32> -> vector<256x32xf32>
    %158 = arith.truncf %157 : vector<256x32xf32> to vector<256x32xbf16>
    %c0_141 = arith.constant 0 : index
    %c0_142 = arith.constant 0 : index
    %159 = vector.load %arg9[%c0_141, %c0_142] : memref<32x256xbf16, #tpu.memory_space<vmem>>, vector<32x256xbf16>
    %cst_143 = arith.constant dense<0.000000e+00> : vector<32x32xf32>
    %160 = tpu.matmul %159, %158, %cst_143 {dimension_numbers = #tpu.dot_dimension_numbers<[1], [0], [0], [1], [0, 0, 1, 1], [], []>} : vector<32x256xbf16>, vector<256x32xbf16>, vector<32x32xf32> -> vector<32x32xf32>
    %c0_144 = arith.constant 0 : index
    %c0_145 = arith.constant 0 : index
    %161 = vector.load %arg10[%c0_144, %c0_145] : memref<32x1xf32, #tpu.memory_space<vmem>>, vector<32x1xf32>
    %c0_146 = arith.constant 0 : index
    %c0_147 = arith.constant 0 : index
    %162 = vector.load %arg11[%c0_146, %c0_147] : memref<32x1xf32, #tpu.memory_space<vmem>>, vector<32x1xf32>
    %cst_148 = arith.constant dense<0.000000e+00> : vector<32xf32>
    %163 = vector.multi_reduction <add>, %160, %cst_148 [1] : vector<32x32xf32> to vector<32xf32>
    %164 = vector.shape_cast %163 : vector<32xf32> to vector<32x1xf32>
    %cst_149 = arith.constant 3.125000e-02 : f32
    %165 = vector.broadcast %cst_149 : f32 to vector<32x1xf32>
    %166 = arith.mulf %164, %165 : vector<32x1xf32>
    %167 = vector.broadcast %166 : vector<32x1xf32> to vector<32x32xf32>
    %168 = arith.subf %160, %167 : vector<32x32xf32>
    %169 = arith.mulf %168, %168 : vector<32x32xf32>
    %cst_150 = arith.constant dense<0.000000e+00> : vector<32xf32>
    %170 = vector.multi_reduction <add>, %169, %cst_150 [1] : vector<32x32xf32> to vector<32xf32>
    %171 = vector.shape_cast %170 : vector<32xf32> to vector<32x1xf32>
    %cst_151 = arith.constant 3.125000e-02 : f32
    %172 = vector.broadcast %cst_151 : f32 to vector<32x1xf32>
    %173 = arith.mulf %171, %172 : vector<32x1xf32>
    %cst_152 = arith.constant 9.99999974E-6 : f32
    %174 = vector.broadcast %cst_152 : f32 to vector<32x1xf32>
    %175 = arith.addf %173, %174 : vector<32x1xf32>
    %176 = math.rsqrt %175 : vector<32x1xf32>
    %177 = arith.mulf %161, %176 : vector<32x1xf32>
    %178 = vector.broadcast %177 : vector<32x1xf32> to vector<32x32xf32>
    %179 = arith.mulf %168, %178 : vector<32x32xf32>
    %180 = vector.broadcast %162 : vector<32x1xf32> to vector<32x32xf32>
    %181 = arith.addf %179, %180 : vector<32x32xf32>
    %cst_153 = arith.constant 0.000000e+00 : f32
    %182 = vector.broadcast %cst_153 : f32 to vector<32x32xf32>
    %183 = arith.cmpf oge, %181, %182 : vector<32x32xf32>
    %cst_154 = arith.constant 2.000000e-01 : f32
    %184 = vector.broadcast %cst_154 : f32 to vector<32x32xf32>
    %185 = arith.mulf %184, %181 : vector<32x32xf32>
    %186 = arith.select %183, %181, %185 : vector<32x32xi1>, vector<32x32xf32>
    %187 = arith.truncf %186 : vector<32x32xf32> to vector<32x32xbf16>
    %c0_155 = arith.constant 0 : index
    %c0_156 = arith.constant 0 : index
    %c0_157 = arith.constant 0 : index
    %188 = vector.load %arg14[%c0_155, %c0_156, %c0_157] : memref<16x32x2xbf16, #tpu.memory_space<vmem>>, vector<1x32x2xbf16>
    %189 = vector.shape_cast %188 : vector<1x32x2xbf16> to vector<32x2xbf16>
    %cst_158 = arith.constant dense<0.000000e+00> : vector<32x2xf32>
    %190 = tpu.matmul %187, %189, %cst_158 {dimension_numbers = #tpu.dot_dimension_numbers<[1], [0], [0], [1], [0, 0, 1, 1], [], []>} : vector<32x32xbf16>, vector<32x2xbf16>, vector<32x2xf32> -> vector<32x2xf32>
    %c1_159 = arith.constant 1 : index
    %c0_160 = arith.constant 0 : index
    %c0_161 = arith.constant 0 : index
    %191 = vector.load %arg14[%c1_159, %c0_160, %c0_161] : memref<16x32x2xbf16, #tpu.memory_space<vmem>>, vector<1x32x2xbf16>
    %192 = vector.shape_cast %191 : vector<1x32x2xbf16> to vector<32x2xbf16>
    %cst_162 = arith.constant dense<0.000000e+00> : vector<32x2xf32>
    %193 = tpu.matmul %187, %192, %cst_162 {dimension_numbers = #tpu.dot_dimension_numbers<[1], [0], [0], [1], [0, 0, 1, 1], [], []>} : vector<32x32xbf16>, vector<32x2xbf16>, vector<32x2xf32> -> vector<32x2xf32>
    %c2_163 = arith.constant 2 : index
    %c0_164 = arith.constant 0 : index
    %c0_165 = arith.constant 0 : index
    %194 = vector.load %arg14[%c2_163, %c0_164, %c0_165] : memref<16x32x2xbf16, #tpu.memory_space<vmem>>, vector<1x32x2xbf16>
    %195 = vector.shape_cast %194 : vector<1x32x2xbf16> to vector<32x2xbf16>
    %cst_166 = arith.constant dense<0.000000e+00> : vector<32x2xf32>
    %196 = tpu.matmul %187, %195, %cst_166 {dimension_numbers = #tpu.dot_dimension_numbers<[1], [0], [0], [1], [0, 0, 1, 1], [], []>} : vector<32x32xbf16>, vector<32x2xbf16>, vector<32x2xf32> -> vector<32x2xf32>
    %c3_167 = arith.constant 3 : index
    %c0_168 = arith.constant 0 : index
    %c0_169 = arith.constant 0 : index
    %197 = vector.load %arg14[%c3_167, %c0_168, %c0_169] : memref<16x32x2xbf16, #tpu.memory_space<vmem>>, vector<1x32x2xbf16>
    %198 = vector.shape_cast %197 : vector<1x32x2xbf16> to vector<32x2xbf16>
    %cst_170 = arith.constant dense<0.000000e+00> : vector<32x2xf32>
    %199 = tpu.matmul %187, %198, %cst_170 {dimension_numbers = #tpu.dot_dimension_numbers<[1], [0], [0], [1], [0, 0, 1, 1], [], []>} : vector<32x32xbf16>, vector<32x2xbf16>, vector<32x2xf32> -> vector<32x2xf32>
    %c4_171 = arith.constant 4 : index
    %c0_172 = arith.constant 0 : index
    %c0_173 = arith.constant 0 : index
    %200 = vector.load %arg14[%c4_171, %c0_172, %c0_173] : memref<16x32x2xbf16, #tpu.memory_space<vmem>>, vector<1x32x2xbf16>
    %201 = vector.shape_cast %200 : vector<1x32x2xbf16> to vector<32x2xbf16>
    %cst_174 = arith.constant dense<0.000000e+00> : vector<32x2xf32>
    %202 = tpu.matmul %187, %201, %cst_174 {dimension_numbers = #tpu.dot_dimension_numbers<[1], [0], [0], [1], [0, 0, 1, 1], [], []>} : vector<32x32xbf16>, vector<32x2xbf16>, vector<32x2xf32> -> vector<32x2xf32>
    %c5_175 = arith.constant 5 : index
    %c0_176 = arith.constant 0 : index
    %c0_177 = arith.constant 0 : index
    %203 = vector.load %arg14[%c5_175, %c0_176, %c0_177] : memref<16x32x2xbf16, #tpu.memory_space<vmem>>, vector<1x32x2xbf16>
    %204 = vector.shape_cast %203 : vector<1x32x2xbf16> to vector<32x2xbf16>
    %cst_178 = arith.constant dense<0.000000e+00> : vector<32x2xf32>
    %205 = tpu.matmul %187, %204, %cst_178 {dimension_numbers = #tpu.dot_dimension_numbers<[1], [0], [0], [1], [0, 0, 1, 1], [], []>} : vector<32x32xbf16>, vector<32x2xbf16>, vector<32x2xf32> -> vector<32x2xf32>
    %c6_179 = arith.constant 6 : index
    %c0_180 = arith.constant 0 : index
    %c0_181 = arith.constant 0 : index
    %206 = vector.load %arg14[%c6_179, %c0_180, %c0_181] : memref<16x32x2xbf16, #tpu.memory_space<vmem>>, vector<1x32x2xbf16>
    %207 = vector.shape_cast %206 : vector<1x32x2xbf16> to vector<32x2xbf16>
    %cst_182 = arith.constant dense<0.000000e+00> : vector<32x2xf32>
    %208 = tpu.matmul %187, %207, %cst_182 {dimension_numbers = #tpu.dot_dimension_numbers<[1], [0], [0], [1], [0, 0, 1, 1], [], []>} : vector<32x32xbf16>, vector<32x2xbf16>, vector<32x2xf32> -> vector<32x2xf32>
    %c7_183 = arith.constant 7 : index
    %c0_184 = arith.constant 0 : index
    %c0_185 = arith.constant 0 : index
    %209 = vector.load %arg14[%c7_183, %c0_184, %c0_185] : memref<16x32x2xbf16, #tpu.memory_space<vmem>>, vector<1x32x2xbf16>
    %210 = vector.shape_cast %209 : vector<1x32x2xbf16> to vector<32x2xbf16>
    %cst_186 = arith.constant dense<0.000000e+00> : vector<32x2xf32>
    %211 = tpu.matmul %187, %210, %cst_186 {dimension_numbers = #tpu.dot_dimension_numbers<[1], [0], [0], [1], [0, 0, 1, 1], [], []>} : vector<32x32xbf16>, vector<32x2xbf16>, vector<32x2xf32> -> vector<32x2xf32>
    %c8_187 = arith.constant 8 : index
    %c0_188 = arith.constant 0 : index
    %c0_189 = arith.constant 0 : index
    %212 = vector.load %arg14[%c8_187, %c0_188, %c0_189] : memref<16x32x2xbf16, #tpu.memory_space<vmem>>, vector<1x32x2xbf16>
    %213 = vector.shape_cast %212 : vector<1x32x2xbf16> to vector<32x2xbf16>
    %cst_190 = arith.constant dense<0.000000e+00> : vector<32x2xf32>
    %214 = tpu.matmul %187, %213, %cst_190 {dimension_numbers = #tpu.dot_dimension_numbers<[1], [0], [0], [1], [0, 0, 1, 1], [], []>} : vector<32x32xbf16>, vector<32x2xbf16>, vector<32x2xf32> -> vector<32x2xf32>
    %c9_191 = arith.constant 9 : index
    %c0_192 = arith.constant 0 : index
    %c0_193 = arith.constant 0 : index
    %215 = vector.load %arg14[%c9_191, %c0_192, %c0_193] : memref<16x32x2xbf16, #tpu.memory_space<vmem>>, vector<1x32x2xbf16>
    %216 = vector.shape_cast %215 : vector<1x32x2xbf16> to vector<32x2xbf16>
    %cst_194 = arith.constant dense<0.000000e+00> : vector<32x2xf32>
    %217 = tpu.matmul %187, %216, %cst_194 {dimension_numbers = #tpu.dot_dimension_numbers<[1], [0], [0], [1], [0, 0, 1, 1], [], []>} : vector<32x32xbf16>, vector<32x2xbf16>, vector<32x2xf32> -> vector<32x2xf32>
    %c10_195 = arith.constant 10 : index
    %c0_196 = arith.constant 0 : index
    %c0_197 = arith.constant 0 : index
    %218 = vector.load %arg14[%c10_195, %c0_196, %c0_197] : memref<16x32x2xbf16, #tpu.memory_space<vmem>>, vector<1x32x2xbf16>
    %219 = vector.shape_cast %218 : vector<1x32x2xbf16> to vector<32x2xbf16>
    %cst_198 = arith.constant dense<0.000000e+00> : vector<32x2xf32>
    %220 = tpu.matmul %187, %219, %cst_198 {dimension_numbers = #tpu.dot_dimension_numbers<[1], [0], [0], [1], [0, 0, 1, 1], [], []>} : vector<32x32xbf16>, vector<32x2xbf16>, vector<32x2xf32> -> vector<32x2xf32>
    %c11_199 = arith.constant 11 : index
    %c0_200 = arith.constant 0 : index
    %c0_201 = arith.constant 0 : index
    %221 = vector.load %arg14[%c11_199, %c0_200, %c0_201] : memref<16x32x2xbf16, #tpu.memory_space<vmem>>, vector<1x32x2xbf16>
    %222 = vector.shape_cast %221 : vector<1x32x2xbf16> to vector<32x2xbf16>
    %cst_202 = arith.constant dense<0.000000e+00> : vector<32x2xf32>
    %223 = tpu.matmul %187, %222, %cst_202 {dimension_numbers = #tpu.dot_dimension_numbers<[1], [0], [0], [1], [0, 0, 1, 1], [], []>} : vector<32x32xbf16>, vector<32x2xbf16>, vector<32x2xf32> -> vector<32x2xf32>
    %c12_203 = arith.constant 12 : index
    %c0_204 = arith.constant 0 : index
    %c0_205 = arith.constant 0 : index
    %224 = vector.load %arg14[%c12_203, %c0_204, %c0_205] : memref<16x32x2xbf16, #tpu.memory_space<vmem>>, vector<1x32x2xbf16>
    %225 = vector.shape_cast %224 : vector<1x32x2xbf16> to vector<32x2xbf16>
    %cst_206 = arith.constant dense<0.000000e+00> : vector<32x2xf32>
    %226 = tpu.matmul %187, %225, %cst_206 {dimension_numbers = #tpu.dot_dimension_numbers<[1], [0], [0], [1], [0, 0, 1, 1], [], []>} : vector<32x32xbf16>, vector<32x2xbf16>, vector<32x2xf32> -> vector<32x2xf32>
    %c13_207 = arith.constant 13 : index
    %c0_208 = arith.constant 0 : index
    %c0_209 = arith.constant 0 : index
    %227 = vector.load %arg14[%c13_207, %c0_208, %c0_209] : memref<16x32x2xbf16, #tpu.memory_space<vmem>>, vector<1x32x2xbf16>
    %228 = vector.shape_cast %227 : vector<1x32x2xbf16> to vector<32x2xbf16>
    %cst_210 = arith.constant dense<0.000000e+00> : vector<32x2xf32>
    %229 = tpu.matmul %187, %228, %cst_210 {dimension_numbers = #tpu.dot_dimension_numbers<[1], [0], [0], [1], [0, 0, 1, 1], [], []>} : vector<32x32xbf16>, vector<32x2xbf16>, vector<32x2xf32> -> vector<32x2xf32>
    %c14_211 = arith.constant 14 : index
    %c0_212 = arith.constant 0 : index
    %c0_213 = arith.constant 0 : index
    %230 = vector.load %arg14[%c14_211, %c0_212, %c0_213] : memref<16x32x2xbf16, #tpu.memory_space<vmem>>, vector<1x32x2xbf16>
    %231 = vector.shape_cast %230 : vector<1x32x2xbf16> to vector<32x2xbf16>
    %cst_214 = arith.constant dense<0.000000e+00> : vector<32x2xf32>
    %232 = tpu.matmul %187, %231, %cst_214 {dimension_numbers = #tpu.dot_dimension_numbers<[1], [0], [0], [1], [0, 0, 1, 1], [], []>} : vector<32x32xbf16>, vector<32x2xbf16>, vector<32x2xf32> -> vector<32x2xf32>
    %c15_215 = arith.constant 15 : index
    %c0_216 = arith.constant 0 : index
    %c0_217 = arith.constant 0 : index
    %233 = vector.load %arg14[%c15_215, %c0_216, %c0_217] : memref<16x32x2xbf16, #tpu.memory_space<vmem>>, vector<1x32x2xbf16>
    %234 = vector.shape_cast %233 : vector<1x32x2xbf16> to vector<32x2xbf16>
    %cst_218 = arith.constant dense<0.000000e+00> : vector<32x2xf32>
    %235 = tpu.matmul %187, %234, %cst_218 {dimension_numbers = #tpu.dot_dimension_numbers<[1], [0], [0], [1], [0, 0, 1, 1], [], []>} : vector<32x32xbf16>, vector<32x2xbf16>, vector<32x2xf32> -> vector<32x2xf32>
    %236 = tpu.concatenate %190, %193, %196, %199, %202, %205, %208, %211, %214, %217, %220, %223, %226, %229, %232, %235 in 0 : vector<32x2xf32>, vector<32x2xf32>, vector<32x2xf32>, vector<32x2xf32>, vector<32x2xf32>, vector<32x2xf32>, vector<32x2xf32>, vector<32x2xf32>, vector<32x2xf32>, vector<32x2xf32>, vector<32x2xf32>, vector<32x2xf32>, vector<32x2xf32>, vector<32x2xf32>, vector<32x2xf32>, vector<32x2xf32> -> vector<512x2xf32>
    %237 = arith.truncf %236 : vector<512x2xf32> to vector<512x2xbf16>
    %c0_219 = arith.constant 0 : index
    %c0_220 = arith.constant 0 : index
    %238 = vector.load %arg13[%c0_219, %c0_220] : memref<16x512xbf16, #tpu.memory_space<vmem>>, vector<16x512xbf16>
    %cst_221 = arith.constant dense<0.000000e+00> : vector<16x2xf32>
    %239 = tpu.matmul %238, %237, %cst_221 {dimension_numbers = #tpu.dot_dimension_numbers<[1], [0], [0], [1], [0, 0, 1, 1], [], []>} : vector<16x512xbf16>, vector<512x2xbf16>, vector<16x2xf32> -> vector<16x2xf32>
    %c0_222 = arith.constant 0 : index
    %c0_223 = arith.constant 0 : index
    %240 = vector.load %arg15[%c0_222, %c0_223] : memref<16x2xf32, #tpu.memory_space<vmem>>, vector<16x2xf32>
    tpu.vector_store %arg15[%c0_222, %c0_223], %239 {strides = array<i32>} : memref<16x2xf32, #tpu.memory_space<vmem>>, vector<16x2xf32>,
    return
  }
  func.func @transform_0(%arg0: i32) -> (i32, i32) {
    %c0_i32 = arith.constant 0 : i32
    %c0_i32_0 = arith.constant 0 : i32
    %c0_i32_1 = arith.constant 0 : i32
    return %c0_i32, %c0_i32_0 : i32, i32
  }
  func.func @transform_1(%arg0: i32) -> (i32, i32) {
    %c0_i32 = arith.constant 0 : i32
    %c0_i32_0 = arith.constant 0 : i32
    %c0_i32_1 = arith.constant 0 : i32
    return %c0_i32, %c0_i32_0 : i32, i32
  }
  func.func @transform_2(%arg0: i32) -> (i32, i32) {
    %c0_i32 = arith.constant 0 : i32
    %c0_i32_0 = arith.constant 0 : i32
    %c0_i32_1 = arith.constant 0 : i32
    return %c0_i32, %c0_i32_0 : i32, i32
  }
  func.func @transform_3(%arg0: i32) -> (i32, i32) {
    %c0_i32 = arith.constant 0 : i32
    %c0_i32_0 = arith.constant 0 : i32
    %c0_i32_1 = arith.constant 0 : i32
    return %c0_i32, %c0_i32_0 : i32, i32
  }
  func.func @transform_4(%arg0: i32) -> (i32, i32) {
    %c0_i32 = arith.constant 0 : i32
    %c0_i32_0 = arith.constant 0 : i32
    %c0_i32_1 = arith.constant 0 : i32
    return %c0_i32, %c0_i32_0 : i32, i32
  }
  func.func @transform_5(%arg0: i32) -> (i32, i32) {
    %c0_i32 = arith.constant 0 : i32
    %c0_i32_0 = arith.constant 0 : i32
    %c0_i32_1 = arith.constant 0 : i32
    return %c0_i32, %c0_i32_0 : i32, i32
  }
  func.func @transform_6(%arg0: i32) -> (i32, i32) {
    %c0_i32 = arith.constant 0 : i32
    %c0_i32_0 = arith.constant 0 : i32
    %c0_i32_1 = arith.constant 0 : i32
    return %c0_i32, %c0_i32_0 : i32, i32
  }
  func.func @transform_7(%arg0: i32) -> (i32, i32, i32) {
    %c0_i32 = arith.constant 0 : i32
    %c0_i32_0 = arith.constant 0 : i32
    %c0_i32_1 = arith.constant 0 : i32
    %c0_i32_2 = arith.constant 0 : i32
    return %c0_i32, %c0_i32_0, %c0_i32_1 : i32, i32, i32
  }
  func.func @transform_8(%arg0: i32) -> (i32, i32) {
    %c0_i32 = arith.constant 0 : i32
    %c0_i32_0 = arith.constant 0 : i32
    %c0_i32_1 = arith.constant 0 : i32
    return %c0_i32, %c0_i32_0 : i32, i32
  }
  func.func @transform_9(%arg0: i32) -> (i32, i32) {
    %c0_i32 = arith.constant 0 : i32
    %c0_i32_0 = arith.constant 0 : i32
    %c0_i32_1 = arith.constant 0 : i32
    return %c0_i32, %c0_i32_0 : i32, i32
  }
  func.func @transform_10(%arg0: i32) -> (i32, i32) {
    %c0_i32 = arith.constant 0 : i32
    %c0_i32_0 = arith.constant 0 : i32
    %c0_i32_1 = arith.constant 0 : i32
    return %c0_i32, %c0_i32_0 : i32, i32
  }
  func.func @transform_11(%arg0: i32) -> (i32, i32, i32) {
    %c0_i32 = arith.constant 0 : i32
    %c0_i32_0 = arith.constant 0 : i32
    %c0_i32_1 = arith.constant 0 : i32
    %c0_i32_2 = arith.constant 0 : i32
    return %c0_i32, %c0_i32_0, %c0_i32_1 : i32, i32, i32
  }
  func.func @transform_12(%arg0: i32) -> (i32, i32) {
    %c0_i32 = arith.constant 0 : i32
    %c0_i32_0 = arith.constant 0 : i32
    %c0_i32_1 = arith.constant 0 : i32
    return %c0_i32, %c0_i32_0 : i32, i32
  }
  func.func @transform_13(%arg0: i32) -> (i32, i32, i32) {
    %c0_i32 = arith.constant 0 : i32
    %c0_i32_0 = arith.constant 0 : i32
    %c0_i32_1 = arith.constant 0 : i32
    %c0_i32_2 = arith.constant 0 : i32
    return %c0_i32, %c0_i32_0, %c0_i32_1 : i32, i32, i32
  }
  func.func @transform_14(%arg0: i32) -> (i32, i32) {
    %c0_i32 = arith.constant 0 : i32
    %c0_i32_0 = arith.constant 0 : i32
    %c0_i32_1 = arith.constant 0 : i32
    return %c0_i32, %c0_i32_0 : i32, i32
  }
}

</mosaic_0001>

<llo_original>
// kernel: encoder_forward.1
$region0: #{encoder_forward.1}
  #allocation0 [shape = 'u32[]', space=smem, size = 0x4, offset = 0x4, fixed_abs, tag = 'smem constant byte address 0x4 - core index']
  #allocation1 [shape = 'u32[144,128]{1,0:T(1,128)}', space=vmem, size = 0x12000, scoped, tag = 'internal scratch']
  %s0 = inlined_call_operand.vmem [shape: bf16[384,512], index: 0, kind: input, shape index: {}]
  %s1 = inlined_call_operand.vmem [shape: bf16[8,384], index: 1, kind: input, shape index: {}]
  %s2 = inlined_call_operand.vmem [shape: f32[8,1], index: 2, kind: input, shape index: {}]
  %s3 = inlined_call_operand.vmem [shape: f32[8,1], index: 3, kind: input, shape index: {}]
  %s4 = inlined_call_operand.vmem [shape: bf16[16,128], index: 4, kind: input, shape index: {}]
  %s5 = inlined_call_operand.vmem [shape: f32[16,1], index: 5, kind: input, shape index: {}]
  %s6 = inlined_call_operand.vmem [shape: f32[16,1], index: 6, kind: input, shape index: {}]
  %s7 = inlined_call_operand.vmem [shape: bf16[16,512,128], index: 7, kind: input, shape index: {}]
  %s8 = inlined_call_operand.vmem [shape: bf16[32,256], index: 8, kind: input, shape index: {}]
  %s9 = inlined_call_operand.vmem [shape: f32[32,1], index: 9, kind: input, shape index: {}]
  %s10 = inlined_call_operand.vmem [shape: f32[32,1], index: 10, kind: input, shape index: {}]
  %s11 = inlined_call_operand.vmem [shape: bf16[16,128,32], index: 11, kind: input, shape index: {}]
  %s12 = inlined_call_operand.vmem [shape: bf16[16,512], index: 12, kind: input, shape index: {}]
  %s13 = inlined_call_operand.vmem [shape: bf16[16,32,2], index: 13, kind: input, shape index: {}]
  %s14 = inlined_call_operand.vmem [shape: f32[16,2], index: 14, kind: output, shape index: {}]
  %s15 = sld [smem:[#allocation0]]
  $region66: #{encoder_forward.1} parent=0
    _
  %s17 = ssub.s32 1, %s15
  %s18 = scalar_select 0, %s17, %s15
  // Predicated region
  $region2: #{encoder_forward.1} parent=0 // pred_check
    _
  $region3: #{encoder_forward.1} parent=0 // pred_check_branch
    %20 = sbr.rel (0) target = $region5
  $region4: #{encoder_forward.1} parent=0 // pred_region
    _
  $region5: #{encoder_forward.1} parent=0 // pred_fallthru
    _
  // Predicated region
  $region6: #{encoder_forward.1} parent=0 // pred_check
    _
  $region7: #{encoder_forward.1} parent=0 // pred_check_branch
    %22 = sbr.rel (0) target = $region9
  $region8: #{encoder_forward.1} parent=0 // pred_region
    _
  $region9: #{encoder_forward.1} parent=0 // pred_fallthru
    _
  // Predicated region
  $region10: #{encoder_forward.1} parent=0 // pred_check
    _
  $region11: #{encoder_forward.1} parent=0 // pred_check_branch
    %24 = sbr.rel (0) target = $region13
  $region12: #{encoder_forward.1} parent=0 // pred_region
    _
  $region13: #{encoder_forward.1} parent=0 // pred_fallthru
    _
  // Predicated region
  $region14: #{encoder_forward.1} parent=0 // pred_check
    _
  $region15: #{encoder_forward.1} parent=0 // pred_check_branch
    %26 = sbr.rel (0) target = $region17
  $region16: #{encoder_forward.1} parent=0 // pred_region
    _
  $region17: #{encoder_forward.1} parent=0 // pred_fallthru
    _
  // Predicated region
  $region18: #{encoder_forward.1} parent=0 // pred_check
    _
  $region19: #{encoder_forward.1} parent=0 // pred_check_branch
    %28 = sbr.rel (0) target = $region21
  $region20: #{encoder_forward.1} parent=0 // pred_region
    _
  $region21: #{encoder_forward.1} parent=0 // pred_fallthru
    _
  // Predicated region
  $region22: #{encoder_forward.1} parent=0 // pred_check
    _
  $region23: #{encoder_forward.1} parent=0 // pred_check_branch
    %30 = sbr.rel (0) target = $region25
  $region24: #{encoder_forward.1} parent=0 // pred_region
    _
  $region25: #{encoder_forward.1} parent=0 // pred_fallthru
    _
  // Predicated region
  $region26: #{encoder_forward.1} parent=0 // pred_check
    _
  $region27: #{encoder_forward.1} parent=0 // pred_check_branch
    %32 = sbr.rel (0) target = $region29
  $region28: #{encoder_forward.1} parent=0 // pred_region
    _
  $region29: #{encoder_forward.1} parent=0 // pred_fallthru
    _
  // Predicated region
  $region30: #{encoder_forward.1} parent=0 // pred_check
    _
  $region31: #{encoder_forward.1} parent=0 // pred_check_branch
    %34 = sbr.rel (0) target = $region33
  $region32: #{encoder_forward.1} parent=0 // pred_region
    _
  $region33: #{encoder_forward.1} parent=0 // pred_fallthru
    _
  // Predicated region
  $region34: #{encoder_forward.1} parent=0 // pred_check
    _
  $region35: #{encoder_forward.1} parent=0 // pred_check_branch
    %36 = sbr.rel (0) target = $region37
  $region36: #{encoder_forward.1} parent=0 // pred_region
    _
  $region37: #{encoder_forward.1} parent=0 // pred_fallthru
    _
  // Predicated region
  $region38: #{encoder_forward.1} parent=0 // pred_check
    _
  $region39: #{encoder_forward.1} parent=0 // pred_check_branch
    %38 = sbr.rel (0) target = $region41
  $region40: #{encoder_forward.1} parent=0 // pred_region
    _
  $region41: #{encoder_forward.1} parent=0 // pred_fallthru
    _
  // Predicated region
  $region42: #{encoder_forward.1} parent=0 // pred_check
    _
  $region43: #{encoder_forward.1} parent=0 // pred_check_branch
    %40 = sbr.rel (0) target = $region45
  $region44: #{encoder_forward.1} parent=0 // pred_region
    _
  $region45: #{encoder_forward.1} parent=0 // pred_fallthru
    _
  // Predicated region
  $region46: #{encoder_forward.1} parent=0 // pred_check
    _
  $region47: #{encoder_forward.1} parent=0 // pred_check_branch
    %42 = sbr.rel (0) target = $region49
  $region48: #{encoder_forward.1} parent=0 // pred_region
    _
  $region49: #{encoder_forward.1} parent=0 // pred_fallthru
    _
  // Predicated region
  $region50: #{encoder_forward.1} parent=0 // pred_check
    _
  $region51: #{encoder_forward.1} parent=0 // pred_check_branch
    %44 = sbr.rel (0) target = $region53
  $region52: #{encoder_forward.1} parent=0 // pred_region
    _
  $region53: #{encoder_forward.1} parent=0 // pred_fallthru
    _
  // Predicated region
  $region54: #{encoder_forward.1} parent=0 // pred_check
    _
  $region55: #{encoder_forward.1} parent=0 // pred_check_branch
    %46 = sbr.rel (0) target = $region57
  $region56: #{encoder_forward.1} parent=0 // pred_region
    _
  $region57: #{encoder_forward.1} parent=0 // pred_fallthru
    _
  %v48 = vld [vmem:[%s1] sm:$0xff]
  %v49 = vld [vmem:[%s1 + $0x8] sm:$0xf]
  %v50 = vld [vmem:[%s0] sm:$0xff]
  %v51 = vld [vmem:[%s0 + $0x8] sm:$0xff]
  %v52 = vld [vmem:[%s0 + $0x10] sm:$0xff]
  %v53 = vld [vmem:[%s0 + $0x18] sm:$0xff]
  %v54 = vld [vmem:[%s0 + $0x20] sm:$0xff]
  %v55 = vld [vmem:[%s0 + $0x28] sm:$0xff]
  %v56 = vld [vmem:[%s0 + $0x30] sm:$0xff]
  %v57 = vld [vmem:[%s0 + $0x38] sm:$0xff]
  %v58 = vld [vmem:[%s0 + $0x40] sm:$0xff]
  %v59 = vld [vmem:[%s0 + $0x48] sm:$0xff]
  %v60 = vld [vmem:[%s0 + $0x50] sm:$0xff]
  %v61 = vld [vmem:[%s0 + $0x58] sm:$0xff]
  %v62 = vld [vmem:[%s0 + $0x60] sm:$0xff]
  %v63 = vld [vmem:[%s0 + $0x68] sm:$0xff]
  %v64 = vld [vmem:[%s0 + $0x70] sm:$0xff]
  %v65 = vld [vmem:[%s0 + $0x78] sm:$0xff]
  %v66 = vld [vmem:[%s0 + $0x80] sm:$0xff]
  %v67 = vld [vmem:[%s0 + $0x88] sm:$0xff]
  %v68 = vld [vmem:[%s0 + $0x90] sm:$0xff]
  %v69 = vld [vmem:[%s0 + $0x98] sm:$0xff]
  %v70 = vld [vmem:[%s0 + $0xa0] sm:$0xff]
  %v71 = vld [vmem:[%s0 + $0xa8] sm:$0xff]
  %v72 = vld [vmem:[%s0 + $0xb0] sm:$0xff]
  %v73 = vld [vmem:[%s0 + $0xb8] sm:$0xff]
  %v74 = vld [vmem:[%s0 + $0xc0] sm:$0xff]
  %v75 = vld [vmem:[%s0 + $0xc8] sm:$0xff]
  %v76 = vld [vmem:[%s0 + $0xd0] sm:$0xff]
  %v77 = vld [vmem:[%s0 + $0xd8] sm:$0xff]
  %v78 = vld [vmem:[%s0 + $0xe0] sm:$0xff]
  %v79 = vld [vmem:[%s0 + $0xe8] sm:$0xff]
  %v80 = vld [vmem:[%s0 + $0xf0] sm:$0xff]
  %v81 = vld [vmem:[%s0 + $0xf8] sm:$0xff]
  %v82 = vld [vmem:[%s0 + $0x100] sm:$0xff]
  %v83 = vld [vmem:[%s0 + $0x108] sm:$0xff]
  %v84 = vld [vmem:[%s0 + $0x110] sm:$0xff]
  %v85 = vld [vmem:[%s0 + $0x118] sm:$0xff]
  %v86 = vld [vmem:[%s0 + $0x120] sm:$0xff]
  %v87 = vld [vmem:[%s0 + $0x128] sm:$0xff]
  %v88 = vld [vmem:[%s0 + $0x130] sm:$0xff]
  %v89 = vld [vmem:[%s0 + $0x138] sm:$0xff]
  %v90 = vld [vmem:[%s0 + $0x140] sm:$0xff]
  %v91 = vld [vmem:[%s0 + $0x148] sm:$0xff]
  %v92 = vld [vmem:[%s0 + $0x150] sm:$0xff]
  %v93 = vld [vmem:[%s0 + $0x158] sm:$0xff]
  %v94 = vld [vmem:[%s0 + $0x160] sm:$0xff]
  %v95 = vld [vmem:[%s0 + $0x168] sm:$0xff]
  %v96 = vld [vmem:[%s0 + $0x170] sm:$0xff]
  %v97 = vld [vmem:[%s0 + $0x178] sm:$0xff]
  %v98 = vld [vmem:[%s0 + $0x180] sm:$0xff]
  %v99 = vld [vmem:[%s0 + $0x188] sm:$0xff]
  %v100 = vld [vmem:[%s0 + $0x190] sm:$0xff]
  %v101 = vld [vmem:[%s0 + $0x198] sm:$0xff]
  %v102 = vld [vmem:[%s0 + $0x1a0] sm:$0xff]
  %v103 = vld [vmem:[%s0 + $0x1a8] sm:$0xff]
  %v104 = vld [vmem:[%s0 + $0x1b0] sm:$0xff]
  %v105 = vld [vmem:[%s0 + $0x1b8] sm:$0xff]
  %v106 = vld [vmem:[%s0 + $0x1c0] sm:$0xff]
  %v107 = vld [vmem:[%s0 + $0x1c8] sm:$0xff]
  %v108 = vld [vmem:[%s0 + $0x1d0] sm:$0xff]
  %v109 = vld [vmem:[%s0 + $0x1d8] sm:$0xff]
  %v110 = vld [vmem:[%s0 + $0x1e0] sm:$0xff]
  %v111 = vld [vmem:[%s0 + $0x1e8] sm:$0xff]
  %v112 = vld [vmem:[%s0 + $0x1f0] sm:$0xff]
  %v113 = vld [vmem:[%s0 + $0x1f8] sm:$0xff]
  %v114 = vld [vmem:[%s0 + $0x200] sm:$0xff]
  %v115 = vld [vmem:[%s0 + $0x208] sm:$0xff]
  %v116 = vld [vmem:[%s0 + $0x210] sm:$0xff]
  %v117 = vld [vmem:[%s0 + $0x218] sm:$0xff]
  %v118 = vld [vmem:[%s0 + $0x220] sm:$0xff]
  %v119 = vld [vmem:[%s0 + $0x228] sm:$0xff]
  %v120 = vld [vmem:[%s0 + $0x230] sm:$0xff]
  %v121 = vld [vmem:[%s0 + $0x238] sm:$0xff]
  %v122 = vld [vmem:[%s0 + $0x240] sm:$0xff]
  %v123 = vld [vmem:[%s0 + $0x248] sm:$0xff]
  %v124 = vld [vmem:[%s0 + $0x250] sm:$0xff]
  %v125 = vld [vmem:[%s0 + $0x258] sm:$0xff]
  %v126 = vld [vmem:[%s0 + $0x260] sm:$0xff]
  %v127 = vld [vmem:[%s0 + $0x268] sm:$0xff]
  %v128 = vld [vmem:[%s0 + $0x270] sm:$0xff]
  %v129 = vld [vmem:[%s0 + $0x278] sm:$0xff]
  %v130 = vld [vmem:[%s0 + $0x280] sm:$0xff]
  %v131 = vld [vmem:[%s0 + $0x288] sm:$0xff]
  %v132 = vld [vmem:[%s0 + $0x290] sm:$0xff]
  %v133 = vld [vmem:[%s0 + $0x298] sm:$0xff]
  %v134 = vld [vmem:[%s0 + $0x2a0] sm:$0xff]
  %v135 = vld [vmem:[%s0 + $0x2a8] sm:$0xff]
  %v136 = vld [vmem:[%s0 + $0x2b0] sm:$0xff]
  %v137 = vld [vmem:[%s0 + $0x2b8] sm:$0xff]
  %v138 = vld [vmem:[%s0 + $0x2c0] sm:$0xff]
  %v139 = vld [vmem:[%s0 + $0x2c8] sm:$0xff]
  %v140 = vld [vmem:[%s0 + $0x2d0] sm:$0xff]
  %v141 = vld [vmem:[%s0 + $0x2d8] sm:$0xff]
  %v142 = vld [vmem:[%s0 + $0x2e0] sm:$0xff]
  %v143 = vld [vmem:[%s0 + $0x2e8] sm:$0xff]
  %v144 = vld [vmem:[%s0 + $0x2f0] sm:$0xff]
  %v145 = vld [vmem:[%s0 + $0x2f8] sm:$0xff]
  %v148 = vunpack.c.l.b16 %v48
  %v149 = vunpack.c.h.b16 %v48
  %v150 = vunpack.c.l.b16 %v49
  %v151 = vpack.c.b16 %v148, %v148
  %v152 = vpack.c.b16 %v149, %v149
  %v153 = vpack.c.b16 %v150, %v150
  %v253 = vunpack.c.l.b16 %v50
  %v254 = vunpack.c.h.b16 %v50
  %v255 = vunpack.c.l.b16 %v51
  %v256 = vunpack.c.h.b16 %v51
  %v257 = vunpack.c.l.b16 %v52
  %v258 = vunpack.c.h.b16 %v52
  %v259 = vunpack.c.l.b16 %v53
  %v260 = vunpack.c.h.b16 %v53
  %v261 = vunpack.c.l.b16 %v54
  %v262 = vunpack.c.h.b16 %v54
  %v263 = vunpack.c.l.b16 %v55
  %v264 = vunpack.c.h.b16 %v55
  %v265 = vunpack.c.l.b16 %v56
  %v266 = vunpack.c.h.b16 %v56
  %v267 = vunpack.c.l.b16 %v57
  %v268 = vunpack.c.h.b16 %v57
  %v269 = vunpack.c.l.b16 %v58
  %v270 = vunpack.c.h.b16 %v58
  %v271 = vunpack.c.l.b16 %v59
  %v272 = vunpack.c.h.b16 %v59
  %v273 = vunpack.c.l.b16 %v60
  %v274 = vunpack.c.h.b16 %v60
  %v275 = vunpack.c.l.b16 %v61
  %v276 = vunpack.c.h.b16 %v61
  %v277 = vunpack.c.l.b16 %v62
  %v278 = vunpack.c.h.b16 %v62
  %v279 = vunpack.c.l.b16 %v63
  %v280 = vunpack.c.h.b16 %v63
  %v281 = vunpack.c.l.b16 %v64
  %v282 = vunpack.c.h.b16 %v64
  %v283 = vunpack.c.l.b16 %v65
  %v284 = vunpack.c.h.b16 %v65
  %v285 = vunpack.c.l.b16 %v66
  %v286 = vunpack.c.h.b16 %v66
  %v287 = vunpack.c.l.b16 %v67
  %v288 = vunpack.c.h.b16 %v67
  %v289 = vunpack.c.l.b16 %v68
  %v290 = vunpack.c.h.b16 %v68
  %v291 = vunpack.c.l.b16 %v69
  %v292 = vunpack.c.h.b16 %v69
  %v293 = vunpack.c.l.b16 %v70
  %v294 = vunpack.c.h.b16 %v70
  %v295 = vunpack.c.l.b16 %v71
  %v296 = vunpack.c.h.b16 %v71
  %v297 = vunpack.c.l.b16 %v72
  %v298 = vunpack.c.h.b16 %v72
  %v299 = vunpack.c.l.b16 %v73
  %v300 = vunpack.c.h.b16 %v73
  %v301 = vunpack.c.l.b16 %v74
  %v302 = vunpack.c.h.b16 %v74
  %v303 = vunpack.c.l.b16 %v75
  %v304 = vunpack.c.h.b16 %v75
  %v305 = vunpack.c.l.b16 %v76
  %v306 = vunpack.c.h.b16 %v76
  %v307 = vunpack.c.l.b16 %v77
  %v308 = vunpack.c.h.b16 %v77
  %v309 = vunpack.c.l.b16 %v78
  %v310 = vunpack.c.h.b16 %v78
  %v311 = vunpack.c.l.b16 %v79
  %v312 = vunpack.c.h.b16 %v79
  %v313 = vunpack.c.l.b16 %v80
  %v314 = vunpack.c.h.b16 %v80
  %v315 = vunpack.c.l.b16 %v81
  %v316 = vunpack.c.h.b16 %v81
  %v317 = vunpack.c.l.b16 %v82
  %v318 = vunpack.c.h.b16 %v82
  %v319 = vunpack.c.l.b16 %v83
  %v320 = vunpack.c.h.b16 %v83
  %v321 = vunpack.c.l.b16 %v84
  %v322 = vunpack.c.h.b16 %v84
  %v323 = vunpack.c.l.b16 %v85
  %v324 = vunpack.c.h.b16 %v85
  %v325 = vunpack.c.l.b16 %v86
  %v326 = vunpack.c.h.b16 %v86
  %v327 = vunpack.c.l.b16 %v87
  %v328 = vunpack.c.h.b16 %v87
  %v329 = vunpack.c.l.b16 %v88
  %v330 = vunpack.c.h.b16 %v88
  %v331 = vunpack.c.l.b16 %v89
  %v332 = vunpack.c.h.b16 %v89
  %v333 = vunpack.c.l.b16 %v90
  %v334 = vunpack.c.h.b16 %v90
  %v335 = vunpack.c.l.b16 %v91
  %v336 = vunpack.c.h.b16 %v91
  %v337 = vunpack.c.l.b16 %v92
  %v338 = vunpack.c.h.b16 %v92
  %v339 = vunpack.c.l.b16 %v93
  %v340 = vunpack.c.h.b16 %v93
  %v341 = vunpack.c.l.b16 %v94
  %v342 = vunpack.c.h.b16 %v94
  %v343 = vunpack.c.l.b16 %v95
  %v344 = vunpack.c.h.b16 %v95
  %v345 = vunpack.c.l.b16 %v96
  %v346 = vunpack.c.h.b16 %v96
  %v347 = vunpack.c.l.b16 %v97
  %v348 = vunpack.c.h.b16 %v97
  %v349 = vunpack.c.l.b16 %v98
  %v350 = vunpack.c.h.b16 %v98
  %v351 = vunpack.c.l.b16 %v99
  %v352 = vunpack.c.h.b16 %v99
  %v353 = vunpack.c.l.b16 %v100
  %v354 = vunpack.c.h.b16 %v100
  %v355 = vunpack.c.l.b16 %v101
  %v356 = vunpack.c.h.b16 %v101
  %v357 = vunpack.c.l.b16 %v102
  %v358 = vunpack.c.h.b16 %v102
  %v359 = vunpack.c.l.b16 %v103
  %v360 = vunpack.c.h.b16 %v103
  %v361 = vunpack.c.l.b16 %v104
  %v362 = vunpack.c.h.b16 %v104
  %v363 = vunpack.c.l.b16 %v105
  %v364 = vunpack.c.h.b16 %v105
  %v365 = vunpack.c.l.b16 %v106
  %v366 = vunpack.c.h.b16 %v106
  %v367 = vunpack.c.l.b16 %v107
  %v368 = vunpack.c.h.b16 %v107
  %v369 = vunpack.c.l.b16 %v108
  %v370 = vunpack.c.h.b16 %v108
  %v371 = vunpack.c.l.b16 %v109
  %v372 = vunpack.c.h.b16 %v109
  %v373 = vunpack.c.l.b16 %v110
  %v374 = vunpack.c.h.b16 %v110
  %v375 = vunpack.c.l.b16 %v111
  %v376 = vunpack.c.h.b16 %v111
  %v377 = vunpack.c.l.b16 %v112
  %v378 = vunpack.c.h.b16 %v112
  %v379 = vunpack.c.l.b16 %v113
  %v380 = vunpack.c.h.b16 %v113
  %v381 = vunpack.c.l.b16 %v114
  %v382 = vunpack.c.h.b16 %v114
  %v383 = vunpack.c.l.b16 %v115
  %v384 = vunpack.c.h.b16 %v115
  %v385 = vunpack.c.l.b16 %v116
  %v386 = vunpack.c.h.b16 %v116
  %v387 = vunpack.c.l.b16 %v117
  %v388 = vunpack.c.h.b16 %v117
  %v389 = vunpack.c.l.b16 %v118
  %v390 = vunpack.c.h.b16 %v118
  %v391 = vunpack.c.l.b16 %v119
  %v392 = vunpack.c.h.b16 %v119
  %v393 = vunpack.c.l.b16 %v120
  %v394 = vunpack.c.h.b16 %v120
  %v395 = vunpack.c.l.b16 %v121
  %v396 = vunpack.c.h.b16 %v121
  %v397 = vunpack.c.l.b16 %v122
  %v398 = vunpack.c.h.b16 %v122
  %v399 = vunpack.c.l.b16 %v123
  %v400 = vunpack.c.h.b16 %v123
  %v401 = vunpack.c.l.b16 %v124
  %v402 = vunpack.c.h.b16 %v124
  %v403 = vunpack.c.l.b16 %v125
  %v404 = vunpack.c.h.b16 %v125
  %v405 = vunpack.c.l.b16 %v126
  %v406 = vunpack.c.h.b16 %v126
  %v407 = vunpack.c.l.b16 %v127
  %v408 = vunpack.c.h.b16 %v127
  %v409 = vunpack.c.l.b16 %v128
  %v410 = vunpack.c.h.b16 %v128
  %v411 = vunpack.c.l.b16 %v129
  %v412 = vunpack.c.h.b16 %v129
  %v413 = vunpack.c.l.b16 %v130
  %v414 = vunpack.c.h.b16 %v130
  %v415 = vunpack.c.l.b16 %v131
  %v416 = vunpack.c.h.b16 %v131
  %v417 = vunpack.c.l.b16 %v132
  %v418 = vunpack.c.h.b16 %v132
  %v419 = vunpack.c.l.b16 %v133
  %v420 = vunpack.c.h.b16 %v133
  %v421 = vunpack.c.l.b16 %v134
  %v422 = vunpack.c.h.b16 %v134
  %v423 = vunpack.c.l.b16 %v135
  %v424 = vunpack.c.h.b16 %v135
  %v425 = vunpack.c.l.b16 %v136
  %v426 = vunpack.c.h.b16 %v136
  %v427 = vunpack.c.l.b16 %v137
  %v428 = vunpack.c.h.b16 %v137
  %v429 = vunpack.c.l.b16 %v138
  %v430 = vunpack.c.h.b16 %v138
  %v431 = vunpack.c.l.b16 %v139
  %v432 = vunpack.c.h.b16 %v139
  %v433 = vunpack.c.l.b16 %v140
  %v434 = vunpack.c.h.b16 %v140
  %v435 = vunpack.c.l.b16 %v141
  %v436 = vunpack.c.h.b16 %v141
  %v437 = vunpack.c.l.b16 %v142
  %v438 = vunpack.c.h.b16 %v142
  %v439 = vunpack.c.l.b16 %v143
  %v440 = vunpack.c.h.b16 %v143
  %v441 = vunpack.c.l.b16 %v144
  %v442 = vunpack.c.h.b16 %v144
  %v443 = vunpack.c.l.b16 %v145
  %v444 = vunpack.c.h.b16 %v145
  %v445 = vpack.c.b16 %v257, %v253
  %v446 = vpack.c.b16 %v258, %v254
  %v447 = vpack.c.b16 %v259, %v255
  %v448 = vpack.c.b16 %v260, %v256
  %v449 = vpack.c.b16 %v265, %v261
  %v450 = vpack.c.b16 %v266, %v262
  %v451 = vpack.c.b16 %v267, %v263
  %v452 = vpack.c.b16 %v268, %v264
  %v453 = vpack.c.b16 %v273, %v269
  %v454 = vpack.c.b16 %v274, %v270
  %v455 = vpack.c.b16 %v275, %v271
  %v456 = vpack.c.b16 %v276, %v272
  %v457 = vpack.c.b16 %v281, %v277
  %v458 = vpack.c.b16 %v282, %v278
  %v459 = vpack.c.b16 %v283, %v279
  %v460 = vpack.c.b16 %v284, %v280
  %v461 = vpack.c.b16 %v289, %v285
  %v462 = vpack.c.b16 %v290, %v286
  %v463 = vpack.c.b16 %v291, %v287
  %v464 = vpack.c.b16 %v292, %v288
  %v465 = vpack.c.b16 %v297, %v293
  %v466 = vpack.c.b16 %v298, %v294
  %v467 = vpack.c.b16 %v299, %v295
  %v468 = vpack.c.b16 %v300, %v296
  %v469 = vpack.c.b16 %v305, %v301
  %v470 = vpack.c.b16 %v306, %v302
  %v471 = vpack.c.b16 %v307, %v303
  %v472 = vpack.c.b16 %v308, %v304
  %v473 = vpack.c.b16 %v313, %v309
  %v474 = vpack.c.b16 %v314, %v310
  %v475 = vpack.c.b16 %v315, %v311
  %v476 = vpack.c.b16 %v316, %v312
  %v477 = vpack.c.b16 %v321, %v317
  %v478 = vpack.c.b16 %v322, %v318
  %v479 = vpack.c.b16 %v323, %v319
  %v480 = vpack.c.b16 %v324, %v320
  %v481 = vpack.c.b16 %v329, %v325
  %v482 = vpack.c.b16 %v330, %v326
  %v483 = vpack.c.b16 %v331, %v327
  %v484 = vpack.c.b16 %v332, %v328
  %v485 = vpack.c.b16 %v337, %v333
  %v486 = vpack.c.b16 %v338, %v334
  %v487 = vpack.c.b16 %v339, %v335
  %v488 = vpack.c.b16 %v340, %v336
  %v489 = vpack.c.b16 %v345, %v341
  %v490 = vpack.c.b16 %v346, %v342
  %v491 = vpack.c.b16 %v347, %v343
  %v492 = vpack.c.b16 %v348, %v344
  %v493 = vpack.c.b16 %v353, %v349
  %v494 = vpack.c.b16 %v354, %v350
  %v495 = vpack.c.b16 %v355, %v351
  %v496 = vpack.c.b16 %v356, %v352
  %v497 = vpack.c.b16 %v361, %v357
  %v498 = vpack.c.b16 %v362, %v358
  %v499 = vpack.c.b16 %v363, %v359
  %v500 = vpack.c.b16 %v364, %v360
  %v501 = vpack.c.b16 %v369, %v365
  %v502 = vpack.c.b16 %v370, %v366
  %v503 = vpack.c.b16 %v371, %v367
  %v504 = vpack.c.b16 %v372, %v368
  %v505 = vpack.c.b16 %v377, %v373
  %v506 = vpack.c.b16 %v378, %v374
  %v507 = vpack.c.b16 %v379, %v375
  %v508 = vpack.c.b16 %v380, %v376
  %v509 = vpack.c.b16 %v385, %v381
  %v510 = vpack.c.b16 %v386, %v382
  %v511 = vpack.c.b16 %v387, %v383
  %v512 = vpack.c.b16 %v388, %v384
  %v513 = vpack.c.b16 %v393, %v389
  %v514 = vpack.c.b16 %v394, %v390
  %v515 = vpack.c.b16 %v395, %v391
  %v516 = vpack.c.b16 %v396, %v392
  %v517 = vpack.c.b16 %v401, %v397
  %v518 = vpack.c.b16 %v402, %v398
  %v519 = vpack.c.b16 %v403, %v399
  %v520 = vpack.c.b16 %v404, %v400
  %v521 = vpack.c.b16 %v409, %v405
  %v522 = vpack.c.b16 %v410, %v406
  %v523 = vpack.c.b16 %v411, %v407
  %v524 = vpack.c.b16 %v412, %v408
  %v525 = vpack.c.b16 %v417, %v413
  %v526 = vpack.c.b16 %v418, %v414
  %v527 = vpack.c.b16 %v419, %v415
  %v528 = vpack.c.b16 %v420, %v416
  %v529 = vpack.c.b16 %v425, %v421
  %v530 = vpack.c.b16 %v426, %v422
  %v531 = vpack.c.b16 %v427, %v423
  %v532 = vpack.c.b16 %v428, %v424
  %v533 = vpack.c.b16 %v433, %v429
  %v534 = vpack.c.b16 %v434, %v430
  %v535 = vpack.c.b16 %v435, %v431
  %v536 = vpack.c.b16 %v436, %v432
  %v537 = vpack.c.b16 %v441, %v437
  %v538 = vpack.c.b16 %v442, %v438
  %v539 = vpack.c.b16 %v443, %v439
  %v540 = vpack.c.b16 %v444, %v440
  %637 = vmatprep.subr.bf16.mxu0 %v446
  %638 = vmatpush1.bf16.msra.mxu0 %v445
  %639 = vmatprep.subr.bf16.mxu0 %v450
  %640 = vmatpush1.bf16.msra.mxu0 %v449
  %641 = vmatprep.subr.bf16.mxu0 %v454
  %642 = vmatpush1.bf16.msra.mxu0 %v453
  %643 = vmatprep.subr.bf16.mxu0 %v458
  %644 = vmatpush1.bf16.msra.mxu0 %v457
  %645 = vmatprep.subr.bf16.mxu0 %v462
  %646 = vmatpush1.bf16.msra.mxu0 %v461
  %647 = vmatprep.subr.bf16.mxu0 %v466
  %648 = vmatpush1.bf16.msra.mxu0 %v465
  %649 = vmatprep.subr.bf16.mxu0 %v470
  %650 = vmatpush1.bf16.msra.mxu0 %v469
  %651 = vmatprep.subr.bf16.mxu0 %v474
  %652 = vmatpush1.bf16.msra.mxu0 %v473
  %653 = vmatprep.subr.bf16.mxu0 %v478
  %654 = vmatpush1.bf16.msra.mxu0 %v477
  %655 = vmatprep.subr.bf16.mxu0 %v482
  %656 = vmatpush1.bf16.msra.mxu0 %v481
  %657 = vmatprep.subr.bf16.mxu0 %v486
  %658 = vmatpush1.bf16.msra.mxu0 %v485
  %659 = vmatprep.subr.bf16.mxu0 %v490
  %660 = vmatpush1.bf16.msra.mxu0 %v489
  %661 = vmatprep.subr.bf16.mxu0 %v494
  %662 = vmatpush1.bf16.msra.mxu0 %v493
  %663 = vmatprep.subr.bf16.mxu0 %v498
  %664 = vmatpush1.bf16.msra.mxu0 %v497
  %665 = vmatprep.subr.bf16.mxu0 %v502
  %666 = vmatpush1.bf16.msra.mxu0 %v501
  %667 = vmatprep.subr.bf16.mxu0 %v506
  %668 = vmatpush1.bf16.msra.mxu0 %v505
  %669 = vmatprep.mubr.bf16.mxu0 %v152
  %670 = vmatmul.mubr.bf16.gmra.mrb[0].mxu0 %v151
  %v671 = vpop.f32.mrb[0].mxu0
  %v672 = vadd.f32 0.0, %v671
  %v673 = vpop.f32.mrb[0].mxu0
  %v674 = vadd.f32 0.0, %v673
  %v675 = vpop.f32.mrb[0].mxu0
  %v676 = vpop.f32.mrb[0].mxu0
  %677 = vdwg.mxu0
  %678 = vmatprep.subr.bf16.mxu0 %v510
  %679 = vmatpush1.bf16.msra.mxu0 %v509
  %680 = vmatprep.subr.bf16.mxu0 %v514
  %681 = vmatpush1.bf16.msra.mxu0 %v513
  %682 = vmatprep.subr.bf16.mxu0 %v518
  %683 = vmatpush1.bf16.msra.mxu0 %v517
  %684 = vmatprep.subr.bf16.mxu0 %v522
  %685 = vmatpush1.bf16.msra.mxu0 %v521
  %686 = vmatprep.subr.bf16.mxu0 %v526
  %687 = vmatpush1.bf16.msra.mxu0 %v525
  %688 = vmatprep.subr.bf16.mxu0 %v530
  %689 = vmatpush1.bf16.msra.mxu0 %v529
  %690 = vmatprep.subr.bf16.mxu0 %v534
  %691 = vmatpush1.bf16.msra.mxu0 %v533
  %692 = vmatprep.subr.bf16.mxu0 %v538
  %693 = vmatpush1.bf16.msra.mxu0 %v537
  %694 = vmatprep.subr.bf16.mxu0 0
  %695 = vmatpush1.bf16.msra.mxu0 0
  %696 = vmatprep.subr.bf16.mxu0 0
  %697 = vmatpush1.bf16.msra.mxu0 0
  %698 = vmatprep.subr.bf16.mxu0 0
  %699 = vmatpush1.bf16.msra.mxu0 0
  %700 = vmatprep.subr.bf16.mxu0 0
  %701 = vmatpush1.bf16.msra.mxu0 0
  %702 = vmatprep.subr.bf16.mxu0 0
  %703 = vmatpush1.bf16.msra.mxu0 0
  %704 = vmatprep.subr.bf16.mxu0 0
  %705 = vmatpush1.bf16.msra.mxu0 0
  %706 = vmatprep.subr.bf16.mxu0 0
  %707 = vmatpush1.bf16.msra.mxu0 0
  %708 = vmatprep.subr.bf16.mxu0 0
  %709 = vmatpush1.bf16.msra.mxu0 0
  %710 = vmatprep.mubr.bf16.mxu0 0
  %711 = vmatmul.mubr.bf16.gmra.mrb[0].mxu0 %v153
  %v712 = vpop.f32.mrb[0].mxu0
  %v713 = vadd.f32 %v672, %v712
  %v714 = vpop.f32.mrb[0].mxu0
  %v715 = vadd.f32 %v674, %v714
  %v716 = vpop.f32.mrb[0].mxu0
  %v717 = vpop.f32.mrb[0].mxu0
  %718 = vdwg.mxu0
  %719 = vmatprep.subr.bf16.mxu0 %v448
  %720 = vmatpush1.bf16.msra.mxu0 %v447
  %721 = vmatprep.subr.bf16.mxu0 %v452
  %722 = vmatpush1.bf16.msra.mxu0 %v451
  %723 = vmatprep.subr.bf16.mxu0 %v456
  %724 = vmatpush1.bf16.msra.mxu0 %v455
  %725 = vmatprep.subr.bf16.mxu0 %v460
  %726 = vmatpush1.bf16.msra.mxu0 %v459
  %727 = vmatprep.subr.bf16.mxu0 %v464
  %728 = vmatpush1.bf16.msra.mxu0 %v463
  %729 = vmatprep.subr.bf16.mxu0 %v468
  %730 = vmatpush1.bf16.msra.mxu0 %v467
  %731 = vmatprep.subr.bf16.mxu0 %v472
  %732 = vmatpush1.bf16.msra.mxu0 %v471
  %733 = vmatprep.subr.bf16.mxu0 %v476
  %734 = vmatpush1.bf16.msra.mxu0 %v475
  %735 = vmatprep.subr.bf16.mxu0 %v480
  %736 = vmatpush1.bf16.msra.mxu0 %v479
  %737 = vmatprep.subr.bf16.mxu0 %v484
  %738 = vmatpush1.bf16.msra.mxu0 %v483
  %739 = vmatprep.subr.bf16.mxu0 %v488
  %740 = vmatpush1.bf16.msra.mxu0 %v487
  %741 = vmatprep.subr.bf16.mxu0 %v492
  %742 = vmatpush1.bf16.msra.mxu0 %v491
  %743 = vmatprep.subr.bf16.mxu0 %v496
  %744 = vmatpush1.bf16.msra.mxu0 %v495
  %745 = vmatprep.subr.bf16.mxu0 %v500
  %746 = vmatpush1.bf16.msra.mxu0 %v499
  %747 = vmatprep.subr.bf16.mxu0 %v504
  %748 = vmatpush1.bf16.msra.mxu0 %v503
  %749 = vmatprep.subr.bf16.mxu0 %v508
  %750 = vmatpush1.bf16.msra.mxu0 %v507
  %751 = vmatprep.mubr.bf16.mxu0 %v152
  %752 = vmatmul.mubr.bf16.gmra.mrb[0].mxu0 %v151
  %v753 = vpop.f32.mrb[0].mxu0
  %v754 = vadd.f32 0.0, %v753
  %v755 = vpop.f32.mrb[0].mxu0
  %v756 = vadd.f32 0.0, %v755
  %v757 = vpop.f32.mrb[0].mxu0
  %v758 = vpop.f32.mrb[0].mxu0
  %759 = vdwg.mxu0
  %760 = vmatprep.subr.bf16.mxu0 %v512
  %761 = vmatpush1.bf16.msra.mxu0 %v511
  %762 = vmatprep.subr.bf16.mxu0 %v516
  %763 = vmatpush1.bf16.msra.mxu0 %v515
  %764 = vmatprep.subr.bf16.mxu0 %v520
  %765 = vmatpush1.bf16.msra.mxu0 %v519
  %766 = vmatprep.subr.bf16.mxu0 %v524
  %767 = vmatpush1.bf16.msra.mxu0 %v523
  %768 = vmatprep.subr.bf16.mxu0 %v528
  %769 = vmatpush1.bf16.msra.mxu0 %v527
  %770 = vmatprep.subr.bf16.mxu0 %v532
  %771 = vmatpush1.bf16.msra.mxu0 %v531
  %772 = vmatprep.subr.bf16.mxu0 %v536
  %773 = vmatpush1.bf16.msra.mxu0 %v535
  %774 = vmatprep.subr.bf16.mxu0 %v540
  %775 = vmatpush1.bf16.msra.mxu0 %v539
  %776 = vmatprep.subr.bf16.mxu0 0
  %777 = vmatpush1.bf16.msra.mxu0 0
  %778 = vmatprep.subr.bf16.mxu0 0
  %779 = vmatpush1.bf16.msra.mxu0 0
  %780 = vmatprep.subr.bf16.mxu0 0
  %781 = vmatpush1.bf16.msra.mxu0 0
  %782 = vmatprep.subr.bf16.mxu0 0
  %783 = vmatpush1.bf16.msra.mxu0 0
  %784 = vmatprep.subr.bf16.mxu0 0
  %785 = vmatpush1.bf16.msra.mxu0 0
  %786 = vmatprep.subr.bf16.mxu0 0
  %787 = vmatpush1.bf16.msra.mxu0 0
  %788 = vmatprep.subr.bf16.mxu0 0
  %789 = vmatpush1.bf16.msra.mxu0 0
  %790 = vmatprep.subr.bf16.mxu0 0
  %791 = vmatpush1.bf16.msra.mxu0 0
  %792 = vmatprep.mubr.bf16.mxu0 0
  %793 = vmatmul.mubr.bf16.gmra.mrb[0].mxu0 %v153
  %v794 = vpop.f32.mrb[0].mxu0
  %v795 = vadd.f32 %v754, %v794
  %v796 = vpop.f32.mrb[0].mxu0
  %v797 = vadd.f32 %v756, %v796
  %v798 = vpop.f32.mrb[0].mxu0
  %v799 = vpop.f32.mrb[0].mxu0
  %800 = vdwg.mxu0
  %v801 = vld [vmem:[%s2] sm:$0xff]
  %v802 = vld [vmem:[%s3] sm:$0xff]
  %v803 = vadd.f32 %v713, %v715
  %v804 = vadd.f32 %v803, %v795
  %v805 = vadd.f32 %v804, %v797
  %806 = vadd.xlane.f32.xlu0 %v805
  %v807 = vpop.xlane.xlu0 %806
  %v808 = vmul.f32 %v807, 0.001953125
  %v809 = vsub.f32 %v713, %v808
  %v810 = vsub.f32 %v715, %v808
  %v811 = vsub.f32 %v795, %v808
  %v812 = vsub.f32 %v797, %v808
  %v813 = vmul.f32 %v809, %v809
  %v814 = vmul.f32 %v810, %v810
  %v815 = vmul.f32 %v811, %v811
  %v816 = vmul.f32 %v812, %v812
  %v817 = vadd.f32 %v813, %v814
  %v818 = vadd.f32 %v817, %v815
  %v819 = vadd.f32 %v818, %v816
  %820 = vadd.xlane.f32.xlu0 %v819
  %v821 = vpop.xlane.xlu0 %820
  %v822 = vmul.f32 %v821, 0.001953125
  %v823 = vadd.f32 %v822, 1e-05
  %v824 = vrsqrt.pop %v823
  %v825 = vmul.f32 %v801, %v824
  %827 = vset.pattern.permute.xlu0 0
  %828 = vperm.xlu0 %827, %v825
  %v829 = vpop.permute.xlu0 %828
  %v831 = vmul.f32 %v809, %v829
  %v832 = vmul.f32 %v810, %v829
  %v833 = vmul.f32 %v811, %v829
  %v834 = vmul.f32 %v812, %v829
  %836 = vset.pattern.permute.xlu0 0
  %837 = vperm.xlu0 %836, %v802
  %v838 = vpop.permute.xlu0 %837
  %v840 = vadd.f32 %v831, %v838
  %v841 = vadd.f32 %v832, %v838
  %v842 = vadd.f32 %v833, %v838
  %v843 = vadd.f32 %v834, %v838
  %vm844 = vcmp.ge.f32.partialorder %v840, 0.0
  %vm845 = vcmp.ge.f32.partialorder %v841, 0.0
  %vm846 = vcmp.ge.f32.partialorder %v842, 0.0
  %vm847 = vcmp.ge.f32.partialorder %v843, 0.0
  %v848 = vmul.f32 %v840, 0.2
  %v849 = vmul.f32 %v841, 0.2
  %v850 = vmul.f32 %v842, 0.2
  %v851 = vmul.f32 %v843, 0.2
  %v852 = vsel %vm844, %v840, %v848
  %v853 = vsel %vm845, %v841, %v849
  %v854 = vsel %vm846, %v842, %v850
  %v855 = vsel %vm847, %v843, %v851
  %v856 = vpack.c.bf16 %v852, %v852
  %v857 = vpack.c.bf16 %v853, %v853
  %v858 = vpack.c.bf16 %v854, %v854
  %v859 = vpack.c.bf16 %v855, %v855
  %v860 = vld [vmem:[%s7] sm:$0xf]
  %v861 = vld [vmem:[%s7 + $0x4] sm:$0xf]
  %v862 = vld [vmem:[%s7 + $0x8] sm:$0xf]
  %v863 = vld [vmem:[%s7 + $0xc] sm:$0xf]
  %v864 = vld [vmem:[%s7 + $0x10] sm:$0xf]
  %v865 = vld [vmem:[%s7 + $0x14] sm:$0xf]
  %v866 = vld [vmem:[%s7 + $0x18] sm:$0xf]
  %v867 = vld [vmem:[%s7 + $0x1c] sm:$0xf]
  %v868 = vld [vmem:[%s7 + $0x20] sm:$0xf]
  %v869 = vld [vmem:[%s7 + $0x24] sm:$0xf]
  %v870 = vld [vmem:[%s7 + $0x28] sm:$0xf]
  %v871 = vld [vmem:[%s7 + $0x2c] sm:$0xf]
  %v872 = vld [vmem:[%s7 + $0x30] sm:$0xf]
  %v873 = vld [vmem:[%s7 + $0x34] sm:$0xf]
  %v874 = vld [vmem:[%s7 + $0x38] sm:$0xf]
  %v875 = vld [vmem:[%s7 + $0x3c] sm:$0xf]
  %v876 = vld [vmem:[%s7 + $0x40] sm:$0xf]
  %v877 = vld [vmem:[%s7 + $0x44] sm:$0xf]
  %v878 = vld [vmem:[%s7 + $0x48] sm:$0xf]
  %v879 = vld [vmem:[%s7 + $0x4c] sm:$0xf]
  %v880 = vld [vmem:[%s7 + $0x50] sm:$0xf]
  %v881 = vld [vmem:[%s7 + $0x54] sm:$0xf]
  %v882 = vld [vmem:[%s7 + $0x58] sm:$0xf]
  %v883 = vld [vmem:[%s7 + $0x5c] sm:$0xf]
  %v884 = vld [vmem:[%s7 + $0x60] sm:$0xf]
  %v885 = vld [vmem:[%s7 + $0x64] sm:$0xf]
  %v886 = vld [vmem:[%s7 + $0x68] sm:$0xf]
  %v887 = vld [vmem:[%s7 + $0x6c] sm:$0xf]
  %v888 = vld [vmem:[%s7 + $0x70] sm:$0xf]
  %v889 = vld [vmem:[%s7 + $0x74] sm:$0xf]
  %v890 = vld [vmem:[%s7 + $0x78] sm:$0xf]
  %v891 = vld [vmem:[%s7 + $0x7c] sm:$0xf]
  %v892 = vld [vmem:[%s7 + $0x80] sm:$0xf]
  %v893 = vld [vmem:[%s7 + $0x84] sm:$0xf]
  %v894 = vld [vmem:[%s7 + $0x88] sm:$0xf]
  %v895 = vld [vmem:[%s7 + $0x8c] sm:$0xf]
  %v896 = vld [vmem:[%s7 + $0x90] sm:$0xf]
  %v897 = vld [vmem:[%s7 + $0x94] sm:$0xf]
  %v898 = vld [vmem:[%s7 + $0x98] sm:$0xf]
  %v899 = vld [vmem:[%s7 + $0x9c] sm:$0xf]
  %v900 = vld [vmem:[%s7 + $0xa0] sm:$0xf]
  %v901 = vld [vmem:[%s7 + $0xa4] sm:$0xf]
  %v902 = vld [vmem:[%s7 + $0xa8] sm:$0xf]
  %v903 = vld [vmem:[%s7 + $0xac] sm:$0xf]
  %v904 = vld [vmem:[%s7 + $0xb0] sm:$0xf]
  %v905 = vld [vmem:[%s7 + $0xb4] sm:$0xf]
  %v906 = vld [vmem:[%s7 + $0xb8] sm:$0xf]
  %v907 = vld [vmem:[%s7 + $0xbc] sm:$0xf]
  %v908 = vld [vmem:[%s7 + $0xc0] sm:$0xf]
  %v909 = vld [vmem:[%s7 + $0xc4] sm:$0xf]
  %v910 = vld [vmem:[%s7 + $0xc8] sm:$0xf]
  %v911 = vld [vmem:[%s7 + $0xcc] sm:$0xf]
  %v912 = vld [vmem:[%s7 + $0xd0] sm:$0xf]
  %v913 = vld [vmem:[%s7 + $0xd4] sm:$0xf]
  %v914 = vld [vmem:[%s7 + $0xd8] sm:$0xf]
  %v915 = vld [vmem:[%s7 + $0xdc] sm:$0xf]
  %v916 = vld [vmem:[%s7 + $0xe0] sm:$0xf]
  %v917 = vld [vmem:[%s7 + $0xe4] sm:$0xf]
  %v918 = vld [vmem:[%s7 + $0xe8] sm:$0xf]
  %v919 = vld [vmem:[%s7 + $0xec] sm:$0xf]
  %v920 = vld [vmem:[%s7 + $0xf0] sm:$0xf]
  %v921 = vld [vmem:[%s7 + $0xf4] sm:$0xf]
  %v922 = vld [vmem:[%s7 + $0xf8] sm:$0xf]
  %v923 = vld [vmem:[%s7 + $0xfc] sm:$0xf]
  %v988 = vunpack.c.l.b16 %v860
  %v989 = vunpack.c.l.b16 %v861
  %v990 = vunpack.c.l.b16 %v862
  %v991 = vunpack.c.l.b16 %v863
  %v992 = vunpack.c.l.b16 %v864
  %v993 = vunpack.c.l.b16 %v865
  %v994 = vunpack.c.l.b16 %v866
  %v995 = vunpack.c.l.b16 %v867
  %v996 = vunpack.c.l.b16 %v868
  %v997 = vunpack.c.l.b16 %v869
  %v998 = vunpack.c.l.b16 %v870
  %v999 = vunpack.c.l.b16 %v871
  %v1000 = vunpack.c.l.b16 %v872
  %v1001 = vunpack.c.l.b16 %v873
  %v1002 = vunpack.c.l.b16 %v874
  %v1003 = vunpack.c.l.b16 %v875
  %v1004 = vunpack.c.l.b16 %v876
  %v1005 = vunpack.c.l.b16 %v877
  %v1006 = vunpack.c.l.b16 %v878
  %v1007 = vunpack.c.l.b16 %v879
  %v1008 = vunpack.c.l.b16 %v880
  %v1009 = vunpack.c.l.b16 %v881
  %v1010 = vunpack.c.l.b16 %v882
  %v1011 = vunpack.c.l.b16 %v883
  %v1012 = vunpack.c.l.b16 %v884
  %v1013 = vunpack.c.l.b16 %v885
  %v1014 = vunpack.c.l.b16 %v886
  %v1015 = vunpack.c.l.b16 %v887
  %v1016 = vunpack.c.l.b16 %v888
  %v1017 = vunpack.c.l.b16 %v889
  %v1018 = vunpack.c.l.b16 %v890
  %v1019 = vunpack.c.l.b16 %v891
  %v1020 = vunpack.c.l.b16 %v892
  %v1021 = vunpack.c.l.b16 %v893
  %v1022 = vunpack.c.l.b16 %v894
  %v1023 = vunpack.c.l.b16 %v895
  %v1024 = vunpack.c.l.b16 %v896
  %v1025 = vunpack.c.l.b16 %v897
  %v1026 = vunpack.c.l.b16 %v898
  %v1027 = vunpack.c.l.b16 %v899
  %v1028 = vunpack.c.l.b16 %v900
  %v1029 = vunpack.c.l.b16 %v901
  %v1030 = vunpack.c.l.b16 %v902
  %v1031 = vunpack.c.l.b16 %v903
  %v1032 = vunpack.c.l.b16 %v904
  %v1033 = vunpack.c.l.b16 %v905
  %v1034 = vunpack.c.l.b16 %v906
  %v1035 = vunpack.c.l.b16 %v907
  %v1036 = vunpack.c.l.b16 %v908
  %v1037 = vunpack.c.l.b16 %v909
  %v1038 = vunpack.c.l.b16 %v910
  %v1039 = vunpack.c.l.b16 %v911
  %v1040 = vunpack.c.l.b16 %v912
  %v1041 = vunpack.c.l.b16 %v913
  %v1042 = vunpack.c.l.b16 %v914
  %v1043 = vunpack.c.l.b16 %v915
  %v1044 = vunpack.c.l.b16 %v916
  %v1045 = vunpack.c.l.b16 %v917
  %v1046 = vunpack.c.l.b16 %v918
  %v1047 = vunpack.c.l.b16 %v919
  %v1048 = vunpack.c.l.b16 %v920
  %v1049 = vunpack.c.l.b16 %v921
  %v1050 = vunpack.c.l.b16 %v922
  %v1051 = vunpack.c.l.b16 %v923
  %v1052 = vpack.c.b16 %v989, %v988
  %v1053 = vpack.c.b16 %v991, %v990
  %v1054 = vpack.c.b16 %v993, %v992
  %v1055 = vpack.c.b16 %v995, %v994
  %v1056 = vpack.c.b16 %v997, %v996
  %v1057 = vpack.c.b16 %v999, %v998
  %v1058 = vpack.c.b16 %v1001, %v1000
  %v1059 = vpack.c.b16 %v1003, %v1002
  %v1060 = vpack.c.b16 %v1005, %v1004
  %v1061 = vpack.c.b16 %v1007, %v1006
  %v1062 = vpack.c.b16 %v1009, %v1008
  %v1063 = vpack.c.b16 %v1011, %v1010
  %v1064 = vpack.c.b16 %v1013, %v1012
  %v1065 = vpack.c.b16 %v1015, %v1014
  %v1066 = vpack.c.b16 %v1017, %v1016
  %v1067 = vpack.c.b16 %v1019, %v1018
  %v1068 = vpack.c.b16 %v1021, %v1020
  %v1069 = vpack.c.b16 %v1023, %v1022
  %v1070 = vpack.c.b16 %v1025, %v1024
  %v1071 = vpack.c.b16 %v1027, %v1026
  %v1072 = vpack.c.b16 %v1029, %v1028
  %v1073 = vpack.c.b16 %v1031, %v1030
  %v1074 = vpack.c.b16 %v1033, %v1032
  %v1075 = vpack.c.b16 %v1035, %v1034
  %v1076 = vpack.c.b16 %v1037, %v1036
  %v1077 = vpack.c.b16 %v1039, %v1038
  %v1078 = vpack.c.b16 %v1041, %v1040
  %v1079 = vpack.c.b16 %v1043, %v1042
  %v1080 = vpack.c.b16 %v1045, %v1044
  %v1081 = vpack.c.b16 %v1047, %v1046
  %v1082 = vpack.c.b16 %v1049, %v1048
  %v1083 = vpack.c.b16 %v1051, %v1050
  %1116 = vmatprep.subr.bf16.mxu0 0
  %1117 = vmatpush1.bf16.msra.mxu0 %v1052
  %1118 = vmatprep.subr.bf16.mxu0 0
  %1119 = vmatpush1.bf16.msra.mxu0 %v1053
  %1120 = vmatprep.subr.bf16.mxu0 0
  %1121 = vmatpush1.bf16.msra.mxu0 %v1054
  %1122 = vmatprep.subr.bf16.mxu0 0
  %1123 = vmatpush1.bf16.msra.mxu0 %v1055
  %1124 = vmatprep.subr.bf16.mxu0 0
  %1125 = vmatpush1.bf16.msra.mxu0 %v1056
  %1126 = vmatprep.subr.bf16.mxu0 0
  %1127 = vmatpush1.bf16.msra.mxu0 %v1057
  %1128 = vmatprep.subr.bf16.mxu0 0
  %1129 = vmatpush1.bf16.msra.mxu0 %v1058
  %1130 = vmatprep.subr.bf16.mxu0 0
  %1131 = vmatpush1.bf16.msra.mxu0 %v1059
  %1132 = vmatprep.subr.bf16.mxu0 0
  %1133 = vmatpush1.bf16.msra.mxu0 %v1060
  %1134 = vmatprep.subr.bf16.mxu0 0
  %1135 = vmatpush1.bf16.msra.mxu0 %v1061
  %1136 = vmatprep.subr.bf16.mxu0 0
  %1137 = vmatpush1.bf16.msra.mxu0 %v1062
  %1138 = vmatprep.subr.bf16.mxu0 0
  %1139 = vmatpush1.bf16.msra.mxu0 %v1063
  %1140 = vmatprep.subr.bf16.mxu0 0
  %1141 = vmatpush1.bf16.msra.mxu0 %v1064
  %1142 = vmatprep.subr.bf16.mxu0 0
  %1143 = vmatpush1.bf16.msra.mxu0 %v1065
  %1144 = vmatprep.subr.bf16.mxu0 0
  %1145 = vmatpush1.bf16.msra.mxu0 %v1066
  %1146 = vmatprep.subr.bf16.mxu0 0
  %1147 = vmatpush1.bf16.msra.mxu0 %v1067
  %1148 = vmatprep.mubr.bf16.mxu0 %v857
  %1149 = vmatmul.mubr.bf16.gmra.mrb[0].mxu0 %v856
  %v1150 = vpop.f32.mrb[0].mxu0
  %v1151 = vadd.f32 0.0, %v1150
  %v1152 = vpop.f32.mrb[0].mxu0
  %v1153 = vpop.f32.mrb[0].mxu0
  %v1154 = vpop.f32.mrb[0].mxu0
  %1155 = vdwg.mxu0
  %1156 = vmatprep.subr.bf16.mxu0 0
  %1157 = vmatpush1.bf16.msra.mxu0 %v1068
  %1158 = vmatprep.subr.bf16.mxu0 0
  %1159 = vmatpush1.bf16.msra.mxu0 %v1069
  %1160 = vmatprep.subr.bf16.mxu0 0
  %1161 = vmatpush1.bf16.msra.mxu0 %v1070
  %1162 = vmatprep.subr.bf16.mxu0 0
  %1163 = vmatpush1.bf16.msra.mxu0 %v1071
  %1164 = vmatprep.subr.bf16.mxu0 0
  %1165 = vmatpush1.bf16.msra.mxu0 %v1072
  %1166 = vmatprep.subr.bf16.mxu0 0
  %1167 = vmatpush1.bf16.msra.mxu0 %v1073
  %1168 = vmatprep.subr.bf16.mxu0 0
  %1169 = vmatpush1.bf16.msra.mxu0 %v1074
  %1170 = vmatprep.subr.bf16.mxu0 0
  %1171 = vmatpush1.bf16.msra.mxu0 %v1075
  %1172 = vmatprep.subr.bf16.mxu0 0
  %1173 = vmatpush1.bf16.msra.mxu0 %v1076
  %1174 = vmatprep.subr.bf16.mxu0 0
  %1175 = vmatpush1.bf16.msra.mxu0 %v1077
  %1176 = vmatprep.subr.bf16.mxu0 0
  %1177 = vmatpush1.bf16.msra.mxu0 %v1078
  %1178 = vmatprep.subr.bf16.mxu0 0
  %1179 = vmatpush1.bf16.msra.mxu0 %v1079
  %1180 = vmatprep.subr.bf16.mxu0 0
  %1181 = vmatpush1.bf16.msra.mxu0 %v1080
  %1182 = vmatprep.subr.bf16.mxu0 0
  %1183 = vmatpush1.bf16.msra.mxu0 %v1081
  %1184 = vmatprep.subr.bf16.mxu0 0
  %1185 = vmatpush1.bf16.msra.mxu0 %v1082
  %1186 = vmatprep.subr.bf16.mxu0 0
  %1187 = vmatpush1.bf16.msra.mxu0 %v1083
  %1188 = vmatprep.mubr.bf16.mxu0 %v859
  %1189 = vmatmul.mubr.bf16.gmra.mrb[0].mxu0 %v858
  %v1190 = vpop.f32.mrb[0].mxu0
  %v1191 = vadd.f32 %v1151, %v1190
  %v1192 = vpop.f32.mrb[0].mxu0
  %v1193 = vpop.f32.mrb[0].mxu0
  %v1194 = vpop.f32.mrb[0].mxu0
  %1195 = vdwg.mxu0
  %s1196 = scalar_lea.vmem %s7, 256
  %v1197 = vld [vmem:[%s1196] sm:$0xf]
  %v1198 = vld [vmem:[%s1196 + $0x4] sm:$0xf]
  %v1199 = vld [vmem:[%s1196 + $0x8] sm:$0xf]
  %v1200 = vld [vmem:[%s1196 + $0xc] sm:$0xf]
  %v1201 = vld [vmem:[%s1196 + $0x10] sm:$0xf]
  %v1202 = vld [vmem:[%s1196 + $0x14] sm:$0xf]
  %v1203 = vld [vmem:[%s1196 + $0x18] sm:$0xf]
  %v1204 = vld [vmem:[%s1196 + $0x1c] sm:$0xf]
  %v1205 = vld [vmem:[%s1196 + $0x20] sm:$0xf]
  %v1206 = vld [vmem:[%s1196 + $0x24] sm:$0xf]
  %v1207 = vld [vmem:[%s1196 + $0x28] sm:$0xf]
  %v1208 = vld [vmem:[%s1196 + $0x2c] sm:$0xf]
  %v1209 = vld [vmem:[%s1196 + $0x30] sm:$0xf]
  %v1210 = vld [vmem:[%s1196 + $0x34] sm:$0xf]
  %v1211 = vld [vmem:[%s1196 + $0x38] sm:$0xf]
  %v1212 = vld [vmem:[%s1196 + $0x3c] sm:$0xf]
  %v1213 = vld [vmem:[%s1196 + $0x40] sm:$0xf]
  %v1214 = vld [vmem:[%s1196 + $0x44] sm:$0xf]
  %v1215 = vld [vmem:[%s1196 + $0x48] sm:$0xf]
  %v1216 = vld [vmem:[%s1196 + $0x4c] sm:$0xf]
  %v1217 = vld [vmem:[%s1196 + $0x50] sm:$0xf]
  %v1218 = vld [vmem:[%s1196 + $0x54] sm:$0xf]
  %v1219 = vld [vmem:[%s1196 + $0x58] sm:$0xf]
  %v1220 = vld [vmem:[%s1196 + $0x5c] sm:$0xf]
  %v1221 = vld [vmem:[%s1196 + $0x60] sm:$0xf]
  %v1222 = vld [vmem:[%s1196 + $0x64] sm:$0xf]
  %v1223 = vld [vmem:[%s1196 + $0x68] sm:$0xf]
  %v1224 = vld [vmem:[%s1196 + $0x6c] sm:$0xf]
  %v1225 = vld [vmem:[%s1196 + $0x70] sm:$0xf]
  %v1226 = vld [vmem:[%s1196 + $0x74] sm:$0xf]
  %v1227 = vld [vmem:[%s1196 + $0x78] sm:$0xf]
  %v1228 = vld [vmem:[%s1196 + $0x7c] sm:$0xf]
  %v1229 = vld [vmem:[%s1196 + $0x80] sm:$0xf]
  %v1230 = vld [vmem:[%s1196 + $0x84] sm:$0xf]
  %v1231 = vld [vmem:[%s1196 + $0x88] sm:$0xf]
  %v1232 = vld [vmem:[%s1196 + $0x8c] sm:$0xf]
  %v1233 = vld [vmem:[%s1196 + $0x90] sm:$0xf]
  %v1234 = vld [vmem:[%s1196 + $0x94] sm:$0xf]
  %v1235 = vld [vmem:[%s1196 + $0x98] sm:$0xf]
  %v1236 = vld [vmem:[%s1196 + $0x9c] sm:$0xf]
  %v1237 = vld [vmem:[%s1196 + $0xa0] sm:$0xf]
  %v1238 = vld [vmem:[%s1196 + $0xa4] sm:$0xf]
  %v1239 = vld [vmem:[%s1196 + $0xa8] sm:$0xf]
  %v1240 = vld [vmem:[%s1196 + $0xac] sm:$0xf]
  %v1241 = vld [vmem:[%s1196 + $0xb0] sm:$0xf]
  %v1242 = vld [vmem:[%s1196 + $0xb4] sm:$0xf]
  %v1243 = vld [vmem:[%s1196 + $0xb8] sm:$0xf]
  %v1244 = vld [vmem:[%s1196 + $0xbc] sm:$0xf]
  %v1245 = vld [vmem:[%s1196 + $0xc0] sm:$0xf]
  %v1246 = vld [vmem:[%s1196 + $0xc4] sm:$0xf]
  %v1247 = vld [vmem:[%s1196 + $0xc8] sm:$0xf]
  %v1248 = vld [vmem:[%s1196 + $0xcc] sm:$0xf]
  %v1249 = vld [vmem:[%s1196 + $0xd0] sm:$0xf]
  %v1250 = vld [vmem:[%s1196 + $0xd4] sm:$0xf]
  %v1251 = vld [vmem:[%s1196 + $0xd8] sm:$0xf]
  %v1252 = vld [vmem:[%s1196 + $0xdc] sm:$0xf]
  %v1253 = vld [vmem:[%s1196 + $0xe0] sm:$0xf]
  %v1254 = vld [vmem:[%s1196 + $0xe4] sm:$0xf]
  %v1255 = vld [vmem:[%s1196 + $0xe8] sm:$0xf]
  %v1256 = vld [vmem:[%s1196 + $0xec] sm:$0xf]
  %v1257 = vld [vmem:[%s1196 + $0xf0] sm:$0xf]
  %v1258 = vld [vmem:[%s1196 + $0xf4] sm:$0xf]
  %v1259 = vld [vmem:[%s1196 + $0xf8] sm:$0xf]
  %v1260 = vld [vmem:[%s1196 + $0xfc] sm:$0xf]
  %v1325 = vunpack.c.l.b16 %v1197
  %v1326 = vunpack.c.l.b16 %v1198
  %v1327 = vunpack.c.l.b16 %v1199
  %v1328 = vunpack.c.l.b16 %v1200
  %v1329 = vunpack.c.l.b16 %v1201
  %v1330 = vunpack.c.l.b16 %v1202
  %v1331 = vunpack.c.l.b16 %v1203
  %v1332 = vunpack.c.l.b16 %v1204
  %v1333 = vunpack.c.l.b16 %v1205
  %v1334 = vunpack.c.l.b16 %v1206
  %v1335 = vunpack.c.l.b16 %v1207
  %v1336 = vunpack.c.l.b16 %v1208
  %v1337 = vunpack.c.l.b16 %v1209
  %v1338 = vunpack.c.l.b16 %v1210
  %v1339 = vunpack.c.l.b16 %v1211
  %v1340 = vunpack.c.l.b16 %v1212
  %v1341 = vunpack.c.l.b16 %v1213
  %v1342 = vunpack.c.l.b16 %v1214
  %v1343 = vunpack.c.l.b16 %v1215
  %v1344 = vunpack.c.l.b16 %v1216
  %v1345 = vunpack.c.l.b16 %v1217
  %v1346 = vunpack.c.l.b16 %v1218
  %v1347 = vunpack.c.l.b16 %v1219
  %v1348 = vunpack.c.l.b16 %v1220
  %v1349 = vunpack.c.l.b16 %v1221
  %v1350 = vunpack.c.l.b16 %v1222
  %v1351 = vunpack.c.l.b16 %v1223
  %v1352 = vunpack.c.l.b16 %v1224
  %v1353 = vunpack.c.l.b16 %v1225
  %v1354 = vunpack.c.l.b16 %v1226
  %v1355 = vunpack.c.l.b16 %v1227
  %v1356 = vunpack.c.l.b16 %v1228
  %v1357 = vunpack.c.l.b16 %v1229
  %v1358 = vunpack.c.l.b16 %v1230
  %v1359 = vunpack.c.l.b16 %v1231
  %v1360 = vunpack.c.l.b16 %v1232
  %v1361 = vunpack.c.l.b16 %v1233
  %v1362 = vunpack.c.l.b16 %v1234
  %v1363 = vunpack.c.l.b16 %v1235
  %v1364 = vunpack.c.l.b16 %v1236
  %v1365 = vunpack.c.l.b16 %v1237
  %v1366 = vunpack.c.l.b16 %v1238
  %v1367 = vunpack.c.l.b16 %v1239
  %v1368 = vunpack.c.l.b16 %v1240
  %v1369 = vunpack.c.l.b16 %v1241
  %v1370 = vunpack.c.l.b16 %v1242
  %v1371 = vunpack.c.l.b16 %v1243
  %v1372 = vunpack.c.l.b16 %v1244
  %v1373 = vunpack.c.l.b16 %v1245
  %v1374 = vunpack.c.l.b16 %v1246
  %v1375 = vunpack.c.l.b16 %v1247
  %v1376 = vunpack.c.l.b16 %v1248
  %v1377 = vunpack.c.l.b16 %v1249
  %v1378 = vunpack.c.l.b16 %v1250
  %v1379 = vunpack.c.l.b16 %v1251
  %v1380 = vunpack.c.l.b16 %v1252
  %v1381 = vunpack.c.l.b16 %v1253
  %v1382 = vunpack.c.l.b16 %v1254
  %v1383 = vunpack.c.l.b16 %v1255
  %v1384 = vunpack.c.l.b16 %v1256
  %v1385 = vunpack.c.l.b16 %v1257
  %v1386 = vunpack.c.l.b16 %v1258
  %v1387 = vunpack.c.l.b16 %v1259
  %v1388 = vunpack.c.l.b16 %v1260
  %v1389 = vpack.c.b16 %v1326, %v1325
  %v1390 = vpack.c.b16 %v1328, %v1327
  %v1391 = vpack.c.b16 %v1330, %v1329
  %v1392 = vpack.c.b16 %v1332, %v1331
  %v1393 = vpack.c.b16 %v1334, %v1333
  %v1394 = vpack.c.b16 %v1336, %v1335
  %v1395 = vpack.c.b16 %v1338, %v1337
  %v1396 = vpack.c.b16 %v1340, %v1339
  %v1397 = vpack.c.b16 %v1342, %v1341
  %v1398 = vpack.c.b16 %v1344, %v1343
  %v1399 = vpack.c.b16 %v1346, %v1345
  %v1400 = vpack.c.b16 %v1348, %v1347
  %v1401 = vpack.c.b16 %v1350, %v1349
  %v1402 = vpack.c.b16 %v1352, %v1351
  %v1403 = vpack.c.b16 %v1354, %v1353
  %v1404 = vpack.c.b16 %v1356, %v1355
  %v1405 = vpack.c.b16 %v1358, %v1357
  %v1406 = vpack.c.b16 %v1360, %v1359
  %v1407 = vpack.c.b16 %v1362, %v1361
  %v1408 = vpack.c.b16 %v1364, %v1363
  %v1409 = vpack.c.b16 %v1366, %v1365
  %v1410 = vpack.c.b16 %v1368, %v1367
  %v1411 = vpack.c.b16 %v1370, %v1369
  %v1412 = vpack.c.b16 %v1372, %v1371
  %v1413 = vpack.c.b16 %v1374, %v1373
  %v1414 = vpack.c.b16 %v1376, %v1375
  %v1415 = vpack.c.b16 %v1378, %v1377
  %v1416 = vpack.c.b16 %v1380, %v1379
  %v1417 = vpack.c.b16 %v1382, %v1381
  %v1418 = vpack.c.b16 %v1384, %v1383
  %v1419 = vpack.c.b16 %v1386, %v1385
  %v1420 = vpack.c.b16 %v1388, %v1387
  %1453 = vmatprep.subr.bf16.mxu0 0
  %1454 = vmatpush1.bf16.msra.mxu0 %v1389
  %1455 = vmatprep.subr.bf16.mxu0 0
  %1456 = vmatpush1.bf16.msra.mxu0 %v1390
  %1457 = vmatprep.subr.bf16.mxu0 0
  %1458 = vmatpush1.bf16.msra.mxu0 %v1391
  %1459 = vmatprep.subr.bf16.mxu0 0
  %1460 = vmatpush1.bf16.msra.mxu0 %v1392
  %1461 = vmatprep.subr.bf16.mxu0 0
  %1462 = vmatpush1.bf16.msra.mxu0 %v1393
  %1463 = vmatprep.subr.bf16.mxu0 0
  %1464 = vmatpush1.bf16.msra.mxu0 %v1394
  %1465 = vmatprep.subr.bf16.mxu0 0
  %1466 = vmatpush1.bf16.msra.mxu0 %v1395
  %1467 = vmatprep.subr.bf16.mxu0 0
  %1468 = vmatpush1.bf16.msra.mxu0 %v1396
  %1469 = vmatprep.subr.bf16.mxu0 0
  %1470 = vmatpush1.bf16.msra.mxu0 %v1397
  %1471 = vmatprep.subr.bf16.mxu0 0
  %1472 = vmatpush1.bf16.msra.mxu0 %v1398
  %1473 = vmatprep.subr.bf16.mxu0 0
  %1474 = vmatpush1.bf16.msra.mxu0 %v1399
  %1475 = vmatprep.subr.bf16.mxu0 0
  %1476 = vmatpush1.bf16.msra.mxu0 %v1400
  %1477 = vmatprep.subr.bf16.mxu0 0
  %1478 = vmatpush1.bf16.msra.mxu0 %v1401
  %1479 = vmatprep.subr.bf16.mxu0 0
  %1480 = vmatpush1.bf16.msra.mxu0 %v1402
  %1481 = vmatprep.subr.bf16.mxu0 0
  %1482 = vmatpush1.bf16.msra.mxu0 %v1403
  %1483 = vmatprep.subr.bf16.mxu0 0
  %1484 = vmatpush1.bf16.msra.mxu0 %v1404
  %1485 = vmatprep.mubr.bf16.mxu0 %v857
  %1486 = vmatmul.mubr.bf16.gmra.mrb[0].mxu0 %v856
  %v1487 = vpop.f32.mrb[0].mxu0
  %v1488 = vadd.f32 0.0, %v1487
  %v1489 = vpop.f32.mrb[0].mxu0
  %v1490 = vpop.f32.mrb[0].mxu0
  %v1491 = vpop.f32.mrb[0].mxu0
  %1492 = vdwg.mxu0
  %1493 = vmatprep.subr.bf16.mxu0 0
  %1494 = vmatpush1.bf16.msra.mxu0 %v1405
  %1495 = vmatprep.subr.bf16.mxu0 0
  %1496 = vmatpush1.bf16.msra.mxu0 %v1406
  %1497 = vmatprep.subr.bf16.mxu0 0
  %1498 = vmatpush1.bf16.msra.mxu0 %v1407
  %1499 = vmatprep.subr.bf16.mxu0 0
  %1500 = vmatpush1.bf16.msra.mxu0 %v1408
  %1501 = vmatprep.subr.bf16.mxu0 0
  %1502 = vmatpush1.bf16.msra.mxu0 %v1409
  %1503 = vmatprep.subr.bf16.mxu0 0
  %1504 = vmatpush1.bf16.msra.mxu0 %v1410
  %1505 = vmatprep.subr.bf16.mxu0 0
  %1506 = vmatpush1.bf16.msra.mxu0 %v1411
  %1507 = vmatprep.subr.bf16.mxu0 0
  %1508 = vmatpush1.bf16.msra.mxu0 %v1412
  %1509 = vmatprep.subr.bf16.mxu0 0
  %1510 = vmatpush1.bf16.msra.mxu0 %v1413
  %1511 = vmatprep.subr.bf16.mxu0 0
  %1512 = vmatpush1.bf16.msra.mxu0 %v1414
  %1513 = vmatprep.subr.bf16.mxu0 0
  %1514 = vmatpush1.bf16.msra.mxu0 %v1415
  %1515 = vmatprep.subr.bf16.mxu0 0
  %1516 = vmatpush1.bf16.msra.mxu0 %v1416
  %1517 = vmatprep.subr.bf16.mxu0 0
  %1518 = vmatpush1.bf16.msra.mxu0 %v1417
  %1519 = vmatprep.subr.bf16.mxu0 0
  %1520 = vmatpush1.bf16.msra.mxu0 %v1418
  %1521 = vmatprep.subr.bf16.mxu0 0
  %1522 = vmatpush1.bf16.msra.mxu0 %v1419
  %1523 = vmatprep.subr.bf16.mxu0 0
  %1524 = vmatpush1.bf16.msra.mxu0 %v1420
  %1525 = vmatprep.mubr.bf16.mxu0 %v859
  %1526 = vmatmul.mubr.bf16.gmra.mrb[0].mxu0 %v858
  %v1527 = vpop.f32.mrb[0].mxu0
  %v1528 = vadd.f32 %v1488, %v1527
  %v1529 = vpop.f32.mrb[0].mxu0
  %v1530 = vpop.f32.mrb[0].mxu0
  %v1531 = vpop.f32.mrb[0].mxu0
  %1532 = vdwg.mxu0
  %s1533 = scalar_lea.vmem %s7, 512
  %v1534 = vld [vmem:[%s1533] sm:$0xf]
  %v1535 = vld [vmem:[%s1533 + $0x4] sm:$0xf]
  %v1536 = vld [vmem:[%s1533 + $0x8] sm:$0xf]
  %v1537 = vld [vmem:[%s1533 + $0xc] sm:$0xf]
  %v1538 = vld [vmem:[%s1533 + $0x10] sm:$0xf]
  %v1539 = vld [vmem:[%s1533 + $0x14] sm:$0xf]
  %v1540 = vld [vmem:[%s1533 + $0x18] sm:$0xf]
  %v1541 = vld [vmem:[%s1533 + $0x1c] sm:$0xf]
  %v1542 = vld [vmem:[%s1533 + $0x20] sm:$0xf]
  %v1543 = vld [vmem:[%s1533 + $0x24] sm:$0xf]
  %v1544 = vld [vmem:[%s1533 + $0x28] sm:$0xf]
  %v1545 = vld [vmem:[%s1533 + $0x2c] sm:$0xf]
  %v1546 = vld [vmem:[%s1533 + $0x30] sm:$0xf]
  %v1547 = vld [vmem:[%s1533 + $0x34] sm:$0xf]
  %v1548 = vld [vmem:[%s1533 + $0x38] sm:$0xf]
  %v1549 = vld [vmem:[%s1533 + $0x3c] sm:$0xf]
  %v1550 = vld [vmem:[%s1533 + $0x40] sm:$0xf]
  %v1551 = vld [vmem:[%s1533 + $0x44] sm:$0xf]
  %v1552 = vld [vmem:[%s1533 + $0x48] sm:$0xf]
  %v1553 = vld [vmem:[%s1533 + $0x4c] sm:$0xf]
  %v1554 = vld [vmem:[%s1533 + $0x50] sm:$0xf]
  %v1555 = vld [vmem:[%s1533 + $0x54] sm:$0xf]
  %v1556 = vld [vmem:[%s1533 + $0x58] sm:$0xf]
  %v1557 = vld [vmem:[%s1533 + $0x5c] sm:$0xf]
  %v1558 = vld [vmem:[%s1533 + $0x60] sm:$0xf]
  %v1559 = vld [vmem:[%s1533 + $0x64] sm:$0xf]
  %v1560 = vld [vmem:[%s1533 + $0x68] sm:$0xf]
  %v1561 = vld [vmem:[%s1533 + $0x6c] sm:$0xf]
  %v1562 = vld [vmem:[%s1533 + $0x70] sm:$0xf]
  %v1563 = vld [vmem:[%s1533 + $0x74] sm:$0xf]
  %v1564 = vld [vmem:[%s1533 + $0x78] sm:$0xf]
  %v1565 = vld [vmem:[%s1533 + $0x7c] sm:$0xf]
  %v1566 = vld [vmem:[%s1533 + $0x80] sm:$0xf]
  %v1567 = vld [vmem:[%s1533 + $0x84] sm:$0xf]
  %v1568 = vld [vmem:[%s1533 + $0x88] sm:$0xf]
  %v1569 = vld [vmem:[%s1533 + $0x8c] sm:$0xf]
  %v1570 = vld [vmem:[%s1533 + $0x90] sm:$0xf]
  %v1571 = vld [vmem:[%s1533 + $0x94] sm:$0xf]
  %v1572 = vld [vmem:[%s1533 + $0x98] sm:$0xf]
  %v1573 = vld [vmem:[%s1533 + $0x9c] sm:$0xf]
  %v1574 = vld [vmem:[%s1533 + $0xa0] sm:$0xf]
  %v1575 = vld [vmem:[%s1533 + $0xa4] sm:$0xf]
  %v1576 = vld [vmem:[%s1533 + $0xa8] sm:$0xf]
  %v1577 = vld [vmem:[%s1533 + $0xac] sm:$0xf]
  %v1578 = vld [vmem:[%s1533 + $0xb0] sm:$0xf]
  %v1579 = vld [vmem:[%s1533 + $0xb4] sm:$0xf]
  %v1580 = vld [vmem:[%s1533 + $0xb8] sm:$0xf]
  %v1581 = vld [vmem:[%s1533 + $0xbc] sm:$0xf]
  %v1582 = vld [vmem:[%s1533 + $0xc0] sm:$0xf]
  %v1583 = vld [vmem:[%s1533 + $0xc4] sm:$0xf]
  %v1584 = vld [vmem:[%s1533 + $0xc8] sm:$0xf]
  %v1585 = vld [vmem:[%s1533 + $0xcc] sm:$0xf]
  %v1586 = vld [vmem:[%s1533 + $0xd0] sm:$0xf]
  %v1587 = vld [vmem:[%s1533 + $0xd4] sm:$0xf]
  %v1588 = vld [vmem:[%s1533 + $0xd8] sm:$0xf]
  %v1589 = vld [vmem:[%s1533 + $0xdc] sm:$0xf]
  %v1590 = vld [vmem:[%s1533 + $0xe0] sm:$0xf]
  %v1591 = vld [vmem:[%s1533 + $0xe4] sm:$0xf]
  %v1592 = vld [vmem:[%s1533 + $0xe8] sm:$0xf]
  %v1593 = vld [vmem:[%s1533 + $0xec] sm:$0xf]
  %v1594 = vld [vmem:[%s1533 + $0xf0] sm:$0xf]
  %v1595 = vld [vmem:[%s1533 + $0xf4] sm:$0xf]
  %v1596 = vld [vmem:[%s1533 + $0xf8] sm:$0xf]
  %v1597 = vld [vmem:[%s1533 + $0xfc] sm:$0xf]
  %v1662 = vunpack.c.l.b16 %v1534
  %v1663 = vunpack.c.l.b16 %v1535
  %v1664 = vunpack.c.l.b16 %v1536
  %v1665 = vunpack.c.l.b16 %v1537
  %v1666 = vunpack.c.l.b16 %v1538
  %v1667 = vunpack.c.l.b16 %v1539
  %v1668 = vunpack.c.l.b16 %v1540
  %v1669 = vunpack.c.l.b16 %v1541
  %v1670 = vunpack.c.l.b16 %v1542
  %v1671 = vunpack.c.l.b16 %v1543
  %v1672 = vunpack.c.l.b16 %v1544
  %v1673 = vunpack.c.l.b16 %v1545
  %v1674 = vunpack.c.l.b16 %v1546
  %v1675 = vunpack.c.l.b16 %v1547
  %v1676 = vunpack.c.l.b16 %v1548
  %v1677 = vunpack.c.l.b16 %v1549
  %v1678 = vunpack.c.l.b16 %v1550
  %v1679 = vunpack.c.l.b16 %v1551
  %v1680 = vunpack.c.l.b16 %v1552
  %v1681 = vunpack.c.l.b16 %v1553
  %v1682 = vunpack.c.l.b16 %v1554
  %v1683 = vunpack.c.l.b16 %v1555
  %v1684 = vunpack.c.l.b16 %v1556
  %v1685 = vunpack.c.l.b16 %v1557
  %v1686 = vunpack.c.l.b16 %v1558
  %v1687 = vunpack.c.l.b16 %v1559
  %v1688 = vunpack.c.l.b16 %v1560
  %v1689 = vunpack.c.l.b16 %v1561
  %v1690 = vunpack.c.l.b16 %v1562
  %v1691 = vunpack.c.l.b16 %v1563
  %v1692 = vunpack.c.l.b16 %v1564
  %v1693 = vunpack.c.l.b16 %v1565
  %v1694 = vunpack.c.l.b16 %v1566
  %v1695 = vunpack.c.l.b16 %v1567
  %v1696 = vunpack.c.l.b16 %v1568
  %v1697 = vunpack.c.l.b16 %v1569
  %v1698 = vunpack.c.l.b16 %v1570
  %v1699 = vunpack.c.l.b16 %v1571
  %v1700 = vunpack.c.l.b16 %v1572
  %v1701 = vunpack.c.l.b16 %v1573
  %v1702 = vunpack.c.l.b16 %v1574
  %v1703 = vunpack.c.l.b16 %v1575
  %v1704 = vunpack.c.l.b16 %v1576
  %v1705 = vunpack.c.l.b16 %v1577
  %v1706 = vunpack.c.l.b16 %v1578
  %v1707 = vunpack.c.l.b16 %v1579
  %v1708 = vunpack.c.l.b16 %v1580
  %v1709 = vunpack.c.l.b16 %v1581
  %v1710 = vunpack.c.l.b16 %v1582
  %v1711 = vunpack.c.l.b16 %v1583
  %v1712 = vunpack.c.l.b16 %v1584
  %v1713 = vunpack.c.l.b16 %v1585
  %v1714 = vunpack.c.l.b16 %v1586
  %v1715 = vunpack.c.l.b16 %v1587
  %v1716 = vunpack.c.l.b16 %v1588
  %v1717 = vunpack.c.l.b16 %v1589
  %v1718 = vunpack.c.l.b16 %v1590
  %v1719 = vunpack.c.l.b16 %v1591
  %v1720 = vunpack.c.l.b16 %v1592
  %v1721 = vunpack.c.l.b16 %v1593
  %v1722 = vunpack.c.l.b16 %v1594
  %v1723 = vunpack.c.l.b16 %v1595
  %v1724 = vunpack.c.l.b16 %v1596
  %v1725 = vunpack.c.l.b16 %v1597
  %v1726 = vpack.c.b16 %v1663, %v1662
  %v1727 = vpack.c.b16 %v1665, %v1664
  %v1728 = vpack.c.b16 %v1667, %v1666
  %v1729 = vpack.c.b16 %v1669, %v1668
  %v1730 = vpack.c.b16 %v1671, %v1670
  %v1731 = vpack.c.b16 %v1673, %v1672
  %v1732 = vpack.c.b16 %v1675, %v1674
  %v1733 = vpack.c.b16 %v1677, %v1676
  %v1734 = vpack.c.b16 %v1679, %v1678
  %v1735 = vpack.c.b16 %v1681, %v1680
  %v1736 = vpack.c.b16 %v1683, %v1682
  %v1737 = vpack.c.b16 %v1685, %v1684
  %v1738 = vpack.c.b16 %v1687, %v1686
  %v1739 = vpack.c.b16 %v1689, %v1688
  %v1740 = vpack.c.b16 %v1691, %v1690
  %v1741 = vpack.c.b16 %v1693, %v1692
  %v1742 = vpack.c.b16 %v1695, %v1694
  %v1743 = vpack.c.b16 %v1697, %v1696
  %v1744 = vpack.c.b16 %v1699, %v1698
  %v1745 = vpack.c.b16 %v1701, %v1700
  %v1746 = vpack.c.b16 %v1703, %v1702
  %v1747 = vpack.c.b16 %v1705, %v1704
  %v1748 = vpack.c.b16 %v1707, %v1706
  %v1749 = vpack.c.b16 %v1709, %v1708
  %v1750 = vpack.c.b16 %v1711, %v1710
  %v1751 = vpack.c.b16 %v1713, %v1712
  %v1752 = vpack.c.b16 %v1715, %v1714
  %v1753 = vpack.c.b16 %v1717, %v1716
  %v1754 = vpack.c.b16 %v1719, %v1718
  %v1755 = vpack.c.b16 %v1721, %v1720
  %v1756 = vpack.c.b16 %v1723, %v1722
  %v1757 = vpack.c.b16 %v1725, %v1724
  %1790 = vmatprep.subr.bf16.mxu0 0
  %1791 = vmatpush1.bf16.msra.mxu0 %v1726
  %1792 = vmatprep.subr.bf16.mxu0 0
  %1793 = vmatpush1.bf16.msra.mxu0 %v1727
  %1794 = vmatprep.subr.bf16.mxu0 0
  %1795 = vmatpush1.bf16.msra.mxu0 %v1728
  %1796 = vmatprep.subr.bf16.mxu0 0
  %1797 = vmatpush1.bf16.msra.mxu0 %v1729
  %1798 = vmatprep.subr.bf16.mxu0 0
  %1799 = vmatpush1.bf16.msra.mxu0 %v1730
  %1800 = vmatprep.subr.bf16.mxu0 0
  %1801 = vmatpush1.bf16.msra.mxu0 %v1731
  %1802 = vmatprep.subr.bf16.mxu0 0
  %1803 = vmatpush1.bf16.msra.mxu0 %v1732
  %1804 = vmatprep.subr.bf16.mxu0 0
  %1805 = vmatpush1.bf16.msra.mxu0 %v1733
  %1806 = vmatprep.subr.bf16.mxu0 0
  %1807 = vmatpush1.bf16.msra.mxu0 %v1734
  %1808 = vmatprep.subr.bf16.mxu0 0
  %1809 = vmatpush1.bf16.msra.mxu0 %v1735
  %1810 = vmatprep.subr.bf16.mxu0 0
  %1811 = vmatpush1.bf16.msra.mxu0 %v1736
  %1812 = vmatprep.subr.bf16.mxu0 0
  %1813 = vmatpush1.bf16.msra.mxu0 %v1737
  %1814 = vmatprep.subr.bf16.mxu0 0
  %1815 = vmatpush1.bf16.msra.mxu0 %v1738
  %1816 = vmatprep.subr.bf16.mxu0 0
  %1817 = vmatpush1.bf16.msra.mxu0 %v1739
  %1818 = vmatprep.subr.bf16.mxu0 0
  %1819 = vmatpush1.bf16.msra.mxu0 %v1740
  %1820 = vmatprep.subr.bf16.mxu0 0
  %1821 = vmatpush1.bf16.msra.mxu0 %v1741
  %1822 = vmatprep.mubr.bf16.mxu0 %v857
  %1823 = vmatmul.mubr.bf16.gmra.mrb[0].mxu0 %v856
  %v1824 = vpop.f32.mrb[0].mxu0
  %v1825 = vadd.f32 0.0, %v1824
  %v1826 = vpop.f32.mrb[0].mxu0
  %v1827 = vpop.f32.mrb[0].mxu0
  %v1828 = vpop.f32.mrb[0].mxu0
  %1829 = vdwg.mxu0
  %1830 = vmatprep.subr.bf16.mxu0 0
  %1831 = vmatpush1.bf16.msra.mxu0 %v1742
  %1832 = vmatprep.subr.bf16.mxu0 0
  %1833 = vmatpush1.bf16.msra.mxu0 %v1743
  %1834 = vmatprep.subr.bf16.mxu0 0
  %1835 = vmatpush1.bf16.msra.mxu0 %v1744
  %1836 = vmatprep.subr.bf16.mxu0 0
  %1837 = vmatpush1.bf16.msra.mxu0 %v1745
  %1838 = vmatprep.subr.bf16.mxu0 0
  %1839 = vmatpush1.bf16.msra.mxu0 %v1746
  %1840 = vmatprep.subr.bf16.mxu0 0
  %1841 = vmatpush1.bf16.msra.mxu0 %v1747
  %1842 = vmatprep.subr.bf16.mxu0 0
  %1843 = vmatpush1.bf16.msra.mxu0 %v1748
  %1844 = vmatprep.subr.bf16.mxu0 0
  %1845 = vmatpush1.bf16.msra.mxu0 %v1749
  %1846 = vmatprep.subr.bf16.mxu0 0
  %1847 = vmatpush1.bf16.msra.mxu0 %v1750
  %1848 = vmatprep.subr.bf16.mxu0 0
  %1849 = vmatpush1.bf16.msra.mxu0 %v1751
  %1850 = vmatprep.subr.bf16.mxu0 0
  %1851 = vmatpush1.bf16.msra.mxu0 %v1752
  %1852 = vmatprep.subr.bf16.mxu0 0
  %1853 = vmatpush1.bf16.msra.mxu0 %v1753
  %1854 = vmatprep.subr.bf16.mxu0 0
  %1855 = vmatpush1.bf16.msra.mxu0 %v1754
  %1856 = vmatprep.subr.bf16.mxu0 0
  %1857 = vmatpush1.bf16.msra.mxu0 %v1755
  %1858 = vmatprep.subr.bf16.mxu0 0
  %1859 = vmatpush1.bf16.msra.mxu0 %v1756
  %1860 = vmatprep.subr.bf16.mxu0 0
  %1861 = vmatpush1.bf16.msra.mxu0 %v1757
  %1862 = vmatprep.mubr.bf16.mxu0 %v859
  %1863 = vmatmul.mubr.bf16.gmra.mrb[0].mxu0 %v858
  %v1864 = vpop.f32.mrb[0].mxu0
  %v1865 = vadd.f32 %v1825, %v1864
  %v1866 = vpop.f32.mrb[0].mxu0
  %v1867 = vpop.f32.mrb[0].mxu0
  %v1868 = vpop.f32.mrb[0].mxu0
  %1869 = vdwg.mxu0
  %s1870 = scalar_lea.vmem %s7, 768
  %v1871 = vld [vmem:[%s1870] sm:$0xf]
  %v1872 = vld [vmem:[%s1870 + $0x4] sm:$0xf]
  %v1873 = vld [vmem:[%s1870 + $0x8] sm:$0xf]
  %v1874 = vld [vmem:[%s1870 + $0xc] sm:$0xf]
  %v1875 = vld [vmem:[%s1870 + $0x10] sm:$0xf]
  %v1876 = vld [vmem:[%s1870 + $0x14] sm:$0xf]
  %v1877 = vld [vmem:[%s1870 + $0x18] sm:$0xf]
  %v1878 = vld [vmem:[%s1870 + $0x1c] sm:$0xf]
  %v1879 = vld [vmem:[%s1870 + $0x20] sm:$0xf]
  %v1880 = vld [vmem:[%s1870 + $0x24] sm:$0xf]
  %v1881 = vld [vmem:[%s1870 + $0x28] sm:$0xf]
  %v1882 = vld [vmem:[%s1870 + $0x2c] sm:$0xf]
  %v1883 = vld [vmem:[%s1870 + $0x30] sm:$0xf]
  %v1884 = vld [vmem:[%s1870 + $0x34] sm:$0xf]
  %v1885 = vld [vmem:[%s1870 + $0x38] sm:$0xf]
  %v1886 = vld [vmem:[%s1870 + $0x3c] sm:$0xf]
  %v1887 = vld [vmem:[%s1870 + $0x40] sm:$0xf]
  %v1888 = vld [vmem:[%s1870 + $0x44] sm:$0xf]
  %v1889 = vld [vmem:[%s1870 + $0x48] sm:$0xf]
  %v1890 = vld [vmem:[%s1870 + $0x4c] sm:$0xf]
  %v1891 = vld [vmem:[%s1870 + $0x50] sm:$0xf]
  %v1892 = vld [vmem:[%s1870 + $0x54] sm:$0xf]
  %v1893 = vld [vmem:[%s1870 + $0x58] sm:$0xf]
  %v1894 = vld [vmem:[%s1870 + $0x5c] sm:$0xf]
  %v1895 = vld [vmem:[%s1870 + $0x60] sm:$0xf]
  %v1896 = vld [vmem:[%s1870 + $0x64] sm:$0xf]
  %v1897 = vld [vmem:[%s1870 + $0x68] sm:$0xf]
  %v1898 = vld [vmem:[%s1870 + $0x6c] sm:$0xf]
  %v1899 = vld [vmem:[%s1870 + $0x70] sm:$0xf]
  %v1900 = vld [vmem:[%s1870 + $0x74] sm:$0xf]
  %v1901 = vld [vmem:[%s1870 + $0x78] sm:$0xf]
  %v1902 = vld [vmem:[%s1870 + $0x7c] sm:$0xf]
  %v1903 = vld [vmem:[%s1870 + $0x80] sm:$0xf]
  %v1904 = vld [vmem:[%s1870 + $0x84] sm:$0xf]
  %v1905 = vld [vmem:[%s1870 + $0x88] sm:$0xf]
  %v1906 = vld [vmem:[%s1870 + $0x8c] sm:$0xf]
  %v1907 = vld [vmem:[%s1870 + $0x90] sm:$0xf]
  %v1908 = vld [vmem:[%s1870 + $0x94] sm:$0xf]
  %v1909 = vld [vmem:[%s1870 + $0x98] sm:$0xf]
  %v1910 = vld [vmem:[%s1870 + $0x9c] sm:$0xf]
  %v1911 = vld [vmem:[%s1870 + $0xa0] sm:$0xf]
  %v1912 = vld [vmem:[%s1870 + $0xa4] sm:$0xf]
  %v1913 = vld [vmem:[%s1870 + $0xa8] sm:$0xf]
  %v1914 = vld [vmem:[%s1870 + $0xac] sm:$0xf]
  %v1915 = vld [vmem:[%s1870 + $0xb0] sm:$0xf]
  %v1916 = vld [vmem:[%s1870 + $0xb4] sm:$0xf]
  %v1917 = vld [vmem:[%s1870 + $0xb8] sm:$0xf]
  %v1918 = vld [vmem:[%s1870 + $0xbc] sm:$0xf]
  %v1919 = vld [vmem:[%s1870 + $0xc0] sm:$0xf]
  %v1920 = vld [vmem:[%s1870 + $0xc4] sm:$0xf]
  %v1921 = vld [vmem:[%s1870 + $0xc8] sm:$0xf]
  %v1922 = vld [vmem:[%s1870 + $0xcc] sm:$0xf]
  %v1923 = vld [vmem:[%s1870 + $0xd0] sm:$0xf]
  %v1924 = vld [vmem:[%s1870 + $0xd4] sm:$0xf]
  %v1925 = vld [vmem:[%s1870 + $0xd8] sm:$0xf]
  %v1926 = vld [vmem:[%s1870 + $0xdc] sm:$0xf]
  %v1927 = vld [vmem:[%s1870 + $0xe0] sm:$0xf]
  %v1928 = vld [vmem:[%s1870 + $0xe4] sm:$0xf]
  %v1929 = vld [vmem:[%s1870 + $0xe8] sm:$0xf]
  %v1930 = vld [vmem:[%s1870 + $0xec] sm:$0xf]
  %v1931 = vld [vmem:[%s1870 + $0xf0] sm:$0xf]
  %v1932 = vld [vmem:[%s1870 + $0xf4] sm:$0xf]
  %v1933 = vld [vmem:[%s1870 + $0xf8] sm:$0xf]
  %v1934 = vld [vmem:[%s1870 + $0xfc] sm:$0xf]
  %v1999 = vunpack.c.l.b16 %v1871
  %v2000 = vunpack.c.l.b16 %v1872
  %v2001 = vunpack.c.l.b16 %v1873
  %v2002 = vunpack.c.l.b16 %v1874
  %v2003 = vunpack.c.l.b16 %v1875
  %v2004 = vunpack.c.l.b16 %v1876
  %v2005 = vunpack.c.l.b16 %v1877
  %v2006 = vunpack.c.l.b16 %v1878
  %v2007 = vunpack.c.l.b16 %v1879
  %v2008 = vunpack.c.l.b16 %v1880
  %v2009 = vunpack.c.l.b16 %v1881
  %v2010 = vunpack.c.l.b16 %v1882
  %v2011 = vunpack.c.l.b16 %v1883
  %v2012 = vunpack.c.l.b16 %v1884
  %v2013 = vunpack.c.l.b16 %v1885
  %v2014 = vunpack.c.l.b16 %v1886
  %v2015 = vunpack.c.l.b16 %v1887
  %v2016 = vunpack.c.l.b16 %v1888
  %v2017 = vunpack.c.l.b16 %v1889
  %v2018 = vunpack.c.l.b16 %v1890
  %v2019 = vunpack.c.l.b16 %v1891
  %v2020 = vunpack.c.l.b16 %v1892
  %v2021 = vunpack.c.l.b16 %v1893
  %v2022 = vunpack.c.l.b16 %v1894
  %v2023 = vunpack.c.l.b16 %v1895
  %v2024 = vunpack.c.l.b16 %v1896
  %v2025 = vunpack.c.l.b16 %v1897
  %v2026 = vunpack.c.l.b16 %v1898
  %v2027 = vunpack.c.l.b16 %v1899
  %v2028 = vunpack.c.l.b16 %v1900
  %v2029 = vunpack.c.l.b16 %v1901
  %v2030 = vunpack.c.l.b16 %v1902
  %v2031 = vunpack.c.l.b16 %v1903
  %v2032 = vunpack.c.l.b16 %v1904
  %v2033 = vunpack.c.l.b16 %v1905
  %v2034 = vunpack.c.l.b16 %v1906
  %v2035 = vunpack.c.l.b16 %v1907
  %v2036 = vunpack.c.l.b16 %v1908
  %v2037 = vunpack.c.l.b16 %v1909
  %v2038 = vunpack.c.l.b16 %v1910
  %v2039 = vunpack.c.l.b16 %v1911
  %v2040 = vunpack.c.l.b16 %v1912
  %v2041 = vunpack.c.l.b16 %v1913
  %v2042 = vunpack.c.l.b16 %v1914
  %v2043 = vunpack.c.l.b16 %v1915
  %v2044 = vunpack.c.l.b16 %v1916
  %v2045 = vunpack.c.l.b16 %v1917
  %v2046 = vunpack.c.l.b16 %v1918
  %v2047 = vunpack.c.l.b16 %v1919
  %v2048 = vunpack.c.l.b16 %v1920
  %v2049 = vunpack.c.l.b16 %v1921
  %v2050 = vunpack.c.l.b16 %v1922
  %v2051 = vunpack.c.l.b16 %v1923
  %v2052 = vunpack.c.l.b16 %v1924
  %v2053 = vunpack.c.l.b16 %v1925
  %v2054 = vunpack.c.l.b16 %v1926
  %v2055 = vunpack.c.l.b16 %v1927
  %v2056 = vunpack.c.l.b16 %v1928
  %v2057 = vunpack.c.l.b16 %v1929
  %v2058 = vunpack.c.l.b16 %v1930
  %v2059 = vunpack.c.l.b16 %v1931
  %v2060 = vunpack.c.l.b16 %v1932
  %v2061 = vunpack.c.l.b16 %v1933
  %v2062 = vunpack.c.l.b16 %v1934
  %v2063 = vpack.c.b16 %v2000, %v1999
  %v2064 = vpack.c.b16 %v2002, %v2001
  %v2065 = vpack.c.b16 %v2004, %v2003
  %v2066 = vpack.c.b16 %v2006, %v2005
  %v2067 = vpack.c.b16 %v2008, %v2007
  %v2068 = vpack.c.b16 %v2010, %v2009
  %v2069 = vpack.c.b16 %v2012, %v2011
  %v2070 = vpack.c.b16 %v2014, %v2013
  %v2071 = vpack.c.b16 %v2016, %v2015
  %v2072 = vpack.c.b16 %v2018, %v2017
  %v2073 = vpack.c.b16 %v2020, %v2019
  %v2074 = vpack.c.b16 %v2022, %v2021
  %v2075 = vpack.c.b16 %v2024, %v2023
  %v2076 = vpack.c.b16 %v2026, %v2025
  %v2077 = vpack.c.b16 %v2028, %v2027
  %v2078 = vpack.c.b16 %v2030, %v2029
  %v2079 = vpack.c.b16 %v2032, %v2031
  %v2080 = vpack.c.b16 %v2034, %v2033
  %v2081 = vpack.c.b16 %v2036, %v2035
  %v2082 = vpack.c.b16 %v2038, %v2037
  %v2083 = vpack.c.b16 %v2040, %v2039
  %v2084 = vpack.c.b16 %v2042, %v2041
  %v2085 = vpack.c.b16 %v2044, %v2043
  %v2086 = vpack.c.b16 %v2046, %v2045
  %v2087 = vpack.c.b16 %v2048, %v2047
  %v2088 = vpack.c.b16 %v2050, %v2049
  %v2089 = vpack.c.b16 %v2052, %v2051
  %v2090 = vpack.c.b16 %v2054, %v2053
  %v2091 = vpack.c.b16 %v2056, %v2055
  %v2092 = vpack.c.b16 %v2058, %v2057
  %v2093 = vpack.c.b16 %v2060, %v2059
  %v2094 = vpack.c.b16 %v2062, %v2061
  %2127 = vmatprep.subr.bf16.mxu0 0
  %2128 = vmatpush1.bf16.msra.mxu0 %v2063
  %2129 = vmatprep.subr.bf16.mxu0 0
  %2130 = vmatpush1.bf16.msra.mxu0 %v2064
  %2131 = vmatprep.subr.bf16.mxu0 0
  %2132 = vmatpush1.bf16.msra.mxu0 %v2065
  %2133 = vmatprep.subr.bf16.mxu0 0
  %2134 = vmatpush1.bf16.msra.mxu0 %v2066
  %2135 = vmatprep.subr.bf16.mxu0 0
  %2136 = vmatpush1.bf16.msra.mxu0 %v2067
  %2137 = vmatprep.subr.bf16.mxu0 0
  %2138 = vmatpush1.bf16.msra.mxu0 %v2068
  %2139 = vmatprep.subr.bf16.mxu0 0
  %2140 = vmatpush1.bf16.msra.mxu0 %v2069
  %2141 = vmatprep.subr.bf16.mxu0 0
  %2142 = vmatpush1.bf16.msra.mxu0 %v2070
  %2143 = vmatprep.subr.bf16.mxu0 0
  %2144 = vmatpush1.bf16.msra.mxu0 %v2071
  %2145 = vmatprep.subr.bf16.mxu0 0
  %2146 = vmatpush1.bf16.msra.mxu0 %v2072
  %2147 = vmatprep.subr.bf16.mxu0 0
  %2148 = vmatpush1.bf16.msra.mxu0 %v2073
  %2149 = vmatprep.subr.bf16.mxu0 0
  %2150 = vmatpush1.bf16.msra.mxu0 %v2074
  %2151 = vmatprep.subr.bf16.mxu0 0
  %2152 = vmatpush1.bf16.msra.mxu0 %v2075
  %2153 = vmatprep.subr.bf16.mxu0 0
  %2154 = vmatpush1.bf16.msra.mxu0 %v2076
  %2155 = vmatprep.subr.bf16.mxu0 0
  %2156 = vmatpush1.bf16.msra.mxu0 %v2077
  %2157 = vmatprep.subr.bf16.mxu0 0
  %2158 = vmatpush1.bf16.msra.mxu0 %v2078
  %2159 = vmatprep.mubr.bf16.mxu0 %v857
  %2160 = vmatmul.mubr.bf16.gmra.mrb[0].mxu0 %v856
  %v2161 = vpop.f32.mrb[0].mxu0
  %v2162 = vadd.f32 0.0, %v2161
  %v2163 = vpop.f32.mrb[0].mxu0
  %v2164 = vpop.f32.mrb[0].mxu0
  %v2165 = vpop.f32.mrb[0].mxu0
  %2166 = vdwg.mxu0
  %2167 = vmatprep.subr.bf16.mxu0 0
  %2168 = vmatpush1.bf16.msra.mxu0 %v2079
  %2169 = vmatprep.subr.bf16.mxu0 0
  %2170 = vmatpush1.bf16.msra.mxu0 %v2080
  %2171 = vmatprep.subr.bf16.mxu0 0
  %2172 = vmatpush1.bf16.msra.mxu0 %v2081
  %2173 = vmatprep.subr.bf16.mxu0 0
  %2174 = vmatpush1.bf16.msra.mxu0 %v2082
  %2175 = vmatprep.subr.bf16.mxu0 0
  %2176 = vmatpush1.bf16.msra.mxu0 %v2083
  %2177 = vmatprep.subr.bf16.mxu0 0
  %2178 = vmatpush1.bf16.msra.mxu0 %v2084
  %2179 = vmatprep.subr.bf16.mxu0 0
  %2180 = vmatpush1.bf16.msra.mxu0 %v2085
  %2181 = vmatprep.subr.bf16.mxu0 0
  %2182 = vmatpush1.bf16.msra.mxu0 %v2086
  %2183 = vmatprep.subr.bf16.mxu0 0
  %2184 = vmatpush1.bf16.msra.mxu0 %v2087
  %2185 = vmatprep.subr.bf16.mxu0 0
  %2186 = vmatpush1.bf16.msra.mxu0 %v2088
  %2187 = vmatprep.subr.bf16.mxu0 0
  %2188 = vmatpush1.bf16.msra.mxu0 %v2089
  %2189 = vmatprep.subr.bf16.mxu0 0
  %2190 = vmatpush1.bf16.msra.mxu0 %v2090
  %2191 = vmatprep.subr.bf16.mxu0 0
  %2192 = vmatpush1.bf16.msra.mxu0 %v2091
  %2193 = vmatprep.subr.bf16.mxu0 0
  %2194 = vmatpush1.bf16.msra.mxu0 %v2092
  %2195 = vmatprep.subr.bf16.mxu0 0
  %2196 = vmatpush1.bf16.msra.mxu0 %v2093
  %2197 = vmatprep.subr.bf16.mxu0 0
  %2198 = vmatpush1.bf16.msra.mxu0 %v2094
  %2199 = vmatprep.mubr.bf16.mxu0 %v859
  %2200 = vmatmul.mubr.bf16.gmra.mrb[0].mxu0 %v858
  %v2201 = vpop.f32.mrb[0].mxu0
  %v2202 = vadd.f32 %v2162, %v2201
  %v2203 = vpop.f32.mrb[0].mxu0
  %v2204 = vpop.f32.mrb[0].mxu0
  %v2205 = vpop.f32.mrb[0].mxu0
  %2206 = vdwg.mxu0
  %s2207 = scalar_lea.vmem %s7, 1024
  %v2208 = vld [vmem:[%s2207] sm:$0xf]
  %v2209 = vld [vmem:[%s2207 + $0x4] sm:$0xf]
  %v2210 = vld [vmem:[%s2207 + $0x8] sm:$0xf]
  %v2211 = vld [vmem:[%s2207 + $0xc] sm:$0xf]
  %v2212 = vld [vmem:[%s2207 + $0x10] sm:$0xf]
  %v2213 = vld [vmem:[%s2207 + $0x14] sm:$0xf]
  %v2214 = vld [vmem:[%s2207 + $0x18] sm:$0xf]
  %v2215 = vld [vmem:[%s2207 + $0x1c] sm:$0xf]
  %v2216 = vld [vmem:[%s2207 + $0x20] sm:$0xf]
  %v2217 = vld [vmem:[%s2207 + $0x24] sm:$0xf]
  %v2218 = vld [vmem:[%s2207 + $0x28] sm:$0xf]
  %v2219 = vld [vmem:[%s2207 + $0x2c] sm:$0xf]
  %v2220 = vld [vmem:[%s2207 + $0x30] sm:$0xf]
  %v2221 = vld [vmem:[%s2207 + $0x34] sm:$0xf]
  %v2222 = vld [vmem:[%s2207 + $0x38] sm:$0xf]
  %v2223 = vld [vmem:[%s2207 + $0x3c] sm:$0xf]
  %v2224 = vld [vmem:[%s2207 + $0x40] sm:$0xf]
  %v2225 = vld [vmem:[%s2207 + $0x44] sm:$0xf]
  %v2226 = vld [vmem:[%s2207 + $0x48] sm:$0xf]
  %v2227 = vld [vmem:[%s2207 + $0x4c] sm:$0xf]
  %v2228 = vld [vmem:[%s2207 + $0x50] sm:$0xf]
  %v2229 = vld [vmem:[%s2207 + $0x54] sm:$0xf]
  %v2230 = vld [vmem:[%s2207 + $0x58] sm:$0xf]
  %v2231 = vld [vmem:[%s2207 + $0x5c] sm:$0xf]
  %v2232 = vld [vmem:[%s2207 + $0x60] sm:$0xf]
  %v2233 = vld [vmem:[%s2207 + $0x64] sm:$0xf]
  %v2234 = vld [vmem:[%s2207 + $0x68] sm:$0xf]
  %v2235 = vld [vmem:[%s2207 + $0x6c] sm:$0xf]
  %v2236 = vld [vmem:[%s2207 + $0x70] sm:$0xf]
  %v2237 = vld [vmem:[%s2207 + $0x74] sm:$0xf]
  %v2238 = vld [vmem:[%s2207 + $0x78] sm:$0xf]
  %v2239 = vld [vmem:[%s2207 + $0x7c] sm:$0xf]
  %v2240 = vld [vmem:[%s2207 + $0x80] sm:$0xf]
  %v2241 = vld [vmem:[%s2207 + $0x84] sm:$0xf]
  %v2242 = vld [vmem:[%s2207 + $0x88] sm:$0xf]
  %v2243 = vld [vmem:[%s2207 + $0x8c] sm:$0xf]
  %v2244 = vld [vmem:[%s2207 + $0x90] sm:$0xf]
  %v2245 = vld [vmem:[%s2207 + $0x94] sm:$0xf]
  %v2246 = vld [vmem:[%s2207 + $0x98] sm:$0xf]
  %v2247 = vld [vmem:[%s2207 + $0x9c] sm:$0xf]
  %v2248 = vld [vmem:[%s2207 + $0xa0] sm:$0xf]
  %v2249 = vld [vmem:[%s2207 + $0xa4] sm:$0xf]
  %v2250 = vld [vmem:[%s2207 + $0xa8] sm:$0xf]
  %v2251 = vld [vmem:[%s2207 + $0xac] sm:$0xf]
  %v2252 = vld [vmem:[%s2207 + $0xb0] sm:$0xf]
  %v2253 = vld [vmem:[%s2207 + $0xb4] sm:$0xf]
  %v2254 = vld [vmem:[%s2207 + $0xb8] sm:$0xf]
  %v2255 = vld [vmem:[%s2207 + $0xbc] sm:$0xf]
  %v2256 = vld [vmem:[%s2207 + $0xc0] sm:$0xf]
  %v2257 = vld [vmem:[%s2207 + $0xc4] sm:$0xf]
  %v2258 = vld [vmem:[%s2207 + $0xc8] sm:$0xf]
  %v2259 = vld [vmem:[%s2207 + $0xcc] sm:$0xf]
  %v2260 = vld [vmem:[%s2207 + $0xd0] sm:$0xf]
  %v2261 = vld [vmem:[%s2207 + $0xd4] sm:$0xf]
  %v2262 = vld [vmem:[%s2207 + $0xd8] sm:$0xf]
  %v2263 = vld [vmem:[%s2207 + $0xdc] sm:$0xf]
  %v2264 = vld [vmem:[%s2207 + $0xe0] sm:$0xf]
  %v2265 = vld [vmem:[%s2207 + $0xe4] sm:$0xf]
  %v2266 = vld [vmem:[%s2207 + $0xe8] sm:$0xf]
  %v2267 = vld [vmem:[%s2207 + $0xec] sm:$0xf]
  %v2268 = vld [vmem:[%s2207 + $0xf0] sm:$0xf]
  %v2269 = vld [vmem:[%s2207 + $0xf4] sm:$0xf]
  %v2270 = vld [vmem:[%s2207 + $0xf8] sm:$0xf]
  %v2271 = vld [vmem:[%s2207 + $0xfc] sm:$0xf]
  %v2336 = vunpack.c.l.b16 %v2208
  %v2337 = vunpack.c.l.b16 %v2209
  %v2338 = vunpack.c.l.b16 %v2210
  %v2339 = vunpack.c.l.b16 %v2211
  %v2340 = vunpack.c.l.b16 %v2212
  %v2341 = vunpack.c.l.b16 %v2213
  %v2342 = vunpack.c.l.b16 %v2214
  %v2343 = vunpack.c.l.b16 %v2215
  %v2344 = vunpack.c.l.b16 %v2216
  %v2345 = vunpack.c.l.b16 %v2217
  %v2346 = vunpack.c.l.b16 %v2218
  %v2347 = vunpack.c.l.b16 %v2219
  %v2348 = vunpack.c.l.b16 %v2220
  %v2349 = vunpack.c.l.b16 %v2221
  %v2350 = vunpack.c.l.b16 %v2222
  %v2351 = vunpack.c.l.b16 %v2223
  %v2352 = vunpack.c.l.b16 %v2224
  %v2353 = vunpack.c.l.b16 %v2225
  %v2354 = vunpack.c.l.b16 %v2226
  %v2355 = vunpack.c.l.b16 %v2227
  %v2356 = vunpack.c.l.b16 %v2228
  %v2357 = vunpack.c.l.b16 %v2229
  %v2358 = vunpack.c.l.b16 %v2230
  %v2359 = vunpack.c.l.b16 %v2231
  %v2360 = vunpack.c.l.b16 %v2232
  %v2361 = vunpack.c.l.b16 %v2233
  %v2362 = vunpack.c.l.b16 %v2234
  %v2363 = vunpack.c.l.b16 %v2235
  %v2364 = vunpack.c.l.b16 %v2236
  %v2365 = vunpack.c.l.b16 %v2237
  %v2366 = vunpack.c.l.b16 %v2238
  %v2367 = vunpack.c.l.b16 %v2239
  %v2368 = vunpack.c.l.b16 %v2240
  %v2369 = vunpack.c.l.b16 %v2241
  %v2370 = vunpack.c.l.b16 %v2242
  %v2371 = vunpack.c.l.b16 %v2243
  %v2372 = vunpack.c.l.b16 %v2244
  %v2373 = vunpack.c.l.b16 %v2245
  %v2374 = vunpack.c.l.b16 %v2246
  %v2375 = vunpack.c.l.b16 %v2247
  %v2376 = vunpack.c.l.b16 %v2248
  %v2377 = vunpack.c.l.b16 %v2249
  %v2378 = vunpack.c.l.b16 %v2250
  %v2379 = vunpack.c.l.b16 %v2251
  %v2380 = vunpack.c.l.b16 %v2252
  %v2381 = vunpack.c.l.b16 %v2253
  %v2382 = vunpack.c.l.b16 %v2254
  %v2383 = vunpack.c.l.b16 %v2255
  %v2384 = vunpack.c.l.b16 %v2256
  %v2385 = vunpack.c.l.b16 %v2257
  %v2386 = vunpack.c.l.b16 %v2258
  %v2387 = vunpack.c.l.b16 %v2259
  %v2388 = vunpack.c.l.b16 %v2260
  %v2389 = vunpack.c.l.b16 %v2261
  %v2390 = vunpack.c.l.b16 %v2262
  %v2391 = vunpack.c.l.b16 %v2263
  %v2392 = vunpack.c.l.b16 %v2264
  %v2393 = vunpack.c.l.b16 %v2265
  %v2394 = vunpack.c.l.b16 %v2266
  %v2395 = vunpack.c.l.b16 %v2267
  %v2396 = vunpack.c.l.b16 %v2268
  %v2397 = vunpack.c.l.b16 %v2269
  %v2398 = vunpack.c.l.b16 %v2270
  %v2399 = vunpack.c.l.b16 %v2271
  %v2400 = vpack.c.b16 %v2337, %v2336
  %v2401 = vpack.c.b16 %v2339, %v2338
  %v2402 = vpack.c.b16 %v2341, %v2340
  %v2403 = vpack.c.b16 %v2343, %v2342
  %v2404 = vpack.c.b16 %v2345, %v2344
  %v2405 = vpack.c.b16 %v2347, %v2346
  %v2406 = vpack.c.b16 %v2349, %v2348
  %v2407 = vpack.c.b16 %v2351, %v2350
  %v2408 = vpack.c.b16 %v2353, %v2352
  %v2409 = vpack.c.b16 %v2355, %v2354
  %v2410 = vpack.c.b16 %v2357, %v2356
  %v2411 = vpack.c.b16 %v2359, %v2358
  %v2412 = vpack.c.b16 %v2361, %v2360
  %v2413 = vpack.c.b16 %v2363, %v2362
  %v2414 = vpack.c.b16 %v2365, %v2364
  %v2415 = vpack.c.b16 %v2367, %v2366
  %v2416 = vpack.c.b16 %v2369, %v2368
  %v2417 = vpack.c.b16 %v2371, %v2370
  %v2418 = vpack.c.b16 %v2373, %v2372
  %v2419 = vpack.c.b16 %v2375, %v2374
  %v2420 = vpack.c.b16 %v2377, %v2376
  %v2421 = vpack.c.b16 %v2379, %v2378
  %v2422 = vpack.c.b16 %v2381, %v2380
  %v2423 = vpack.c.b16 %v2383, %v2382
  %v2424 = vpack.c.b16 %v2385, %v2384
  %v2425 = vpack.c.b16 %v2387, %v2386
  %v2426 = vpack.c.b16 %v2389, %v2388
  %v2427 = vpack.c.b16 %v2391, %v2390
  %v2428 = vpack.c.b16 %v2393, %v2392
  %v2429 = vpack.c.b16 %v2395, %v2394
  %v2430 = vpack.c.b16 %v2397, %v2396
  %v2431 = vpack.c.b16 %v2399, %v2398
  %2464 = vmatprep.subr.bf16.mxu0 0
  %2465 = vmatpush1.bf16.msra.mxu0 %v2400
  %2466 = vmatprep.subr.bf16.mxu0 0
  %2467 = vmatpush1.bf16.msra.mxu0 %v2401
  %2468 = vmatprep.subr.bf16.mxu0 0
  %2469 = vmatpush1.bf16.msra.mxu0 %v2402
  %2470 = vmatprep.subr.bf16.mxu0 0
  %2471 = vmatpush1.bf16.msra.mxu0 %v2403
  %2472 = vmatprep.subr.bf16.mxu0 0
  %2473 = vmatpush1.bf16.msra.mxu0 %v2404
  %2474 = vmatprep.subr.bf16.mxu0 0
  %2475 = vmatpush1.bf16.msra.mxu0 %v2405
  %2476 = vmatprep.subr.bf16.mxu0 0
  %2477 = vmatpush1.bf16.msra.mxu0 %v2406
  %2478 = vmatprep.subr.bf16.mxu0 0
  %2479 = vmatpush1.bf16.msra.mxu0 %v2407
  %2480 = vmatprep.subr.bf16.mxu0 0
  %2481 = vmatpush1.bf16.msra.mxu0 %v2408
  %2482 = vmatprep.subr.bf16.mxu0 0
  %2483 = vmatpush1.bf16.msra.mxu0 %v2409
  %2484 = vmatprep.subr.bf16.mxu0 0
  %2485 = vmatpush1.bf16.msra.mxu0 %v2410
  %2486 = vmatprep.subr.bf16.mxu0 0
  %2487 = vmatpush1.bf16.msra.mxu0 %v2411
  %2488 = vmatprep.subr.bf16.mxu0 0
  %2489 = vmatpush1.bf16.msra.mxu0 %v2412
  %2490 = vmatprep.subr.bf16.mxu0 0
  %2491 = vmatpush1.bf16.msra.mxu0 %v2413
  %2492 = vmatprep.subr.bf16.mxu0 0
  %2493 = vmatpush1.bf16.msra.mxu0 %v2414
  %2494 = vmatprep.subr.bf16.mxu0 0
  %2495 = vmatpush1.bf16.msra.mxu0 %v2415
  %2496 = vmatprep.mubr.bf16.mxu0 %v857
  %2497 = vmatmul.mubr.bf16.gmra.mrb[0].mxu0 %v856
  %v2498 = vpop.f32.mrb[0].mxu0
  %v2499 = vadd.f32 0.0, %v2498
  %v2500 = vpop.f32.mrb[0].mxu0
  %v2501 = vpop.f32.mrb[0].mxu0
  %v2502 = vpop.f32.mrb[0].mxu0
  %2503 = vdwg.mxu0
  %2504 = vmatprep.subr.bf16.mxu0 0
  %2505 = vmatpush1.bf16.msra.mxu0 %v2416
  %2506 = vmatprep.subr.bf16.mxu0 0
  %2507 = vmatpush1.bf16.msra.mxu0 %v2417
  %2508 = vmatprep.subr.bf16.mxu0 0
  %2509 = vmatpush1.bf16.msra.mxu0 %v2418
  %2510 = vmatprep.subr.bf16.mxu0 0
  %2511 = vmatpush1.bf16.msra.mxu0 %v2419
  %2512 = vmatprep.subr.bf16.mxu0 0
  %2513 = vmatpush1.bf16.msra.mxu0 %v2420
  %2514 = vmatprep.subr.bf16.mxu0 0
  %2515 = vmatpush1.bf16.msra.mxu0 %v2421
  %2516 = vmatprep.subr.bf16.mxu0 0
  %2517 = vmatpush1.bf16.msra.mxu0 %v2422
  %2518 = vmatprep.subr.bf16.mxu0 0
  %2519 = vmatpush1.bf16.msra.mxu0 %v2423
  %2520 = vmatprep.subr.bf16.mxu0 0
  %2521 = vmatpush1.bf16.msra.mxu0 %v2424
  %2522 = vmatprep.subr.bf16.mxu0 0
  %2523 = vmatpush1.bf16.msra.mxu0 %v2425
  %2524 = vmatprep.subr.bf16.mxu0 0
  %2525 = vmatpush1.bf16.msra.mxu0 %v2426
  %2526 = vmatprep.subr.bf16.mxu0 0
  %2527 = vmatpush1.bf16.msra.mxu0 %v2427
  %2528 = vmatprep.subr.bf16.mxu0 0
  %2529 = vmatpush1.bf16.msra.mxu0 %v2428
  %2530 = vmatprep.subr.bf16.mxu0 0
  %2531 = vmatpush1.bf16.msra.mxu0 %v2429
  %2532 = vmatprep.subr.bf16.mxu0 0
  %2533 = vmatpush1.bf16.msra.mxu0 %v2430
  %2534 = vmatprep.subr.bf16.mxu0 0
  %2535 = vmatpush1.bf16.msra.mxu0 %v2431
  %2536 = vmatprep.mubr.bf16.mxu0 %v859
  %2537 = vmatmul.mubr.bf16.gmra.mrb[0].mxu0 %v858
  %v2538 = vpop.f32.mrb[0].mxu0
  %v2539 = vadd.f32 %v2499, %v2538
  %v2540 = vpop.f32.mrb[0].mxu0
  %v2541 = vpop.f32.mrb[0].mxu0
  %v2542 = vpop.f32.mrb[0].mxu0
  %2543 = vdwg.mxu0
  %s2544 = scalar_lea.vmem %s7, 1280
  %v2545 = vld [vmem:[%s2544] sm:$0xf]
  %v2546 = vld [vmem:[%s2544 + $0x4] sm:$0xf]
  %v2547 = vld [vmem:[%s2544 + $0x8] sm:$0xf]
  %v2548 = vld [vmem:[%s2544 + $0xc] sm:$0xf]
  %v2549 = vld [vmem:[%s2544 + $0x10] sm:$0xf]
  %v2550 = vld [vmem:[%s2544 + $0x14] sm:$0xf]
  %v2551 = vld [vmem:[%s2544 + $0x18] sm:$0xf]
  %v2552 = vld [vmem:[%s2544 + $0x1c] sm:$0xf]
  %v2553 = vld [vmem:[%s2544 + $0x20] sm:$0xf]
  %v2554 = vld [vmem:[%s2544 + $0x24] sm:$0xf]
  %v2555 = vld [vmem:[%s2544 + $0x28] sm:$0xf]
  %v2556 = vld [vmem:[%s2544 + $0x2c] sm:$0xf]
  %v2557 = vld [vmem:[%s2544 + $0x30] sm:$0xf]
  %v2558 = vld [vmem:[%s2544 + $0x34] sm:$0xf]
  %v2559 = vld [vmem:[%s2544 + $0x38] sm:$0xf]
  %v2560 = vld [vmem:[%s2544 + $0x3c] sm:$0xf]
  %v2561 = vld [vmem:[%s2544 + $0x40] sm:$0xf]
  %v2562 = vld [vmem:[%s2544 + $0x44] sm:$0xf]
  %v2563 = vld [vmem:[%s2544 + $0x48] sm:$0xf]
  %v2564 = vld [vmem:[%s2544 + $0x4c] sm:$0xf]
  %v2565 = vld [vmem:[%s2544 + $0x50] sm:$0xf]
  %v2566 = vld [vmem:[%s2544 + $0x54] sm:$0xf]
  %v2567 = vld [vmem:[%s2544 + $0x58] sm:$0xf]
  %v2568 = vld [vmem:[%s2544 + $0x5c] sm:$0xf]
  %v2569 = vld [vmem:[%s2544 + $0x60] sm:$0xf]
  %v2570 = vld [vmem:[%s2544 + $0x64] sm:$0xf]
  %v2571 = vld [vmem:[%s2544 + $0x68] sm:$0xf]
  %v2572 = vld [vmem:[%s2544 + $0x6c] sm:$0xf]
  %v2573 = vld [vmem:[%s2544 + $0x70] sm:$0xf]
  %v2574 = vld [vmem:[%s2544 + $0x74] sm:$0xf]
  %v2575 = vld [vmem:[%s2544 + $0x78] sm:$0xf]
  %v2576 = vld [vmem:[%s2544 + $0x7c] sm:$0xf]
  %v2577 = vld [vmem:[%s2544 + $0x80] sm:$0xf]
  %v2578 = vld [vmem:[%s2544 + $0x84] sm:$0xf]
  %v2579 = vld [vmem:[%s2544 + $0x88] sm:$0xf]
  %v2580 = vld [vmem:[%s2544 + $0x8c] sm:$0xf]
  %v2581 = vld [vmem:[%s2544 + $0x90] sm:$0xf]
  %v2582 = vld [vmem:[%s2544 + $0x94] sm:$0xf]
  %v2583 = vld [vmem:[%s2544 + $0x98] sm:$0xf]
  %v2584 = vld [vmem:[%s2544 + $0x9c] sm:$0xf]
  %v2585 = vld [vmem:[%s2544 + $0xa0] sm:$0xf]
  %v2586 = vld [vmem:[%s2544 + $0xa4] sm:$0xf]
  %v2587 = vld [vmem:[%s2544 + $0xa8] sm:$0xf]
  %v2588 = vld [vmem:[%s2544 + $0xac] sm:$0xf]
  %v2589 = vld [vmem:[%s2544 + $0xb0] sm:$0xf]
  %v2590 = vld [vmem:[%s2544 + $0xb4] sm:$0xf]
  %v2591 = vld [vmem:[%s2544 + $0xb8] sm:$0xf]
  %v2592 = vld [vmem:[%s2544 + $0xbc] sm:$0xf]
  %v2593 = vld [vmem:[%s2544 + $0xc0] sm:$0xf]
  %v2594 = vld [vmem:[%s2544 + $0xc4] sm:$0xf]
  %v2595 = vld [vmem:[%s2544 + $0xc8] sm:$0xf]
  %v2596 = vld [vmem:[%s2544 + $0xcc] sm:$0xf]
  %v2597 = vld [vmem:[%s2544 + $0xd0] sm:$0xf]
  %v2598 = vld [vmem:[%s2544 + $0xd4] sm:$0xf]
  %v2599 = vld [vmem:[%s2544 + $0xd8] sm:$0xf]
  %v2600 = vld [vmem:[%s2544 + $0xdc] sm:$0xf]
  %v2601 = vld [vmem:[%s2544 + $0xe0] sm:$0xf]
  %v2602 = vld [vmem:[%s2544 + $0xe4] sm:$0xf]
  %v2603 = vld [vmem:[%s2544 + $0xe8] sm:$0xf]
  %v2604 = vld [vmem:[%s2544 + $0xec] sm:$0xf]
  %v2605 = vld [vmem:[%s2544 + $0xf0] sm:$0xf]
  %v2606 = vld [vmem:[%s2544 + $0xf4] sm:$0xf]
  %v2607 = vld [vmem:[%s2544 + $0xf8] sm:$0xf]
  %v2608 = vld [vmem:[%s2544 + $0xfc] sm:$0xf]
  %v2673 = vunpack.c.l.b16 %v2545
  %v2674 = vunpack.c.l.b16 %v2546
  %v2675 = vunpack.c.l.b16 %v2547
  %v2676 = vunpack.c.l.b16 %v2548
  %v2677 = vunpack.c.l.b16 %v2549
  %v2678 = vunpack.c.l.b16 %v2550
  %v2679 = vunpack.c.l.b16 %v2551
  %v2680 = vunpack.c.l.b16 %v2552
  %v2681 = vunpack.c.l.b16 %v2553
  %v2682 = vunpack.c.l.b16 %v2554
  %v2683 = vunpack.c.l.b16 %v2555
  %v2684 = vunpack.c.l.b16 %v2556
  %v2685 = vunpack.c.l.b16 %v2557
  %v2686 = vunpack.c.l.b16 %v2558
  %v2687 = vunpack.c.l.b16 %v2559
  %v2688 = vunpack.c.l.b16 %v2560
  %v2689 = vunpack.c.l.b16 %v2561
  %v2690 = vunpack.c.l.b16 %v2562
  %v2691 = vunpack.c.l.b16 %v2563
  %v2692 = vunpack.c.l.b16 %v2564
  %v2693 = vunpack.c.l.b16 %v2565
  %v2694 = vunpack.c.l.b16 %v2566
  %v2695 = vunpack.c.l.b16 %v2567
  %v2696 = vunpack.c.l.b16 %v2568
  %v2697 = vunpack.c.l.b16 %v2569
  %v2698 = vunpack.c.l.b16 %v2570
  %v2699 = vunpack.c.l.b16 %v2571
  %v2700 = vunpack.c.l.b16 %v2572
  %v2701 = vunpack.c.l.b16 %v2573
  %v2702 = vunpack.c.l.b16 %v2574
  %v2703 = vunpack.c.l.b16 %v2575
  %v2704 = vunpack.c.l.b16 %v2576
  %v2705 = vunpack.c.l.b16 %v2577
  %v2706 = vunpack.c.l.b16 %v2578
  %v2707 = vunpack.c.l.b16 %v2579
  %v2708 = vunpack.c.l.b16 %v2580
  %v2709 = vunpack.c.l.b16 %v2581
  %v2710 = vunpack.c.l.b16 %v2582
  %v2711 = vunpack.c.l.b16 %v2583
  %v2712 = vunpack.c.l.b16 %v2584
  %v2713 = vunpack.c.l.b16 %v2585
  %v2714 = vunpack.c.l.b16 %v2586
  %v2715 = vunpack.c.l.b16 %v2587
  %v2716 = vunpack.c.l.b16 %v2588
  %v2717 = vunpack.c.l.b16 %v2589
  %v2718 = vunpack.c.l.b16 %v2590
  %v2719 = vunpack.c.l.b16 %v2591
  %v2720 = vunpack.c.l.b16 %v2592
  %v2721 = vunpack.c.l.b16 %v2593
  %v2722 = vunpack.c.l.b16 %v2594
  %v2723 = vunpack.c.l.b16 %v2595
  %v2724 = vunpack.c.l.b16 %v2596
  %v2725 = vunpack.c.l.b16 %v2597
  %v2726 = vunpack.c.l.b16 %v2598
  %v2727 = vunpack.c.l.b16 %v2599
  %v2728 = vunpack.c.l.b16 %v2600
  %v2729 = vunpack.c.l.b16 %v2601
  %v2730 = vunpack.c.l.b16 %v2602
  %v2731 = vunpack.c.l.b16 %v2603
  %v2732 = vunpack.c.l.b16 %v2604
  %v2733 = vunpack.c.l.b16 %v2605
  %v2734 = vunpack.c.l.b16 %v2606
  %v2735 = vunpack.c.l.b16 %v2607
  %v2736 = vunpack.c.l.b16 %v2608
  %v2737 = vpack.c.b16 %v2674, %v2673
  %v2738 = vpack.c.b16 %v2676, %v2675
  %v2739 = vpack.c.b16 %v2678, %v2677
  %v2740 = vpack.c.b16 %v2680, %v2679
  %v2741 = vpack.c.b16 %v2682, %v2681
  %v2742 = vpack.c.b16 %v2684, %v2683
  %v2743 = vpack.c.b16 %v2686, %v2685
  %v2744 = vpack.c.b16 %v2688, %v2687
  %v2745 = vpack.c.b16 %v2690, %v2689
  %v2746 = vpack.c.b16 %v2692, %v2691
  %v2747 = vpack.c.b16 %v2694, %v2693
  %v2748 = vpack.c.b16 %v2696, %v2695
  %v2749 = vpack.c.b16 %v2698, %v2697
  %v2750 = vpack.c.b16 %v2700, %v2699
  %v2751 = vpack.c.b16 %v2702, %v2701
  %v2752 = vpack.c.b16 %v2704, %v2703
  %v2753 = vpack.c.b16 %v2706, %v2705
  %v2754 = vpack.c.b16 %v2708, %v2707
  %v2755 = vpack.c.b16 %v2710, %v2709
  %v2756 = vpack.c.b16 %v2712, %v2711
  %v2757 = vpack.c.b16 %v2714, %v2713
  %v2758 = vpack.c.b16 %v2716, %v2715
  %v2759 = vpack.c.b16 %v2718, %v2717
  %v2760 = vpack.c.b16 %v2720, %v2719
  %v2761 = vpack.c.b16 %v2722, %v2721
  %v2762 = vpack.c.b16 %v2724, %v2723
  %v2763 = vpack.c.b16 %v2726, %v2725
  %v2764 = vpack.c.b16 %v2728, %v2727
  %v2765 = vpack.c.b16 %v2730, %v2729
  %v2766 = vpack.c.b16 %v2732, %v2731
  %v2767 = vpack.c.b16 %v2734, %v2733
  %v2768 = vpack.c.b16 %v2736, %v2735
  %2801 = vmatprep.subr.bf16.mxu0 0
  %2802 = vmatpush1.bf16.msra.mxu0 %v2737
  %2803 = vmatprep.subr.bf16.mxu0 0
  %2804 = vmatpush1.bf16.msra.mxu0 %v2738
  %2805 = vmatprep.subr.bf16.mxu0 0
  %2806 = vmatpush1.bf16.msra.mxu0 %v2739
  %2807 = vmatprep.subr.bf16.mxu0 0
  %2808 = vmatpush1.bf16.msra.mxu0 %v2740
  %2809 = vmatprep.subr.bf16.mxu0 0
  %2810 = vmatpush1.bf16.msra.mxu0 %v2741
  %2811 = vmatprep.subr.bf16.mxu0 0
  %2812 = vmatpush1.bf16.msra.mxu0 %v2742
  %2813 = vmatprep.subr.bf16.mxu0 0
  %2814 = vmatpush1.bf16.msra.mxu0 %v2743
  %2815 = vmatprep.subr.bf16.mxu0 0
  %2816 = vmatpush1.bf16.msra.mxu0 %v2744
  %2817 = vmatprep.subr.bf16.mxu0 0
  %2818 = vmatpush1.bf16.msra.mxu0 %v2745
  %2819 = vmatprep.subr.bf16.mxu0 0
  %2820 = vmatpush1.bf16.msra.mxu0 %v2746
  %2821 = vmatprep.subr.bf16.mxu0 0
  %2822 = vmatpush1.bf16.msra.mxu0 %v2747
  %2823 = vmatprep.subr.bf16.mxu0 0
  %2824 = vmatpush1.bf16.msra.mxu0 %v2748
  %2825 = vmatprep.subr.bf16.mxu0 0
  %2826 = vmatpush1.bf16.msra.mxu0 %v2749
  %2827 = vmatprep.subr.bf16.mxu0 0
  %2828 = vmatpush1.bf16.msra.mxu0 %v2750
  %2829 = vmatprep.subr.bf16.mxu0 0
  %2830 = vmatpush1.bf16.msra.mxu0 %v2751
  %2831 = vmatprep.subr.bf16.mxu0 0
  %2832 = vmatpush1.bf16.msra.mxu0 %v2752
  %2833 = vmatprep.mubr.bf16.mxu0 %v857
  %2834 = vmatmul.mubr.bf16.gmra.mrb[0].mxu0 %v856
  %v2835 = vpop.f32.mrb[0].mxu0
  %v2836 = vadd.f32 0.0, %v2835
  %v2837 = vpop.f32.mrb[0].mxu0
  %v2838 = vpop.f32.mrb[0].mxu0
  %v2839 = vpop.f32.mrb[0].mxu0
  %2840 = vdwg.mxu0
  %2841 = vmatprep.subr.bf16.mxu0 0
  %2842 = vmatpush1.bf16.msra.mxu0 %v2753
  %2843 = vmatprep.subr.bf16.mxu0 0
  %2844 = vmatpush1.bf16.msra.mxu0 %v2754
  %2845 = vmatprep.subr.bf16.mxu0 0
  %2846 = vmatpush1.bf16.msra.mxu0 %v2755
  %2847 = vmatprep.subr.bf16.mxu0 0
  %2848 = vmatpush1.bf16.msra.mxu0 %v2756
  %2849 = vmatprep.subr.bf16.mxu0 0
  %2850 = vmatpush1.bf16.msra.mxu0 %v2757
  %2851 = vmatprep.subr.bf16.mxu0 0
  %2852 = vmatpush1.bf16.msra.mxu0 %v2758
  %2853 = vmatprep.subr.bf16.mxu0 0
  %2854 = vmatpush1.bf16.msra.mxu0 %v2759
  %2855 = vmatprep.subr.bf16.mxu0 0
  %2856 = vmatpush1.bf16.msra.mxu0 %v2760
  %2857 = vmatprep.subr.bf16.mxu0 0
  %2858 = vmatpush1.bf16.msra.mxu0 %v2761
  %2859 = vmatprep.subr.bf16.mxu0 0
  %2860 = vmatpush1.bf16.msra.mxu0 %v2762
  %2861 = vmatprep.subr.bf16.mxu0 0
  %2862 = vmatpush1.bf16.msra.mxu0 %v2763
  %2863 = vmatprep.subr.bf16.mxu0 0
  %2864 = vmatpush1.bf16.msra.mxu0 %v2764
  %2865 = vmatprep.subr.bf16.mxu0 0
  %2866 = vmatpush1.bf16.msra.mxu0 %v2765
  %2867 = vmatprep.subr.bf16.mxu0 0
  %2868 = vmatpush1.bf16.msra.mxu0 %v2766
  %2869 = vmatprep.subr.bf16.mxu0 0
  %2870 = vmatpush1.bf16.msra.mxu0 %v2767
  %2871 = vmatprep.subr.bf16.mxu0 0
  %2872 = vmatpush1.bf16.msra.mxu0 %v2768
  %2873 = vmatprep.mubr.bf16.mxu0 %v859
  %2874 = vmatmul.mubr.bf16.gmra.mrb[0].mxu0 %v858
  %v2875 = vpop.f32.mrb[0].mxu0
  %v2876 = vadd.f32 %v2836, %v2875
  %v2877 = vpop.f32.mrb[0].mxu0
  %v2878 = vpop.f32.mrb[0].mxu0
  %v2879 = vpop.f32.mrb[0].mxu0
  %2880 = vdwg.mxu0
  %s2881 = scalar_lea.vmem %s7, 1536
  %v2882 = vld [vmem:[%s2881] sm:$0xf]
  %v2883 = vld [vmem:[%s2881 + $0x4] sm:$0xf]
  %v2884 = vld [vmem:[%s2881 + $0x8] sm:$0xf]
  %v2885 = vld [vmem:[%s2881 + $0xc] sm:$0xf]
  %v2886 = vld [vmem:[%s2881 + $0x10] sm:$0xf]
  %v2887 = vld [vmem:[%s2881 + $0x14] sm:$0xf]
  %v2888 = vld [vmem:[%s2881 + $0x18] sm:$0xf]
  %v2889 = vld [vmem:[%s2881 + $0x1c] sm:$0xf]
  %v2890 = vld [vmem:[%s2881 + $0x20] sm:$0xf]
  %v2891 = vld [vmem:[%s2881 + $0x24] sm:$0xf]
  %v2892 = vld [vmem:[%s2881 + $0x28] sm:$0xf]
  %v2893 = vld [vmem:[%s2881 + $0x2c] sm:$0xf]
  %v2894 = vld [vmem:[%s2881 + $0x30] sm:$0xf]
  %v2895 = vld [vmem:[%s2881 + $0x34] sm:$0xf]
  %v2896 = vld [vmem:[%s2881 + $0x38] sm:$0xf]
  %v2897 = vld [vmem:[%s2881 + $0x3c] sm:$0xf]
  %v2898 = vld [vmem:[%s2881 + $0x40] sm:$0xf]
  %v2899 = vld [vmem:[%s2881 + $0x44] sm:$0xf]
  %v2900 = vld [vmem:[%s2881 + $0x48] sm:$0xf]
  %v2901 = vld [vmem:[%s2881 + $0x4c] sm:$0xf]
  %v2902 = vld [vmem:[%s2881 + $0x50] sm:$0xf]
  %v2903 = vld [vmem:[%s2881 + $0x54] sm:$0xf]
  %v2904 = vld [vmem:[%s2881 + $0x58] sm:$0xf]
  %v2905 = vld [vmem:[%s2881 + $0x5c] sm:$0xf]
  %v2906 = vld [vmem:[%s2881 + $0x60] sm:$0xf]
  %v2907 = vld [vmem:[%s2881 + $0x64] sm:$0xf]
  %v2908 = vld [vmem:[%s2881 + $0x68] sm:$0xf]
  %v2909 = vld [vmem:[%s2881 + $0x6c] sm:$0xf]
  %v2910 = vld [vmem:[%s2881 + $0x70] sm:$0xf]
  %v2911 = vld [vmem:[%s2881 + $0x74] sm:$0xf]
  %v2912 = vld [vmem:[%s2881 + $0x78] sm:$0xf]
  %v2913 = vld [vmem:[%s2881 + $0x7c] sm:$0xf]
  %v2914 = vld [vmem:[%s2881 + $0x80] sm:$0xf]
  %v2915 = vld [vmem:[%s2881 + $0x84] sm:$0xf]
  %v2916 = vld [vmem:[%s2881 + $0x88] sm:$0xf]
  %v2917 = vld [vmem:[%s2881 + $0x8c] sm:$0xf]
  %v2918 = vld [vmem:[%s2881 + $0x90] sm:$0xf]
  %v2919 = vld [vmem:[%s2881 + $0x94] sm:$0xf]
  %v2920 = vld [vmem:[%s2881 + $0x98] sm:$0xf]
  %v2921 = vld [vmem:[%s2881 + $0x9c] sm:$0xf]
  %v2922 = vld [vmem:[%s2881 + $0xa0] sm:$0xf]
  %v2923 = vld [vmem:[%s2881 + $0xa4] sm:$0xf]
  %v2924 = vld [vmem:[%s2881 + $0xa8] sm:$0xf]
  %v2925 = vld [vmem:[%s2881 + $0xac] sm:$0xf]
  %v2926 = vld [vmem:[%s2881 + $0xb0] sm:$0xf]
  %v2927 = vld [vmem:[%s2881 + $0xb4] sm:$0xf]
  %v2928 = vld [vmem:[%s2881 + $0xb8] sm:$0xf]
  %v2929 = vld [vmem:[%s2881 + $0xbc] sm:$0xf]
  %v2930 = vld [vmem:[%s2881 + $0xc0] sm:$0xf]
  %v2931 = vld [vmem:[%s2881 + $0xc4] sm:$0xf]
  %v2932 = vld [vmem:[%s2881 + $0xc8] sm:$0xf]
  %v2933 = vld [vmem:[%s2881 + $0xcc] sm:$0xf]
  %v2934 = vld [vmem:[%s2881 + $0xd0] sm:$0xf]
  %v2935 = vld [vmem:[%s2881 + $0xd4] sm:$0xf]
  %v2936 = vld [vmem:[%s2881 + $0xd8] sm:$0xf]
  %v2937 = vld [vmem:[%s2881 + $0xdc] sm:$0xf]
  %v2938 = vld [vmem:[%s2881 + $0xe0] sm:$0xf]
  %v2939 = vld [vmem:[%s2881 + $0xe4] sm:$0xf]
  %v2940 = vld [vmem:[%s2881 + $0xe8] sm:$0xf]
  %v2941 = vld [vmem:[%s2881 + $0xec] sm:$0xf]
  %v2942 = vld [vmem:[%s2881 + $0xf0] sm:$0xf]
  %v2943 = vld [vmem:[%s2881 + $0xf4] sm:$0xf]
  %v2944 = vld [vmem:[%s2881 + $0xf8] sm:$0xf]
  %v2945 = vld [vmem:[%s2881 + $0xfc] sm:$0xf]
  %v3010 = vunpack.c.l.b16 %v2882
  %v3011 = vunpack.c.l.b16 %v2883
  %v3012 = vunpack.c.l.b16 %v2884
  %v3013 = vunpack.c.l.b16 %v2885
  %v3014 = vunpack.c.l.b16 %v2886
  %v3015 = vunpack.c.l.b16 %v2887
  %v3016 = vunpack.c.l.b16 %v2888
  %v3017 = vunpack.c.l.b16 %v2889
  %v3018 = vunpack.c.l.b16 %v2890
  %v3019 = vunpack.c.l.b16 %v2891
  %v3020 = vunpack.c.l.b16 %v2892
  %v3021 = vunpack.c.l.b16 %v2893
  %v3022 = vunpack.c.l.b16 %v2894
  %v3023 = vunpack.c.l.b16 %v2895
  %v3024 = vunpack.c.l.b16 %v2896
  %v3025 = vunpack.c.l.b16 %v2897
  %v3026 = vunpack.c.l.b16 %v2898
  %v3027 = vunpack.c.l.b16 %v2899
  %v3028 = vunpack.c.l.b16 %v2900
  %v3029 = vunpack.c.l.b16 %v2901
  %v3030 = vunpack.c.l.b16 %v2902
  %v3031 = vunpack.c.l.b16 %v2903
  %v3032 = vunpack.c.l.b16 %v2904
  %v3033 = vunpack.c.l.b16 %v2905
  %v3034 = vunpack.c.l.b16 %v2906
  %v3035 = vunpack.c.l.b16 %v2907
  %v3036 = vunpack.c.l.b16 %v2908
  %v3037 = vunpack.c.l.b16 %v2909
  %v3038 = vunpack.c.l.b16 %v2910
  %v3039 = vunpack.c.l.b16 %v2911
  %v3040 = vunpack.c.l.b16 %v2912
  %v3041 = vunpack.c.l.b16 %v2913
  %v3042 = vunpack.c.l.b16 %v2914
  %v3043 = vunpack.c.l.b16 %v2915
  %v3044 = vunpack.c.l.b16 %v2916
  %v3045 = vunpack.c.l.b16 %v2917
  %v3046 = vunpack.c.l.b16 %v2918
  %v3047 = vunpack.c.l.b16 %v2919
  %v3048 = vunpack.c.l.b16 %v2920
  %v3049 = vunpack.c.l.b16 %v2921
  %v3050 = vunpack.c.l.b16 %v2922
  %v3051 = vunpack.c.l.b16 %v2923
  %v3052 = vunpack.c.l.b16 %v2924
  %v3053 = vunpack.c.l.b16 %v2925
  %v3054 = vunpack.c.l.b16 %v2926
  %v3055 = vunpack.c.l.b16 %v2927
  %v3056 = vunpack.c.l.b16 %v2928
  %v3057 = vunpack.c.l.b16 %v2929
  %v3058 = vunpack.c.l.b16 %v2930
  %v3059 = vunpack.c.l.b16 %v2931
  %v3060 = vunpack.c.l.b16 %v2932
  %v3061 = vunpack.c.l.b16 %v2933
  %v3062 = vunpack.c.l.b16 %v2934
  %v3063 = vunpack.c.l.b16 %v2935
  %v3064 = vunpack.c.l.b16 %v2936
  %v3065 = vunpack.c.l.b16 %v2937
  %v3066 = vunpack.c.l.b16 %v2938
  %v3067 = vunpack.c.l.b16 %v2939
  %v3068 = vunpack.c.l.b16 %v2940
  %v3069 = vunpack.c.l.b16 %v2941
  %v3070 = vunpack.c.l.b16 %v2942
  %v3071 = vunpack.c.l.b16 %v2943
  %v3072 = vunpack.c.l.b16 %v2944
  %v3073 = vunpack.c.l.b16 %v2945
  %v3074 = vpack.c.b16 %v3011, %v3010
  %v3075 = vpack.c.b16 %v3013, %v3012
  %v3076 = vpack.c.b16 %v3015, %v3014
  %v3077 = vpack.c.b16 %v3017, %v3016
  %v3078 = vpack.c.b16 %v3019, %v3018
  %v3079 = vpack.c.b16 %v3021, %v3020
  %v3080 = vpack.c.b16 %v3023, %v3022
  %v3081 = vpack.c.b16 %v3025, %v3024
  %v3082 = vpack.c.b16 %v3027, %v3026
  %v3083 = vpack.c.b16 %v3029, %v3028
  %v3084 = vpack.c.b16 %v3031, %v3030
  %v3085 = vpack.c.b16 %v3033, %v3032
  %v3086 = vpack.c.b16 %v3035, %v3034
  %v3087 = vpack.c.b16 %v3037, %v3036
  %v3088 = vpack.c.b16 %v3039, %v3038
  %v3089 = vpack.c.b16 %v3041, %v3040
  %v3090 = vpack.c.b16 %v3043, %v3042
  %v3091 = vpack.c.b16 %v3045, %v3044
  %v3092 = vpack.c.b16 %v3047, %v3046
  %v3093 = vpack.c.b16 %v3049, %v3048
  %v3094 = vpack.c.b16 %v3051, %v3050
  %v3095 = vpack.c.b16 %v3053, %v3052
  %v3096 = vpack.c.b16 %v3055, %v3054
  %v3097 = vpack.c.b16 %v3057, %v3056
  %v3098 = vpack.c.b16 %v3059, %v3058
  %v3099 = vpack.c.b16 %v3061, %v3060
  %v3100 = vpack.c.b16 %v3063, %v3062
  %v3101 = vpack.c.b16 %v3065, %v3064
  %v3102 = vpack.c.b16 %v3067, %v3066
  %v3103 = vpack.c.b16 %v3069, %v3068
  %v3104 = vpack.c.b16 %v3071, %v3070
  %v3105 = vpack.c.b16 %v3073, %v3072
  %3138 = vmatprep.subr.bf16.mxu0 0
  %3139 = vmatpush1.bf16.msra.mxu0 %v3074
  %3140 = vmatprep.subr.bf16.mxu0 0
  %3141 = vmatpush1.bf16.msra.mxu0 %v3075
  %3142 = vmatprep.subr.bf16.mxu0 0
  %3143 = vmatpush1.bf16.msra.mxu0 %v3076
  %3144 = vmatprep.subr.bf16.mxu0 0
  %3145 = vmatpush1.bf16.msra.mxu0 %v3077
  %3146 = vmatprep.subr.bf16.mxu0 0
  %3147 = vmatpush1.bf16.msra.mxu0 %v3078
  %3148 = vmatprep.subr.bf16.mxu0 0
  %3149 = vmatpush1.bf16.msra.mxu0 %v3079
  %3150 = vmatprep.subr.bf16.mxu0 0
  %3151 = vmatpush1.bf16.msra.mxu0 %v3080
  %3152 = vmatprep.subr.bf16.mxu0 0
  %3153 = vmatpush1.bf16.msra.mxu0 %v3081
  %3154 = vmatprep.subr.bf16.mxu0 0
  %3155 = vmatpush1.bf16.msra.mxu0 %v3082
  %3156 = vmatprep.subr.bf16.mxu0 0
  %3157 = vmatpush1.bf16.msra.mxu0 %v3083
  %3158 = vmatprep.subr.bf16.mxu0 0
  %3159 = vmatpush1.bf16.msra.mxu0 %v3084
  %3160 = vmatprep.subr.bf16.mxu0 0
  %3161 = vmatpush1.bf16.msra.mxu0 %v3085
  %3162 = vmatprep.subr.bf16.mxu0 0
  %3163 = vmatpush1.bf16.msra.mxu0 %v3086
  %3164 = vmatprep.subr.bf16.mxu0 0
  %3165 = vmatpush1.bf16.msra.mxu0 %v3087
  %3166 = vmatprep.subr.bf16.mxu0 0
  %3167 = vmatpush1.bf16.msra.mxu0 %v3088
  %3168 = vmatprep.subr.bf16.mxu0 0
  %3169 = vmatpush1.bf16.msra.mxu0 %v3089
  %3170 = vmatprep.mubr.bf16.mxu0 %v857
  %3171 = vmatmul.mubr.bf16.gmra.mrb[0].mxu0 %v856
  %v3172 = vpop.f32.mrb[0].mxu0
  %v3173 = vadd.f32 0.0, %v3172
  %v3174 = vpop.f32.mrb[0].mxu0
  %v3175 = vpop.f32.mrb[0].mxu0
  %v3176 = vpop.f32.mrb[0].mxu0
  %3177 = vdwg.mxu0
  %3178 = vmatprep.subr.bf16.mxu0 0
  %3179 = vmatpush1.bf16.msra.mxu0 %v3090
  %3180 = vmatprep.subr.bf16.mxu0 0
  %3181 = vmatpush1.bf16.msra.mxu0 %v3091
  %3182 = vmatprep.subr.bf16.mxu0 0
  %3183 = vmatpush1.bf16.msra.mxu0 %v3092
  %3184 = vmatprep.subr.bf16.mxu0 0
  %3185 = vmatpush1.bf16.msra.mxu0 %v3093
  %3186 = vmatprep.subr.bf16.mxu0 0
  %3187 = vmatpush1.bf16.msra.mxu0 %v3094
  %3188 = vmatprep.subr.bf16.mxu0 0
  %3189 = vmatpush1.bf16.msra.mxu0 %v3095
  %3190 = vmatprep.subr.bf16.mxu0 0
  %3191 = vmatpush1.bf16.msra.mxu0 %v3096
  %3192 = vmatprep.subr.bf16.mxu0 0
  %3193 = vmatpush1.bf16.msra.mxu0 %v3097
  %3194 = vmatprep.subr.bf16.mxu0 0
  %3195 = vmatpush1.bf16.msra.mxu0 %v3098
  %3196 = vmatprep.subr.bf16.mxu0 0
  %3197 = vmatpush1.bf16.msra.mxu0 %v3099
  %3198 = vmatprep.subr.bf16.mxu0 0
  %3199 = vmatpush1.bf16.msra.mxu0 %v3100
  %3200 = vmatprep.subr.bf16.mxu0 0
  %3201 = vmatpush1.bf16.msra.mxu0 %v3101
  %3202 = vmatprep.subr.bf16.mxu0 0
  %3203 = vmatpush1.bf16.msra.mxu0 %v3102
  %3204 = vmatprep.subr.bf16.mxu0 0
  %3205 = vmatpush1.bf16.msra.mxu0 %v3103
  %3206 = vmatprep.subr.bf16.mxu0 0
  %3207 = vmatpush1.bf16.msra.mxu0 %v3104
  %3208 = vmatprep.subr.bf16.mxu0 0
  %3209 = vmatpush1.bf16.msra.mxu0 %v3105
  %3210 = vmatprep.mubr.bf16.mxu0 %v859
  %3211 = vmatmul.mubr.bf16.gmra.mrb[0].mxu0 %v858
  %v3212 = vpop.f32.mrb[0].mxu0
  %v3213 = vadd.f32 %v3173, %v3212
  %v3214 = vpop.f32.mrb[0].mxu0
  %v3215 = vpop.f32.mrb[0].mxu0
  %v3216 = vpop.f32.mrb[0].mxu0
  %3217 = vdwg.mxu0
  %s3218 = scalar_lea.vmem %s7, 1792
  %v3219 = vld [vmem:[%s3218] sm:$0xf]
  %v3220 = vld [vmem:[%s3218 + $0x4] sm:$0xf]
  %v3221 = vld [vmem:[%s3218 + $0x8] sm:$0xf]
  %v3222 = vld [vmem:[%s3218 + $0xc] sm:$0xf]
  %v3223 = vld [vmem:[%s3218 + $0x10] sm:$0xf]
  %v3224 = vld [vmem:[%s3218 + $0x14] sm:$0xf]
  %v3225 = vld [vmem:[%s3218 + $0x18] sm:$0xf]
  %v3226 = vld [vmem:[%s3218 + $0x1c] sm:$0xf]
  %v3227 = vld [vmem:[%s3218 + $0x20] sm:$0xf]
  %v3228 = vld [vmem:[%s3218 + $0x24] sm:$0xf]
  %v3229 = vld [vmem:[%s3218 + $0x28] sm:$0xf]
  %v3230 = vld [vmem:[%s3218 + $0x2c] sm:$0xf]
  %v3231 = vld [vmem:[%s3218 + $0x30] sm:$0xf]
  %v3232 = vld [vmem:[%s3218 + $0x34] sm:$0xf]
  %v3233 = vld [vmem:[%s3218 + $0x38] sm:$0xf]
  %v3234 = vld [vmem:[%s3218 + $0x3c] sm:$0xf]
  %v3235 = vld [vmem:[%s3218 + $0x40] sm:$0xf]
  %v3236 = vld [vmem:[%s3218 + $0x44] sm:$0xf]
  %v3237 = vld [vmem:[%s3218 + $0x48] sm:$0xf]
  %v3238 = vld [vmem:[%s3218 + $0x4c] sm:$0xf]
  %v3239 = vld [vmem:[%s3218 + $0x50] sm:$0xf]
  %v3240 = vld [vmem:[%s3218 + $0x54] sm:$0xf]
  %v3241 = vld [vmem:[%s3218 + $0x58] sm:$0xf]
  %v3242 = vld [vmem:[%s3218 + $0x5c] sm:$0xf]
  %v3243 = vld [vmem:[%s3218 + $0x60] sm:$0xf]
  %v3244 = vld [vmem:[%s3218 + $0x64] sm:$0xf]
  %v3245 = vld [vmem:[%s3218 + $0x68] sm:$0xf]
  %v3246 = vld [vmem:[%s3218 + $0x6c] sm:$0xf]
  %v3247 = vld [vmem:[%s3218 + $0x70] sm:$0xf]
  %v3248 = vld [vmem:[%s3218 + $0x74] sm:$0xf]
  %v3249 = vld [vmem:[%s3218 + $0x78] sm:$0xf]
  %v3250 = vld [vmem:[%s3218 + $0x7c] sm:$0xf]
  %v3251 = vld [vmem:[%s3218 + $0x80] sm:$0xf]
  %v3252 = vld [vmem:[%s3218 + $0x84] sm:$0xf]
  %v3253 = vld [vmem:[%s3218 + $0x88] sm:$0xf]
  %v3254 = vld [vmem:[%s3218 + $0x8c] sm:$0xf]
  %v3255 = vld [vmem:[%s3218 + $0x90] sm:$0xf]
  %v3256 = vld [vmem:[%s3218 + $0x94] sm:$0xf]
  %v3257 = vld [vmem:[%s3218 + $0x98] sm:$0xf]
  %v3258 = vld [vmem:[%s3218 + $0x9c] sm:$0xf]
  %v3259 = vld [vmem:[%s3218 + $0xa0] sm:$0xf]
  %v3260 = vld [vmem:[%s3218 + $0xa4] sm:$0xf]
  %v3261 = vld [vmem:[%s3218 + $0xa8] sm:$0xf]
  %v3262 = vld [vmem:[%s3218 + $0xac] sm:$0xf]
  %v3263 = vld [vmem:[%s3218 + $0xb0] sm:$0xf]
  %v3264 = vld [vmem:[%s3218 + $0xb4] sm:$0xf]
  %v3265 = vld [vmem:[%s3218 + $0xb8] sm:$0xf]
  %v3266 = vld [vmem:[%s3218 + $0xbc] sm:$0xf]
  %v3267 = vld [vmem:[%s3218 + $0xc0] sm:$0xf]
  %v3268 = vld [vmem:[%s3218 + $0xc4] sm:$0xf]
  %v3269 = vld [vmem:[%s3218 + $0xc8] sm:$0xf]
  %v3270 = vld [vmem:[%s3218 + $0xcc] sm:$0xf]
  %v3271 = vld [vmem:[%s3218 + $0xd0] sm:$0xf]
  %v3272 = vld [vmem:[%s3218 + $0xd4] sm:$0xf]
  %v3273 = vld [vmem:[%s3218 + $0xd8] sm:$0xf]
  %v3274 = vld [vmem:[%s3218 + $0xdc] sm:$0xf]
  %v3275 = vld [vmem:[%s3218 + $0xe0] sm:$0xf]
  %v3276 = vld [vmem:[%s3218 + $0xe4] sm:$0xf]
  %v3277 = vld [vmem:[%s3218 + $0xe8] sm:$0xf]
  %v3278 = vld [vmem:[%s3218 + $0xec] sm:$0xf]
  %v3279 = vld [vmem:[%s3218 + $0xf0] sm:$0xf]
  %v3280 = vld [vmem:[%s3218 + $0xf4] sm:$0xf]
  %v3281 = vld [vmem:[%s3218 + $0xf8] sm:$0xf]
  %v3282 = vld [vmem:[%s3218 + $0xfc] sm:$0xf]
  %v3347 = vunpack.c.l.b16 %v3219
  %v3348 = vunpack.c.l.b16 %v3220
  %v3349 = vunpack.c.l.b16 %v3221
  %v3350 = vunpack.c.l.b16 %v3222
  %v3351 = vunpack.c.l.b16 %v3223
  %v3352 = vunpack.c.l.b16 %v3224
  %v3353 = vunpack.c.l.b16 %v3225
  %v3354 = vunpack.c.l.b16 %v3226
  %v3355 = vunpack.c.l.b16 %v3227
  %v3356 = vunpack.c.l.b16 %v3228
  %v3357 = vunpack.c.l.b16 %v3229
  %v3358 = vunpack.c.l.b16 %v3230
  %v3359 = vunpack.c.l.b16 %v3231
  %v3360 = vunpack.c.l.b16 %v3232
  %v3361 = vunpack.c.l.b16 %v3233
  %v3362 = vunpack.c.l.b16 %v3234
  %v3363 = vunpack.c.l.b16 %v3235
  %v3364 = vunpack.c.l.b16 %v3236
  %v3365 = vunpack.c.l.b16 %v3237
  %v3366 = vunpack.c.l.b16 %v3238
  %v3367 = vunpack.c.l.b16 %v3239
  %v3368 = vunpack.c.l.b16 %v3240
  %v3369 = vunpack.c.l.b16 %v3241
  %v3370 = vunpack.c.l.b16 %v3242
  %v3371 = vunpack.c.l.b16 %v3243
  %v3372 = vunpack.c.l.b16 %v3244
  %v3373 = vunpack.c.l.b16 %v3245
  %v3374 = vunpack.c.l.b16 %v3246
  %v3375 = vunpack.c.l.b16 %v3247
  %v3376 = vunpack.c.l.b16 %v3248
  %v3377 = vunpack.c.l.b16 %v3249
  %v3378 = vunpack.c.l.b16 %v3250
  %v3379 = vunpack.c.l.b16 %v3251
  %v3380 = vunpack.c.l.b16 %v3252
  %v3381 = vunpack.c.l.b16 %v3253
  %v3382 = vunpack.c.l.b16 %v3254
  %v3383 = vunpack.c.l.b16 %v3255
  %v3384 = vunpack.c.l.b16 %v3256
  %v3385 = vunpack.c.l.b16 %v3257
  %v3386 = vunpack.c.l.b16 %v3258
  %v3387 = vunpack.c.l.b16 %v3259
  %v3388 = vunpack.c.l.b16 %v3260
  %v3389 = vunpack.c.l.b16 %v3261
  %v3390 = vunpack.c.l.b16 %v3262
  %v3391 = vunpack.c.l.b16 %v3263
  %v3392 = vunpack.c.l.b16 %v3264
  %v3393 = vunpack.c.l.b16 %v3265
  %v3394 = vunpack.c.l.b16 %v3266
  %v3395 = vunpack.c.l.b16 %v3267
  %v3396 = vunpack.c.l.b16 %v3268
  %v3397 = vunpack.c.l.b16 %v3269
  %v3398 = vunpack.c.l.b16 %v3270
  %v3399 = vunpack.c.l.b16 %v3271
  %v3400 = vunpack.c.l.b16 %v3272
  %v3401 = vunpack.c.l.b16 %v3273
  %v3402 = vunpack.c.l.b16 %v3274
  %v3403 = vunpack.c.l.b16 %v3275
  %v3404 = vunpack.c.l.b16 %v3276
  %v3405 = vunpack.c.l.b16 %v3277
  %v3406 = vunpack.c.l.b16 %v3278
  %v3407 = vunpack.c.l.b16 %v3279
  %v3408 = vunpack.c.l.b16 %v3280
  %v3409 = vunpack.c.l.b16 %v3281
  %v3410 = vunpack.c.l.b16 %v3282
  %v3411 = vpack.c.b16 %v3348, %v3347
  %v3412 = vpack.c.b16 %v3350, %v3349
  %v3413 = vpack.c.b16 %v3352, %v3351
  %v3414 = vpack.c.b16 %v3354, %v3353
  %v3415 = vpack.c.b16 %v3356, %v3355
  %v3416 = vpack.c.b16 %v3358, %v3357
  %v3417 = vpack.c.b16 %v3360, %v3359
  %v3418 = vpack.c.b16 %v3362, %v3361
  %v3419 = vpack.c.b16 %v3364, %v3363
  %v3420 = vpack.c.b16 %v3366, %v3365
  %v3421 = vpack.c.b16 %v3368, %v3367
  %v3422 = vpack.c.b16 %v3370, %v3369
  %v3423 = vpack.c.b16 %v3372, %v3371
  %v3424 = vpack.c.b16 %v3374, %v3373
  %v3425 = vpack.c.b16 %v3376, %v3375
  %v3426 = vpack.c.b16 %v3378, %v3377
  %v3427 = vpack.c.b16 %v3380, %v3379
  %v3428 = vpack.c.b16 %v3382, %v3381
  %v3429 = vpack.c.b16 %v3384, %v3383
  %v3430 = vpack.c.b16 %v3386, %v3385
  %v3431 = vpack.c.b16 %v3388, %v3387
  %v3432 = vpack.c.b16 %v3390, %v3389
  %v3433 = vpack.c.b16 %v3392, %v3391
  %v3434 = vpack.c.b16 %v3394, %v3393
  %v3435 = vpack.c.b16 %v3396, %v3395
  %v3436 = vpack.c.b16 %v3398, %v3397
  %v3437 = vpack.c.b16 %v3400, %v3399
  %v3438 = vpack.c.b16 %v3402, %v3401
  %v3439 = vpack.c.b16 %v3404, %v3403
  %v3440 = vpack.c.b16 %v3406, %v3405
  %v3441 = vpack.c.b16 %v3408, %v3407
  %v3442 = vpack.c.b16 %v3410, %v3409
  %3475 = vmatprep.subr.bf16.mxu0 0
  %3476 = vmatpush1.bf16.msra.mxu0 %v3411
  %3477 = vmatprep.subr.bf16.mxu0 0
  %3478 = vmatpush1.bf16.msra.mxu0 %v3412
  %3479 = vmatprep.subr.bf16.mxu0 0
  %3480 = vmatpush1.bf16.msra.mxu0 %v3413
  %3481 = vmatprep.subr.bf16.mxu0 0
  %3482 = vmatpush1.bf16.msra.mxu0 %v3414
  %3483 = vmatprep.subr.bf16.mxu0 0
  %3484 = vmatpush1.bf16.msra.mxu0 %v3415
  %3485 = vmatprep.subr.bf16.mxu0 0
  %3486 = vmatpush1.bf16.msra.mxu0 %v3416
  %3487 = vmatprep.subr.bf16.mxu0 0
  %3488 = vmatpush1.bf16.msra.mxu0 %v3417
  %3489 = vmatprep.subr.bf16.mxu0 0
  %3490 = vmatpush1.bf16.msra.mxu0 %v3418
  %3491 = vmatprep.subr.bf16.mxu0 0
  %3492 = vmatpush1.bf16.msra.mxu0 %v3419
  %3493 = vmatprep.subr.bf16.mxu0 0
  %3494 = vmatpush1.bf16.msra.mxu0 %v3420
  %3495 = vmatprep.subr.bf16.mxu0 0
  %3496 = vmatpush1.bf16.msra.mxu0 %v3421
  %3497 = vmatprep.subr.bf16.mxu0 0
  %3498 = vmatpush1.bf16.msra.mxu0 %v3422
  %3499 = vmatprep.subr.bf16.mxu0 0
  %3500 = vmatpush1.bf16.msra.mxu0 %v3423
  %3501 = vmatprep.subr.bf16.mxu0 0
  %3502 = vmatpush1.bf16.msra.mxu0 %v3424
  %3503 = vmatprep.subr.bf16.mxu0 0
  %3504 = vmatpush1.bf16.msra.mxu0 %v3425
  %3505 = vmatprep.subr.bf16.mxu0 0
  %3506 = vmatpush1.bf16.msra.mxu0 %v3426
  %3507 = vmatprep.mubr.bf16.mxu0 %v857
  %3508 = vmatmul.mubr.bf16.gmra.mrb[0].mxu0 %v856
  %v3509 = vpop.f32.mrb[0].mxu0
  %v3510 = vadd.f32 0.0, %v3509
  %v3511 = vpop.f32.mrb[0].mxu0
  %v3512 = vpop.f32.mrb[0].mxu0
  %v3513 = vpop.f32.mrb[0].mxu0
  %3514 = vdwg.mxu0
  %3515 = vmatprep.subr.bf16.mxu0 0
  %3516 = vmatpush1.bf16.msra.mxu0 %v3427
  %3517 = vmatprep.subr.bf16.mxu0 0
  %3518 = vmatpush1.bf16.msra.mxu0 %v3428
  %3519 = vmatprep.subr.bf16.mxu0 0
  %3520 = vmatpush1.bf16.msra.mxu0 %v3429
  %3521 = vmatprep.subr.bf16.mxu0 0
  %3522 = vmatpush1.bf16.msra.mxu0 %v3430
  %3523 = vmatprep.subr.bf16.mxu0 0
  %3524 = vmatpush1.bf16.msra.mxu0 %v3431
  %3525 = vmatprep.subr.bf16.mxu0 0
  %3526 = vmatpush1.bf16.msra.mxu0 %v3432
  %3527 = vmatprep.subr.bf16.mxu0 0
  %3528 = vmatpush1.bf16.msra.mxu0 %v3433
  %3529 = vmatprep.subr.bf16.mxu0 0
  %3530 = vmatpush1.bf16.msra.mxu0 %v3434
  %3531 = vmatprep.subr.bf16.mxu0 0
  %3532 = vmatpush1.bf16.msra.mxu0 %v3435
  %3533 = vmatprep.subr.bf16.mxu0 0
  %3534 = vmatpush1.bf16.msra.mxu0 %v3436
  %3535 = vmatprep.subr.bf16.mxu0 0
  %3536 = vmatpush1.bf16.msra.mxu0 %v3437
  %3537 = vmatprep.subr.bf16.mxu0 0
  %3538 = vmatpush1.bf16.msra.mxu0 %v3438
  %3539 = vmatprep.subr.bf16.mxu0 0
  %3540 = vmatpush1.bf16.msra.mxu0 %v3439
  %3541 = vmatprep.subr.bf16.mxu0 0
  %3542 = vmatpush1.bf16.msra.mxu0 %v3440
  %3543 = vmatprep.subr.bf16.mxu0 0
  %3544 = vmatpush1.bf16.msra.mxu0 %v3441
  %3545 = vmatprep.subr.bf16.mxu0 0
  %3546 = vmatpush1.bf16.msra.mxu0 %v3442
  %3547 = vmatprep.mubr.bf16.mxu0 %v859
  %3548 = vmatmul.mubr.bf16.gmra.mrb[0].mxu0 %v858
  %v3549 = vpop.f32.mrb[0].mxu0
  %v3550 = vadd.f32 %v3510, %v3549
  %v3551 = vpop.f32.mrb[0].mxu0
  %v3552 = vpop.f32.mrb[0].mxu0
  %v3553 = vpop.f32.mrb[0].mxu0
  %3554 = vdwg.mxu0
  %s3555 = scalar_lea.vmem %s7, 2048
  %v3556 = vld [vmem:[%s3555] sm:$0xf]
  %v3557 = vld [vmem:[%s3555 + $0x4] sm:$0xf]
  %v3558 = vld [vmem:[%s3555 + $0x8] sm:$0xf]
  %v3559 = vld [vmem:[%s3555 + $0xc] sm:$0xf]
  %v3560 = vld [vmem:[%s3555 + $0x10] sm:$0xf]
  %v3561 = vld [vmem:[%s3555 + $0x14] sm:$0xf]
  %v3562 = vld [vmem:[%s3555 + $0x18] sm:$0xf]
  %v3563 = vld [vmem:[%s3555 + $0x1c] sm:$0xf]
  %v3564 = vld [vmem:[%s3555 + $0x20] sm:$0xf]
  %v3565 = vld [vmem:[%s3555 + $0x24] sm:$0xf]
  %v3566 = vld [vmem:[%s3555 + $0x28] sm:$0xf]
  %v3567 = vld [vmem:[%s3555 + $0x2c] sm:$0xf]
  %v3568 = vld [vmem:[%s3555 + $0x30] sm:$0xf]
  %v3569 = vld [vmem:[%s3555 + $0x34] sm:$0xf]
  %v3570 = vld [vmem:[%s3555 + $0x38] sm:$0xf]
  %v3571 = vld [vmem:[%s3555 + $0x3c] sm:$0xf]
  %v3572 = vld [vmem:[%s3555 + $0x40] sm:$0xf]
  %v3573 = vld [vmem:[%s3555 + $0x44] sm:$0xf]
  %v3574 = vld [vmem:[%s3555 + $0x48] sm:$0xf]
  %v3575 = vld [vmem:[%s3555 + $0x4c] sm:$0xf]
  %v3576 = vld [vmem:[%s3555 + $0x50] sm:$0xf]
  %v3577 = vld [vmem:[%s3555 + $0x54] sm:$0xf]
  %v3578 = vld [vmem:[%s3555 + $0x58] sm:$0xf]
  %v3579 = vld [vmem:[%s3555 + $0x5c] sm:$0xf]
  %v3580 = vld [vmem:[%s3555 + $0x60] sm:$0xf]
  %v3581 = vld [vmem:[%s3555 + $0x64] sm:$0xf]
  %v3582 = vld [vmem:[%s3555 + $0x68] sm:$0xf]
  %v3583 = vld [vmem:[%s3555 + $0x6c] sm:$0xf]
  %v3584 = vld [vmem:[%s3555 + $0x70] sm:$0xf]
  %v3585 = vld [vmem:[%s3555 + $0x74] sm:$0xf]
  %v3586 = vld [vmem:[%s3555 + $0x78] sm:$0xf]
  %v3587 = vld [vmem:[%s3555 + $0x7c] sm:$0xf]
  %v3588 = vld [vmem:[%s3555 + $0x80] sm:$0xf]
  %v3589 = vld [vmem:[%s3555 + $0x84] sm:$0xf]
  %v3590 = vld [vmem:[%s3555 + $0x88] sm:$0xf]
  %v3591 = vld [vmem:[%s3555 + $0x8c] sm:$0xf]
  %v3592 = vld [vmem:[%s3555 + $0x90] sm:$0xf]
  %v3593 = vld [vmem:[%s3555 + $0x94] sm:$0xf]
  %v3594 = vld [vmem:[%s3555 + $0x98] sm:$0xf]
  %v3595 = vld [vmem:[%s3555 + $0x9c] sm:$0xf]
  %v3596 = vld [vmem:[%s3555 + $0xa0] sm:$0xf]
  %v3597 = vld [vmem:[%s3555 + $0xa4] sm:$0xf]
  %v3598 = vld [vmem:[%s3555 + $0xa8] sm:$0xf]
  %v3599 = vld [vmem:[%s3555 + $0xac] sm:$0xf]
  %v3600 = vld [vmem:[%s3555 + $0xb0] sm:$0xf]
  %v3601 = vld [vmem:[%s3555 + $0xb4] sm:$0xf]
  %v3602 = vld [vmem:[%s3555 + $0xb8] sm:$0xf]
  %v3603 = vld [vmem:[%s3555 + $0xbc] sm:$0xf]
  %v3604 = vld [vmem:[%s3555 + $0xc0] sm:$0xf]
  %v3605 = vld [vmem:[%s3555 + $0xc4] sm:$0xf]
  %v3606 = vld [vmem:[%s3555 + $0xc8] sm:$0xf]
  %v3607 = vld [vmem:[%s3555 + $0xcc] sm:$0xf]
  %v3608 = vld [vmem:[%s3555 + $0xd0] sm:$0xf]
  %v3609 = vld [vmem:[%s3555 + $0xd4] sm:$0xf]
  %v3610 = vld [vmem:[%s3555 + $0xd8] sm:$0xf]
  %v3611 = vld [vmem:[%s3555 + $0xdc] sm:$0xf]
  %v3612 = vld [vmem:[%s3555 + $0xe0] sm:$0xf]
  %v3613 = vld [vmem:[%s3555 + $0xe4] sm:$0xf]
  %v3614 = vld [vmem:[%s3555 + $0xe8] sm:$0xf]
  %v3615 = vld [vmem:[%s3555 + $0xec] sm:$0xf]
  %v3616 = vld [vmem:[%s3555 + $0xf0] sm:$0xf]
  %v3617 = vld [vmem:[%s3555 + $0xf4] sm:$0xf]
  %v3618 = vld [vmem:[%s3555 + $0xf8] sm:$0xf]
  %v3619 = vld [vmem:[%s3555 + $0xfc] sm:$0xf]
  %v3684 = vunpack.c.l.b16 %v3556
  %v3685 = vunpack.c.l.b16 %v3557
  %v3686 = vunpack.c.l.b16 %v3558
  %v3687 = vunpack.c.l.b16 %v3559
  %v3688 = vunpack.c.l.b16 %v3560
  %v3689 = vunpack.c.l.b16 %v3561
  %v3690 = vunpack.c.l.b16 %v3562
  %v3691 = vunpack.c.l.b16 %v3563
  %v3692 = vunpack.c.l.b16 %v3564
  %v3693 = vunpack.c.l.b16 %v3565
  %v3694 = vunpack.c.l.b16 %v3566
  %v3695 = vunpack.c.l.b16 %v3567
  %v3696 = vunpack.c.l.b16 %v3568
  %v3697 = vunpack.c.l.b16 %v3569
  %v3698 = vunpack.c.l.b16 %v3570
  %v3699 = vunpack.c.l.b16 %v3571
  %v3700 = vunpack.c.l.b16 %v3572
  %v3701 = vunpack.c.l.b16 %v3573
  %v3702 = vunpack.c.l.b16 %v3574
  %v3703 = vunpack.c.l.b16 %v3575
  %v3704 = vunpack.c.l.b16 %v3576
  %v3705 = vunpack.c.l.b16 %v3577
  %v3706 = vunpack.c.l.b16 %v3578
  %v3707 = vunpack.c.l.b16 %v3579
  %v3708 = vunpack.c.l.b16 %v3580
  %v3709 = vunpack.c.l.b16 %v3581
  %v3710 = vunpack.c.l.b16 %v3582
  %v3711 = vunpack.c.l.b16 %v3583
  %v3712 = vunpack.c.l.b16 %v3584
  %v3713 = vunpack.c.l.b16 %v3585
  %v3714 = vunpack.c.l.b16 %v3586
  %v3715 = vunpack.c.l.b16 %v3587
  %v3716 = vunpack.c.l.b16 %v3588
  %v3717 = vunpack.c.l.b16 %v3589
  %v3718 = vunpack.c.l.b16 %v3590
  %v3719 = vunpack.c.l.b16 %v3591
  %v3720 = vunpack.c.l.b16 %v3592
  %v3721 = vunpack.c.l.b16 %v3593
  %v3722 = vunpack.c.l.b16 %v3594
  %v3723 = vunpack.c.l.b16 %v3595
  %v3724 = vunpack.c.l.b16 %v3596
  %v3725 = vunpack.c.l.b16 %v3597
  %v3726 = vunpack.c.l.b16 %v3598
  %v3727 = vunpack.c.l.b16 %v3599
  %v3728 = vunpack.c.l.b16 %v3600
  %v3729 = vunpack.c.l.b16 %v3601
  %v3730 = vunpack.c.l.b16 %v3602
  %v3731 = vunpack.c.l.b16 %v3603
  %v3732 = vunpack.c.l.b16 %v3604
  %v3733 = vunpack.c.l.b16 %v3605
  %v3734 = vunpack.c.l.b16 %v3606
  %v3735 = vunpack.c.l.b16 %v3607
  %v3736 = vunpack.c.l.b16 %v3608
  %v3737 = vunpack.c.l.b16 %v3609
  %v3738 = vunpack.c.l.b16 %v3610
  %v3739 = vunpack.c.l.b16 %v3611
  %v3740 = vunpack.c.l.b16 %v3612
  %v3741 = vunpack.c.l.b16 %v3613
  %v3742 = vunpack.c.l.b16 %v3614
  %v3743 = vunpack.c.l.b16 %v3615
  %v3744 = vunpack.c.l.b16 %v3616
  %v3745 = vunpack.c.l.b16 %v3617
  %v3746 = vunpack.c.l.b16 %v3618
  %v3747 = vunpack.c.l.b16 %v3619
  %v3748 = vpack.c.b16 %v3685, %v3684
  %v3749 = vpack.c.b16 %v3687, %v3686
  %v3750 = vpack.c.b16 %v3689, %v3688
  %v3751 = vpack.c.b16 %v3691, %v3690
  %v3752 = vpack.c.b16 %v3693, %v3692
  %v3753 = vpack.c.b16 %v3695, %v3694
  %v3754 = vpack.c.b16 %v3697, %v3696
  %v3755 = vpack.c.b16 %v3699, %v3698
  %v3756 = vpack.c.b16 %v3701, %v3700
  %v3757 = vpack.c.b16 %v3703, %v3702
  %v3758 = vpack.c.b16 %v3705, %v3704
  %v3759 = vpack.c.b16 %v3707, %v3706
  %v3760 = vpack.c.b16 %v3709, %v3708
  %v3761 = vpack.c.b16 %v3711, %v3710
  %v3762 = vpack.c.b16 %v3713, %v3712
  %v3763 = vpack.c.b16 %v3715, %v3714
  %v3764 = vpack.c.b16 %v3717, %v3716
  %v3765 = vpack.c.b16 %v3719, %v3718
  %v3766 = vpack.c.b16 %v3721, %v3720
  %v3767 = vpack.c.b16 %v3723, %v3722
  %v3768 = vpack.c.b16 %v3725, %v3724
  %v3769 = vpack.c.b16 %v3727, %v3726
  %v3770 = vpack.c.b16 %v3729, %v3728
  %v3771 = vpack.c.b16 %v3731, %v3730
  %v3772 = vpack.c.b16 %v3733, %v3732
  %v3773 = vpack.c.b16 %v3735, %v3734
  %v3774 = vpack.c.b16 %v3737, %v3736
  %v3775 = vpack.c.b16 %v3739, %v3738
  %v3776 = vpack.c.b16 %v3741, %v3740
  %v3777 = vpack.c.b16 %v3743, %v3742
  %v3778 = vpack.c.b16 %v3745, %v3744
  %v3779 = vpack.c.b16 %v3747, %v3746
  %3812 = vmatprep.subr.bf16.mxu0 0
  %3813 = vmatpush1.bf16.msra.mxu0 %v3748
  %3814 = vmatprep.subr.bf16.mxu0 0
  %3815 = vmatpush1.bf16.msra.mxu0 %v3749
  %3816 = vmatprep.subr.bf16.mxu0 0
  %3817 = vmatpush1.bf16.msra.mxu0 %v3750
  %3818 = vmatprep.subr.bf16.mxu0 0
  %3819 = vmatpush1.bf16.msra.mxu0 %v3751
  %3820 = vmatprep.subr.bf16.mxu0 0
  %3821 = vmatpush1.bf16.msra.mxu0 %v3752
  %3822 = vmatprep.subr.bf16.mxu0 0
  %3823 = vmatpush1.bf16.msra.mxu0 %v3753
  %3824 = vmatprep.subr.bf16.mxu0 0
  %3825 = vmatpush1.bf16.msra.mxu0 %v3754
  %3826 = vmatprep.subr.bf16.mxu0 0
  %3827 = vmatpush1.bf16.msra.mxu0 %v3755
  %3828 = vmatprep.subr.bf16.mxu0 0
  %3829 = vmatpush1.bf16.msra.mxu0 %v3756
  %3830 = vmatprep.subr.bf16.mxu0 0
  %3831 = vmatpush1.bf16.msra.mxu0 %v3757
  %3832 = vmatprep.subr.bf16.mxu0 0
  %3833 = vmatpush1.bf16.msra.mxu0 %v3758
  %3834 = vmatprep.subr.bf16.mxu0 0
  %3835 = vmatpush1.bf16.msra.mxu0 %v3759
  %3836 = vmatprep.subr.bf16.mxu0 0
  %3837 = vmatpush1.bf16.msra.mxu0 %v3760
  %3838 = vmatprep.subr.bf16.mxu0 0
  %3839 = vmatpush1.bf16.msra.mxu0 %v3761
  %3840 = vmatprep.subr.bf16.mxu0 0
  %3841 = vmatpush1.bf16.msra.mxu0 %v3762
  %3842 = vmatprep.subr.bf16.mxu0 0
  %3843 = vmatpush1.bf16.msra.mxu0 %v3763
  %3844 = vmatprep.mubr.bf16.mxu0 %v857
  %3845 = vmatmul.mubr.bf16.gmra.mrb[0].mxu0 %v856
  %v3846 = vpop.f32.mrb[0].mxu0
  %v3847 = vadd.f32 0.0, %v3846
  %v3848 = vpop.f32.mrb[0].mxu0
  %v3849 = vpop.f32.mrb[0].mxu0
  %v3850 = vpop.f32.mrb[0].mxu0
  %3851 = vdwg.mxu0
  %3852 = vmatprep.subr.bf16.mxu0 0
  %3853 = vmatpush1.bf16.msra.mxu0 %v3764
  %3854 = vmatprep.subr.bf16.mxu0 0
  %3855 = vmatpush1.bf16.msra.mxu0 %v3765
  %3856 = vmatprep.subr.bf16.mxu0 0
  %3857 = vmatpush1.bf16.msra.mxu0 %v3766
  %3858 = vmatprep.subr.bf16.mxu0 0
  %3859 = vmatpush1.bf16.msra.mxu0 %v3767
  %3860 = vmatprep.subr.bf16.mxu0 0
  %3861 = vmatpush1.bf16.msra.mxu0 %v3768
  %3862 = vmatprep.subr.bf16.mxu0 0
  %3863 = vmatpush1.bf16.msra.mxu0 %v3769
  %3864 = vmatprep.subr.bf16.mxu0 0
  %3865 = vmatpush1.bf16.msra.mxu0 %v3770
  %3866 = vmatprep.subr.bf16.mxu0 0
  %3867 = vmatpush1.bf16.msra.mxu0 %v3771
  %3868 = vmatprep.subr.bf16.mxu0 0
  %3869 = vmatpush1.bf16.msra.mxu0 %v3772
  %3870 = vmatprep.subr.bf16.mxu0 0
  %3871 = vmatpush1.bf16.msra.mxu0 %v3773
  %3872 = vmatprep.subr.bf16.mxu0 0
  %3873 = vmatpush1.bf16.msra.mxu0 %v3774
  %3874 = vmatprep.subr.bf16.mxu0 0
  %3875 = vmatpush1.bf16.msra.mxu0 %v3775
  %3876 = vmatprep.subr.bf16.mxu0 0
  %3877 = vmatpush1.bf16.msra.mxu0 %v3776
  %3878 = vmatprep.subr.bf16.mxu0 0
  %3879 = vmatpush1.bf16.msra.mxu0 %v3777
  %3880 = vmatprep.subr.bf16.mxu0 0
  %3881 = vmatpush1.bf16.msra.mxu0 %v3778
  %3882 = vmatprep.subr.bf16.mxu0 0
  %3883 = vmatpush1.bf16.msra.mxu0 %v3779
  %3884 = vmatprep.mubr.bf16.mxu0 %v859
  %3885 = vmatmul.mubr.bf16.gmra.mrb[0].mxu0 %v858
  %v3886 = vpop.f32.mrb[0].mxu0
  %v3887 = vadd.f32 %v3847, %v3886
  %v3888 = vpop.f32.mrb[0].mxu0
  %v3889 = vpop.f32.mrb[0].mxu0
  %v3890 = vpop.f32.mrb[0].mxu0
  %3891 = vdwg.mxu0
  %s3892 = scalar_lea.vmem %s7, 2304
  %v3893 = vld [vmem:[%s3892] sm:$0xf]
  %v3894 = vld [vmem:[%s3892 + $0x4] sm:$0xf]
  %v3895 = vld [vmem:[%s3892 + $0x8] sm:$0xf]
  %v3896 = vld [vmem:[%s3892 + $0xc] sm:$0xf]
  %v3897 = vld [vmem:[%s3892 + $0x10] sm:$0xf]
  %v3898 = vld [vmem:[%s3892 + $0x14] sm:$0xf]
  %v3899 = vld [vmem:[%s3892 + $0x18] sm:$0xf]
  %v3900 = vld [vmem:[%s3892 + $0x1c] sm:$0xf]
  %v3901 = vld [vmem:[%s3892 + $0x20] sm:$0xf]
  %v3902 = vld [vmem:[%s3892 + $0x24] sm:$0xf]
  %v3903 = vld [vmem:[%s3892 + $0x28] sm:$0xf]
  %v3904 = vld [vmem:[%s3892 + $0x2c] sm:$0xf]
  %v3905 = vld [vmem:[%s3892 + $0x30] sm:$0xf]
  %v3906 = vld [vmem:[%s3892 + $0x34] sm:$0xf]
  %v3907 = vld [vmem:[%s3892 + $0x38] sm:$0xf]
  %v3908 = vld [vmem:[%s3892 + $0x3c] sm:$0xf]
  %v3909 = vld [vmem:[%s3892 + $0x40] sm:$0xf]
  %v3910 = vld [vmem:[%s3892 + $0x44] sm:$0xf]
  %v3911 = vld [vmem:[%s3892 + $0x48] sm:$0xf]
  %v3912 = vld [vmem:[%s3892 + $0x4c] sm:$0xf]
  %v3913 = vld [vmem:[%s3892 + $0x50] sm:$0xf]
  %v3914 = vld [vmem:[%s3892 + $0x54] sm:$0xf]
  %v3915 = vld [vmem:[%s3892 + $0x58] sm:$0xf]
  %v3916 = vld [vmem:[%s3892 + $0x5c] sm:$0xf]
  %v3917 = vld [vmem:[%s3892 + $0x60] sm:$0xf]
  %v3918 = vld [vmem:[%s3892 + $0x64] sm:$0xf]
  %v3919 = vld [vmem:[%s3892 + $0x68] sm:$0xf]
  %v3920 = vld [vmem:[%s3892 + $0x6c] sm:$0xf]
  %v3921 = vld [vmem:[%s3892 + $0x70] sm:$0xf]
  %v3922 = vld [vmem:[%s3892 + $0x74] sm:$0xf]
  %v3923 = vld [vmem:[%s3892 + $0x78] sm:$0xf]
  %v3924 = vld [vmem:[%s3892 + $0x7c] sm:$0xf]
  %v3925 = vld [vmem:[%s3892 + $0x80] sm:$0xf]
  %v3926 = vld [vmem:[%s3892 + $0x84] sm:$0xf]
  %v3927 = vld [vmem:[%s3892 + $0x88] sm:$0xf]
  %v3928 = vld [vmem:[%s3892 + $0x8c] sm:$0xf]
  %v3929 = vld [vmem:[%s3892 + $0x90] sm:$0xf]
  %v3930 = vld [vmem:[%s3892 + $0x94] sm:$0xf]
  %v3931 = vld [vmem:[%s3892 + $0x98] sm:$0xf]
  %v3932 = vld [vmem:[%s3892 + $0x9c] sm:$0xf]
  %v3933 = vld [vmem:[%s3892 + $0xa0] sm:$0xf]
  %v3934 = vld [vmem:[%s3892 + $0xa4] sm:$0xf]
  %v3935 = vld [vmem:[%s3892 + $0xa8] sm:$0xf]
  %v3936 = vld [vmem:[%s3892 + $0xac] sm:$0xf]
  %v3937 = vld [vmem:[%s3892 + $0xb0] sm:$0xf]
  %v3938 = vld [vmem:[%s3892 + $0xb4] sm:$0xf]
  %v3939 = vld [vmem:[%s3892 + $0xb8] sm:$0xf]
  %v3940 = vld [vmem:[%s3892 + $0xbc] sm:$0xf]
  %v3941 = vld [vmem:[%s3892 + $0xc0] sm:$0xf]
  %v3942 = vld [vmem:[%s3892 + $0xc4] sm:$0xf]
  %v3943 = vld [vmem:[%s3892 + $0xc8] sm:$0xf]
  %v3944 = vld [vmem:[%s3892 + $0xcc] sm:$0xf]
  %v3945 = vld [vmem:[%s3892 + $0xd0] sm:$0xf]
  %v3946 = vld [vmem:[%s3892 + $0xd4] sm:$0xf]
  %v3947 = vld [vmem:[%s3892 + $0xd8] sm:$0xf]
  %v3948 = vld [vmem:[%s3892 + $0xdc] sm:$0xf]
  %v3949 = vld [vmem:[%s3892 + $0xe0] sm:$0xf]
  %v3950 = vld [vmem:[%s3892 + $0xe4] sm:$0xf]
  %v3951 = vld [vmem:[%s3892 + $0xe8] sm:$0xf]
  %v3952 = vld [vmem:[%s3892 + $0xec] sm:$0xf]
  %v3953 = vld [vmem:[%s3892 + $0xf0] sm:$0xf]
  %v3954 = vld [vmem:[%s3892 + $0xf4] sm:$0xf]
  %v3955 = vld [vmem:[%s3892 + $0xf8] sm:$0xf]
  %v3956 = vld [vmem:[%s3892 + $0xfc] sm:$0xf]
  %v4021 = vunpack.c.l.b16 %v3893
  %v4022 = vunpack.c.l.b16 %v3894
  %v4023 = vunpack.c.l.b16 %v3895
  %v4024 = vunpack.c.l.b16 %v3896
  %v4025 = vunpack.c.l.b16 %v3897
  %v4026 = vunpack.c.l.b16 %v3898
  %v4027 = vunpack.c.l.b16 %v3899
  %v4028 = vunpack.c.l.b16 %v3900
  %v4029 = vunpack.c.l.b16 %v3901
  %v4030 = vunpack.c.l.b16 %v3902
  %v4031 = vunpack.c.l.b16 %v3903
  %v4032 = vunpack.c.l.b16 %v3904
  %v4033 = vunpack.c.l.b16 %v3905
  %v4034 = vunpack.c.l.b16 %v3906
  %v4035 = vunpack.c.l.b16 %v3907
  %v4036 = vunpack.c.l.b16 %v3908
  %v4037 = vunpack.c.l.b16 %v3909
  %v4038 = vunpack.c.l.b16 %v3910
  %v4039 = vunpack.c.l.b16 %v3911
  %v4040 = vunpack.c.l.b16 %v3912
  %v4041 = vunpack.c.l.b16 %v3913
  %v4042 = vunpack.c.l.b16 %v3914
  %v4043 = vunpack.c.l.b16 %v3915
  %v4044 = vunpack.c.l.b16 %v3916
  %v4045 = vunpack.c.l.b16 %v3917
  %v4046 = vunpack.c.l.b16 %v3918
  %v4047 = vunpack.c.l.b16 %v3919
  %v4048 = vunpack.c.l.b16 %v3920
  %v4049 = vunpack.c.l.b16 %v3921
  %v4050 = vunpack.c.l.b16 %v3922
  %v4051 = vunpack.c.l.b16 %v3923
  %v4052 = vunpack.c.l.b16 %v3924
  %v4053 = vunpack.c.l.b16 %v3925
  %v4054 = vunpack.c.l.b16 %v3926
  %v4055 = vunpack.c.l.b16 %v3927
  %v4056 = vunpack.c.l.b16 %v3928
  %v4057 = vunpack.c.l.b16 %v3929
  %v4058 = vunpack.c.l.b16 %v3930
  %v4059 = vunpack.c.l.b16 %v3931
  %v4060 = vunpack.c.l.b16 %v3932
  %v4061 = vunpack.c.l.b16 %v3933
  %v4062 = vunpack.c.l.b16 %v3934
  %v4063 = vunpack.c.l.b16 %v3935
  %v4064 = vunpack.c.l.b16 %v3936
  %v4065 = vunpack.c.l.b16 %v3937
  %v4066 = vunpack.c.l.b16 %v3938
  %v4067 = vunpack.c.l.b16 %v3939
  %v4068 = vunpack.c.l.b16 %v3940
  %v4069 = vunpack.c.l.b16 %v3941
  %v4070 = vunpack.c.l.b16 %v3942
  %v4071 = vunpack.c.l.b16 %v3943
  %v4072 = vunpack.c.l.b16 %v3944
  %v4073 = vunpack.c.l.b16 %v3945
  %v4074 = vunpack.c.l.b16 %v3946
  %v4075 = vunpack.c.l.b16 %v3947
  %v4076 = vunpack.c.l.b16 %v3948
  %v4077 = vunpack.c.l.b16 %v3949
  %v4078 = vunpack.c.l.b16 %v3950
  %v4079 = vunpack.c.l.b16 %v3951
  %v4080 = vunpack.c.l.b16 %v3952
  %v4081 = vunpack.c.l.b16 %v3953
  %v4082 = vunpack.c.l.b16 %v3954
  %v4083 = vunpack.c.l.b16 %v3955
  %v4084 = vunpack.c.l.b16 %v3956
  %v4085 = vpack.c.b16 %v4022, %v4021
  %v4086 = vpack.c.b16 %v4024, %v4023
  %v4087 = vpack.c.b16 %v4026, %v4025
  %v4088 = vpack.c.b16 %v4028, %v4027
  %v4089 = vpack.c.b16 %v4030, %v4029
  %v4090 = vpack.c.b16 %v4032, %v4031
  %v4091 = vpack.c.b16 %v4034, %v4033
  %v4092 = vpack.c.b16 %v4036, %v4035
  %v4093 = vpack.c.b16 %v4038, %v4037
  %v4094 = vpack.c.b16 %v4040, %v4039
  %v4095 = vpack.c.b16 %v4042, %v4041
  %v4096 = vpack.c.b16 %v4044, %v4043
  %v4097 = vpack.c.b16 %v4046, %v4045
  %v4098 = vpack.c.b16 %v4048, %v4047
  %v4099 = vpack.c.b16 %v4050, %v4049
  %v4100 = vpack.c.b16 %v4052, %v4051
  %v4101 = vpack.c.b16 %v4054, %v4053
  %v4102 = vpack.c.b16 %v4056, %v4055
  %v4103 = vpack.c.b16 %v4058, %v4057
  %v4104 = vpack.c.b16 %v4060, %v4059
  %v4105 = vpack.c.b16 %v4062, %v4061
  %v4106 = vpack.c.b16 %v4064, %v4063
  %v4107 = vpack.c.b16 %v4066, %v4065
  %v4108 = vpack.c.b16 %v4068, %v4067
  %v4109 = vpack.c.b16 %v4070, %v4069
  %v4110 = vpack.c.b16 %v4072, %v4071
  %v4111 = vpack.c.b16 %v4074, %v4073
  %v4112 = vpack.c.b16 %v4076, %v4075
  %v4113 = vpack.c.b16 %v4078, %v4077
  %v4114 = vpack.c.b16 %v4080, %v4079
  %v4115 = vpack.c.b16 %v4082, %v4081
  %v4116 = vpack.c.b16 %v4084, %v4083
  %4149 = vmatprep.subr.bf16.mxu0 0
  %4150 = vmatpush1.bf16.msra.mxu0 %v4085
  %4151 = vmatprep.subr.bf16.mxu0 0
  %4152 = vmatpush1.bf16.msra.mxu0 %v4086
  %4153 = vmatprep.subr.bf16.mxu0 0
  %4154 = vmatpush1.bf16.msra.mxu0 %v4087
  %4155 = vmatprep.subr.bf16.mxu0 0
  %4156 = vmatpush1.bf16.msra.mxu0 %v4088
  %4157 = vmatprep.subr.bf16.mxu0 0
  %4158 = vmatpush1.bf16.msra.mxu0 %v4089
  %4159 = vmatprep.subr.bf16.mxu0 0
  %4160 = vmatpush1.bf16.msra.mxu0 %v4090
  %4161 = vmatprep.subr.bf16.mxu0 0
  %4162 = vmatpush1.bf16.msra.mxu0 %v4091
  %4163 = vmatprep.subr.bf16.mxu0 0
  %4164 = vmatpush1.bf16.msra.mxu0 %v4092
  %4165 = vmatprep.subr.bf16.mxu0 0
  %4166 = vmatpush1.bf16.msra.mxu0 %v4093
  %4167 = vmatprep.subr.bf16.mxu0 0
  %4168 = vmatpush1.bf16.msra.mxu0 %v4094
  %4169 = vmatprep.subr.bf16.mxu0 0
  %4170 = vmatpush1.bf16.msra.mxu0 %v4095
  %4171 = vmatprep.subr.bf16.mxu0 0
  %4172 = vmatpush1.bf16.msra.mxu0 %v4096
  %4173 = vmatprep.subr.bf16.mxu0 0
  %4174 = vmatpush1.bf16.msra.mxu0 %v4097
  %4175 = vmatprep.subr.bf16.mxu0 0
  %4176 = vmatpush1.bf16.msra.mxu0 %v4098
  %4177 = vmatprep.subr.bf16.mxu0 0
  %4178 = vmatpush1.bf16.msra.mxu0 %v4099
  %4179 = vmatprep.subr.bf16.mxu0 0
  %4180 = vmatpush1.bf16.msra.mxu0 %v4100
  %4181 = vmatprep.mubr.bf16.mxu0 %v857
  %4182 = vmatmul.mubr.bf16.gmra.mrb[0].mxu0 %v856
  %v4183 = vpop.f32.mrb[0].mxu0
  %v4184 = vadd.f32 0.0, %v4183
  %v4185 = vpop.f32.mrb[0].mxu0
  %v4186 = vpop.f32.mrb[0].mxu0
  %v4187 = vpop.f32.mrb[0].mxu0
  %4188 = vdwg.mxu0
  %4189 = vmatprep.subr.bf16.mxu0 0
  %4190 = vmatpush1.bf16.msra.mxu0 %v4101
  %4191 = vmatprep.subr.bf16.mxu0 0
  %4192 = vmatpush1.bf16.msra.mxu0 %v4102
  %4193 = vmatprep.subr.bf16.mxu0 0
  %4194 = vmatpush1.bf16.msra.mxu0 %v4103
  %4195 = vmatprep.subr.bf16.mxu0 0
  %4196 = vmatpush1.bf16.msra.mxu0 %v4104
  %4197 = vmatprep.subr.bf16.mxu0 0
  %4198 = vmatpush1.bf16.msra.mxu0 %v4105
  %4199 = vmatprep.subr.bf16.mxu0 0
  %4200 = vmatpush1.bf16.msra.mxu0 %v4106
  %4201 = vmatprep.subr.bf16.mxu0 0
  %4202 = vmatpush1.bf16.msra.mxu0 %v4107
  %4203 = vmatprep.subr.bf16.mxu0 0
  %4204 = vmatpush1.bf16.msra.mxu0 %v4108
  %4205 = vmatprep.subr.bf16.mxu0 0
  %4206 = vmatpush1.bf16.msra.mxu0 %v4109
  %4207 = vmatprep.subr.bf16.mxu0 0
  %4208 = vmatpush1.bf16.msra.mxu0 %v4110
  %4209 = vmatprep.subr.bf16.mxu0 0
  %4210 = vmatpush1.bf16.msra.mxu0 %v4111
  %4211 = vmatprep.subr.bf16.mxu0 0
  %4212 = vmatpush1.bf16.msra.mxu0 %v4112
  %4213 = vmatprep.subr.bf16.mxu0 0
  %4214 = vmatpush1.bf16.msra.mxu0 %v4113
  %4215 = vmatprep.subr.bf16.mxu0 0
  %4216 = vmatpush1.bf16.msra.mxu0 %v4114
  %4217 = vmatprep.subr.bf16.mxu0 0
  %4218 = vmatpush1.bf16.msra.mxu0 %v4115
  %4219 = vmatprep.subr.bf16.mxu0 0
  %4220 = vmatpush1.bf16.msra.mxu0 %v4116
  %4221 = vmatprep.mubr.bf16.mxu0 %v859
  %4222 = vmatmul.mubr.bf16.gmra.mrb[0].mxu0 %v858
  %v4223 = vpop.f32.mrb[0].mxu0
  %v4224 = vadd.f32 %v4184, %v4223
  %v4225 = vpop.f32.mrb[0].mxu0
  %v4226 = vpop.f32.mrb[0].mxu0
  %v4227 = vpop.f32.mrb[0].mxu0
  %4228 = vdwg.mxu0
  %s4229 = scalar_lea.vmem %s7, 2560
  %v4230 = vld [vmem:[%s4229] sm:$0xf]
  %v4231 = vld [vmem:[%s4229 + $0x4] sm:$0xf]
  %v4232 = vld [vmem:[%s4229 + $0x8] sm:$0xf]
  %v4233 = vld [vmem:[%s4229 + $0xc] sm:$0xf]
  %v4234 = vld [vmem:[%s4229 + $0x10] sm:$0xf]
  %v4235 = vld [vmem:[%s4229 + $0x14] sm:$0xf]
  %v4236 = vld [vmem:[%s4229 + $0x18] sm:$0xf]
  %v4237 = vld [vmem:[%s4229 + $0x1c] sm:$0xf]
  %v4238 = vld [vmem:[%s4229 + $0x20] sm:$0xf]
  %v4239 = vld [vmem:[%s4229 + $0x24] sm:$0xf]
  %v4240 = vld [vmem:[%s4229 + $0x28] sm:$0xf]
  %v4241 = vld [vmem:[%s4229 + $0x2c] sm:$0xf]
  %v4242 = vld [vmem:[%s4229 + $0x30] sm:$0xf]
  %v4243 = vld [vmem:[%s4229 + $0x34] sm:$0xf]
  %v4244 = vld [vmem:[%s4229 + $0x38] sm:$0xf]
  %v4245 = vld [vmem:[%s4229 + $0x3c] sm:$0xf]
  %v4246 = vld [vmem:[%s4229 + $0x40] sm:$0xf]
  %v4247 = vld [vmem:[%s4229 + $0x44] sm:$0xf]
  %v4248 = vld [vmem:[%s4229 + $0x48] sm:$0xf]
  %v4249 = vld [vmem:[%s4229 + $0x4c] sm:$0xf]
  %v4250 = vld [vmem:[%s4229 + $0x50] sm:$0xf]
  %v4251 = vld [vmem:[%s4229 + $0x54] sm:$0xf]
  %v4252 = vld [vmem:[%s4229 + $0x58] sm:$0xf]
  %v4253 = vld [vmem:[%s4229 + $0x5c] sm:$0xf]
  %v4254 = vld [vmem:[%s4229 + $0x60] sm:$0xf]
  %v4255 = vld [vmem:[%s4229 + $0x64] sm:$0xf]
  %v4256 = vld [vmem:[%s4229 + $0x68] sm:$0xf]
  %v4257 = vld [vmem:[%s4229 + $0x6c] sm:$0xf]
  %v4258 = vld [vmem:[%s4229 + $0x70] sm:$0xf]
  %v4259 = vld [vmem:[%s4229 + $0x74] sm:$0xf]
  %v4260 = vld [vmem:[%s4229 + $0x78] sm:$0xf]
  %v4261 = vld [vmem:[%s4229 + $0x7c] sm:$0xf]
  %v4262 = vld [vmem:[%s4229 + $0x80] sm:$0xf]
  %v4263 = vld [vmem:[%s4229 + $0x84] sm:$0xf]
  %v4264 = vld [vmem:[%s4229 + $0x88] sm:$0xf]
  %v4265 = vld [vmem:[%s4229 + $0x8c] sm:$0xf]
  %v4266 = vld [vmem:[%s4229 + $0x90] sm:$0xf]
  %v4267 = vld [vmem:[%s4229 + $0x94] sm:$0xf]
  %v4268 = vld [vmem:[%s4229 + $0x98] sm:$0xf]
  %v4269 = vld [vmem:[%s4229 + $0x9c] sm:$0xf]
  %v4270 = vld [vmem:[%s4229 + $0xa0] sm:$0xf]
  %v4271 = vld [vmem:[%s4229 + $0xa4] sm:$0xf]
  %v4272 = vld [vmem:[%s4229 + $0xa8] sm:$0xf]
  %v4273 = vld [vmem:[%s4229 + $0xac] sm:$0xf]
  %v4274 = vld [vmem:[%s4229 + $0xb0] sm:$0xf]
  %v4275 = vld [vmem:[%s4229 + $0xb4] sm:$0xf]
  %v4276 = vld [vmem:[%s4229 + $0xb8] sm:$0xf]
  %v4277 = vld [vmem:[%s4229 + $0xbc] sm:$0xf]
  %v4278 = vld [vmem:[%s4229 + $0xc0] sm:$0xf]
  %v4279 = vld [vmem:[%s4229 + $0xc4] sm:$0xf]
  %v4280 = vld [vmem:[%s4229 + $0xc8] sm:$0xf]
  %v4281 = vld [vmem:[%s4229 + $0xcc] sm:$0xf]
  %v4282 = vld [vmem:[%s4229 + $0xd0] sm:$0xf]
  %v4283 = vld [vmem:[%s4229 + $0xd4] sm:$0xf]
  %v4284 = vld [vmem:[%s4229 + $0xd8] sm:$0xf]
  %v4285 = vld [vmem:[%s4229 + $0xdc] sm:$0xf]
  %v4286 = vld [vmem:[%s4229 + $0xe0] sm:$0xf]
  %v4287 = vld [vmem:[%s4229 + $0xe4] sm:$0xf]
  %v4288 = vld [vmem:[%s4229 + $0xe8] sm:$0xf]
  %v4289 = vld [vmem:[%s4229 + $0xec] sm:$0xf]
  %v4290 = vld [vmem:[%s4229 + $0xf0] sm:$0xf]
  %v4291 = vld [vmem:[%s4229 + $0xf4] sm:$0xf]
  %v4292 = vld [vmem:[%s4229 + $0xf8] sm:$0xf]
  %v4293 = vld [vmem:[%s4229 + $0xfc] sm:$0xf]
  %v4358 = vunpack.c.l.b16 %v4230
  %v4359 = vunpack.c.l.b16 %v4231
  %v4360 = vunpack.c.l.b16 %v4232
  %v4361 = vunpack.c.l.b16 %v4233
  %v4362 = vunpack.c.l.b16 %v4234
  %v4363 = vunpack.c.l.b16 %v4235
  %v4364 = vunpack.c.l.b16 %v4236
  %v4365 = vunpack.c.l.b16 %v4237
  %v4366 = vunpack.c.l.b16 %v4238
  %v4367 = vunpack.c.l.b16 %v4239
  %v4368 = vunpack.c.l.b16 %v4240
  %v4369 = vunpack.c.l.b16 %v4241
  %v4370 = vunpack.c.l.b16 %v4242
  %v4371 = vunpack.c.l.b16 %v4243
  %v4372 = vunpack.c.l.b16 %v4244
  %v4373 = vunpack.c.l.b16 %v4245
  %v4374 = vunpack.c.l.b16 %v4246
  %v4375 = vunpack.c.l.b16 %v4247
  %v4376 = vunpack.c.l.b16 %v4248
  %v4377 = vunpack.c.l.b16 %v4249
  %v4378 = vunpack.c.l.b16 %v4250
  %v4379 = vunpack.c.l.b16 %v4251
  %v4380 = vunpack.c.l.b16 %v4252
  %v4381 = vunpack.c.l.b16 %v4253
  %v4382 = vunpack.c.l.b16 %v4254
  %v4383 = vunpack.c.l.b16 %v4255
  %v4384 = vunpack.c.l.b16 %v4256
  %v4385 = vunpack.c.l.b16 %v4257
  %v4386 = vunpack.c.l.b16 %v4258
  %v4387 = vunpack.c.l.b16 %v4259
  %v4388 = vunpack.c.l.b16 %v4260
  %v4389 = vunpack.c.l.b16 %v4261
  %v4390 = vunpack.c.l.b16 %v4262
  %v4391 = vunpack.c.l.b16 %v4263
  %v4392 = vunpack.c.l.b16 %v4264
  %v4393 = vunpack.c.l.b16 %v4265
  %v4394 = vunpack.c.l.b16 %v4266
  %v4395 = vunpack.c.l.b16 %v4267
  %v4396 = vunpack.c.l.b16 %v4268
  %v4397 = vunpack.c.l.b16 %v4269
  %v4398 = vunpack.c.l.b16 %v4270
  %v4399 = vunpack.c.l.b16 %v4271
  %v4400 = vunpack.c.l.b16 %v4272
  %v4401 = vunpack.c.l.b16 %v4273
  %v4402 = vunpack.c.l.b16 %v4274
  %v4403 = vunpack.c.l.b16 %v4275
  %v4404 = vunpack.c.l.b16 %v4276
  %v4405 = vunpack.c.l.b16 %v4277
  %v4406 = vunpack.c.l.b16 %v4278
  %v4407 = vunpack.c.l.b16 %v4279
  %v4408 = vunpack.c.l.b16 %v4280
  %v4409 = vunpack.c.l.b16 %v4281
  %v4410 = vunpack.c.l.b16 %v4282
  %v4411 = vunpack.c.l.b16 %v4283
  %v4412 = vunpack.c.l.b16 %v4284
  %v4413 = vunpack.c.l.b16 %v4285
  %v4414 = vunpack.c.l.b16 %v4286
  %v4415 = vunpack.c.l.b16 %v4287
  %v4416 = vunpack.c.l.b16 %v4288
  %v4417 = vunpack.c.l.b16 %v4289
  %v4418 = vunpack.c.l.b16 %v4290
  %v4419 = vunpack.c.l.b16 %v4291
  %v4420 = vunpack.c.l.b16 %v4292
  %v4421 = vunpack.c.l.b16 %v4293
  %v4422 = vpack.c.b16 %v4359, %v4358
  %v4423 = vpack.c.b16 %v4361, %v4360
  %v4424 = vpack.c.b16 %v4363, %v4362
  %v4425 = vpack.c.b16 %v4365, %v4364
  %v4426 = vpack.c.b16 %v4367, %v4366
  %v4427 = vpack.c.b16 %v4369, %v4368
  %v4428 = vpack.c.b16 %v4371, %v4370
  %v4429 = vpack.c.b16 %v4373, %v4372
  %v4430 = vpack.c.b16 %v4375, %v4374
  %v4431 = vpack.c.b16 %v4377, %v4376
  %v4432 = vpack.c.b16 %v4379, %v4378
  %v4433 = vpack.c.b16 %v4381, %v4380
  %v4434 = vpack.c.b16 %v4383, %v4382
  %v4435 = vpack.c.b16 %v4385, %v4384
  %v4436 = vpack.c.b16 %v4387, %v4386
  %v4437 = vpack.c.b16 %v4389, %v4388
  %v4438 = vpack.c.b16 %v4391, %v4390
  %v4439 = vpack.c.b16 %v4393, %v4392
  %v4440 = vpack.c.b16 %v4395, %v4394
  %v4441 = vpack.c.b16 %v4397, %v4396
  %v4442 = vpack.c.b16 %v4399, %v4398
  %v4443 = vpack.c.b16 %v4401, %v4400
  %v4444 = vpack.c.b16 %v4403, %v4402
  %v4445 = vpack.c.b16 %v4405, %v4404
  %v4446 = vpack.c.b16 %v4407, %v4406
  %v4447 = vpack.c.b16 %v4409, %v4408
  %v4448 = vpack.c.b16 %v4411, %v4410
  %v4449 = vpack.c.b16 %v4413, %v4412
  %v4450 = vpack.c.b16 %v4415, %v4414
  %v4451 = vpack.c.b16 %v4417, %v4416
  %v4452 = vpack.c.b16 %v4419, %v4418
  %v4453 = vpack.c.b16 %v4421, %v4420
  %4486 = vmatprep.subr.bf16.mxu0 0
  %4487 = vmatpush1.bf16.msra.mxu0 %v4422
  %4488 = vmatprep.subr.bf16.mxu0 0
  %4489 = vmatpush1.bf16.msra.mxu0 %v4423
  %4490 = vmatprep.subr.bf16.mxu0 0
  %4491 = vmatpush1.bf16.msra.mxu0 %v4424
  %4492 = vmatprep.subr.bf16.mxu0 0
  %4493 = vmatpush1.bf16.msra.mxu0 %v4425
  %4494 = vmatprep.subr.bf16.mxu0 0
  %4495 = vmatpush1.bf16.msra.mxu0 %v4426
  %4496 = vmatprep.subr.bf16.mxu0 0
  %4497 = vmatpush1.bf16.msra.mxu0 %v4427
  %4498 = vmatprep.subr.bf16.mxu0 0
  %4499 = vmatpush1.bf16.msra.mxu0 %v4428
  %4500 = vmatprep.subr.bf16.mxu0 0
  %4501 = vmatpush1.bf16.msra.mxu0 %v4429
  %4502 = vmatprep.subr.bf16.mxu0 0
  %4503 = vmatpush1.bf16.msra.mxu0 %v4430
  %4504 = vmatprep.subr.bf16.mxu0 0
  %4505 = vmatpush1.bf16.msra.mxu0 %v4431
  %4506 = vmatprep.subr.bf16.mxu0 0
  %4507 = vmatpush1.bf16.msra.mxu0 %v4432
  %4508 = vmatprep.subr.bf16.mxu0 0
  %4509 = vmatpush1.bf16.msra.mxu0 %v4433
  %4510 = vmatprep.subr.bf16.mxu0 0
  %4511 = vmatpush1.bf16.msra.mxu0 %v4434
  %4512 = vmatprep.subr.bf16.mxu0 0
  %4513 = vmatpush1.bf16.msra.mxu0 %v4435
  %4514 = vmatprep.subr.bf16.mxu0 0
  %4515 = vmatpush1.bf16.msra.mxu0 %v4436
  %4516 = vmatprep.subr.bf16.mxu0 0
  %4517 = vmatpush1.bf16.msra.mxu0 %v4437
  %4518 = vmatprep.mubr.bf16.mxu0 %v857
  %4519 = vmatmul.mubr.bf16.gmra.mrb[0].mxu0 %v856
  %v4520 = vpop.f32.mrb[0].mxu0
  %v4521 = vadd.f32 0.0, %v4520
  %v4522 = vpop.f32.mrb[0].mxu0
  %v4523 = vpop.f32.mrb[0].mxu0
  %v4524 = vpop.f32.mrb[0].mxu0
  %4525 = vdwg.mxu0
  %4526 = vmatprep.subr.bf16.mxu0 0
  %4527 = vmatpush1.bf16.msra.mxu0 %v4438
  %4528 = vmatprep.subr.bf16.mxu0 0
  %4529 = vmatpush1.bf16.msra.mxu0 %v4439
  %4530 = vmatprep.subr.bf16.mxu0 0
  %4531 = vmatpush1.bf16.msra.mxu0 %v4440
  %4532 = vmatprep.subr.bf16.mxu0 0
  %4533 = vmatpush1.bf16.msra.mxu0 %v4441
  %4534 = vmatprep.subr.bf16.mxu0 0
  %4535 = vmatpush1.bf16.msra.mxu0 %v4442
  %4536 = vmatprep.subr.bf16.mxu0 0
  %4537 = vmatpush1.bf16.msra.mxu0 %v4443
  %4538 = vmatprep.subr.bf16.mxu0 0
  %4539 = vmatpush1.bf16.msra.mxu0 %v4444
  %4540 = vmatprep.subr.bf16.mxu0 0
  %4541 = vmatpush1.bf16.msra.mxu0 %v4445
  %4542 = vmatprep.subr.bf16.mxu0 0
  %4543 = vmatpush1.bf16.msra.mxu0 %v4446
  %4544 = vmatprep.subr.bf16.mxu0 0
  %4545 = vmatpush1.bf16.msra.mxu0 %v4447
  %4546 = vmatprep.subr.bf16.mxu0 0
  %4547 = vmatpush1.bf16.msra.mxu0 %v4448
  %4548 = vmatprep.subr.bf16.mxu0 0
  %4549 = vmatpush1.bf16.msra.mxu0 %v4449
  %4550 = vmatprep.subr.bf16.mxu0 0
  %4551 = vmatpush1.bf16.msra.mxu0 %v4450
  %4552 = vmatprep.subr.bf16.mxu0 0
  %4553 = vmatpush1.bf16.msra.mxu0 %v4451
  %4554 = vmatprep.subr.bf16.mxu0 0
  %4555 = vmatpush1.bf16.msra.mxu0 %v4452
  %4556 = vmatprep.subr.bf16.mxu0 0
  %4557 = vmatpush1.bf16.msra.mxu0 %v4453
  %4558 = vmatprep.mubr.bf16.mxu0 %v859
  %4559 = vmatmul.mubr.bf16.gmra.mrb[0].mxu0 %v858
  %v4560 = vpop.f32.mrb[0].mxu0
  %v4561 = vadd.f32 %v4521, %v4560
  %v4562 = vpop.f32.mrb[0].mxu0
  %v4563 = vpop.f32.mrb[0].mxu0
  %v4564 = vpop.f32.mrb[0].mxu0
  %4565 = vdwg.mxu0
  %s4566 = scalar_lea.vmem %s7, 2816
  %v4567 = vld [vmem:[%s4566] sm:$0xf]
  %v4568 = vld [vmem:[%s4566 + $0x4] sm:$0xf]
  %v4569 = vld [vmem:[%s4566 + $0x8] sm:$0xf]
  %v4570 = vld [vmem:[%s4566 + $0xc] sm:$0xf]
  %v4571 = vld [vmem:[%s4566 + $0x10] sm:$0xf]
  %v4572 = vld [vmem:[%s4566 + $0x14] sm:$0xf]
  %v4573 = vld [vmem:[%s4566 + $0x18] sm:$0xf]
  %v4574 = vld [vmem:[%s4566 + $0x1c] sm:$0xf]
  %v4575 = vld [vmem:[%s4566 + $0x20] sm:$0xf]
  %v4576 = vld [vmem:[%s4566 + $0x24] sm:$0xf]
  %v4577 = vld [vmem:[%s4566 + $0x28] sm:$0xf]
  %v4578 = vld [vmem:[%s4566 + $0x2c] sm:$0xf]
  %v4579 = vld [vmem:[%s4566 + $0x30] sm:$0xf]
  %v4580 = vld [vmem:[%s4566 + $0x34] sm:$0xf]
  %v4581 = vld [vmem:[%s4566 + $0x38] sm:$0xf]
  %v4582 = vld [vmem:[%s4566 + $0x3c] sm:$0xf]
  %v4583 = vld [vmem:[%s4566 + $0x40] sm:$0xf]
  %v4584 = vld [vmem:[%s4566 + $0x44] sm:$0xf]
  %v4585 = vld [vmem:[%s4566 + $0x48] sm:$0xf]
  %v4586 = vld [vmem:[%s4566 + $0x4c] sm:$0xf]
  %v4587 = vld [vmem:[%s4566 + $0x50] sm:$0xf]
  %v4588 = vld [vmem:[%s4566 + $0x54] sm:$0xf]
  %v4589 = vld [vmem:[%s4566 + $0x58] sm:$0xf]
  %v4590 = vld [vmem:[%s4566 + $0x5c] sm:$0xf]
  %v4591 = vld [vmem:[%s4566 + $0x60] sm:$0xf]
  %v4592 = vld [vmem:[%s4566 + $0x64] sm:$0xf]
  %v4593 = vld [vmem:[%s4566 + $0x68] sm:$0xf]
  %v4594 = vld [vmem:[%s4566 + $0x6c] sm:$0xf]
  %v4595 = vld [vmem:[%s4566 + $0x70] sm:$0xf]
  %v4596 = vld [vmem:[%s4566 + $0x74] sm:$0xf]
  %v4597 = vld [vmem:[%s4566 + $0x78] sm:$0xf]
  %v4598 = vld [vmem:[%s4566 + $0x7c] sm:$0xf]
  %v4599 = vld [vmem:[%s4566 + $0x80] sm:$0xf]
  %v4600 = vld [vmem:[%s4566 + $0x84] sm:$0xf]
  %v4601 = vld [vmem:[%s4566 + $0x88] sm:$0xf]
  %v4602 = vld [vmem:[%s4566 + $0x8c] sm:$0xf]
  %v4603 = vld [vmem:[%s4566 + $0x90] sm:$0xf]
  %v4604 = vld [vmem:[%s4566 + $0x94] sm:$0xf]
  %v4605 = vld [vmem:[%s4566 + $0x98] sm:$0xf]
  %v4606 = vld [vmem:[%s4566 + $0x9c] sm:$0xf]
  %v4607 = vld [vmem:[%s4566 + $0xa0] sm:$0xf]
  %v4608 = vld [vmem:[%s4566 + $0xa4] sm:$0xf]
  %v4609 = vld [vmem:[%s4566 + $0xa8] sm:$0xf]
  %v4610 = vld [vmem:[%s4566 + $0xac] sm:$0xf]
  %v4611 = vld [vmem:[%s4566 + $0xb0] sm:$0xf]
  %v4612 = vld [vmem:[%s4566 + $0xb4] sm:$0xf]
  %v4613 = vld [vmem:[%s4566 + $0xb8] sm:$0xf]
  %v4614 = vld [vmem:[%s4566 + $0xbc] sm:$0xf]
  %v4615 = vld [vmem:[%s4566 + $0xc0] sm:$0xf]
  %v4616 = vld [vmem:[%s4566 + $0xc4] sm:$0xf]
  %v4617 = vld [vmem:[%s4566 + $0xc8] sm:$0xf]
  %v4618 = vld [vmem:[%s4566 + $0xcc] sm:$0xf]
  %v4619 = vld [vmem:[%s4566 + $0xd0] sm:$0xf]
  %v4620 = vld [vmem:[%s4566 + $0xd4] sm:$0xf]
  %v4621 = vld [vmem:[%s4566 + $0xd8] sm:$0xf]
  %v4622 = vld [vmem:[%s4566 + $0xdc] sm:$0xf]
  %v4623 = vld [vmem:[%s4566 + $0xe0] sm:$0xf]
  %v4624 = vld [vmem:[%s4566 + $0xe4] sm:$0xf]
  %v4625 = vld [vmem:[%s4566 + $0xe8] sm:$0xf]
  %v4626 = vld [vmem:[%s4566 + $0xec] sm:$0xf]
  %v4627 = vld [vmem:[%s4566 + $0xf0] sm:$0xf]
  %v4628 = vld [vmem:[%s4566 + $0xf4] sm:$0xf]
  %v4629 = vld [vmem:[%s4566 + $0xf8] sm:$0xf]
  %v4630 = vld [vmem:[%s4566 + $0xfc] sm:$0xf]
  %v4695 = vunpack.c.l.b16 %v4567
  %v4696 = vunpack.c.l.b16 %v4568
  %v4697 = vunpack.c.l.b16 %v4569
  %v4698 = vunpack.c.l.b16 %v4570
  %v4699 = vunpack.c.l.b16 %v4571
  %v4700 = vunpack.c.l.b16 %v4572
  %v4701 = vunpack.c.l.b16 %v4573
  %v4702 = vunpack.c.l.b16 %v4574
  %v4703 = vunpack.c.l.b16 %v4575
  %v4704 = vunpack.c.l.b16 %v4576
  %v4705 = vunpack.c.l.b16 %v4577
  %v4706 = vunpack.c.l.b16 %v4578
  %v4707 = vunpack.c.l.b16 %v4579
  %v4708 = vunpack.c.l.b16 %v4580
  %v4709 = vunpack.c.l.b16 %v4581
  %v4710 = vunpack.c.l.b16 %v4582
  %v4711 = vunpack.c.l.b16 %v4583
  %v4712 = vunpack.c.l.b16 %v4584
  %v4713 = vunpack.c.l.b16 %v4585
  %v4714 = vunpack.c.l.b16 %v4586
  %v4715 = vunpack.c.l.b16 %v4587
  %v4716 = vunpack.c.l.b16 %v4588
  %v4717 = vunpack.c.l.b16 %v4589
  %v4718 = vunpack.c.l.b16 %v4590
  %v4719 = vunpack.c.l.b16 %v4591
  %v4720 = vunpack.c.l.b16 %v4592
  %v4721 = vunpack.c.l.b16 %v4593
  %v4722 = vunpack.c.l.b16 %v4594
  %v4723 = vunpack.c.l.b16 %v4595
  %v4724 = vunpack.c.l.b16 %v4596
  %v4725 = vunpack.c.l.b16 %v4597
  %v4726 = vunpack.c.l.b16 %v4598
  %v4727 = vunpack.c.l.b16 %v4599
  %v4728 = vunpack.c.l.b16 %v4600
  %v4729 = vunpack.c.l.b16 %v4601
  %v4730 = vunpack.c.l.b16 %v4602
  %v4731 = vunpack.c.l.b16 %v4603
  %v4732 = vunpack.c.l.b16 %v4604
  %v4733 = vunpack.c.l.b16 %v4605
  %v4734 = vunpack.c.l.b16 %v4606
  %v4735 = vunpack.c.l.b16 %v4607
  %v4736 = vunpack.c.l.b16 %v4608
  %v4737 = vunpack.c.l.b16 %v4609
  %v4738 = vunpack.c.l.b16 %v4610
  %v4739 = vunpack.c.l.b16 %v4611
  %v4740 = vunpack.c.l.b16 %v4612
  %v4741 = vunpack.c.l.b16 %v4613
  %v4742 = vunpack.c.l.b16 %v4614
  %v4743 = vunpack.c.l.b16 %v4615
  %v4744 = vunpack.c.l.b16 %v4616
  %v4745 = vunpack.c.l.b16 %v4617
  %v4746 = vunpack.c.l.b16 %v4618
  %v4747 = vunpack.c.l.b16 %v4619
  %v4748 = vunpack.c.l.b16 %v4620
  %v4749 = vunpack.c.l.b16 %v4621
  %v4750 = vunpack.c.l.b16 %v4622
  %v4751 = vunpack.c.l.b16 %v4623
  %v4752 = vunpack.c.l.b16 %v4624
  %v4753 = vunpack.c.l.b16 %v4625
  %v4754 = vunpack.c.l.b16 %v4626
  %v4755 = vunpack.c.l.b16 %v4627
  %v4756 = vunpack.c.l.b16 %v4628
  %v4757 = vunpack.c.l.b16 %v4629
  %v4758 = vunpack.c.l.b16 %v4630
  %v4759 = vpack.c.b16 %v4696, %v4695
  %v4760 = vpack.c.b16 %v4698, %v4697
  %v4761 = vpack.c.b16 %v4700, %v4699
  %v4762 = vpack.c.b16 %v4702, %v4701
  %v4763 = vpack.c.b16 %v4704, %v4703
  %v4764 = vpack.c.b16 %v4706, %v4705
  %v4765 = vpack.c.b16 %v4708, %v4707
  %v4766 = vpack.c.b16 %v4710, %v4709
  %v4767 = vpack.c.b16 %v4712, %v4711
  %v4768 = vpack.c.b16 %v4714, %v4713
  %v4769 = vpack.c.b16 %v4716, %v4715
  %v4770 = vpack.c.b16 %v4718, %v4717
  %v4771 = vpack.c.b16 %v4720, %v4719
  %v4772 = vpack.c.b16 %v4722, %v4721
  %v4773 = vpack.c.b16 %v4724, %v4723
  %v4774 = vpack.c.b16 %v4726, %v4725
  %v4775 = vpack.c.b16 %v4728, %v4727
  %v4776 = vpack.c.b16 %v4730, %v4729
  %v4777 = vpack.c.b16 %v4732, %v4731
  %v4778 = vpack.c.b16 %v4734, %v4733
  %v4779 = vpack.c.b16 %v4736, %v4735
  %v4780 = vpack.c.b16 %v4738, %v4737
  %v4781 = vpack.c.b16 %v4740, %v4739
  %v4782 = vpack.c.b16 %v4742, %v4741
  %v4783 = vpack.c.b16 %v4744, %v4743
  %v4784 = vpack.c.b16 %v4746, %v4745
  %v4785 = vpack.c.b16 %v4748, %v4747
  %v4786 = vpack.c.b16 %v4750, %v4749
  %v4787 = vpack.c.b16 %v4752, %v4751
  %v4788 = vpack.c.b16 %v4754, %v4753
  %v4789 = vpack.c.b16 %v4756, %v4755
  %v4790 = vpack.c.b16 %v4758, %v4757
  %4823 = vmatprep.subr.bf16.mxu0 0
  %4824 = vmatpush1.bf16.msra.mxu0 %v4759
  %4825 = vmatprep.subr.bf16.mxu0 0
  %4826 = vmatpush1.bf16.msra.mxu0 %v4760
  %4827 = vmatprep.subr.bf16.mxu0 0
  %4828 = vmatpush1.bf16.msra.mxu0 %v4761
  %4829 = vmatprep.subr.bf16.mxu0 0
  %4830 = vmatpush1.bf16.msra.mxu0 %v4762
  %4831 = vmatprep.subr.bf16.mxu0 0
  %4832 = vmatpush1.bf16.msra.mxu0 %v4763
  %4833 = vmatprep.subr.bf16.mxu0 0
  %4834 = vmatpush1.bf16.msra.mxu0 %v4764
  %4835 = vmatprep.subr.bf16.mxu0 0
  %4836 = vmatpush1.bf16.msra.mxu0 %v4765
  %4837 = vmatprep.subr.bf16.mxu0 0
  %4838 = vmatpush1.bf16.msra.mxu0 %v4766
  %4839 = vmatprep.subr.bf16.mxu0 0
  %4840 = vmatpush1.bf16.msra.mxu0 %v4767
  %4841 = vmatprep.subr.bf16.mxu0 0
  %4842 = vmatpush1.bf16.msra.mxu0 %v4768
  %4843 = vmatprep.subr.bf16.mxu0 0
  %4844 = vmatpush1.bf16.msra.mxu0 %v4769
  %4845 = vmatprep.subr.bf16.mxu0 0
  %4846 = vmatpush1.bf16.msra.mxu0 %v4770
  %4847 = vmatprep.subr.bf16.mxu0 0
  %4848 = vmatpush1.bf16.msra.mxu0 %v4771
  %4849 = vmatprep.subr.bf16.mxu0 0
  %4850 = vmatpush1.bf16.msra.mxu0 %v4772
  %4851 = vmatprep.subr.bf16.mxu0 0
  %4852 = vmatpush1.bf16.msra.mxu0 %v4773
  %4853 = vmatprep.subr.bf16.mxu0 0
  %4854 = vmatpush1.bf16.msra.mxu0 %v4774
  %4855 = vmatprep.mubr.bf16.mxu0 %v857
  %4856 = vmatmul.mubr.bf16.gmra.mrb[0].mxu0 %v856
  %v4857 = vpop.f32.mrb[0].mxu0
  %v4858 = vadd.f32 0.0, %v4857
  %v4859 = vpop.f32.mrb[0].mxu0
  %v4860 = vpop.f32.mrb[0].mxu0
  %v4861 = vpop.f32.mrb[0].mxu0
  %4862 = vdwg.mxu0
  %4863 = vmatprep.subr.bf16.mxu0 0
  %4864 = vmatpush1.bf16.msra.mxu0 %v4775
  %4865 = vmatprep.subr.bf16.mxu0 0
  %4866 = vmatpush1.bf16.msra.mxu0 %v4776
  %4867 = vmatprep.subr.bf16.mxu0 0
  %4868 = vmatpush1.bf16.msra.mxu0 %v4777
  %4869 = vmatprep.subr.bf16.mxu0 0
  %4870 = vmatpush1.bf16.msra.mxu0 %v4778
  %4871 = vmatprep.subr.bf16.mxu0 0
  %4872 = vmatpush1.bf16.msra.mxu0 %v4779
  %4873 = vmatprep.subr.bf16.mxu0 0
  %4874 = vmatpush1.bf16.msra.mxu0 %v4780
  %4875 = vmatprep.subr.bf16.mxu0 0
  %4876 = vmatpush1.bf16.msra.mxu0 %v4781
  %4877 = vmatprep.subr.bf16.mxu0 0
  %4878 = vmatpush1.bf16.msra.mxu0 %v4782
  %4879 = vmatprep.subr.bf16.mxu0 0
  %4880 = vmatpush1.bf16.msra.mxu0 %v4783
  %4881 = vmatprep.subr.bf16.mxu0 0
  %4882 = vmatpush1.bf16.msra.mxu0 %v4784
  %4883 = vmatprep.subr.bf16.mxu0 0
  %4884 = vmatpush1.bf16.msra.mxu0 %v4785
  %4885 = vmatprep.subr.bf16.mxu0 0
  %4886 = vmatpush1.bf16.msra.mxu0 %v4786
  %4887 = vmatprep.subr.bf16.mxu0 0
  %4888 = vmatpush1.bf16.msra.mxu0 %v4787
  %4889 = vmatprep.subr.bf16.mxu0 0
  %4890 = vmatpush1.bf16.msra.mxu0 %v4788
  %4891 = vmatprep.subr.bf16.mxu0 0
  %4892 = vmatpush1.bf16.msra.mxu0 %v4789
  %4893 = vmatprep.subr.bf16.mxu0 0
  %4894 = vmatpush1.bf16.msra.mxu0 %v4790
  %4895 = vmatprep.mubr.bf16.mxu0 %v859
  %4896 = vmatmul.mubr.bf16.gmra.mrb[0].mxu0 %v858
  %v4897 = vpop.f32.mrb[0].mxu0
  %v4898 = vadd.f32 %v4858, %v4897
  %v4899 = vpop.f32.mrb[0].mxu0
  %v4900 = vpop.f32.mrb[0].mxu0
  %v4901 = vpop.f32.mrb[0].mxu0
  %4902 = vdwg.mxu0
  %s4903 = scalar_lea.vmem %s7, 3072
  %v4904 = vld [vmem:[%s4903] sm:$0xf]
  %v4905 = vld [vmem:[%s4903 + $0x4] sm:$0xf]
  %v4906 = vld [vmem:[%s4903 + $0x8] sm:$0xf]
  %v4907 = vld [vmem:[%s4903 + $0xc] sm:$0xf]
  %v4908 = vld [vmem:[%s4903 + $0x10] sm:$0xf]
  %v4909 = vld [vmem:[%s4903 + $0x14] sm:$0xf]
  %v4910 = vld [vmem:[%s4903 + $0x18] sm:$0xf]
  %v4911 = vld [vmem:[%s4903 + $0x1c] sm:$0xf]
  %v4912 = vld [vmem:[%s4903 + $0x20] sm:$0xf]
  %v4913 = vld [vmem:[%s4903 + $0x24] sm:$0xf]
  %v4914 = vld [vmem:[%s4903 + $0x28] sm:$0xf]
  %v4915 = vld [vmem:[%s4903 + $0x2c] sm:$0xf]
  %v4916 = vld [vmem:[%s4903 + $0x30] sm:$0xf]
  %v4917 = vld [vmem:[%s4903 + $0x34] sm:$0xf]
  %v4918 = vld [vmem:[%s4903 + $0x38] sm:$0xf]
  %v4919 = vld [vmem:[%s4903 + $0x3c] sm:$0xf]
  %v4920 = vld [vmem:[%s4903 + $0x40] sm:$0xf]
  %v4921 = vld [vmem:[%s4903 + $0x44] sm:$0xf]
  %v4922 = vld [vmem:[%s4903 + $0x48] sm:$0xf]
  %v4923 = vld [vmem:[%s4903 + $0x4c] sm:$0xf]
  %v4924 = vld [vmem:[%s4903 + $0x50] sm:$0xf]
  %v4925 = vld [vmem:[%s4903 + $0x54] sm:$0xf]
  %v4926 = vld [vmem:[%s4903 + $0x58] sm:$0xf]
  %v4927 = vld [vmem:[%s4903 + $0x5c] sm:$0xf]
  %v4928 = vld [vmem:[%s4903 + $0x60] sm:$0xf]
  %v4929 = vld [vmem:[%s4903 + $0x64] sm:$0xf]
  %v4930 = vld [vmem:[%s4903 + $0x68] sm:$0xf]
  %v4931 = vld [vmem:[%s4903 + $0x6c] sm:$0xf]
  %v4932 = vld [vmem:[%s4903 + $0x70] sm:$0xf]
  %v4933 = vld [vmem:[%s4903 + $0x74] sm:$0xf]
  %v4934 = vld [vmem:[%s4903 + $0x78] sm:$0xf]
  %v4935 = vld [vmem:[%s4903 + $0x7c] sm:$0xf]
  %v4936 = vld [vmem:[%s4903 + $0x80] sm:$0xf]
  %v4937 = vld [vmem:[%s4903 + $0x84] sm:$0xf]
  %v4938 = vld [vmem:[%s4903 + $0x88] sm:$0xf]
  %v4939 = vld [vmem:[%s4903 + $0x8c] sm:$0xf]
  %v4940 = vld [vmem:[%s4903 + $0x90] sm:$0xf]
  %v4941 = vld [vmem:[%s4903 + $0x94] sm:$0xf]
  %v4942 = vld [vmem:[%s4903 + $0x98] sm:$0xf]
  %v4943 = vld [vmem:[%s4903 + $0x9c] sm:$0xf]
  %v4944 = vld [vmem:[%s4903 + $0xa0] sm:$0xf]
  %v4945 = vld [vmem:[%s4903 + $0xa4] sm:$0xf]
  %v4946 = vld [vmem:[%s4903 + $0xa8] sm:$0xf]
  %v4947 = vld [vmem:[%s4903 + $0xac] sm:$0xf]
  %v4948 = vld [vmem:[%s4903 + $0xb0] sm:$0xf]
  %v4949 = vld [vmem:[%s4903 + $0xb4] sm:$0xf]
  %v4950 = vld [vmem:[%s4903 + $0xb8] sm:$0xf]
  %v4951 = vld [vmem:[%s4903 + $0xbc] sm:$0xf]
  %v4952 = vld [vmem:[%s4903 + $0xc0] sm:$0xf]
  %v4953 = vld [vmem:[%s4903 + $0xc4] sm:$0xf]
  %v4954 = vld [vmem:[%s4903 + $0xc8] sm:$0xf]
  %v4955 = vld [vmem:[%s4903 + $0xcc] sm:$0xf]
  %v4956 = vld [vmem:[%s4903 + $0xd0] sm:$0xf]
  %v4957 = vld [vmem:[%s4903 + $0xd4] sm:$0xf]
  %v4958 = vld [vmem:[%s4903 + $0xd8] sm:$0xf]
  %v4959 = vld [vmem:[%s4903 + $0xdc] sm:$0xf]
  %v4960 = vld [vmem:[%s4903 + $0xe0] sm:$0xf]
  %v4961 = vld [vmem:[%s4903 + $0xe4] sm:$0xf]
  %v4962 = vld [vmem:[%s4903 + $0xe8] sm:$0xf]
  %v4963 = vld [vmem:[%s4903 + $0xec] sm:$0xf]
  %v4964 = vld [vmem:[%s4903 + $0xf0] sm:$0xf]
  %v4965 = vld [vmem:[%s4903 + $0xf4] sm:$0xf]
  %v4966 = vld [vmem:[%s4903 + $0xf8] sm:$0xf]
  %v4967 = vld [vmem:[%s4903 + $0xfc] sm:$0xf]
  %v5032 = vunpack.c.l.b16 %v4904
  %v5033 = vunpack.c.l.b16 %v4905
  %v5034 = vunpack.c.l.b16 %v4906
  %v5035 = vunpack.c.l.b16 %v4907
  %v5036 = vunpack.c.l.b16 %v4908
  %v5037 = vunpack.c.l.b16 %v4909
  %v5038 = vunpack.c.l.b16 %v4910
  %v5039 = vunpack.c.l.b16 %v4911
  %v5040 = vunpack.c.l.b16 %v4912
  %v5041 = vunpack.c.l.b16 %v4913
  %v5042 = vunpack.c.l.b16 %v4914
  %v5043 = vunpack.c.l.b16 %v4915
  %v5044 = vunpack.c.l.b16 %v4916
  %v5045 = vunpack.c.l.b16 %v4917
  %v5046 = vunpack.c.l.b16 %v4918
  %v5047 = vunpack.c.l.b16 %v4919
  %v5048 = vunpack.c.l.b16 %v4920
  %v5049 = vunpack.c.l.b16 %v4921
  %v5050 = vunpack.c.l.b16 %v4922
  %v5051 = vunpack.c.l.b16 %v4923
  %v5052 = vunpack.c.l.b16 %v4924
  %v5053 = vunpack.c.l.b16 %v4925
  %v5054 = vunpack.c.l.b16 %v4926
  %v5055 = vunpack.c.l.b16 %v4927
  %v5056 = vunpack.c.l.b16 %v4928
  %v5057 = vunpack.c.l.b16 %v4929
  %v5058 = vunpack.c.l.b16 %v4930
  %v5059 = vunpack.c.l.b16 %v4931
  %v5060 = vunpack.c.l.b16 %v4932
  %v5061 = vunpack.c.l.b16 %v4933
  %v5062 = vunpack.c.l.b16 %v4934
  %v5063 = vunpack.c.l.b16 %v4935
  %v5064 = vunpack.c.l.b16 %v4936
  %v5065 = vunpack.c.l.b16 %v4937
  %v5066 = vunpack.c.l.b16 %v4938
  %v5067 = vunpack.c.l.b16 %v4939
  %v5068 = vunpack.c.l.b16 %v4940
  %v5069 = vunpack.c.l.b16 %v4941
  %v5070 = vunpack.c.l.b16 %v4942
  %v5071 = vunpack.c.l.b16 %v4943
  %v5072 = vunpack.c.l.b16 %v4944
  %v5073 = vunpack.c.l.b16 %v4945
  %v5074 = vunpack.c.l.b16 %v4946
  %v5075 = vunpack.c.l.b16 %v4947
  %v5076 = vunpack.c.l.b16 %v4948
  %v5077 = vunpack.c.l.b16 %v4949
  %v5078 = vunpack.c.l.b16 %v4950
  %v5079 = vunpack.c.l.b16 %v4951
  %v5080 = vunpack.c.l.b16 %v4952
  %v5081 = vunpack.c.l.b16 %v4953
  %v5082 = vunpack.c.l.b16 %v4954
  %v5083 = vunpack.c.l.b16 %v4955
  %v5084 = vunpack.c.l.b16 %v4956
  %v5085 = vunpack.c.l.b16 %v4957
  %v5086 = vunpack.c.l.b16 %v4958
  %v5087 = vunpack.c.l.b16 %v4959
  %v5088 = vunpack.c.l.b16 %v4960
  %v5089 = vunpack.c.l.b16 %v4961
  %v5090 = vunpack.c.l.b16 %v4962
  %v5091 = vunpack.c.l.b16 %v4963
  %v5092 = vunpack.c.l.b16 %v4964
  %v5093 = vunpack.c.l.b16 %v4965
  %v5094 = vunpack.c.l.b16 %v4966
  %v5095 = vunpack.c.l.b16 %v4967
  %v5096 = vpack.c.b16 %v5033, %v5032
  %v5097 = vpack.c.b16 %v5035, %v5034
  %v5098 = vpack.c.b16 %v5037, %v5036
  %v5099 = vpack.c.b16 %v5039, %v5038
  %v5100 = vpack.c.b16 %v5041, %v5040
  %v5101 = vpack.c.b16 %v5043, %v5042
  %v5102 = vpack.c.b16 %v5045, %v5044
  %v5103 = vpack.c.b16 %v5047, %v5046
  %v5104 = vpack.c.b16 %v5049, %v5048
  %v5105 = vpack.c.b16 %v5051, %v5050
  %v5106 = vpack.c.b16 %v5053, %v5052
  %v5107 = vpack.c.b16 %v5055, %v5054
  %v5108 = vpack.c.b16 %v5057, %v5056
  %v5109 = vpack.c.b16 %v5059, %v5058
  %v5110 = vpack.c.b16 %v5061, %v5060
  %v5111 = vpack.c.b16 %v5063, %v5062
  %v5112 = vpack.c.b16 %v5065, %v5064
  %v5113 = vpack.c.b16 %v5067, %v5066
  %v5114 = vpack.c.b16 %v5069, %v5068
  %v5115 = vpack.c.b16 %v5071, %v5070
  %v5116 = vpack.c.b16 %v5073, %v5072
  %v5117 = vpack.c.b16 %v5075, %v5074
  %v5118 = vpack.c.b16 %v5077, %v5076
  %v5119 = vpack.c.b16 %v5079, %v5078
  %v5120 = vpack.c.b16 %v5081, %v5080
  %v5121 = vpack.c.b16 %v5083, %v5082
  %v5122 = vpack.c.b16 %v5085, %v5084
  %v5123 = vpack.c.b16 %v5087, %v5086
  %v5124 = vpack.c.b16 %v5089, %v5088
  %v5125 = vpack.c.b16 %v5091, %v5090
  %v5126 = vpack.c.b16 %v5093, %v5092
  %v5127 = vpack.c.b16 %v5095, %v5094
  %5160 = vmatprep.subr.bf16.mxu0 0
  %5161 = vmatpush1.bf16.msra.mxu0 %v5096
  %5162 = vmatprep.subr.bf16.mxu0 0
  %5163 = vmatpush1.bf16.msra.mxu0 %v5097
  %5164 = vmatprep.subr.bf16.mxu0 0
  %5165 = vmatpush1.bf16.msra.mxu0 %v5098
  %5166 = vmatprep.subr.bf16.mxu0 0
  %5167 = vmatpush1.bf16.msra.mxu0 %v5099
  %5168 = vmatprep.subr.bf16.mxu0 0
  %5169 = vmatpush1.bf16.msra.mxu0 %v5100
  %5170 = vmatprep.subr.bf16.mxu0 0
  %5171 = vmatpush1.bf16.msra.mxu0 %v5101
  %5172 = vmatprep.subr.bf16.mxu0 0
  %5173 = vmatpush1.bf16.msra.mxu0 %v5102
  %5174 = vmatprep.subr.bf16.mxu0 0
  %5175 = vmatpush1.bf16.msra.mxu0 %v5103
  %5176 = vmatprep.subr.bf16.mxu0 0
  %5177 = vmatpush1.bf16.msra.mxu0 %v5104
  %5178 = vmatprep.subr.bf16.mxu0 0
  %5179 = vmatpush1.bf16.msra.mxu0 %v5105
  %5180 = vmatprep.subr.bf16.mxu0 0
  %5181 = vmatpush1.bf16.msra.mxu0 %v5106
  %5182 = vmatprep.subr.bf16.mxu0 0
  %5183 = vmatpush1.bf16.msra.mxu0 %v5107
  %5184 = vmatprep.subr.bf16.mxu0 0
  %5185 = vmatpush1.bf16.msra.mxu0 %v5108
  %5186 = vmatprep.subr.bf16.mxu0 0
  %5187 = vmatpush1.bf16.msra.mxu0 %v5109
  %5188 = vmatprep.subr.bf16.mxu0 0
  %5189 = vmatpush1.bf16.msra.mxu0 %v5110
  %5190 = vmatprep.subr.bf16.mxu0 0
  %5191 = vmatpush1.bf16.msra.mxu0 %v5111
  %5192 = vmatprep.mubr.bf16.mxu0 %v857
  %5193 = vmatmul.mubr.bf16.gmra.mrb[0].mxu0 %v856
  %v5194 = vpop.f32.mrb[0].mxu0
  %v5195 = vadd.f32 0.0, %v5194
  %v5196 = vpop.f32.mrb[0].mxu0
  %v5197 = vpop.f32.mrb[0].mxu0
  %v5198 = vpop.f32.mrb[0].mxu0
  %5199 = vdwg.mxu0
  %5200 = vmatprep.subr.bf16.mxu0 0
  %5201 = vmatpush1.bf16.msra.mxu0 %v5112
  %5202 = vmatprep.subr.bf16.mxu0 0
  %5203 = vmatpush1.bf16.msra.mxu0 %v5113
  %5204 = vmatprep.subr.bf16.mxu0 0
  %5205 = vmatpush1.bf16.msra.mxu0 %v5114
  %5206 = vmatprep.subr.bf16.mxu0 0
  %5207 = vmatpush1.bf16.msra.mxu0 %v5115
  %5208 = vmatprep.subr.bf16.mxu0 0
  %5209 = vmatpush1.bf16.msra.mxu0 %v5116
  %5210 = vmatprep.subr.bf16.mxu0 0
  %5211 = vmatpush1.bf16.msra.mxu0 %v5117
  %5212 = vmatprep.subr.bf16.mxu0 0
  %5213 = vmatpush1.bf16.msra.mxu0 %v5118
  %5214 = vmatprep.subr.bf16.mxu0 0
  %5215 = vmatpush1.bf16.msra.mxu0 %v5119
  %5216 = vmatprep.subr.bf16.mxu0 0
  %5217 = vmatpush1.bf16.msra.mxu0 %v5120
  %5218 = vmatprep.subr.bf16.mxu0 0
  %5219 = vmatpush1.bf16.msra.mxu0 %v5121
  %5220 = vmatprep.subr.bf16.mxu0 0
  %5221 = vmatpush1.bf16.msra.mxu0 %v5122
  %5222 = vmatprep.subr.bf16.mxu0 0
  %5223 = vmatpush1.bf16.msra.mxu0 %v5123
  %5224 = vmatprep.subr.bf16.mxu0 0
  %5225 = vmatpush1.bf16.msra.mxu0 %v5124
  %5226 = vmatprep.subr.bf16.mxu0 0
  %5227 = vmatpush1.bf16.msra.mxu0 %v5125
  %5228 = vmatprep.subr.bf16.mxu0 0
  %5229 = vmatpush1.bf16.msra.mxu0 %v5126
  %5230 = vmatprep.subr.bf16.mxu0 0
  %5231 = vmatpush1.bf16.msra.mxu0 %v5127
  %5232 = vmatprep.mubr.bf16.mxu0 %v859
  %5233 = vmatmul.mubr.bf16.gmra.mrb[0].mxu0 %v858
  %v5234 = vpop.f32.mrb[0].mxu0
  %v5235 = vadd.f32 %v5195, %v5234
  %v5236 = vpop.f32.mrb[0].mxu0
  %v5237 = vpop.f32.mrb[0].mxu0
  %v5238 = vpop.f32.mrb[0].mxu0
  %5239 = vdwg.mxu0
  %s5240 = scalar_lea.vmem %s7, 3328
  %v5241 = vld [vmem:[%s5240] sm:$0xf]
  %v5242 = vld [vmem:[%s5240 + $0x4] sm:$0xf]
  %v5243 = vld [vmem:[%s5240 + $0x8] sm:$0xf]
  %v5244 = vld [vmem:[%s5240 + $0xc] sm:$0xf]
  %v5245 = vld [vmem:[%s5240 + $0x10] sm:$0xf]
  %v5246 = vld [vmem:[%s5240 + $0x14] sm:$0xf]
  %v5247 = vld [vmem:[%s5240 + $0x18] sm:$0xf]
  %v5248 = vld [vmem:[%s5240 + $0x1c] sm:$0xf]
  %v5249 = vld [vmem:[%s5240 + $0x20] sm:$0xf]
  %v5250 = vld [vmem:[%s5240 + $0x24] sm:$0xf]
  %v5251 = vld [vmem:[%s5240 + $0x28] sm:$0xf]
  %v5252 = vld [vmem:[%s5240 + $0x2c] sm:$0xf]
  %v5253 = vld [vmem:[%s5240 + $0x30] sm:$0xf]
  %v5254 = vld [vmem:[%s5240 + $0x34] sm:$0xf]
  %v5255 = vld [vmem:[%s5240 + $0x38] sm:$0xf]
  %v5256 = vld [vmem:[%s5240 + $0x3c] sm:$0xf]
  %v5257 = vld [vmem:[%s5240 + $0x40] sm:$0xf]
  %v5258 = vld [vmem:[%s5240 + $0x44] sm:$0xf]
  %v5259 = vld [vmem:[%s5240 + $0x48] sm:$0xf]
  %v5260 = vld [vmem:[%s5240 + $0x4c] sm:$0xf]
  %v5261 = vld [vmem:[%s5240 + $0x50] sm:$0xf]
  %v5262 = vld [vmem:[%s5240 + $0x54] sm:$0xf]
  %v5263 = vld [vmem:[%s5240 + $0x58] sm:$0xf]
  %v5264 = vld [vmem:[%s5240 + $0x5c] sm:$0xf]
  %v5265 = vld [vmem:[%s5240 + $0x60] sm:$0xf]
  %v5266 = vld [vmem:[%s5240 + $0x64] sm:$0xf]
  %v5267 = vld [vmem:[%s5240 + $0x68] sm:$0xf]
  %v5268 = vld [vmem:[%s5240 + $0x6c] sm:$0xf]
  %v5269 = vld [vmem:[%s5240 + $0x70] sm:$0xf]
  %v5270 = vld [vmem:[%s5240 + $0x74] sm:$0xf]
  %v5271 = vld [vmem:[%s5240 + $0x78] sm:$0xf]
  %v5272 = vld [vmem:[%s5240 + $0x7c] sm:$0xf]
  %v5273 = vld [vmem:[%s5240 + $0x80] sm:$0xf]
  %v5274 = vld [vmem:[%s5240 + $0x84] sm:$0xf]
  %v5275 = vld [vmem:[%s5240 + $0x88] sm:$0xf]
  %v5276 = vld [vmem:[%s5240 + $0x8c] sm:$0xf]
  %v5277 = vld [vmem:[%s5240 + $0x90] sm:$0xf]
  %v5278 = vld [vmem:[%s5240 + $0x94] sm:$0xf]
  %v5279 = vld [vmem:[%s5240 + $0x98] sm:$0xf]
  %v5280 = vld [vmem:[%s5240 + $0x9c] sm:$0xf]
  %v5281 = vld [vmem:[%s5240 + $0xa0] sm:$0xf]
  %v5282 = vld [vmem:[%s5240 + $0xa4] sm:$0xf]
  %v5283 = vld [vmem:[%s5240 + $0xa8] sm:$0xf]
  %v5284 = vld [vmem:[%s5240 + $0xac] sm:$0xf]
  %v5285 = vld [vmem:[%s5240 + $0xb0] sm:$0xf]
  %v5286 = vld [vmem:[%s5240 + $0xb4] sm:$0xf]
  %v5287 = vld [vmem:[%s5240 + $0xb8] sm:$0xf]
  %v5288 = vld [vmem:[%s5240 + $0xbc] sm:$0xf]
  %v5289 = vld [vmem:[%s5240 + $0xc0] sm:$0xf]
  %v5290 = vld [vmem:[%s5240 + $0xc4] sm:$0xf]
  %v5291 = vld [vmem:[%s5240 + $0xc8] sm:$0xf]
  %v5292 = vld [vmem:[%s5240 + $0xcc] sm:$0xf]
  %v5293 = vld [vmem:[%s5240 + $0xd0] sm:$0xf]
  %v5294 = vld [vmem:[%s5240 + $0xd4] sm:$0xf]
  %v5295 = vld [vmem:[%s5240 + $0xd8] sm:$0xf]
  %v5296 = vld [vmem:[%s5240 + $0xdc] sm:$0xf]
  %v5297 = vld [vmem:[%s5240 + $0xe0] sm:$0xf]
  %v5298 = vld [vmem:[%s5240 + $0xe4] sm:$0xf]
  %v5299 = vld [vmem:[%s5240 + $0xe8] sm:$0xf]
  %v5300 = vld [vmem:[%s5240 + $0xec] sm:$0xf]
  %v5301 = vld [vmem:[%s5240 + $0xf0] sm:$0xf]
  %v5302 = vld [vmem:[%s5240 + $0xf4] sm:$0xf]
  %v5303 = vld [vmem:[%s5240 + $0xf8] sm:$0xf]
  %v5304 = vld [vmem:[%s5240 + $0xfc] sm:$0xf]
  %v5369 = vunpack.c.l.b16 %v5241
  %v5370 = vunpack.c.l.b16 %v5242
  %v5371 = vunpack.c.l.b16 %v5243
  %v5372 = vunpack.c.l.b16 %v5244
  %v5373 = vunpack.c.l.b16 %v5245
  %v5374 = vunpack.c.l.b16 %v5246
  %v5375 = vunpack.c.l.b16 %v5247
  %v5376 = vunpack.c.l.b16 %v5248
  %v5377 = vunpack.c.l.b16 %v5249
  %v5378 = vunpack.c.l.b16 %v5250
  %v5379 = vunpack.c.l.b16 %v5251
  %v5380 = vunpack.c.l.b16 %v5252
  %v5381 = vunpack.c.l.b16 %v5253
  %v5382 = vunpack.c.l.b16 %v5254
  %v5383 = vunpack.c.l.b16 %v5255
  %v5384 = vunpack.c.l.b16 %v5256
  %v5385 = vunpack.c.l.b16 %v5257
  %v5386 = vunpack.c.l.b16 %v5258
  %v5387 = vunpack.c.l.b16 %v5259
  %v5388 = vunpack.c.l.b16 %v5260
  %v5389 = vunpack.c.l.b16 %v5261
  %v5390 = vunpack.c.l.b16 %v5262
  %v5391 = vunpack.c.l.b16 %v5263
  %v5392 = vunpack.c.l.b16 %v5264
  %v5393 = vunpack.c.l.b16 %v5265
  %v5394 = vunpack.c.l.b16 %v5266
  %v5395 = vunpack.c.l.b16 %v5267
  %v5396 = vunpack.c.l.b16 %v5268
  %v5397 = vunpack.c.l.b16 %v5269
  %v5398 = vunpack.c.l.b16 %v5270
  %v5399 = vunpack.c.l.b16 %v5271
  %v5400 = vunpack.c.l.b16 %v5272
  %v5401 = vunpack.c.l.b16 %v5273
  %v5402 = vunpack.c.l.b16 %v5274
  %v5403 = vunpack.c.l.b16 %v5275
  %v5404 = vunpack.c.l.b16 %v5276
  %v5405 = vunpack.c.l.b16 %v5277
  %v5406 = vunpack.c.l.b16 %v5278
  %v5407 = vunpack.c.l.b16 %v5279
  %v5408 = vunpack.c.l.b16 %v5280
  %v5409 = vunpack.c.l.b16 %v5281
  %v5410 = vunpack.c.l.b16 %v5282
  %v5411 = vunpack.c.l.b16 %v5283
  %v5412 = vunpack.c.l.b16 %v5284
  %v5413 = vunpack.c.l.b16 %v5285
  %v5414 = vunpack.c.l.b16 %v5286
  %v5415 = vunpack.c.l.b16 %v5287
  %v5416 = vunpack.c.l.b16 %v5288
  %v5417 = vunpack.c.l.b16 %v5289
  %v5418 = vunpack.c.l.b16 %v5290
  %v5419 = vunpack.c.l.b16 %v5291
  %v5420 = vunpack.c.l.b16 %v5292
  %v5421 = vunpack.c.l.b16 %v5293
  %v5422 = vunpack.c.l.b16 %v5294
  %v5423 = vunpack.c.l.b16 %v5295
  %v5424 = vunpack.c.l.b16 %v5296
  %v5425 = vunpack.c.l.b16 %v5297
  %v5426 = vunpack.c.l.b16 %v5298
  %v5427 = vunpack.c.l.b16 %v5299
  %v5428 = vunpack.c.l.b16 %v5300
  %v5429 = vunpack.c.l.b16 %v5301
  %v5430 = vunpack.c.l.b16 %v5302
  %v5431 = vunpack.c.l.b16 %v5303
  %v5432 = vunpack.c.l.b16 %v5304
  %v5433 = vpack.c.b16 %v5370, %v5369
  %v5434 = vpack.c.b16 %v5372, %v5371
  %v5435 = vpack.c.b16 %v5374, %v5373
  %v5436 = vpack.c.b16 %v5376, %v5375
  %v5437 = vpack.c.b16 %v5378, %v5377
  %v5438 = vpack.c.b16 %v5380, %v5379
  %v5439 = vpack.c.b16 %v5382, %v5381
  %v5440 = vpack.c.b16 %v5384, %v5383
  %v5441 = vpack.c.b16 %v5386, %v5385
  %v5442 = vpack.c.b16 %v5388, %v5387
  %v5443 = vpack.c.b16 %v5390, %v5389
  %v5444 = vpack.c.b16 %v5392, %v5391
  %v5445 = vpack.c.b16 %v5394, %v5393
  %v5446 = vpack.c.b16 %v5396, %v5395
  %v5447 = vpack.c.b16 %v5398, %v5397
  %v5448 = vpack.c.b16 %v5400, %v5399
  %v5449 = vpack.c.b16 %v5402, %v5401
  %v5450 = vpack.c.b16 %v5404, %v5403
  %v5451 = vpack.c.b16 %v5406, %v5405
  %v5452 = vpack.c.b16 %v5408, %v5407
  %v5453 = vpack.c.b16 %v5410, %v5409
  %v5454 = vpack.c.b16 %v5412, %v5411
  %v5455 = vpack.c.b16 %v5414, %v5413
  %v5456 = vpack.c.b16 %v5416, %v5415
  %v5457 = vpack.c.b16 %v5418, %v5417
  %v5458 = vpack.c.b16 %v5420, %v5419
  %v5459 = vpack.c.b16 %v5422, %v5421
  %v5460 = vpack.c.b16 %v5424, %v5423
  %v5461 = vpack.c.b16 %v5426, %v5425
  %v5462 = vpack.c.b16 %v5428, %v5427
  %v5463 = vpack.c.b16 %v5430, %v5429
  %v5464 = vpack.c.b16 %v5432, %v5431
  %5497 = vmatprep.subr.bf16.mxu0 0
  %5498 = vmatpush1.bf16.msra.mxu0 %v5433
  %5499 = vmatprep.subr.bf16.mxu0 0
  %5500 = vmatpush1.bf16.msra.mxu0 %v5434
  %5501 = vmatprep.subr.bf16.mxu0 0
  %5502 = vmatpush1.bf16.msra.mxu0 %v5435
  %5503 = vmatprep.subr.bf16.mxu0 0
  %5504 = vmatpush1.bf16.msra.mxu0 %v5436
  %5505 = vmatprep.subr.bf16.mxu0 0
  %5506 = vmatpush1.bf16.msra.mxu0 %v5437
  %5507 = vmatprep.subr.bf16.mxu0 0
  %5508 = vmatpush1.bf16.msra.mxu0 %v5438
  %5509 = vmatprep.subr.bf16.mxu0 0
  %5510 = vmatpush1.bf16.msra.mxu0 %v5439
  %5511 = vmatprep.subr.bf16.mxu0 0
  %5512 = vmatpush1.bf16.msra.mxu0 %v5440
  %5513 = vmatprep.subr.bf16.mxu0 0
  %5514 = vmatpush1.bf16.msra.mxu0 %v5441
  %5515 = vmatprep.subr.bf16.mxu0 0
  %5516 = vmatpush1.bf16.msra.mxu0 %v5442
  %5517 = vmatprep.subr.bf16.mxu0 0
  %5518 = vmatpush1.bf16.msra.mxu0 %v5443
  %5519 = vmatprep.subr.bf16.mxu0 0
  %5520 = vmatpush1.bf16.msra.mxu0 %v5444
  %5521 = vmatprep.subr.bf16.mxu0 0
  %5522 = vmatpush1.bf16.msra.mxu0 %v5445
  %5523 = vmatprep.subr.bf16.mxu0 0
  %5524 = vmatpush1.bf16.msra.mxu0 %v5446
  %5525 = vmatprep.subr.bf16.mxu0 0
  %5526 = vmatpush1.bf16.msra.mxu0 %v5447
  %5527 = vmatprep.subr.bf16.mxu0 0
  %5528 = vmatpush1.bf16.msra.mxu0 %v5448
  %5529 = vmatprep.mubr.bf16.mxu0 %v857
  %5530 = vmatmul.mubr.bf16.gmra.mrb[0].mxu0 %v856
  %v5531 = vpop.f32.mrb[0].mxu0
  %v5532 = vadd.f32 0.0, %v5531
  %v5533 = vpop.f32.mrb[0].mxu0
  %v5534 = vpop.f32.mrb[0].mxu0
  %v5535 = vpop.f32.mrb[0].mxu0
  %5536 = vdwg.mxu0
  %5537 = vmatprep.subr.bf16.mxu0 0
  %5538 = vmatpush1.bf16.msra.mxu0 %v5449
  %5539 = vmatprep.subr.bf16.mxu0 0
  %5540 = vmatpush1.bf16.msra.mxu0 %v5450
  %5541 = vmatprep.subr.bf16.mxu0 0
  %5542 = vmatpush1.bf16.msra.mxu0 %v5451
  %5543 = vmatprep.subr.bf16.mxu0 0
  %5544 = vmatpush1.bf16.msra.mxu0 %v5452
  %5545 = vmatprep.subr.bf16.mxu0 0
  %5546 = vmatpush1.bf16.msra.mxu0 %v5453
  %5547 = vmatprep.subr.bf16.mxu0 0
  %5548 = vmatpush1.bf16.msra.mxu0 %v5454
  %5549 = vmatprep.subr.bf16.mxu0 0
  %5550 = vmatpush1.bf16.msra.mxu0 %v5455
  %5551 = vmatprep.subr.bf16.mxu0 0
  %5552 = vmatpush1.bf16.msra.mxu0 %v5456
  %5553 = vmatprep.subr.bf16.mxu0 0
  %5554 = vmatpush1.bf16.msra.mxu0 %v5457
  %5555 = vmatprep.subr.bf16.mxu0 0
  %5556 = vmatpush1.bf16.msra.mxu0 %v5458
  %5557 = vmatprep.subr.bf16.mxu0 0
  %5558 = vmatpush1.bf16.msra.mxu0 %v5459
  %5559 = vmatprep.subr.bf16.mxu0 0
  %5560 = vmatpush1.bf16.msra.mxu0 %v5460
  %5561 = vmatprep.subr.bf16.mxu0 0
  %5562 = vmatpush1.bf16.msra.mxu0 %v5461
  %5563 = vmatprep.subr.bf16.mxu0 0
  %5564 = vmatpush1.bf16.msra.mxu0 %v5462
  %5565 = vmatprep.subr.bf16.mxu0 0
  %5566 = vmatpush1.bf16.msra.mxu0 %v5463
  %5567 = vmatprep.subr.bf16.mxu0 0
  %5568 = vmatpush1.bf16.msra.mxu0 %v5464
  %5569 = vmatprep.mubr.bf16.mxu0 %v859
  %5570 = vmatmul.mubr.bf16.gmra.mrb[0].mxu0 %v858
  %v5571 = vpop.f32.mrb[0].mxu0
  %v5572 = vadd.f32 %v5532, %v5571
  %v5573 = vpop.f32.mrb[0].mxu0
  %v5574 = vpop.f32.mrb[0].mxu0
  %v5575 = vpop.f32.mrb[0].mxu0
  %5576 = vdwg.mxu0
  %s5577 = scalar_lea.vmem %s7, 3584
  %v5578 = vld [vmem:[%s5577] sm:$0xf]
  %v5579 = vld [vmem:[%s5577 + $0x4] sm:$0xf]
  %v5580 = vld [vmem:[%s5577 + $0x8] sm:$0xf]
  %v5581 = vld [vmem:[%s5577 + $0xc] sm:$0xf]
  %v5582 = vld [vmem:[%s5577 + $0x10] sm:$0xf]
  %v5583 = vld [vmem:[%s5577 + $0x14] sm:$0xf]
  %v5584 = vld [vmem:[%s5577 + $0x18] sm:$0xf]
  %v5585 = vld [vmem:[%s5577 + $0x1c] sm:$0xf]
  %v5586 = vld [vmem:[%s5577 + $0x20] sm:$0xf]
  %v5587 = vld [vmem:[%s5577 + $0x24] sm:$0xf]
  %v5588 = vld [vmem:[%s5577 + $0x28] sm:$0xf]
  %v5589 = vld [vmem:[%s5577 + $0x2c] sm:$0xf]
  %v5590 = vld [vmem:[%s5577 + $0x30] sm:$0xf]
  %v5591 = vld [vmem:[%s5577 + $0x34] sm:$0xf]
  %v5592 = vld [vmem:[%s5577 + $0x38] sm:$0xf]
  %v5593 = vld [vmem:[%s5577 + $0x3c] sm:$0xf]
  %v5594 = vld [vmem:[%s5577 + $0x40] sm:$0xf]
  %v5595 = vld [vmem:[%s5577 + $0x44] sm:$0xf]
  %v5596 = vld [vmem:[%s5577 + $0x48] sm:$0xf]
  %v5597 = vld [vmem:[%s5577 + $0x4c] sm:$0xf]
  %v5598 = vld [vmem:[%s5577 + $0x50] sm:$0xf]
  %v5599 = vld [vmem:[%s5577 + $0x54] sm:$0xf]
  %v5600 = vld [vmem:[%s5577 + $0x58] sm:$0xf]
  %v5601 = vld [vmem:[%s5577 + $0x5c] sm:$0xf]
  %v5602 = vld [vmem:[%s5577 + $0x60] sm:$0xf]
  %v5603 = vld [vmem:[%s5577 + $0x64] sm:$0xf]
  %v5604 = vld [vmem:[%s5577 + $0x68] sm:$0xf]
  %v5605 = vld [vmem:[%s5577 + $0x6c] sm:$0xf]
  %v5606 = vld [vmem:[%s5577 + $0x70] sm:$0xf]
  %v5607 = vld [vmem:[%s5577 + $0x74] sm:$0xf]
  %v5608 = vld [vmem:[%s5577 + $0x78] sm:$0xf]
  %v5609 = vld [vmem:[%s5577 + $0x7c] sm:$0xf]
  %v5610 = vld [vmem:[%s5577 + $0x80] sm:$0xf]
  %v5611 = vld [vmem:[%s5577 + $0x84] sm:$0xf]
  %v5612 = vld [vmem:[%s5577 + $0x88] sm:$0xf]
  %v5613 = vld [vmem:[%s5577 + $0x8c] sm:$0xf]
  %v5614 = vld [vmem:[%s5577 + $0x90] sm:$0xf]
  %v5615 = vld [vmem:[%s5577 + $0x94] sm:$0xf]
  %v5616 = vld [vmem:[%s5577 + $0x98] sm:$0xf]
  %v5617 = vld [vmem:[%s5577 + $0x9c] sm:$0xf]
  %v5618 = vld [vmem:[%s5577 + $0xa0] sm:$0xf]
  %v5619 = vld [vmem:[%s5577 + $0xa4] sm:$0xf]
  %v5620 = vld [vmem:[%s5577 + $0xa8] sm:$0xf]
  %v5621 = vld [vmem:[%s5577 + $0xac] sm:$0xf]
  %v5622 = vld [vmem:[%s5577 + $0xb0] sm:$0xf]
  %v5623 = vld [vmem:[%s5577 + $0xb4] sm:$0xf]
  %v5624 = vld [vmem:[%s5577 + $0xb8] sm:$0xf]
  %v5625 = vld [vmem:[%s5577 + $0xbc] sm:$0xf]
  %v5626 = vld [vmem:[%s5577 + $0xc0] sm:$0xf]
  %v5627 = vld [vmem:[%s5577 + $0xc4] sm:$0xf]
  %v5628 = vld [vmem:[%s5577 + $0xc8] sm:$0xf]
  %v5629 = vld [vmem:[%s5577 + $0xcc] sm:$0xf]
  %v5630 = vld [vmem:[%s5577 + $0xd0] sm:$0xf]
  %v5631 = vld [vmem:[%s5577 + $0xd4] sm:$0xf]
  %v5632 = vld [vmem:[%s5577 + $0xd8] sm:$0xf]
  %v5633 = vld [vmem:[%s5577 + $0xdc] sm:$0xf]
  %v5634 = vld [vmem:[%s5577 + $0xe0] sm:$0xf]
  %v5635 = vld [vmem:[%s5577 + $0xe4] sm:$0xf]
  %v5636 = vld [vmem:[%s5577 + $0xe8] sm:$0xf]
  %v5637 = vld [vmem:[%s5577 + $0xec] sm:$0xf]
  %v5638 = vld [vmem:[%s5577 + $0xf0] sm:$0xf]
  %v5639 = vld [vmem:[%s5577 + $0xf4] sm:$0xf]
  %v5640 = vld [vmem:[%s5577 + $0xf8] sm:$0xf]
  %v5641 = vld [vmem:[%s5577 + $0xfc] sm:$0xf]
  %v5706 = vunpack.c.l.b16 %v5578
  %v5707 = vunpack.c.l.b16 %v5579
  %v5708 = vunpack.c.l.b16 %v5580
  %v5709 = vunpack.c.l.b16 %v5581
  %v5710 = vunpack.c.l.b16 %v5582
  %v5711 = vunpack.c.l.b16 %v5583
  %v5712 = vunpack.c.l.b16 %v5584
  %v5713 = vunpack.c.l.b16 %v5585
  %v5714 = vunpack.c.l.b16 %v5586
  %v5715 = vunpack.c.l.b16 %v5587
  %v5716 = vunpack.c.l.b16 %v5588
  %v5717 = vunpack.c.l.b16 %v5589
  %v5718 = vunpack.c.l.b16 %v5590
  %v5719 = vunpack.c.l.b16 %v5591
  %v5720 = vunpack.c.l.b16 %v5592
  %v5721 = vunpack.c.l.b16 %v5593
  %v5722 = vunpack.c.l.b16 %v5594
  %v5723 = vunpack.c.l.b16 %v5595
  %v5724 = vunpack.c.l.b16 %v5596
  %v5725 = vunpack.c.l.b16 %v5597
  %v5726 = vunpack.c.l.b16 %v5598
  %v5727 = vunpack.c.l.b16 %v5599
  %v5728 = vunpack.c.l.b16 %v5600
  %v5729 = vunpack.c.l.b16 %v5601
  %v5730 = vunpack.c.l.b16 %v5602
  %v5731 = vunpack.c.l.b16 %v5603
  %v5732 = vunpack.c.l.b16 %v5604
  %v5733 = vunpack.c.l.b16 %v5605
  %v5734 = vunpack.c.l.b16 %v5606
  %v5735 = vunpack.c.l.b16 %v5607
  %v5736 = vunpack.c.l.b16 %v5608
  %v5737 = vunpack.c.l.b16 %v5609
  %v5738 = vunpack.c.l.b16 %v5610
  %v5739 = vunpack.c.l.b16 %v5611
  %v5740 = vunpack.c.l.b16 %v5612
  %v5741 = vunpack.c.l.b16 %v5613
  %v5742 = vunpack.c.l.b16 %v5614
  %v5743 = vunpack.c.l.b16 %v5615
  %v5744 = vunpack.c.l.b16 %v5616
  %v5745 = vunpack.c.l.b16 %v5617
  %v5746 = vunpack.c.l.b16 %v5618
  %v5747 = vunpack.c.l.b16 %v5619
  %v5748 = vunpack.c.l.b16 %v5620
  %v5749 = vunpack.c.l.b16 %v5621
  %v5750 = vunpack.c.l.b16 %v5622
  %v5751 = vunpack.c.l.b16 %v5623
  %v5752 = vunpack.c.l.b16 %v5624
  %v5753 = vunpack.c.l.b16 %v5625
  %v5754 = vunpack.c.l.b16 %v5626
  %v5755 = vunpack.c.l.b16 %v5627
  %v5756 = vunpack.c.l.b16 %v5628
  %v5757 = vunpack.c.l.b16 %v5629
  %v5758 = vunpack.c.l.b16 %v5630
  %v5759 = vunpack.c.l.b16 %v5631
  %v5760 = vunpack.c.l.b16 %v5632
  %v5761 = vunpack.c.l.b16 %v5633
  %v5762 = vunpack.c.l.b16 %v5634
  %v5763 = vunpack.c.l.b16 %v5635
  %v5764 = vunpack.c.l.b16 %v5636
  %v5765 = vunpack.c.l.b16 %v5637
  %v5766 = vunpack.c.l.b16 %v5638
  %v5767 = vunpack.c.l.b16 %v5639
  %v5768 = vunpack.c.l.b16 %v5640
  %v5769 = vunpack.c.l.b16 %v5641
  %v5770 = vpack.c.b16 %v5707, %v5706
  %v5771 = vpack.c.b16 %v5709, %v5708
  %v5772 = vpack.c.b16 %v5711, %v5710
  %v5773 = vpack.c.b16 %v5713, %v5712
  %v5774 = vpack.c.b16 %v5715, %v5714
  %v5775 = vpack.c.b16 %v5717, %v5716
  %v5776 = vpack.c.b16 %v5719, %v5718
  %v5777 = vpack.c.b16 %v5721, %v5720
  %v5778 = vpack.c.b16 %v5723, %v5722
  %v5779 = vpack.c.b16 %v5725, %v5724
  %v5780 = vpack.c.b16 %v5727, %v5726
  %v5781 = vpack.c.b16 %v5729, %v5728
  %v5782 = vpack.c.b16 %v5731, %v5730
  %v5783 = vpack.c.b16 %v5733, %v5732
  %v5784 = vpack.c.b16 %v5735, %v5734
  %v5785 = vpack.c.b16 %v5737, %v5736
  %v5786 = vpack.c.b16 %v5739, %v5738
  %v5787 = vpack.c.b16 %v5741, %v5740
  %v5788 = vpack.c.b16 %v5743, %v5742
  %v5789 = vpack.c.b16 %v5745, %v5744
  %v5790 = vpack.c.b16 %v5747, %v5746
  %v5791 = vpack.c.b16 %v5749, %v5748
  %v5792 = vpack.c.b16 %v5751, %v5750
  %v5793 = vpack.c.b16 %v5753, %v5752
  %v5794 = vpack.c.b16 %v5755, %v5754
  %v5795 = vpack.c.b16 %v5757, %v5756
  %v5796 = vpack.c.b16 %v5759, %v5758
  %v5797 = vpack.c.b16 %v5761, %v5760
  %v5798 = vpack.c.b16 %v5763, %v5762
  %v5799 = vpack.c.b16 %v5765, %v5764
  %v5800 = vpack.c.b16 %v5767, %v5766
  %v5801 = vpack.c.b16 %v5769, %v5768
  %5834 = vmatprep.subr.bf16.mxu0 0
  %5835 = vmatpush1.bf16.msra.mxu0 %v5770
  %5836 = vmatprep.subr.bf16.mxu0 0
  %5837 = vmatpush1.bf16.msra.mxu0 %v5771
  %5838 = vmatprep.subr.bf16.mxu0 0
  %5839 = vmatpush1.bf16.msra.mxu0 %v5772
  %5840 = vmatprep.subr.bf16.mxu0 0
  %5841 = vmatpush1.bf16.msra.mxu0 %v5773
  %5842 = vmatprep.subr.bf16.mxu0 0
  %5843 = vmatpush1.bf16.msra.mxu0 %v5774
  %5844 = vmatprep.subr.bf16.mxu0 0
  %5845 = vmatpush1.bf16.msra.mxu0 %v5775
  %5846 = vmatprep.subr.bf16.mxu0 0
  %5847 = vmatpush1.bf16.msra.mxu0 %v5776
  %5848 = vmatprep.subr.bf16.mxu0 0
  %5849 = vmatpush1.bf16.msra.mxu0 %v5777
  %5850 = vmatprep.subr.bf16.mxu0 0
  %5851 = vmatpush1.bf16.msra.mxu0 %v5778
  %5852 = vmatprep.subr.bf16.mxu0 0
  %5853 = vmatpush1.bf16.msra.mxu0 %v5779
  %5854 = vmatprep.subr.bf16.mxu0 0
  %5855 = vmatpush1.bf16.msra.mxu0 %v5780
  %5856 = vmatprep.subr.bf16.mxu0 0
  %5857 = vmatpush1.bf16.msra.mxu0 %v5781
  %5858 = vmatprep.subr.bf16.mxu0 0
  %5859 = vmatpush1.bf16.msra.mxu0 %v5782
  %5860 = vmatprep.subr.bf16.mxu0 0
  %5861 = vmatpush1.bf16.msra.mxu0 %v5783
  %5862 = vmatprep.subr.bf16.mxu0 0
  %5863 = vmatpush1.bf16.msra.mxu0 %v5784
  %5864 = vmatprep.subr.bf16.mxu0 0
  %5865 = vmatpush1.bf16.msra.mxu0 %v5785
  %5866 = vmatprep.mubr.bf16.mxu0 %v857
  %5867 = vmatmul.mubr.bf16.gmra.mrb[0].mxu0 %v856
  %v5868 = vpop.f32.mrb[0].mxu0
  %v5869 = vadd.f32 0.0, %v5868
  %v5870 = vpop.f32.mrb[0].mxu0
  %v5871 = vpop.f32.mrb[0].mxu0
  %v5872 = vpop.f32.mrb[0].mxu0
  %5873 = vdwg.mxu0
  %5874 = vmatprep.subr.bf16.mxu0 0
  %5875 = vmatpush1.bf16.msra.mxu0 %v5786
  %5876 = vmatprep.subr.bf16.mxu0 0
  %5877 = vmatpush1.bf16.msra.mxu0 %v5787
  %5878 = vmatprep.subr.bf16.mxu0 0
  %5879 = vmatpush1.bf16.msra.mxu0 %v5788
  %5880 = vmatprep.subr.bf16.mxu0 0
  %5881 = vmatpush1.bf16.msra.mxu0 %v5789
  %5882 = vmatprep.subr.bf16.mxu0 0
  %5883 = vmatpush1.bf16.msra.mxu0 %v5790
  %5884 = vmatprep.subr.bf16.mxu0 0
  %5885 = vmatpush1.bf16.msra.mxu0 %v5791
  %5886 = vmatprep.subr.bf16.mxu0 0
  %5887 = vmatpush1.bf16.msra.mxu0 %v5792
  %5888 = vmatprep.subr.bf16.mxu0 0
  %5889 = vmatpush1.bf16.msra.mxu0 %v5793
  %5890 = vmatprep.subr.bf16.mxu0 0
  %5891 = vmatpush1.bf16.msra.mxu0 %v5794
  %5892 = vmatprep.subr.bf16.mxu0 0
  %5893 = vmatpush1.bf16.msra.mxu0 %v5795
  %5894 = vmatprep.subr.bf16.mxu0 0
  %5895 = vmatpush1.bf16.msra.mxu0 %v5796
  %5896 = vmatprep.subr.bf16.mxu0 0
  %5897 = vmatpush1.bf16.msra.mxu0 %v5797
  %5898 = vmatprep.subr.bf16.mxu0 0
  %5899 = vmatpush1.bf16.msra.mxu0 %v5798
  %5900 = vmatprep.subr.bf16.mxu0 0
  %5901 = vmatpush1.bf16.msra.mxu0 %v5799
  %5902 = vmatprep.subr.bf16.mxu0 0
  %5903 = vmatpush1.bf16.msra.mxu0 %v5800
  %5904 = vmatprep.subr.bf16.mxu0 0
  %5905 = vmatpush1.bf16.msra.mxu0 %v5801
  %5906 = vmatprep.mubr.bf16.mxu0 %v859
  %5907 = vmatmul.mubr.bf16.gmra.mrb[0].mxu0 %v858
  %v5908 = vpop.f32.mrb[0].mxu0
  %v5909 = vadd.f32 %v5869, %v5908
  %v5910 = vpop.f32.mrb[0].mxu0
  %v5911 = vpop.f32.mrb[0].mxu0
  %v5912 = vpop.f32.mrb[0].mxu0
  %5913 = vdwg.mxu0
  %s5914 = scalar_lea.vmem %s7, 3840
  %v5915 = vld [vmem:[%s5914] sm:$0xf]
  %v5916 = vld [vmem:[%s5914 + $0x4] sm:$0xf]
  %v5917 = vld [vmem:[%s5914 + $0x8] sm:$0xf]
  %v5918 = vld [vmem:[%s5914 + $0xc] sm:$0xf]
  %v5919 = vld [vmem:[%s5914 + $0x10] sm:$0xf]
  %v5920 = vld [vmem:[%s5914 + $0x14] sm:$0xf]
  %v5921 = vld [vmem:[%s5914 + $0x18] sm:$0xf]
  %v5922 = vld [vmem:[%s5914 + $0x1c] sm:$0xf]
  %v5923 = vld [vmem:[%s5914 + $0x20] sm:$0xf]
  %v5924 = vld [vmem:[%s5914 + $0x24] sm:$0xf]
  %v5925 = vld [vmem:[%s5914 + $0x28] sm:$0xf]
  %v5926 = vld [vmem:[%s5914 + $0x2c] sm:$0xf]
  %v5927 = vld [vmem:[%s5914 + $0x30] sm:$0xf]
  %v5928 = vld [vmem:[%s5914 + $0x34] sm:$0xf]
  %v5929 = vld [vmem:[%s5914 + $0x38] sm:$0xf]
  %v5930 = vld [vmem:[%s5914 + $0x3c] sm:$0xf]
  %v5931 = vld [vmem:[%s5914 + $0x40] sm:$0xf]
  %v5932 = vld [vmem:[%s5914 + $0x44] sm:$0xf]
  %v5933 = vld [vmem:[%s5914 + $0x48] sm:$0xf]
  %v5934 = vld [vmem:[%s5914 + $0x4c] sm:$0xf]
  %v5935 = vld [vmem:[%s5914 + $0x50] sm:$0xf]
  %v5936 = vld [vmem:[%s5914 + $0x54] sm:$0xf]
  %v5937 = vld [vmem:[%s5914 + $0x58] sm:$0xf]
  %v5938 = vld [vmem:[%s5914 + $0x5c] sm:$0xf]
  %v5939 = vld [vmem:[%s5914 + $0x60] sm:$0xf]
  %v5940 = vld [vmem:[%s5914 + $0x64] sm:$0xf]
  %v5941 = vld [vmem:[%s5914 + $0x68] sm:$0xf]
  %v5942 = vld [vmem:[%s5914 + $0x6c] sm:$0xf]
  %v5943 = vld [vmem:[%s5914 + $0x70] sm:$0xf]
  %v5944 = vld [vmem:[%s5914 + $0x74] sm:$0xf]
  %v5945 = vld [vmem:[%s5914 + $0x78] sm:$0xf]
  %v5946 = vld [vmem:[%s5914 + $0x7c] sm:$0xf]
  %v5947 = vld [vmem:[%s5914 + $0x80] sm:$0xf]
  %v5948 = vld [vmem:[%s5914 + $0x84] sm:$0xf]
  %v5949 = vld [vmem:[%s5914 + $0x88] sm:$0xf]
  %v5950 = vld [vmem:[%s5914 + $0x8c] sm:$0xf]
  %v5951 = vld [vmem:[%s5914 + $0x90] sm:$0xf]
  %v5952 = vld [vmem:[%s5914 + $0x94] sm:$0xf]
  %v5953 = vld [vmem:[%s5914 + $0x98] sm:$0xf]
  %v5954 = vld [vmem:[%s5914 + $0x9c] sm:$0xf]
  %v5955 = vld [vmem:[%s5914 + $0xa0] sm:$0xf]
  %v5956 = vld [vmem:[%s5914 + $0xa4] sm:$0xf]
  %v5957 = vld [vmem:[%s5914 + $0xa8] sm:$0xf]
  %v5958 = vld [vmem:[%s5914 + $0xac] sm:$0xf]
  %v5959 = vld [vmem:[%s5914 + $0xb0] sm:$0xf]
  %v5960 = vld [vmem:[%s5914 + $0xb4] sm:$0xf]
  %v5961 = vld [vmem:[%s5914 + $0xb8] sm:$0xf]
  %v5962 = vld [vmem:[%s5914 + $0xbc] sm:$0xf]
  %v5963 = vld [vmem:[%s5914 + $0xc0] sm:$0xf]
  %v5964 = vld [vmem:[%s5914 + $0xc4] sm:$0xf]
  %v5965 = vld [vmem:[%s5914 + $0xc8] sm:$0xf]
  %v5966 = vld [vmem:[%s5914 + $0xcc] sm:$0xf]
  %v5967 = vld [vmem:[%s5914 + $0xd0] sm:$0xf]
  %v5968 = vld [vmem:[%s5914 + $0xd4] sm:$0xf]
  %v5969 = vld [vmem:[%s5914 + $0xd8] sm:$0xf]
  %v5970 = vld [vmem:[%s5914 + $0xdc] sm:$0xf]
  %v5971 = vld [vmem:[%s5914 + $0xe0] sm:$0xf]
  %v5972 = vld [vmem:[%s5914 + $0xe4] sm:$0xf]
  %v5973 = vld [vmem:[%s5914 + $0xe8] sm:$0xf]
  %v5974 = vld [vmem:[%s5914 + $0xec] sm:$0xf]
  %v5975 = vld [vmem:[%s5914 + $0xf0] sm:$0xf]
  %v5976 = vld [vmem:[%s5914 + $0xf4] sm:$0xf]
  %v5977 = vld [vmem:[%s5914 + $0xf8] sm:$0xf]
  %v5978 = vld [vmem:[%s5914 + $0xfc] sm:$0xf]
  %v6043 = vunpack.c.l.b16 %v5915
  %v6044 = vunpack.c.l.b16 %v5916
  %v6045 = vunpack.c.l.b16 %v5917
  %v6046 = vunpack.c.l.b16 %v5918
  %v6047 = vunpack.c.l.b16 %v5919
  %v6048 = vunpack.c.l.b16 %v5920
  %v6049 = vunpack.c.l.b16 %v5921
  %v6050 = vunpack.c.l.b16 %v5922
  %v6051 = vunpack.c.l.b16 %v5923
  %v6052 = vunpack.c.l.b16 %v5924
  %v6053 = vunpack.c.l.b16 %v5925
  %v6054 = vunpack.c.l.b16 %v5926
  %v6055 = vunpack.c.l.b16 %v5927
  %v6056 = vunpack.c.l.b16 %v5928
  %v6057 = vunpack.c.l.b16 %v5929
  %v6058 = vunpack.c.l.b16 %v5930
  %v6059 = vunpack.c.l.b16 %v5931
  %v6060 = vunpack.c.l.b16 %v5932
  %v6061 = vunpack.c.l.b16 %v5933
  %v6062 = vunpack.c.l.b16 %v5934
  %v6063 = vunpack.c.l.b16 %v5935
  %v6064 = vunpack.c.l.b16 %v5936
  %v6065 = vunpack.c.l.b16 %v5937
  %v6066 = vunpack.c.l.b16 %v5938
  %v6067 = vunpack.c.l.b16 %v5939
  %v6068 = vunpack.c.l.b16 %v5940
  %v6069 = vunpack.c.l.b16 %v5941
  %v6070 = vunpack.c.l.b16 %v5942
  %v6071 = vunpack.c.l.b16 %v5943
  %v6072 = vunpack.c.l.b16 %v5944
  %v6073 = vunpack.c.l.b16 %v5945
  %v6074 = vunpack.c.l.b16 %v5946
  %v6075 = vunpack.c.l.b16 %v5947
  %v6076 = vunpack.c.l.b16 %v5948
  %v6077 = vunpack.c.l.b16 %v5949
  %v6078 = vunpack.c.l.b16 %v5950
  %v6079 = vunpack.c.l.b16 %v5951
  %v6080 = vunpack.c.l.b16 %v5952
  %v6081 = vunpack.c.l.b16 %v5953
  %v6082 = vunpack.c.l.b16 %v5954
  %v6083 = vunpack.c.l.b16 %v5955
  %v6084 = vunpack.c.l.b16 %v5956
  %v6085 = vunpack.c.l.b16 %v5957
  %v6086 = vunpack.c.l.b16 %v5958
  %v6087 = vunpack.c.l.b16 %v5959
  %v6088 = vunpack.c.l.b16 %v5960
  %v6089 = vunpack.c.l.b16 %v5961
  %v6090 = vunpack.c.l.b16 %v5962
  %v6091 = vunpack.c.l.b16 %v5963
  %v6092 = vunpack.c.l.b16 %v5964
  %v6093 = vunpack.c.l.b16 %v5965
  %v6094 = vunpack.c.l.b16 %v5966
  %v6095 = vunpack.c.l.b16 %v5967
  %v6096 = vunpack.c.l.b16 %v5968
  %v6097 = vunpack.c.l.b16 %v5969
  %v6098 = vunpack.c.l.b16 %v5970
  %v6099 = vunpack.c.l.b16 %v5971
  %v6100 = vunpack.c.l.b16 %v5972
  %v6101 = vunpack.c.l.b16 %v5973
  %v6102 = vunpack.c.l.b16 %v5974
  %v6103 = vunpack.c.l.b16 %v5975
  %v6104 = vunpack.c.l.b16 %v5976
  %v6105 = vunpack.c.l.b16 %v5977
  %v6106 = vunpack.c.l.b16 %v5978
  %v6107 = vpack.c.b16 %v6044, %v6043
  %v6108 = vpack.c.b16 %v6046, %v6045
  %v6109 = vpack.c.b16 %v6048, %v6047
  %v6110 = vpack.c.b16 %v6050, %v6049
  %v6111 = vpack.c.b16 %v6052, %v6051
  %v6112 = vpack.c.b16 %v6054, %v6053
  %v6113 = vpack.c.b16 %v6056, %v6055
  %v6114 = vpack.c.b16 %v6058, %v6057
  %v6115 = vpack.c.b16 %v6060, %v6059
  %v6116 = vpack.c.b16 %v6062, %v6061
  %v6117 = vpack.c.b16 %v6064, %v6063
  %v6118 = vpack.c.b16 %v6066, %v6065
  %v6119 = vpack.c.b16 %v6068, %v6067
  %v6120 = vpack.c.b16 %v6070, %v6069
  %v6121 = vpack.c.b16 %v6072, %v6071
  %v6122 = vpack.c.b16 %v6074, %v6073
  %v6123 = vpack.c.b16 %v6076, %v6075
  %v6124 = vpack.c.b16 %v6078, %v6077
  %v6125 = vpack.c.b16 %v6080, %v6079
  %v6126 = vpack.c.b16 %v6082, %v6081
  %v6127 = vpack.c.b16 %v6084, %v6083
  %v6128 = vpack.c.b16 %v6086, %v6085
  %v6129 = vpack.c.b16 %v6088, %v6087
  %v6130 = vpack.c.b16 %v6090, %v6089
  %v6131 = vpack.c.b16 %v6092, %v6091
  %v6132 = vpack.c.b16 %v6094, %v6093
  %v6133 = vpack.c.b16 %v6096, %v6095
  %v6134 = vpack.c.b16 %v6098, %v6097
  %v6135 = vpack.c.b16 %v6100, %v6099
  %v6136 = vpack.c.b16 %v6102, %v6101
  %v6137 = vpack.c.b16 %v6104, %v6103
  %v6138 = vpack.c.b16 %v6106, %v6105
  %6171 = vmatprep.subr.bf16.mxu0 0
  %6172 = vmatpush1.bf16.msra.mxu0 %v6107
  %6173 = vmatprep.subr.bf16.mxu0 0
  %6174 = vmatpush1.bf16.msra.mxu0 %v6108
  %6175 = vmatprep.subr.bf16.mxu0 0
  %6176 = vmatpush1.bf16.msra.mxu0 %v6109
  %6177 = vmatprep.subr.bf16.mxu0 0
  %6178 = vmatpush1.bf16.msra.mxu0 %v6110
  %6179 = vmatprep.subr.bf16.mxu0 0
  %6180 = vmatpush1.bf16.msra.mxu0 %v6111
  %6181 = vmatprep.subr.bf16.mxu0 0
  %6182 = vmatpush1.bf16.msra.mxu0 %v6112
  %6183 = vmatprep.subr.bf16.mxu0 0
  %6184 = vmatpush1.bf16.msra.mxu0 %v6113
  %6185 = vmatprep.subr.bf16.mxu0 0
  %6186 = vmatpush1.bf16.msra.mxu0 %v6114
  %6187 = vmatprep.subr.bf16.mxu0 0
  %6188 = vmatpush1.bf16.msra.mxu0 %v6115
  %6189 = vmatprep.subr.bf16.mxu0 0
  %6190 = vmatpush1.bf16.msra.mxu0 %v6116
  %6191 = vmatprep.subr.bf16.mxu0 0
  %6192 = vmatpush1.bf16.msra.mxu0 %v6117
  %6193 = vmatprep.subr.bf16.mxu0 0
  %6194 = vmatpush1.bf16.msra.mxu0 %v6118
  %6195 = vmatprep.subr.bf16.mxu0 0
  %6196 = vmatpush1.bf16.msra.mxu0 %v6119
  %6197 = vmatprep.subr.bf16.mxu0 0
  %6198 = vmatpush1.bf16.msra.mxu0 %v6120
  %6199 = vmatprep.subr.bf16.mxu0 0
  %6200 = vmatpush1.bf16.msra.mxu0 %v6121
  %6201 = vmatprep.subr.bf16.mxu0 0
  %6202 = vmatpush1.bf16.msra.mxu0 %v6122
  %6203 = vmatprep.mubr.bf16.mxu0 %v857
  %6204 = vmatmul.mubr.bf16.gmra.mrb[0].mxu0 %v856
  %v6205 = vpop.f32.mrb[0].mxu0
  %v6206 = vadd.f32 0.0, %v6205
  %v6207 = vpop.f32.mrb[0].mxu0
  %v6208 = vpop.f32.mrb[0].mxu0
  %v6209 = vpop.f32.mrb[0].mxu0
  %6210 = vdwg.mxu0
  %6211 = vmatprep.subr.bf16.mxu0 0
  %6212 = vmatpush1.bf16.msra.mxu0 %v6123
  %6213 = vmatprep.subr.bf16.mxu0 0
  %6214 = vmatpush1.bf16.msra.mxu0 %v6124
  %6215 = vmatprep.subr.bf16.mxu0 0
  %6216 = vmatpush1.bf16.msra.mxu0 %v6125
  %6217 = vmatprep.subr.bf16.mxu0 0
  %6218 = vmatpush1.bf16.msra.mxu0 %v6126
  %6219 = vmatprep.subr.bf16.mxu0 0
  %6220 = vmatpush1.bf16.msra.mxu0 %v6127
  %6221 = vmatprep.subr.bf16.mxu0 0
  %6222 = vmatpush1.bf16.msra.mxu0 %v6128
  %6223 = vmatprep.subr.bf16.mxu0 0
  %6224 = vmatpush1.bf16.msra.mxu0 %v6129
  %6225 = vmatprep.subr.bf16.mxu0 0
  %6226 = vmatpush1.bf16.msra.mxu0 %v6130
  %6227 = vmatprep.subr.bf16.mxu0 0
  %6228 = vmatpush1.bf16.msra.mxu0 %v6131
  %6229 = vmatprep.subr.bf16.mxu0 0
  %6230 = vmatpush1.bf16.msra.mxu0 %v6132
  %6231 = vmatprep.subr.bf16.mxu0 0
  %6232 = vmatpush1.bf16.msra.mxu0 %v6133
  %6233 = vmatprep.subr.bf16.mxu0 0
  %6234 = vmatpush1.bf16.msra.mxu0 %v6134
  %6235 = vmatprep.subr.bf16.mxu0 0
  %6236 = vmatpush1.bf16.msra.mxu0 %v6135
  %6237 = vmatprep.subr.bf16.mxu0 0
  %6238 = vmatpush1.bf16.msra.mxu0 %v6136
  %6239 = vmatprep.subr.bf16.mxu0 0
  %6240 = vmatpush1.bf16.msra.mxu0 %v6137
  %6241 = vmatprep.subr.bf16.mxu0 0
  %6242 = vmatpush1.bf16.msra.mxu0 %v6138
  %6243 = vmatprep.mubr.bf16.mxu0 %v859
  %6244 = vmatmul.mubr.bf16.gmra.mrb[0].mxu0 %v858
  %v6245 = vpop.f32.mrb[0].mxu0
  %v6246 = vadd.f32 %v6206, %v6245
  %v6247 = vpop.f32.mrb[0].mxu0
  %v6248 = vpop.f32.mrb[0].mxu0
  %v6249 = vpop.f32.mrb[0].mxu0
  %6250 = vdwg.mxu0
  %v6251 = vpack.c.bf16 %v1528, %v1191
  %v6252 = vpack.c.bf16 %v2202, %v1865
  %v6253 = vpack.c.bf16 %v2876, %v2539
  %v6254 = vpack.c.bf16 %v3550, %v3213
  %v6255 = vpack.c.bf16 %v4224, %v3887
  %v6256 = vpack.c.bf16 %v4898, %v4561
  %v6257 = vpack.c.bf16 %v5572, %v5235
  %v6258 = vpack.c.bf16 %v6246, %v5909
  %v6259 = vld [vmem:[%s4] sm:$0xf]
  %v6260 = vld [vmem:[%s4 + $0x4] sm:$0xf]
  %v6263 = vunpack.c.l.b16 %v6259
  %v6264 = vunpack.c.l.b16 %v6260
  %v6265 = vpack.c.b16 %v6264, %v6263
  %6267 = vmatprep.subr.bf16.mxu0 0
  %6268 = vmatpush1.bf16.msra.mxu0 %v6251
  %6269 = vmatprep.subr.bf16.mxu0 0
  %6270 = vmatpush1.bf16.msra.mxu0 %v6252
  %6271 = vmatprep.subr.bf16.mxu0 0
  %6272 = vmatpush1.bf16.msra.mxu0 %v6253
  %6273 = vmatprep.subr.bf16.mxu0 0
  %6274 = vmatpush1.bf16.msra.mxu0 %v6254
  %6275 = vmatprep.subr.bf16.mxu0 0
  %6276 = vmatpush1.bf16.msra.mxu0 %v6255
  %6277 = vmatprep.subr.bf16.mxu0 0
  %6278 = vmatpush1.bf16.msra.mxu0 %v6256
  %6279 = vmatprep.subr.bf16.mxu0 0
  %6280 = vmatpush1.bf16.msra.mxu0 %v6257
  %6281 = vmatprep.subr.bf16.mxu0 0
  %6282 = vmatpush1.bf16.msra.mxu0 %v6258
  %6283 = vmatprep.subr.bf16.mxu0 0
  %6284 = vmatpush1.bf16.msra.mxu0 0
  %6285 = vmatprep.subr.bf16.mxu0 0
  %6286 = vmatpush1.bf16.msra.mxu0 0
  %6287 = vmatprep.subr.bf16.mxu0 0
  %6288 = vmatpush1.bf16.msra.mxu0 0
  %6289 = vmatprep.subr.bf16.mxu0 0
  %6290 = vmatpush1.bf16.msra.mxu0 0
  %6291 = vmatprep.subr.bf16.mxu0 0
  %6292 = vmatpush1.bf16.msra.mxu0 0
  %6293 = vmatprep.subr.bf16.mxu0 0
  %6294 = vmatpush1.bf16.msra.mxu0 0
  %6295 = vmatprep.subr.bf16.mxu0 0
  %6296 = vmatpush1.bf16.msra.mxu0 0
  %6297 = vmatprep.subr.bf16.mxu0 0
  %6298 = vmatpush1.bf16.msra.mxu0 0
  %6299 = vmatprep.mubr.bf16.mxu0 0
  %6300 = vmatmul.mubr.bf16.gmra.mrb[0].mxu0 %v6265
  %v6301 = vpop.f32.mrb[0].mxu0
  %v6302 = vadd.f32 0.0, %v6301
  %v6303 = vpop.f32.mrb[0].mxu0
  %v6304 = vpop.f32.mrb[0].mxu0
  %v6305 = vadd.f32 0.0, %v6304
  %v6306 = vpop.f32.mrb[0].mxu0
  %6307 = vdwg.mxu0
  %v6308 = vld [vmem:[%s5] sm:$0xff]
  %v6309 = vld [vmem:[%s5 + $0x8] sm:$0xff]
  %v6310 = vld [vmem:[%s6] sm:$0xff]
  %v6311 = vld [vmem:[%s6 + $0x8] sm:$0xff]
  %6312 = vadd.xlane.f32.xlu0 %v6302
  %v6313 = vpop.xlane.xlu0 %6312
  %6314 = vadd.xlane.f32.xlu0 %v6305
  %v6315 = vpop.xlane.xlu0 %6314
  %v6316 = vmul.f32 %v6313, 0.0078125
  %v6317 = vmul.f32 %v6315, 0.0078125
  %v6318 = vsub.f32 %v6302, %v6316
  %v6319 = vsub.f32 %v6305, %v6317
  %v6320 = vmul.f32 %v6318, %v6318
  %v6321 = vmul.f32 %v6319, %v6319
  %6322 = vadd.xlane.f32.xlu0 %v6320
  %v6323 = vpop.xlane.xlu0 %6322
  %6324 = vadd.xlane.f32.xlu0 %v6321
  %v6325 = vpop.xlane.xlu0 %6324
  %v6326 = vmul.f32 %v6323, 0.0078125
  %v6327 = vmul.f32 %v6325, 0.0078125
  %v6328 = vadd.f32 %v6326, 1e-05
  %v6329 = vadd.f32 %v6327, 1e-05
  %v6330 = vrsqrt.pop %v6328
  %v6331 = vrsqrt.pop %v6329
  %v6332 = vmul.f32 %v6308, %v6330
  %v6333 = vmul.f32 %v6309, %v6331
  %6335 = vset.pattern.permute.xlu0 0
  %6336 = vperm.xlu0 %6335, %v6332
  %v6337 = vpop.permute.xlu0 %6336
  %6340 = vset.pattern.permute.xlu0 0
  %6341 = vperm.xlu0 %6340, %v6333
  %v6342 = vpop.permute.xlu0 %6341
  %v6344 = vmul.f32 %v6318, %v6337
  %v6345 = vmul.f32 %v6319, %v6342
  %6347 = vset.pattern.permute.xlu0 0
  %6348 = vperm.xlu0 %6347, %v6310
  %v6349 = vpop.permute.xlu0 %6348
  %6352 = vset.pattern.permute.xlu0 0
  %6353 = vperm.xlu0 %6352, %v6311
  %v6354 = vpop.permute.xlu0 %6353
  %v6356 = vadd.f32 %v6344, %v6349
  %v6357 = vadd.f32 %v6345, %v6354
  %vm6358 = vcmp.ge.f32.partialorder %v6356, 0.0
  %vm6359 = vcmp.ge.f32.partialorder %v6357, 0.0
  %v6360 = vmul.f32 %v6356, 0.2
  %v6361 = vmul.f32 %v6357, 0.2
  %v6362 = vsel %vm6358, %v6356, %v6360
  %v6363 = vsel %vm6359, %v6357, %v6361
  %v6364 = vpack.c.bf16 %v6363, %v6362
  %v6365 = vld [vmem:[%s11] sm:$0xf]
  %v6366 = vld [vmem:[%s11 + $0x4] sm:$0xf]
  %v6367 = vld [vmem:[%s11 + $0x8] sm:$0xf]
  %v6368 = vld [vmem:[%s11 + $0xc] sm:$0xf]
  %v6369 = vld [vmem:[%s11 + $0x10] sm:$0xf]
  %v6370 = vld [vmem:[%s11 + $0x14] sm:$0xf]
  %v6371 = vld [vmem:[%s11 + $0x18] sm:$0xf]
  %v6372 = vld [vmem:[%s11 + $0x1c] sm:$0xf]
  %v6373 = vld [vmem:[%s11 + $0x20] sm:$0xf]
  %v6374 = vld [vmem:[%s11 + $0x24] sm:$0xf]
  %v6375 = vld [vmem:[%s11 + $0x28] sm:$0xf]
  %v6376 = vld [vmem:[%s11 + $0x2c] sm:$0xf]
  %v6377 = vld [vmem:[%s11 + $0x30] sm:$0xf]
  %v6378 = vld [vmem:[%s11 + $0x34] sm:$0xf]
  %v6379 = vld [vmem:[%s11 + $0x38] sm:$0xf]
  %v6380 = vld [vmem:[%s11 + $0x3c] sm:$0xf]
  %v6397 = vunpack.c.l.b16 %v6365
  %v6398 = vunpack.c.l.b16 %v6366
  %v6399 = vunpack.c.l.b16 %v6367
  %v6400 = vunpack.c.l.b16 %v6368
  %v6401 = vunpack.c.l.b16 %v6369
  %v6402 = vunpack.c.l.b16 %v6370
  %v6403 = vunpack.c.l.b16 %v6371
  %v6404 = vunpack.c.l.b16 %v6372
  %v6405 = vunpack.c.l.b16 %v6373
  %v6406 = vunpack.c.l.b16 %v6374
  %v6407 = vunpack.c.l.b16 %v6375
  %v6408 = vunpack.c.l.b16 %v6376
  %v6409 = vunpack.c.l.b16 %v6377
  %v6410 = vunpack.c.l.b16 %v6378
  %v6411 = vunpack.c.l.b16 %v6379
  %v6412 = vunpack.c.l.b16 %v6380
  %v6413 = vpack.c.b16 %v6398, %v6397
  %v6414 = vpack.c.b16 %v6400, %v6399
  %v6415 = vpack.c.b16 %v6402, %v6401
  %v6416 = vpack.c.b16 %v6404, %v6403
  %v6417 = vpack.c.b16 %v6406, %v6405
  %v6418 = vpack.c.b16 %v6408, %v6407
  %v6419 = vpack.c.b16 %v6410, %v6409
  %v6420 = vpack.c.b16 %v6412, %v6411
  %6429 = vmatprep.subr.bf16.mxu0 0
  %6430 = vmatpush1.bf16.msra.mxu0 %v6413
  %6431 = vmatprep.subr.bf16.mxu0 0
  %6432 = vmatpush1.bf16.msra.mxu0 %v6414
  %6433 = vmatprep.subr.bf16.mxu0 0
  %6434 = vmatpush1.bf16.msra.mxu0 %v6415
  %6435 = vmatprep.subr.bf16.mxu0 0
  %6436 = vmatpush1.bf16.msra.mxu0 %v6416
  %6437 = vmatprep.subr.bf16.mxu0 0
  %6438 = vmatpush1.bf16.msra.mxu0 %v6417
  %6439 = vmatprep.subr.bf16.mxu0 0
  %6440 = vmatpush1.bf16.msra.mxu0 %v6418
  %6441 = vmatprep.subr.bf16.mxu0 0
  %6442 = vmatpush1.bf16.msra.mxu0 %v6419
  %6443 = vmatprep.subr.bf16.mxu0 0
  %6444 = vmatpush1.bf16.msra.mxu0 %v6420
  %6445 = vmatprep.subr.bf16.mxu0 0
  %6446 = vmatpush1.bf16.msra.mxu0 0
  %6447 = vmatprep.subr.bf16.mxu0 0
  %6448 = vmatpush1.bf16.msra.mxu0 0
  %6449 = vmatprep.subr.bf16.mxu0 0
  %6450 = vmatpush1.bf16.msra.mxu0 0
  %6451 = vmatprep.subr.bf16.mxu0 0
  %6452 = vmatpush1.bf16.msra.mxu0 0
  %6453 = vmatprep.subr.bf16.mxu0 0
  %6454 = vmatpush1.bf16.msra.mxu0 0
  %6455 = vmatprep.subr.bf16.mxu0 0
  %6456 = vmatpush1.bf16.msra.mxu0 0
  %6457 = vmatprep.subr.bf16.mxu0 0
  %6458 = vmatpush1.bf16.msra.mxu0 0
  %6459 = vmatprep.subr.bf16.mxu0 0
  %6460 = vmatpush1.bf16.msra.mxu0 0
  %6461 = vmatprep.mubr.bf16.mxu0 0
  %6462 = vmatmul.mubr.bf16.gmra.mrb[0].mxu0 %v6364
  %v6463 = vpop.f32.mrb[0].mxu0
  %v6464 = vadd.f32 0.0, %v6463
  %v6465 = vpop.f32.mrb[0].mxu0
  %v6466 = vpop.f32.mrb[0].mxu0
  %v6467 = vadd.f32 0.0, %v6466
  %v6468 = vpop.f32.mrb[0].mxu0
  %6469 = vdwg.mxu0
  %s6470 = scalar_lea.vmem %s11, 64
  %v6471 = vld [vmem:[%s6470] sm:$0xf]
  %v6472 = vld [vmem:[%s6470 + $0x4] sm:$0xf]
  %v6473 = vld [vmem:[%s6470 + $0x8] sm:$0xf]
  %v6474 = vld [vmem:[%s6470 + $0xc] sm:$0xf]
  %v6475 = vld [vmem:[%s6470 + $0x10] sm:$0xf]
  %v6476 = vld [vmem:[%s6470 + $0x14] sm:$0xf]
  %v6477 = vld [vmem:[%s6470 + $0x18] sm:$0xf]
  %v6478 = vld [vmem:[%s6470 + $0x1c] sm:$0xf]
  %v6479 = vld [vmem:[%s6470 + $0x20] sm:$0xf]
  %v6480 = vld [vmem:[%s6470 + $0x24] sm:$0xf]
  %v6481 = vld [vmem:[%s6470 + $0x28] sm:$0xf]
  %v6482 = vld [vmem:[%s6470 + $0x2c] sm:$0xf]
  %v6483 = vld [vmem:[%s6470 + $0x30] sm:$0xf]
  %v6484 = vld [vmem:[%s6470 + $0x34] sm:$0xf]
  %v6485 = vld [vmem:[%s6470 + $0x38] sm:$0xf]
  %v6486 = vld [vmem:[%s6470 + $0x3c] sm:$0xf]
  %v6503 = vunpack.c.l.b16 %v6471
  %v6504 = vunpack.c.l.b16 %v6472
  %v6505 = vunpack.c.l.b16 %v6473
  %v6506 = vunpack.c.l.b16 %v6474
  %v6507 = vunpack.c.l.b16 %v6475
  %v6508 = vunpack.c.l.b16 %v6476
  %v6509 = vunpack.c.l.b16 %v6477
  %v6510 = vunpack.c.l.b16 %v6478
  %v6511 = vunpack.c.l.b16 %v6479
  %v6512 = vunpack.c.l.b16 %v6480
  %v6513 = vunpack.c.l.b16 %v6481
  %v6514 = vunpack.c.l.b16 %v6482
  %v6515 = vunpack.c.l.b16 %v6483
  %v6516 = vunpack.c.l.b16 %v6484
  %v6517 = vunpack.c.l.b16 %v6485
  %v6518 = vunpack.c.l.b16 %v6486
  %v6519 = vpack.c.b16 %v6504, %v6503
  %v6520 = vpack.c.b16 %v6506, %v6505
  %v6521 = vpack.c.b16 %v6508, %v6507
  %v6522 = vpack.c.b16 %v6510, %v6509
  %v6523 = vpack.c.b16 %v6512, %v6511
  %v6524 = vpack.c.b16 %v6514, %v6513
  %v6525 = vpack.c.b16 %v6516, %v6515
  %v6526 = vpack.c.b16 %v6518, %v6517
  %6535 = vmatprep.subr.bf16.mxu0 0
  %6536 = vmatpush1.bf16.msra.mxu0 %v6519
  %6537 = vmatprep.subr.bf16.mxu0 0
  %6538 = vmatpush1.bf16.msra.mxu0 %v6520
  %6539 = vmatprep.subr.bf16.mxu0 0
  %6540 = vmatpush1.bf16.msra.mxu0 %v6521
  %6541 = vmatprep.subr.bf16.mxu0 0
  %6542 = vmatpush1.bf16.msra.mxu0 %v6522
  %6543 = vmatprep.subr.bf16.mxu0 0
  %6544 = vmatpush1.bf16.msra.mxu0 %v6523
  %6545 = vmatprep.subr.bf16.mxu0 0
  %6546 = vmatpush1.bf16.msra.mxu0 %v6524
  %6547 = vmatprep.subr.bf16.mxu0 0
  %6548 = vmatpush1.bf16.msra.mxu0 %v6525
  %6549 = vmatprep.subr.bf16.mxu0 0
  %6550 = vmatpush1.bf16.msra.mxu0 %v6526
  %6551 = vmatprep.subr.bf16.mxu0 0
  %6552 = vmatpush1.bf16.msra.mxu0 0
  %6553 = vmatprep.subr.bf16.mxu0 0
  %6554 = vmatpush1.bf16.msra.mxu0 0
  %6555 = vmatprep.subr.bf16.mxu0 0
  %6556 = vmatpush1.bf16.msra.mxu0 0
  %6557 = vmatprep.subr.bf16.mxu0 0
  %6558 = vmatpush1.bf16.msra.mxu0 0
  %6559 = vmatprep.subr.bf16.mxu0 0
  %6560 = vmatpush1.bf16.msra.mxu0 0
  %6561 = vmatprep.subr.bf16.mxu0 0
  %6562 = vmatpush1.bf16.msra.mxu0 0
  %6563 = vmatprep.subr.bf16.mxu0 0
  %6564 = vmatpush1.bf16.msra.mxu0 0
  %6565 = vmatprep.subr.bf16.mxu0 0
  %6566 = vmatpush1.bf16.msra.mxu0 0
  %6567 = vmatprep.mubr.bf16.mxu0 0
  %6568 = vmatmul.mubr.bf16.gmra.mrb[0].mxu0 %v6364
  %v6569 = vpop.f32.mrb[0].mxu0
  %v6570 = vadd.f32 0.0, %v6569
  %v6571 = vpop.f32.mrb[0].mxu0
  %v6572 = vpop.f32.mrb[0].mxu0
  %v6573 = vadd.f32 0.0, %v6572
  %v6574 = vpop.f32.mrb[0].mxu0
  %6575 = vdwg.mxu0
  %s6576 = scalar_lea.vmem %s11, 128
  %v6577 = vld [vmem:[%s6576] sm:$0xf]
  %v6578 = vld [vmem:[%s6576 + $0x4] sm:$0xf]
  %v6579 = vld [vmem:[%s6576 + $0x8] sm:$0xf]
  %v6580 = vld [vmem:[%s6576 + $0xc] sm:$0xf]
  %v6581 = vld [vmem:[%s6576 + $0x10] sm:$0xf]
  %v6582 = vld [vmem:[%s6576 + $0x14] sm:$0xf]
  %v6583 = vld [vmem:[%s6576 + $0x18] sm:$0xf]
  %v6584 = vld [vmem:[%s6576 + $0x1c] sm:$0xf]
  %v6585 = vld [vmem:[%s6576 + $0x20] sm:$0xf]
  %v6586 = vld [vmem:[%s6576 + $0x24] sm:$0xf]
  %v6587 = vld [vmem:[%s6576 + $0x28] sm:$0xf]
  %v6588 = vld [vmem:[%s6576 + $0x2c] sm:$0xf]
  %v6589 = vld [vmem:[%s6576 + $0x30] sm:$0xf]
  %v6590 = vld [vmem:[%s6576 + $0x34] sm:$0xf]
  %v6591 = vld [vmem:[%s6576 + $0x38] sm:$0xf]
  %v6592 = vld [vmem:[%s6576 + $0x3c] sm:$0xf]
  %v6609 = vunpack.c.l.b16 %v6577
  %v6610 = vunpack.c.l.b16 %v6578
  %v6611 = vunpack.c.l.b16 %v6579
  %v6612 = vunpack.c.l.b16 %v6580
  %v6613 = vunpack.c.l.b16 %v6581
  %v6614 = vunpack.c.l.b16 %v6582
  %v6615 = vunpack.c.l.b16 %v6583
  %v6616 = vunpack.c.l.b16 %v6584
  %v6617 = vunpack.c.l.b16 %v6585
  %v6618 = vunpack.c.l.b16 %v6586
  %v6619 = vunpack.c.l.b16 %v6587
  %v6620 = vunpack.c.l.b16 %v6588
  %v6621 = vunpack.c.l.b16 %v6589
  %v6622 = vunpack.c.l.b16 %v6590
  %v6623 = vunpack.c.l.b16 %v6591
  %v6624 = vunpack.c.l.b16 %v6592
  %v6625 = vpack.c.b16 %v6610, %v6609
  %v6626 = vpack.c.b16 %v6612, %v6611
  %v6627 = vpack.c.b16 %v6614, %v6613
  %v6628 = vpack.c.b16 %v6616, %v6615
  %v6629 = vpack.c.b16 %v6618, %v6617
  %v6630 = vpack.c.b16 %v6620, %v6619
  %v6631 = vpack.c.b16 %v6622, %v6621
  %v6632 = vpack.c.b16 %v6624, %v6623
  %6641 = vmatprep.subr.bf16.mxu0 0
  %6642 = vmatpush1.bf16.msra.mxu0 %v6625
  %6643 = vmatprep.subr.bf16.mxu0 0
  %6644 = vmatpush1.bf16.msra.mxu0 %v6626
  %6645 = vmatprep.subr.bf16.mxu0 0
  %6646 = vmatpush1.bf16.msra.mxu0 %v6627
  %6647 = vmatprep.subr.bf16.mxu0 0
  %6648 = vmatpush1.bf16.msra.mxu0 %v6628
  %6649 = vmatprep.subr.bf16.mxu0 0
  %6650 = vmatpush1.bf16.msra.mxu0 %v6629
  %6651 = vmatprep.subr.bf16.mxu0 0
  %6652 = vmatpush1.bf16.msra.mxu0 %v6630
  %6653 = vmatprep.subr.bf16.mxu0 0
  %6654 = vmatpush1.bf16.msra.mxu0 %v6631
  %6655 = vmatprep.subr.bf16.mxu0 0
  %6656 = vmatpush1.bf16.msra.mxu0 %v6632
  %6657 = vmatprep.subr.bf16.mxu0 0
  %6658 = vmatpush1.bf16.msra.mxu0 0
  %6659 = vmatprep.subr.bf16.mxu0 0
  %6660 = vmatpush1.bf16.msra.mxu0 0
  %6661 = vmatprep.subr.bf16.mxu0 0
  %6662 = vmatpush1.bf16.msra.mxu0 0
  %6663 = vmatprep.subr.bf16.mxu0 0
  %6664 = vmatpush1.bf16.msra.mxu0 0
  %6665 = vmatprep.subr.bf16.mxu0 0
  %6666 = vmatpush1.bf16.msra.mxu0 0
  %6667 = vmatprep.subr.bf16.mxu0 0
  %6668 = vmatpush1.bf16.msra.mxu0 0
  %6669 = vmatprep.subr.bf16.mxu0 0
  %6670 = vmatpush1.bf16.msra.mxu0 0
  %6671 = vmatprep.subr.bf16.mxu0 0
  %6672 = vmatpush1.bf16.msra.mxu0 0
  %6673 = vmatprep.mubr.bf16.mxu0 0
  %6674 = vmatmul.mubr.bf16.gmra.mrb[0].mxu0 %v6364
  %v6675 = vpop.f32.mrb[0].mxu0
  %v6676 = vadd.f32 0.0, %v6675
  %v6677 = vpop.f32.mrb[0].mxu0
  %v6678 = vpop.f32.mrb[0].mxu0
  %v6679 = vadd.f32 0.0, %v6678
  %v6680 = vpop.f32.mrb[0].mxu0
  %6681 = vdwg.mxu0
  %s6682 = scalar_lea.vmem %s11, 192
  %v6683 = vld [vmem:[%s6682] sm:$0xf]
  %v6684 = vld [vmem:[%s6682 + $0x4] sm:$0xf]
  %v6685 = vld [vmem:[%s6682 + $0x8] sm:$0xf]
  %v6686 = vld [vmem:[%s6682 + $0xc] sm:$0xf]
  %v6687 = vld [vmem:[%s6682 + $0x10] sm:$0xf]
  %v6688 = vld [vmem:[%s6682 + $0x14] sm:$0xf]
  %v6689 = vld [vmem:[%s6682 + $0x18] sm:$0xf]
  %v6690 = vld [vmem:[%s6682 + $0x1c] sm:$0xf]
  %v6691 = vld [vmem:[%s6682 + $0x20] sm:$0xf]
  %v6692 = vld [vmem:[%s6682 + $0x24] sm:$0xf]
  %v6693 = vld [vmem:[%s6682 + $0x28] sm:$0xf]
  %v6694 = vld [vmem:[%s6682 + $0x2c] sm:$0xf]
  %v6695 = vld [vmem:[%s6682 + $0x30] sm:$0xf]
  %v6696 = vld [vmem:[%s6682 + $0x34] sm:$0xf]
  %v6697 = vld [vmem:[%s6682 + $0x38] sm:$0xf]
  %v6698 = vld [vmem:[%s6682 + $0x3c] sm:$0xf]
  %v6715 = vunpack.c.l.b16 %v6683
  %v6716 = vunpack.c.l.b16 %v6684
  %v6717 = vunpack.c.l.b16 %v6685
  %v6718 = vunpack.c.l.b16 %v6686
  %v6719 = vunpack.c.l.b16 %v6687
  %v6720 = vunpack.c.l.b16 %v6688
  %v6721 = vunpack.c.l.b16 %v6689
  %v6722 = vunpack.c.l.b16 %v6690
  %v6723 = vunpack.c.l.b16 %v6691
  %v6724 = vunpack.c.l.b16 %v6692
  %v6725 = vunpack.c.l.b16 %v6693
  %v6726 = vunpack.c.l.b16 %v6694
  %v6727 = vunpack.c.l.b16 %v6695
  %v6728 = vunpack.c.l.b16 %v6696
  %v6729 = vunpack.c.l.b16 %v6697
  %v6730 = vunpack.c.l.b16 %v6698
  %v6731 = vpack.c.b16 %v6716, %v6715
  %v6732 = vpack.c.b16 %v6718, %v6717
  %v6733 = vpack.c.b16 %v6720, %v6719
  %v6734 = vpack.c.b16 %v6722, %v6721
  %v6735 = vpack.c.b16 %v6724, %v6723
  %v6736 = vpack.c.b16 %v6726, %v6725
  %v6737 = vpack.c.b16 %v6728, %v6727
  %v6738 = vpack.c.b16 %v6730, %v6729
  %6747 = vmatprep.subr.bf16.mxu0 0
  %6748 = vmatpush1.bf16.msra.mxu0 %v6731
  %6749 = vmatprep.subr.bf16.mxu0 0
  %6750 = vmatpush1.bf16.msra.mxu0 %v6732
  %6751 = vmatprep.subr.bf16.mxu0 0
  %6752 = vmatpush1.bf16.msra.mxu0 %v6733
  %6753 = vmatprep.subr.bf16.mxu0 0
  %6754 = vmatpush1.bf16.msra.mxu0 %v6734
  %6755 = vmatprep.subr.bf16.mxu0 0
  %6756 = vmatpush1.bf16.msra.mxu0 %v6735
  %6757 = vmatprep.subr.bf16.mxu0 0
  %6758 = vmatpush1.bf16.msra.mxu0 %v6736
  %6759 = vmatprep.subr.bf16.mxu0 0
  %6760 = vmatpush1.bf16.msra.mxu0 %v6737
  %6761 = vmatprep.subr.bf16.mxu0 0
  %6762 = vmatpush1.bf16.msra.mxu0 %v6738
  %6763 = vmatprep.subr.bf16.mxu0 0
  %6764 = vmatpush1.bf16.msra.mxu0 0
  %6765 = vmatprep.subr.bf16.mxu0 0
  %6766 = vmatpush1.bf16.msra.mxu0 0
  %6767 = vmatprep.subr.bf16.mxu0 0
  %6768 = vmatpush1.bf16.msra.mxu0 0
  %6769 = vmatprep.subr.bf16.mxu0 0
  %6770 = vmatpush1.bf16.msra.mxu0 0
  %6771 = vmatprep.subr.bf16.mxu0 0
  %6772 = vmatpush1.bf16.msra.mxu0 0
  %6773 = vmatprep.subr.bf16.mxu0 0
  %6774 = vmatpush1.bf16.msra.mxu0 0
  %6775 = vmatprep.subr.bf16.mxu0 0
  %6776 = vmatpush1.bf16.msra.mxu0 0
  %6777 = vmatprep.subr.bf16.mxu0 0
  %6778 = vmatpush1.bf16.msra.mxu0 0
  %6779 = vmatprep.mubr.bf16.mxu0 0
  %6780 = vmatmul.mubr.bf16.gmra.mrb[0].mxu0 %v6364
  %v6781 = vpop.f32.mrb[0].mxu0
  %v6782 = vadd.f32 0.0, %v6781
  %v6783 = vpop.f32.mrb[0].mxu0
  %v6784 = vpop.f32.mrb[0].mxu0
  %v6785 = vadd.f32 0.0, %v6784
  %v6786 = vpop.f32.mrb[0].mxu0
  %6787 = vdwg.mxu0
  %s6788 = scalar_lea.vmem %s11, 256
  %v6789 = vld [vmem:[%s6788] sm:$0xf]
  %v6790 = vld [vmem:[%s6788 + $0x4] sm:$0xf]
  %v6791 = vld [vmem:[%s6788 + $0x8] sm:$0xf]
  %v6792 = vld [vmem:[%s6788 + $0xc] sm:$0xf]
  %v6793 = vld [vmem:[%s6788 + $0x10] sm:$0xf]
  %v6794 = vld [vmem:[%s6788 + $0x14] sm:$0xf]
  %v6795 = vld [vmem:[%s6788 + $0x18] sm:$0xf]
  %v6796 = vld [vmem:[%s6788 + $0x1c] sm:$0xf]
  %v6797 = vld [vmem:[%s6788 + $0x20] sm:$0xf]
  %v6798 = vld [vmem:[%s6788 + $0x24] sm:$0xf]
  %v6799 = vld [vmem:[%s6788 + $0x28] sm:$0xf]
  %v6800 = vld [vmem:[%s6788 + $0x2c] sm:$0xf]
  %v6801 = vld [vmem:[%s6788 + $0x30] sm:$0xf]
  %v6802 = vld [vmem:[%s6788 + $0x34] sm:$0xf]
  %v6803 = vld [vmem:[%s6788 + $0x38] sm:$0xf]
  %v6804 = vld [vmem:[%s6788 + $0x3c] sm:$0xf]
  %v6821 = vunpack.c.l.b16 %v6789
  %v6822 = vunpack.c.l.b16 %v6790
  %v6823 = vunpack.c.l.b16 %v6791
  %v6824 = vunpack.c.l.b16 %v6792
  %v6825 = vunpack.c.l.b16 %v6793
  %v6826 = vunpack.c.l.b16 %v6794
  %v6827 = vunpack.c.l.b16 %v6795
  %v6828 = vunpack.c.l.b16 %v6796
  %v6829 = vunpack.c.l.b16 %v6797
  %v6830 = vunpack.c.l.b16 %v6798
  %v6831 = vunpack.c.l.b16 %v6799
  %v6832 = vunpack.c.l.b16 %v6800
  %v6833 = vunpack.c.l.b16 %v6801
  %v6834 = vunpack.c.l.b16 %v6802
  %v6835 = vunpack.c.l.b16 %v6803
  %v6836 = vunpack.c.l.b16 %v6804
  %v6837 = vpack.c.b16 %v6822, %v6821
  %v6838 = vpack.c.b16 %v6824, %v6823
  %v6839 = vpack.c.b16 %v6826, %v6825
  %v6840 = vpack.c.b16 %v6828, %v6827
  %v6841 = vpack.c.b16 %v6830, %v6829
  %v6842 = vpack.c.b16 %v6832, %v6831
  %v6843 = vpack.c.b16 %v6834, %v6833
  %v6844 = vpack.c.b16 %v6836, %v6835
  %6853 = vmatprep.subr.bf16.mxu0 0
  %6854 = vmatpush1.bf16.msra.mxu0 %v6837
  %6855 = vmatprep.subr.bf16.mxu0 0
  %6856 = vmatpush1.bf16.msra.mxu0 %v6838
  %6857 = vmatprep.subr.bf16.mxu0 0
  %6858 = vmatpush1.bf16.msra.mxu0 %v6839
  %6859 = vmatprep.subr.bf16.mxu0 0
  %6860 = vmatpush1.bf16.msra.mxu0 %v6840
  %6861 = vmatprep.subr.bf16.mxu0 0
  %6862 = vmatpush1.bf16.msra.mxu0 %v6841
  %6863 = vmatprep.subr.bf16.mxu0 0
  %6864 = vmatpush1.bf16.msra.mxu0 %v6842
  %6865 = vmatprep.subr.bf16.mxu0 0
  %6866 = vmatpush1.bf16.msra.mxu0 %v6843
  %6867 = vmatprep.subr.bf16.mxu0 0
  %6868 = vmatpush1.bf16.msra.mxu0 %v6844
  %6869 = vmatprep.subr.bf16.mxu0 0
  %6870 = vmatpush1.bf16.msra.mxu0 0
  %6871 = vmatprep.subr.bf16.mxu0 0
  %6872 = vmatpush1.bf16.msra.mxu0 0
  %6873 = vmatprep.subr.bf16.mxu0 0
  %6874 = vmatpush1.bf16.msra.mxu0 0
  %6875 = vmatprep.subr.bf16.mxu0 0
  %6876 = vmatpush1.bf16.msra.mxu0 0
  %6877 = vmatprep.subr.bf16.mxu0 0
  %6878 = vmatpush1.bf16.msra.mxu0 0
  %6879 = vmatprep.subr.bf16.mxu0 0
  %6880 = vmatpush1.bf16.msra.mxu0 0
  %6881 = vmatprep.subr.bf16.mxu0 0
  %6882 = vmatpush1.bf16.msra.mxu0 0
  %6883 = vmatprep.subr.bf16.mxu0 0
  %6884 = vmatpush1.bf16.msra.mxu0 0
  %6885 = vmatprep.mubr.bf16.mxu0 0
  %6886 = vmatmul.mubr.bf16.gmra.mrb[0].mxu0 %v6364
  %v6887 = vpop.f32.mrb[0].mxu0
  %v6888 = vadd.f32 0.0, %v6887
  %v6889 = vpop.f32.mrb[0].mxu0
  %v6890 = vpop.f32.mrb[0].mxu0
  %v6891 = vadd.f32 0.0, %v6890
  %v6892 = vpop.f32.mrb[0].mxu0
  %6893 = vdwg.mxu0
  %s6894 = scalar_lea.vmem %s11, 320
  %v6895 = vld [vmem:[%s6894] sm:$0xf]
  %v6896 = vld [vmem:[%s6894 + $0x4] sm:$0xf]
  %v6897 = vld [vmem:[%s6894 + $0x8] sm:$0xf]
  %v6898 = vld [vmem:[%s6894 + $0xc] sm:$0xf]
  %v6899 = vld [vmem:[%s6894 + $0x10] sm:$0xf]
  %v6900 = vld [vmem:[%s6894 + $0x14] sm:$0xf]
  %v6901 = vld [vmem:[%s6894 + $0x18] sm:$0xf]
  %v6902 = vld [vmem:[%s6894 + $0x1c] sm:$0xf]
  %v6903 = vld [vmem:[%s6894 + $0x20] sm:$0xf]
  %v6904 = vld [vmem:[%s6894 + $0x24] sm:$0xf]
  %v6905 = vld [vmem:[%s6894 + $0x28] sm:$0xf]
  %v6906 = vld [vmem:[%s6894 + $0x2c] sm:$0xf]
  %v6907 = vld [vmem:[%s6894 + $0x30] sm:$0xf]
  %v6908 = vld [vmem:[%s6894 + $0x34] sm:$0xf]
  %v6909 = vld [vmem:[%s6894 + $0x38] sm:$0xf]
  %v6910 = vld [vmem:[%s6894 + $0x3c] sm:$0xf]
  %v6927 = vunpack.c.l.b16 %v6895
  %v6928 = vunpack.c.l.b16 %v6896
  %v6929 = vunpack.c.l.b16 %v6897
  %v6930 = vunpack.c.l.b16 %v6898
  %v6931 = vunpack.c.l.b16 %v6899
  %v6932 = vunpack.c.l.b16 %v6900
  %v6933 = vunpack.c.l.b16 %v6901
  %v6934 = vunpack.c.l.b16 %v6902
  %v6935 = vunpack.c.l.b16 %v6903
  %v6936 = vunpack.c.l.b16 %v6904
  %v6937 = vunpack.c.l.b16 %v6905
  %v6938 = vunpack.c.l.b16 %v6906
  %v6939 = vunpack.c.l.b16 %v6907
  %v6940 = vunpack.c.l.b16 %v6908
  %v6941 = vunpack.c.l.b16 %v6909
  %v6942 = vunpack.c.l.b16 %v6910
  %v6943 = vpack.c.b16 %v6928, %v6927
  %v6944 = vpack.c.b16 %v6930, %v6929
  %v6945 = vpack.c.b16 %v6932, %v6931
  %v6946 = vpack.c.b16 %v6934, %v6933
  %v6947 = vpack.c.b16 %v6936, %v6935
  %v6948 = vpack.c.b16 %v6938, %v6937
  %v6949 = vpack.c.b16 %v6940, %v6939
  %v6950 = vpack.c.b16 %v6942, %v6941
  %6959 = vmatprep.subr.bf16.mxu0 0
  %6960 = vmatpush1.bf16.msra.mxu0 %v6943
  %6961 = vmatprep.subr.bf16.mxu0 0
  %6962 = vmatpush1.bf16.msra.mxu0 %v6944
  %6963 = vmatprep.subr.bf16.mxu0 0
  %6964 = vmatpush1.bf16.msra.mxu0 %v6945
  %6965 = vmatprep.subr.bf16.mxu0 0
  %6966 = vmatpush1.bf16.msra.mxu0 %v6946
  %6967 = vmatprep.subr.bf16.mxu0 0
  %6968 = vmatpush1.bf16.msra.mxu0 %v6947
  %6969 = vmatprep.subr.bf16.mxu0 0
  %6970 = vmatpush1.bf16.msra.mxu0 %v6948
  %6971 = vmatprep.subr.bf16.mxu0 0
  %6972 = vmatpush1.bf16.msra.mxu0 %v6949
  %6973 = vmatprep.subr.bf16.mxu0 0
  %6974 = vmatpush1.bf16.msra.mxu0 %v6950
  %6975 = vmatprep.subr.bf16.mxu0 0
  %6976 = vmatpush1.bf16.msra.mxu0 0
  %6977 = vmatprep.subr.bf16.mxu0 0
  %6978 = vmatpush1.bf16.msra.mxu0 0
  %6979 = vmatprep.subr.bf16.mxu0 0
  %6980 = vmatpush1.bf16.msra.mxu0 0
  %6981 = vmatprep.subr.bf16.mxu0 0
  %6982 = vmatpush1.bf16.msra.mxu0 0
  %6983 = vmatprep.subr.bf16.mxu0 0
  %6984 = vmatpush1.bf16.msra.mxu0 0
  %6985 = vmatprep.subr.bf16.mxu0 0
  %6986 = vmatpush1.bf16.msra.mxu0 0
  %6987 = vmatprep.subr.bf16.mxu0 0
  %6988 = vmatpush1.bf16.msra.mxu0 0
  %6989 = vmatprep.subr.bf16.mxu0 0
  %6990 = vmatpush1.bf16.msra.mxu0 0
  %6991 = vmatprep.mubr.bf16.mxu0 0
  %6992 = vmatmul.mubr.bf16.gmra.mrb[0].mxu0 %v6364
  %v6993 = vpop.f32.mrb[0].mxu0
  %v6994 = vadd.f32 0.0, %v6993
  %v6995 = vpop.f32.mrb[0].mxu0
  %v6996 = vpop.f32.mrb[0].mxu0
  %v6997 = vadd.f32 0.0, %v6996
  %v6998 = vpop.f32.mrb[0].mxu0
  %6999 = vdwg.mxu0
  %s7000 = scalar_lea.vmem %s11, 384
  %v7001 = vld [vmem:[%s7000] sm:$0xf]
  %v7002 = vld [vmem:[%s7000 + $0x4] sm:$0xf]
  %v7003 = vld [vmem:[%s7000 + $0x8] sm:$0xf]
  %v7004 = vld [vmem:[%s7000 + $0xc] sm:$0xf]
  %v7005 = vld [vmem:[%s7000 + $0x10] sm:$0xf]
  %v7006 = vld [vmem:[%s7000 + $0x14] sm:$0xf]
  %v7007 = vld [vmem:[%s7000 + $0x18] sm:$0xf]
  %v7008 = vld [vmem:[%s7000 + $0x1c] sm:$0xf]
  %v7009 = vld [vmem:[%s7000 + $0x20] sm:$0xf]
  %v7010 = vld [vmem:[%s7000 + $0x24] sm:$0xf]
  %v7011 = vld [vmem:[%s7000 + $0x28] sm:$0xf]
  %v7012 = vld [vmem:[%s7000 + $0x2c] sm:$0xf]
  %v7013 = vld [vmem:[%s7000 + $0x30] sm:$0xf]
  %v7014 = vld [vmem:[%s7000 + $0x34] sm:$0xf]
  %v7015 = vld [vmem:[%s7000 + $0x38] sm:$0xf]
  %v7016 = vld [vmem:[%s7000 + $0x3c] sm:$0xf]
  %v7033 = vunpack.c.l.b16 %v7001
  %v7034 = vunpack.c.l.b16 %v7002
  %v7035 = vunpack.c.l.b16 %v7003
  %v7036 = vunpack.c.l.b16 %v7004
  %v7037 = vunpack.c.l.b16 %v7005
  %v7038 = vunpack.c.l.b16 %v7006
  %v7039 = vunpack.c.l.b16 %v7007
  %v7040 = vunpack.c.l.b16 %v7008
  %v7041 = vunpack.c.l.b16 %v7009
  %v7042 = vunpack.c.l.b16 %v7010
  %v7043 = vunpack.c.l.b16 %v7011
  %v7044 = vunpack.c.l.b16 %v7012
  %v7045 = vunpack.c.l.b16 %v7013
  %v7046 = vunpack.c.l.b16 %v7014
  %v7047 = vunpack.c.l.b16 %v7015
  %v7048 = vunpack.c.l.b16 %v7016
  %v7049 = vpack.c.b16 %v7034, %v7033
  %v7050 = vpack.c.b16 %v7036, %v7035
  %v7051 = vpack.c.b16 %v7038, %v7037
  %v7052 = vpack.c.b16 %v7040, %v7039
  %v7053 = vpack.c.b16 %v7042, %v7041
  %v7054 = vpack.c.b16 %v7044, %v7043
  %v7055 = vpack.c.b16 %v7046, %v7045
  %v7056 = vpack.c.b16 %v7048, %v7047
  %7065 = vmatprep.subr.bf16.mxu0 0
  %7066 = vmatpush1.bf16.msra.mxu0 %v7049
  %7067 = vmatprep.subr.bf16.mxu0 0
  %7068 = vmatpush1.bf16.msra.mxu0 %v7050
  %7069 = vmatprep.subr.bf16.mxu0 0
  %7070 = vmatpush1.bf16.msra.mxu0 %v7051
  %7071 = vmatprep.subr.bf16.mxu0 0
  %7072 = vmatpush1.bf16.msra.mxu0 %v7052
  %7073 = vmatprep.subr.bf16.mxu0 0
  %7074 = vmatpush1.bf16.msra.mxu0 %v7053
  %7075 = vmatprep.subr.bf16.mxu0 0
  %7076 = vmatpush1.bf16.msra.mxu0 %v7054
  %7077 = vmatprep.subr.bf16.mxu0 0
  %7078 = vmatpush1.bf16.msra.mxu0 %v7055
  %7079 = vmatprep.subr.bf16.mxu0 0
  %7080 = vmatpush1.bf16.msra.mxu0 %v7056
  %7081 = vmatprep.subr.bf16.mxu0 0
  %7082 = vmatpush1.bf16.msra.mxu0 0
  %7083 = vmatprep.subr.bf16.mxu0 0
  %7084 = vmatpush1.bf16.msra.mxu0 0
  %7085 = vmatprep.subr.bf16.mxu0 0
  %7086 = vmatpush1.bf16.msra.mxu0 0
  %7087 = vmatprep.subr.bf16.mxu0 0
  %7088 = vmatpush1.bf16.msra.mxu0 0
  %7089 = vmatprep.subr.bf16.mxu0 0
  %7090 = vmatpush1.bf16.msra.mxu0 0
  %7091 = vmatprep.subr.bf16.mxu0 0
  %7092 = vmatpush1.bf16.msra.mxu0 0
  %7093 = vmatprep.subr.bf16.mxu0 0
  %7094 = vmatpush1.bf16.msra.mxu0 0
  %7095 = vmatprep.subr.bf16.mxu0 0
  %7096 = vmatpush1.bf16.msra.mxu0 0
  %7097 = vmatprep.mubr.bf16.mxu0 0
  %7098 = vmatmul.mubr.bf16.gmra.mrb[0].mxu0 %v6364
  %v7099 = vpop.f32.mrb[0].mxu0
  %v7100 = vadd.f32 0.0, %v7099
  %v7101 = vpop.f32.mrb[0].mxu0
  %v7102 = vpop.f32.mrb[0].mxu0
  %v7103 = vadd.f32 0.0, %v7102
  %v7104 = vpop.f32.mrb[0].mxu0
  %7105 = vdwg.mxu0
  %s7106 = scalar_lea.vmem %s11, 448
  %v7107 = vld [vmem:[%s7106] sm:$0xf]
  %v7108 = vld [vmem:[%s7106 + $0x4] sm:$0xf]
  %v7109 = vld [vmem:[%s7106 + $0x8] sm:$0xf]
  %v7110 = vld [vmem:[%s7106 + $0xc] sm:$0xf]
  %v7111 = vld [vmem:[%s7106 + $0x10] sm:$0xf]
  %v7112 = vld [vmem:[%s7106 + $0x14] sm:$0xf]
  %v7113 = vld [vmem:[%s7106 + $0x18] sm:$0xf]
  %v7114 = vld [vmem:[%s7106 + $0x1c] sm:$0xf]
  %v7115 = vld [vmem:[%s7106 + $0x20] sm:$0xf]
  %v7116 = vld [vmem:[%s7106 + $0x24] sm:$0xf]
  %v7117 = vld [vmem:[%s7106 + $0x28] sm:$0xf]
  %v7118 = vld [vmem:[%s7106 + $0x2c] sm:$0xf]
  %v7119 = vld [vmem:[%s7106 + $0x30] sm:$0xf]
  %v7120 = vld [vmem:[%s7106 + $0x34] sm:$0xf]
  %v7121 = vld [vmem:[%s7106 + $0x38] sm:$0xf]
  %v7122 = vld [vmem:[%s7106 + $0x3c] sm:$0xf]
  %v7139 = vunpack.c.l.b16 %v7107
  %v7140 = vunpack.c.l.b16 %v7108
  %v7141 = vunpack.c.l.b16 %v7109
  %v7142 = vunpack.c.l.b16 %v7110
  %v7143 = vunpack.c.l.b16 %v7111
  %v7144 = vunpack.c.l.b16 %v7112
  %v7145 = vunpack.c.l.b16 %v7113
  %v7146 = vunpack.c.l.b16 %v7114
  %v7147 = vunpack.c.l.b16 %v7115
  %v7148 = vunpack.c.l.b16 %v7116
  %v7149 = vunpack.c.l.b16 %v7117
  %v7150 = vunpack.c.l.b16 %v7118
  %v7151 = vunpack.c.l.b16 %v7119
  %v7152 = vunpack.c.l.b16 %v7120
  %v7153 = vunpack.c.l.b16 %v7121
  %v7154 = vunpack.c.l.b16 %v7122
  %v7155 = vpack.c.b16 %v7140, %v7139
  %v7156 = vpack.c.b16 %v7142, %v7141
  %v7157 = vpack.c.b16 %v7144, %v7143
  %v7158 = vpack.c.b16 %v7146, %v7145
  %v7159 = vpack.c.b16 %v7148, %v7147
  %v7160 = vpack.c.b16 %v7150, %v7149
  %v7161 = vpack.c.b16 %v7152, %v7151
  %v7162 = vpack.c.b16 %v7154, %v7153
  %7171 = vmatprep.subr.bf16.mxu0 0
  %7172 = vmatpush1.bf16.msra.mxu0 %v7155
  %7173 = vmatprep.subr.bf16.mxu0 0
  %7174 = vmatpush1.bf16.msra.mxu0 %v7156
  %7175 = vmatprep.subr.bf16.mxu0 0
  %7176 = vmatpush1.bf16.msra.mxu0 %v7157
  %7177 = vmatprep.subr.bf16.mxu0 0
  %7178 = vmatpush1.bf16.msra.mxu0 %v7158
  %7179 = vmatprep.subr.bf16.mxu0 0
  %7180 = vmatpush1.bf16.msra.mxu0 %v7159
  %7181 = vmatprep.subr.bf16.mxu0 0
  %7182 = vmatpush1.bf16.msra.mxu0 %v7160
  %7183 = vmatprep.subr.bf16.mxu0 0
  %7184 = vmatpush1.bf16.msra.mxu0 %v7161
  %7185 = vmatprep.subr.bf16.mxu0 0
  %7186 = vmatpush1.bf16.msra.mxu0 %v7162
  %7187 = vmatprep.subr.bf16.mxu0 0
  %7188 = vmatpush1.bf16.msra.mxu0 0
  %7189 = vmatprep.subr.bf16.mxu0 0
  %7190 = vmatpush1.bf16.msra.mxu0 0
  %7191 = vmatprep.subr.bf16.mxu0 0
  %7192 = vmatpush1.bf16.msra.mxu0 0
  %7193 = vmatprep.subr.bf16.mxu0 0
  %7194 = vmatpush1.bf16.msra.mxu0 0
  %7195 = vmatprep.subr.bf16.mxu0 0
  %7196 = vmatpush1.bf16.msra.mxu0 0
  %7197 = vmatprep.subr.bf16.mxu0 0
  %7198 = vmatpush1.bf16.msra.mxu0 0
  %7199 = vmatprep.subr.bf16.mxu0 0
  %7200 = vmatpush1.bf16.msra.mxu0 0
  %7201 = vmatprep.subr.bf16.mxu0 0
  %7202 = vmatpush1.bf16.msra.mxu0 0
  %7203 = vmatprep.mubr.bf16.mxu0 0
  %7204 = vmatmul.mubr.bf16.gmra.mrb[0].mxu0 %v6364
  %v7205 = vpop.f32.mrb[0].mxu0
  %v7206 = vadd.f32 0.0, %v7205
  %v7207 = vpop.f32.mrb[0].mxu0
  %v7208 = vpop.f32.mrb[0].mxu0
  %v7209 = vadd.f32 0.0, %v7208
  %v7210 = vpop.f32.mrb[0].mxu0
  %7211 = vdwg.mxu0
  %s7212 = scalar_lea.vmem %s11, 512
  %v7213 = vld [vmem:[%s7212] sm:$0xf]
  %v7214 = vld [vmem:[%s7212 + $0x4] sm:$0xf]
  %v7215 = vld [vmem:[%s7212 + $0x8] sm:$0xf]
  %v7216 = vld [vmem:[%s7212 + $0xc] sm:$0xf]
  %v7217 = vld [vmem:[%s7212 + $0x10] sm:$0xf]
  %v7218 = vld [vmem:[%s7212 + $0x14] sm:$0xf]
  %v7219 = vld [vmem:[%s7212 + $0x18] sm:$0xf]
  %v7220 = vld [vmem:[%s7212 + $0x1c] sm:$0xf]
  %v7221 = vld [vmem:[%s7212 + $0x20] sm:$0xf]
  %v7222 = vld [vmem:[%s7212 + $0x24] sm:$0xf]
  %v7223 = vld [vmem:[%s7212 + $0x28] sm:$0xf]
  %v7224 = vld [vmem:[%s7212 + $0x2c] sm:$0xf]
  %v7225 = vld [vmem:[%s7212 + $0x30] sm:$0xf]
  %v7226 = vld [vmem:[%s7212 + $0x34] sm:$0xf]
  %v7227 = vld [vmem:[%s7212 + $0x38] sm:$0xf]
  %v7228 = vld [vmem:[%s7212 + $0x3c] sm:$0xf]
  %v7245 = vunpack.c.l.b16 %v7213
  %v7246 = vunpack.c.l.b16 %v7214
  %v7247 = vunpack.c.l.b16 %v7215
  %v7248 = vunpack.c.l.b16 %v7216
  %v7249 = vunpack.c.l.b16 %v7217
  %v7250 = vunpack.c.l.b16 %v7218
  %v7251 = vunpack.c.l.b16 %v7219
  %v7252 = vunpack.c.l.b16 %v7220
  %v7253 = vunpack.c.l.b16 %v7221
  %v7254 = vunpack.c.l.b16 %v7222
  %v7255 = vunpack.c.l.b16 %v7223
  %v7256 = vunpack.c.l.b16 %v7224
  %v7257 = vunpack.c.l.b16 %v7225
  %v7258 = vunpack.c.l.b16 %v7226
  %v7259 = vunpack.c.l.b16 %v7227
  %v7260 = vunpack.c.l.b16 %v7228
  %v7261 = vpack.c.b16 %v7246, %v7245
  %v7262 = vpack.c.b16 %v7248, %v7247
  %v7263 = vpack.c.b16 %v7250, %v7249
  %v7264 = vpack.c.b16 %v7252, %v7251
  %v7265 = vpack.c.b16 %v7254, %v7253
  %v7266 = vpack.c.b16 %v7256, %v7255
  %v7267 = vpack.c.b16 %v7258, %v7257
  %v7268 = vpack.c.b16 %v7260, %v7259
  %7277 = vmatprep.subr.bf16.mxu0 0
  %7278 = vmatpush1.bf16.msra.mxu0 %v7261
  %7279 = vmatprep.subr.bf16.mxu0 0
  %7280 = vmatpush1.bf16.msra.mxu0 %v7262
  %7281 = vmatprep.subr.bf16.mxu0 0
  %7282 = vmatpush1.bf16.msra.mxu0 %v7263
  %7283 = vmatprep.subr.bf16.mxu0 0
  %7284 = vmatpush1.bf16.msra.mxu0 %v7264
  %7285 = vmatprep.subr.bf16.mxu0 0
  %7286 = vmatpush1.bf16.msra.mxu0 %v7265
  %7287 = vmatprep.subr.bf16.mxu0 0
  %7288 = vmatpush1.bf16.msra.mxu0 %v7266
  %7289 = vmatprep.subr.bf16.mxu0 0
  %7290 = vmatpush1.bf16.msra.mxu0 %v7267
  %7291 = vmatprep.subr.bf16.mxu0 0
  %7292 = vmatpush1.bf16.msra.mxu0 %v7268
  %7293 = vmatprep.subr.bf16.mxu0 0
  %7294 = vmatpush1.bf16.msra.mxu0 0
  %7295 = vmatprep.subr.bf16.mxu0 0
  %7296 = vmatpush1.bf16.msra.mxu0 0
  %7297 = vmatprep.subr.bf16.mxu0 0
  %7298 = vmatpush1.bf16.msra.mxu0 0
  %7299 = vmatprep.subr.bf16.mxu0 0
  %7300 = vmatpush1.bf16.msra.mxu0 0
  %7301 = vmatprep.subr.bf16.mxu0 0
  %7302 = vmatpush1.bf16.msra.mxu0 0
  %7303 = vmatprep.subr.bf16.mxu0 0
  %7304 = vmatpush1.bf16.msra.mxu0 0
  %7305 = vmatprep.subr.bf16.mxu0 0
  %7306 = vmatpush1.bf16.msra.mxu0 0
  %7307 = vmatprep.subr.bf16.mxu0 0
  %7308 = vmatpush1.bf16.msra.mxu0 0
  %7309 = vmatprep.mubr.bf16.mxu0 0
  %7310 = vmatmul.mubr.bf16.gmra.mrb[0].mxu0 %v6364
  %v7311 = vpop.f32.mrb[0].mxu0
  %v7312 = vadd.f32 0.0, %v7311
  %v7313 = vpop.f32.mrb[0].mxu0
  %v7314 = vpop.f32.mrb[0].mxu0
  %v7315 = vadd.f32 0.0, %v7314
  %v7316 = vpop.f32.mrb[0].mxu0
  %7317 = vdwg.mxu0
  %s7318 = scalar_lea.vmem %s11, 576
  %v7319 = vld [vmem:[%s7318] sm:$0xf]
  %v7320 = vld [vmem:[%s7318 + $0x4] sm:$0xf]
  %v7321 = vld [vmem:[%s7318 + $0x8] sm:$0xf]
  %v7322 = vld [vmem:[%s7318 + $0xc] sm:$0xf]
  %v7323 = vld [vmem:[%s7318 + $0x10] sm:$0xf]
  %v7324 = vld [vmem:[%s7318 + $0x14] sm:$0xf]
  %v7325 = vld [vmem:[%s7318 + $0x18] sm:$0xf]
  %v7326 = vld [vmem:[%s7318 + $0x1c] sm:$0xf]
  %v7327 = vld [vmem:[%s7318 + $0x20] sm:$0xf]
  %v7328 = vld [vmem:[%s7318 + $0x24] sm:$0xf]
  %v7329 = vld [vmem:[%s7318 + $0x28] sm:$0xf]
  %v7330 = vld [vmem:[%s7318 + $0x2c] sm:$0xf]
  %v7331 = vld [vmem:[%s7318 + $0x30] sm:$0xf]
  %v7332 = vld [vmem:[%s7318 + $0x34] sm:$0xf]
  %v7333 = vld [vmem:[%s7318 + $0x38] sm:$0xf]
  %v7334 = vld [vmem:[%s7318 + $0x3c] sm:$0xf]
  %v7351 = vunpack.c.l.b16 %v7319
  %v7352 = vunpack.c.l.b16 %v7320
  %v7353 = vunpack.c.l.b16 %v7321
  %v7354 = vunpack.c.l.b16 %v7322
  %v7355 = vunpack.c.l.b16 %v7323
  %v7356 = vunpack.c.l.b16 %v7324
  %v7357 = vunpack.c.l.b16 %v7325
  %v7358 = vunpack.c.l.b16 %v7326
  %v7359 = vunpack.c.l.b16 %v7327
  %v7360 = vunpack.c.l.b16 %v7328
  %v7361 = vunpack.c.l.b16 %v7329
  %v7362 = vunpack.c.l.b16 %v7330
  %v7363 = vunpack.c.l.b16 %v7331
  %v7364 = vunpack.c.l.b16 %v7332
  %v7365 = vunpack.c.l.b16 %v7333
  %v7366 = vunpack.c.l.b16 %v7334
  %v7367 = vpack.c.b16 %v7352, %v7351
  %v7368 = vpack.c.b16 %v7354, %v7353
  %v7369 = vpack.c.b16 %v7356, %v7355
  %v7370 = vpack.c.b16 %v7358, %v7357
  %v7371 = vpack.c.b16 %v7360, %v7359
  %v7372 = vpack.c.b16 %v7362, %v7361
  %v7373 = vpack.c.b16 %v7364, %v7363
  %v7374 = vpack.c.b16 %v7366, %v7365
  %7383 = vmatprep.subr.bf16.mxu0 0
  %7384 = vmatpush1.bf16.msra.mxu0 %v7367
  %7385 = vmatprep.subr.bf16.mxu0 0
  %7386 = vmatpush1.bf16.msra.mxu0 %v7368
  %7387 = vmatprep.subr.bf16.mxu0 0
  %7388 = vmatpush1.bf16.msra.mxu0 %v7369
  %7389 = vmatprep.subr.bf16.mxu0 0
  %7390 = vmatpush1.bf16.msra.mxu0 %v7370
  %7391 = vmatprep.subr.bf16.mxu0 0
  %7392 = vmatpush1.bf16.msra.mxu0 %v7371
  %7393 = vmatprep.subr.bf16.mxu0 0
  %7394 = vmatpush1.bf16.msra.mxu0 %v7372
  %7395 = vmatprep.subr.bf16.mxu0 0
  %7396 = vmatpush1.bf16.msra.mxu0 %v7373
  %7397 = vmatprep.subr.bf16.mxu0 0
  %7398 = vmatpush1.bf16.msra.mxu0 %v7374
  %7399 = vmatprep.subr.bf16.mxu0 0
  %7400 = vmatpush1.bf16.msra.mxu0 0
  %7401 = vmatprep.subr.bf16.mxu0 0
  %7402 = vmatpush1.bf16.msra.mxu0 0
  %7403 = vmatprep.subr.bf16.mxu0 0
  %7404 = vmatpush1.bf16.msra.mxu0 0
  %7405 = vmatprep.subr.bf16.mxu0 0
  %7406 = vmatpush1.bf16.msra.mxu0 0
  %7407 = vmatprep.subr.bf16.mxu0 0
  %7408 = vmatpush1.bf16.msra.mxu0 0
  %7409 = vmatprep.subr.bf16.mxu0 0
  %7410 = vmatpush1.bf16.msra.mxu0 0
  %7411 = vmatprep.subr.bf16.mxu0 0
  %7412 = vmatpush1.bf16.msra.mxu0 0
  %7413 = vmatprep.subr.bf16.mxu0 0
  %7414 = vmatpush1.bf16.msra.mxu0 0
  %7415 = vmatprep.mubr.bf16.mxu0 0
  %7416 = vmatmul.mubr.bf16.gmra.mrb[0].mxu0 %v6364
  %v7417 = vpop.f32.mrb[0].mxu0
  %v7418 = vadd.f32 0.0, %v7417
  %v7419 = vpop.f32.mrb[0].mxu0
  %v7420 = vpop.f32.mrb[0].mxu0
  %v7421 = vadd.f32 0.0, %v7420
  %v7422 = vpop.f32.mrb[0].mxu0
  %7423 = vdwg.mxu0
  %s7424 = scalar_lea.vmem %s11, 640
  %v7425 = vld [vmem:[%s7424] sm:$0xf]
  %v7426 = vld [vmem:[%s7424 + $0x4] sm:$0xf]
  %v7427 = vld [vmem:[%s7424 + $0x8] sm:$0xf]
  %v7428 = vld [vmem:[%s7424 + $0xc] sm:$0xf]
  %v7429 = vld [vmem:[%s7424 + $0x10] sm:$0xf]
  %v7430 = vld [vmem:[%s7424 + $0x14] sm:$0xf]
  %v7431 = vld [vmem:[%s7424 + $0x18] sm:$0xf]
  %v7432 = vld [vmem:[%s7424 + $0x1c] sm:$0xf]
  %v7433 = vld [vmem:[%s7424 + $0x20] sm:$0xf]
  %v7434 = vld [vmem:[%s7424 + $0x24] sm:$0xf]
  %v7435 = vld [vmem:[%s7424 + $0x28] sm:$0xf]
  %v7436 = vld [vmem:[%s7424 + $0x2c] sm:$0xf]
  %v7437 = vld [vmem:[%s7424 + $0x30] sm:$0xf]
  %v7438 = vld [vmem:[%s7424 + $0x34] sm:$0xf]
  %v7439 = vld [vmem:[%s7424 + $0x38] sm:$0xf]
  %v7440 = vld [vmem:[%s7424 + $0x3c] sm:$0xf]
  %v7457 = vunpack.c.l.b16 %v7425
  %v7458 = vunpack.c.l.b16 %v7426
  %v7459 = vunpack.c.l.b16 %v7427
  %v7460 = vunpack.c.l.b16 %v7428
  %v7461 = vunpack.c.l.b16 %v7429
  %v7462 = vunpack.c.l.b16 %v7430
  %v7463 = vunpack.c.l.b16 %v7431
  %v7464 = vunpack.c.l.b16 %v7432
  %v7465 = vunpack.c.l.b16 %v7433
  %v7466 = vunpack.c.l.b16 %v7434
  %v7467 = vunpack.c.l.b16 %v7435
  %v7468 = vunpack.c.l.b16 %v7436
  %v7469 = vunpack.c.l.b16 %v7437
  %v7470 = vunpack.c.l.b16 %v7438
  %v7471 = vunpack.c.l.b16 %v7439
  %v7472 = vunpack.c.l.b16 %v7440
  %v7473 = vpack.c.b16 %v7458, %v7457
  %v7474 = vpack.c.b16 %v7460, %v7459
  %v7475 = vpack.c.b16 %v7462, %v7461
  %v7476 = vpack.c.b16 %v7464, %v7463
  %v7477 = vpack.c.b16 %v7466, %v7465
  %v7478 = vpack.c.b16 %v7468, %v7467
  %v7479 = vpack.c.b16 %v7470, %v7469
  %v7480 = vpack.c.b16 %v7472, %v7471
  %7489 = vmatprep.subr.bf16.mxu0 0
  %7490 = vmatpush1.bf16.msra.mxu0 %v7473
  %7491 = vmatprep.subr.bf16.mxu0 0
  %7492 = vmatpush1.bf16.msra.mxu0 %v7474
  %7493 = vmatprep.subr.bf16.mxu0 0
  %7494 = vmatpush1.bf16.msra.mxu0 %v7475
  %7495 = vmatprep.subr.bf16.mxu0 0
  %7496 = vmatpush1.bf16.msra.mxu0 %v7476
  %7497 = vmatprep.subr.bf16.mxu0 0
  %7498 = vmatpush1.bf16.msra.mxu0 %v7477
  %7499 = vmatprep.subr.bf16.mxu0 0
  %7500 = vmatpush1.bf16.msra.mxu0 %v7478
  %7501 = vmatprep.subr.bf16.mxu0 0
  %7502 = vmatpush1.bf16.msra.mxu0 %v7479
  %7503 = vmatprep.subr.bf16.mxu0 0
  %7504 = vmatpush1.bf16.msra.mxu0 %v7480
  %7505 = vmatprep.subr.bf16.mxu0 0
  %7506 = vmatpush1.bf16.msra.mxu0 0
  %7507 = vmatprep.subr.bf16.mxu0 0
  %7508 = vmatpush1.bf16.msra.mxu0 0
  %7509 = vmatprep.subr.bf16.mxu0 0
  %7510 = vmatpush1.bf16.msra.mxu0 0
  %7511 = vmatprep.subr.bf16.mxu0 0
  %7512 = vmatpush1.bf16.msra.mxu0 0
  %7513 = vmatprep.subr.bf16.mxu0 0
  %7514 = vmatpush1.bf16.msra.mxu0 0
  %7515 = vmatprep.subr.bf16.mxu0 0
  %7516 = vmatpush1.bf16.msra.mxu0 0
  %7517 = vmatprep.subr.bf16.mxu0 0
  %7518 = vmatpush1.bf16.msra.mxu0 0
  %7519 = vmatprep.subr.bf16.mxu0 0
  %7520 = vmatpush1.bf16.msra.mxu0 0
  %7521 = vmatprep.mubr.bf16.mxu0 0
  %7522 = vmatmul.mubr.bf16.gmra.mrb[0].mxu0 %v6364
  %v7523 = vpop.f32.mrb[0].mxu0
  %v7524 = vadd.f32 0.0, %v7523
  %v7525 = vpop.f32.mrb[0].mxu0
  %v7526 = vpop.f32.mrb[0].mxu0
  %v7527 = vadd.f32 0.0, %v7526
  %v7528 = vpop.f32.mrb[0].mxu0
  %7529 = vdwg.mxu0
  %s7530 = scalar_lea.vmem %s11, 704
  %v7531 = vld [vmem:[%s7530] sm:$0xf]
  %v7532 = vld [vmem:[%s7530 + $0x4] sm:$0xf]
  %v7533 = vld [vmem:[%s7530 + $0x8] sm:$0xf]
  %v7534 = vld [vmem:[%s7530 + $0xc] sm:$0xf]
  %v7535 = vld [vmem:[%s7530 + $0x10] sm:$0xf]
  %v7536 = vld [vmem:[%s7530 + $0x14] sm:$0xf]
  %v7537 = vld [vmem:[%s7530 + $0x18] sm:$0xf]
  %v7538 = vld [vmem:[%s7530 + $0x1c] sm:$0xf]
  %v7539 = vld [vmem:[%s7530 + $0x20] sm:$0xf]
  %v7540 = vld [vmem:[%s7530 + $0x24] sm:$0xf]
  %v7541 = vld [vmem:[%s7530 + $0x28] sm:$0xf]
  %v7542 = vld [vmem:[%s7530 + $0x2c] sm:$0xf]
  %v7543 = vld [vmem:[%s7530 + $0x30] sm:$0xf]
  %v7544 = vld [vmem:[%s7530 + $0x34] sm:$0xf]
  %v7545 = vld [vmem:[%s7530 + $0x38] sm:$0xf]
  %v7546 = vld [vmem:[%s7530 + $0x3c] sm:$0xf]
  %v7563 = vunpack.c.l.b16 %v7531
  %v7564 = vunpack.c.l.b16 %v7532
  %v7565 = vunpack.c.l.b16 %v7533
  %v7566 = vunpack.c.l.b16 %v7534
  %v7567 = vunpack.c.l.b16 %v7535
  %v7568 = vunpack.c.l.b16 %v7536
  %v7569 = vunpack.c.l.b16 %v7537
  %v7570 = vunpack.c.l.b16 %v7538
  %v7571 = vunpack.c.l.b16 %v7539
  %v7572 = vunpack.c.l.b16 %v7540
  %v7573 = vunpack.c.l.b16 %v7541
  %v7574 = vunpack.c.l.b16 %v7542
  %v7575 = vunpack.c.l.b16 %v7543
  %v7576 = vunpack.c.l.b16 %v7544
  %v7577 = vunpack.c.l.b16 %v7545
  %v7578 = vunpack.c.l.b16 %v7546
  %v7579 = vpack.c.b16 %v7564, %v7563
  %v7580 = vpack.c.b16 %v7566, %v7565
  %v7581 = vpack.c.b16 %v7568, %v7567
  %v7582 = vpack.c.b16 %v7570, %v7569
  %v7583 = vpack.c.b16 %v7572, %v7571
  %v7584 = vpack.c.b16 %v7574, %v7573
  %v7585 = vpack.c.b16 %v7576, %v7575
  %v7586 = vpack.c.b16 %v7578, %v7577
  %7595 = vmatprep.subr.bf16.mxu0 0
  %7596 = vmatpush1.bf16.msra.mxu0 %v7579
  %7597 = vmatprep.subr.bf16.mxu0 0
  %7598 = vmatpush1.bf16.msra.mxu0 %v7580
  %7599 = vmatprep.subr.bf16.mxu0 0
  %7600 = vmatpush1.bf16.msra.mxu0 %v7581
  %7601 = vmatprep.subr.bf16.mxu0 0
  %7602 = vmatpush1.bf16.msra.mxu0 %v7582
  %7603 = vmatprep.subr.bf16.mxu0 0
  %7604 = vmatpush1.bf16.msra.mxu0 %v7583
  %7605 = vmatprep.subr.bf16.mxu0 0
  %7606 = vmatpush1.bf16.msra.mxu0 %v7584
  %7607 = vmatprep.subr.bf16.mxu0 0
  %7608 = vmatpush1.bf16.msra.mxu0 %v7585
  %7609 = vmatprep.subr.bf16.mxu0 0
  %7610 = vmatpush1.bf16.msra.mxu0 %v7586
  %7611 = vmatprep.subr.bf16.mxu0 0
  %7612 = vmatpush1.bf16.msra.mxu0 0
  %7613 = vmatprep.subr.bf16.mxu0 0
  %7614 = vmatpush1.bf16.msra.mxu0 0
  %7615 = vmatprep.subr.bf16.mxu0 0
  %7616 = vmatpush1.bf16.msra.mxu0 0
  %7617 = vmatprep.subr.bf16.mxu0 0
  %7618 = vmatpush1.bf16.msra.mxu0 0
  %7619 = vmatprep.subr.bf16.mxu0 0
  %7620 = vmatpush1.bf16.msra.mxu0 0
  %7621 = vmatprep.subr.bf16.mxu0 0
  %7622 = vmatpush1.bf16.msra.mxu0 0
  %7623 = vmatprep.subr.bf16.mxu0 0
  %7624 = vmatpush1.bf16.msra.mxu0 0
  %7625 = vmatprep.subr.bf16.mxu0 0
  %7626 = vmatpush1.bf16.msra.mxu0 0
  %7627 = vmatprep.mubr.bf16.mxu0 0
  %7628 = vmatmul.mubr.bf16.gmra.mrb[0].mxu0 %v6364
  %v7629 = vpop.f32.mrb[0].mxu0
  %v7630 = vadd.f32 0.0, %v7629
  %v7631 = vpop.f32.mrb[0].mxu0
  %v7632 = vpop.f32.mrb[0].mxu0
  %v7633 = vadd.f32 0.0, %v7632
  %v7634 = vpop.f32.mrb[0].mxu0
  %7635 = vdwg.mxu0
  %s7636 = scalar_lea.vmem %s11, 768
  %v7637 = vld [vmem:[%s7636] sm:$0xf]
  %v7638 = vld [vmem:[%s7636 + $0x4] sm:$0xf]
  %v7639 = vld [vmem:[%s7636 + $0x8] sm:$0xf]
  %v7640 = vld [vmem:[%s7636 + $0xc] sm:$0xf]
  %v7641 = vld [vmem:[%s7636 + $0x10] sm:$0xf]
  %v7642 = vld [vmem:[%s7636 + $0x14] sm:$0xf]
  %v7643 = vld [vmem:[%s7636 + $0x18] sm:$0xf]
  %v7644 = vld [vmem:[%s7636 + $0x1c] sm:$0xf]
  %v7645 = vld [vmem:[%s7636 + $0x20] sm:$0xf]
  %v7646 = vld [vmem:[%s7636 + $0x24] sm:$0xf]
  %v7647 = vld [vmem:[%s7636 + $0x28] sm:$0xf]
  %v7648 = vld [vmem:[%s7636 + $0x2c] sm:$0xf]
  %v7649 = vld [vmem:[%s7636 + $0x30] sm:$0xf]
  %v7650 = vld [vmem:[%s7636 + $0x34] sm:$0xf]
  %v7651 = vld [vmem:[%s7636 + $0x38] sm:$0xf]
  %v7652 = vld [vmem:[%s7636 + $0x3c] sm:$0xf]
  %v7669 = vunpack.c.l.b16 %v7637
  %v7670 = vunpack.c.l.b16 %v7638
  %v7671 = vunpack.c.l.b16 %v7639
  %v7672 = vunpack.c.l.b16 %v7640
  %v7673 = vunpack.c.l.b16 %v7641
  %v7674 = vunpack.c.l.b16 %v7642
  %v7675 = vunpack.c.l.b16 %v7643
  %v7676 = vunpack.c.l.b16 %v7644
  %v7677 = vunpack.c.l.b16 %v7645
  %v7678 = vunpack.c.l.b16 %v7646
  %v7679 = vunpack.c.l.b16 %v7647
  %v7680 = vunpack.c.l.b16 %v7648
  %v7681 = vunpack.c.l.b16 %v7649
  %v7682 = vunpack.c.l.b16 %v7650
  %v7683 = vunpack.c.l.b16 %v7651
  %v7684 = vunpack.c.l.b16 %v7652
  %v7685 = vpack.c.b16 %v7670, %v7669
  %v7686 = vpack.c.b16 %v7672, %v7671
  %v7687 = vpack.c.b16 %v7674, %v7673
  %v7688 = vpack.c.b16 %v7676, %v7675
  %v7689 = vpack.c.b16 %v7678, %v7677
  %v7690 = vpack.c.b16 %v7680, %v7679
  %v7691 = vpack.c.b16 %v7682, %v7681
  %v7692 = vpack.c.b16 %v7684, %v7683
  %7701 = vmatprep.subr.bf16.mxu0 0
  %7702 = vmatpush1.bf16.msra.mxu0 %v7685
  %7703 = vmatprep.subr.bf16.mxu0 0
  %7704 = vmatpush1.bf16.msra.mxu0 %v7686
  %7705 = vmatprep.subr.bf16.mxu0 0
  %7706 = vmatpush1.bf16.msra.mxu0 %v7687
  %7707 = vmatprep.subr.bf16.mxu0 0
  %7708 = vmatpush1.bf16.msra.mxu0 %v7688
  %7709 = vmatprep.subr.bf16.mxu0 0
  %7710 = vmatpush1.bf16.msra.mxu0 %v7689
  %7711 = vmatprep.subr.bf16.mxu0 0
  %7712 = vmatpush1.bf16.msra.mxu0 %v7690
  %7713 = vmatprep.subr.bf16.mxu0 0
  %7714 = vmatpush1.bf16.msra.mxu0 %v7691
  %7715 = vmatprep.subr.bf16.mxu0 0
  %7716 = vmatpush1.bf16.msra.mxu0 %v7692
  %7717 = vmatprep.subr.bf16.mxu0 0
  %7718 = vmatpush1.bf16.msra.mxu0 0
  %7719 = vmatprep.subr.bf16.mxu0 0
  %7720 = vmatpush1.bf16.msra.mxu0 0
  %7721 = vmatprep.subr.bf16.mxu0 0
  %7722 = vmatpush1.bf16.msra.mxu0 0
  %7723 = vmatprep.subr.bf16.mxu0 0
  %7724 = vmatpush1.bf16.msra.mxu0 0
  %7725 = vmatprep.subr.bf16.mxu0 0
  %7726 = vmatpush1.bf16.msra.mxu0 0
  %7727 = vmatprep.subr.bf16.mxu0 0
  %7728 = vmatpush1.bf16.msra.mxu0 0
  %7729 = vmatprep.subr.bf16.mxu0 0
  %7730 = vmatpush1.bf16.msra.mxu0 0
  %7731 = vmatprep.subr.bf16.mxu0 0
  %7732 = vmatpush1.bf16.msra.mxu0 0
  %7733 = vmatprep.mubr.bf16.mxu0 0
  %7734 = vmatmul.mubr.bf16.gmra.mrb[0].mxu0 %v6364
  %v7735 = vpop.f32.mrb[0].mxu0
  %v7736 = vadd.f32 0.0, %v7735
  %v7737 = vpop.f32.mrb[0].mxu0
  %v7738 = vpop.f32.mrb[0].mxu0
  %v7739 = vadd.f32 0.0, %v7738
  %v7740 = vpop.f32.mrb[0].mxu0
  %7741 = vdwg.mxu0
  %s7742 = scalar_lea.vmem %s11, 832
  %v7743 = vld [vmem:[%s7742] sm:$0xf]
  %v7744 = vld [vmem:[%s7742 + $0x4] sm:$0xf]
  %v7745 = vld [vmem:[%s7742 + $0x8] sm:$0xf]
  %v7746 = vld [vmem:[%s7742 + $0xc] sm:$0xf]
  %v7747 = vld [vmem:[%s7742 + $0x10] sm:$0xf]
  %v7748 = vld [vmem:[%s7742 + $0x14] sm:$0xf]
  %v7749 = vld [vmem:[%s7742 + $0x18] sm:$0xf]
  %v7750 = vld [vmem:[%s7742 + $0x1c] sm:$0xf]
  %v7751 = vld [vmem:[%s7742 + $0x20] sm:$0xf]
  %v7752 = vld [vmem:[%s7742 + $0x24] sm:$0xf]
  %v7753 = vld [vmem:[%s7742 + $0x28] sm:$0xf]
  %v7754 = vld [vmem:[%s7742 + $0x2c] sm:$0xf]
  %v7755 = vld [vmem:[%s7742 + $0x30] sm:$0xf]
  %v7756 = vld [vmem:[%s7742 + $0x34] sm:$0xf]
  %v7757 = vld [vmem:[%s7742 + $0x38] sm:$0xf]
  %v7758 = vld [vmem:[%s7742 + $0x3c] sm:$0xf]
  %v7775 = vunpack.c.l.b16 %v7743
  %v7776 = vunpack.c.l.b16 %v7744
  %v7777 = vunpack.c.l.b16 %v7745
  %v7778 = vunpack.c.l.b16 %v7746
  %v7779 = vunpack.c.l.b16 %v7747
  %v7780 = vunpack.c.l.b16 %v7748
  %v7781 = vunpack.c.l.b16 %v7749
  %v7782 = vunpack.c.l.b16 %v7750
  %v7783 = vunpack.c.l.b16 %v7751
  %v7784 = vunpack.c.l.b16 %v7752
  %v7785 = vunpack.c.l.b16 %v7753
  %v7786 = vunpack.c.l.b16 %v7754
  %v7787 = vunpack.c.l.b16 %v7755
  %v7788 = vunpack.c.l.b16 %v7756
  %v7789 = vunpack.c.l.b16 %v7757
  %v7790 = vunpack.c.l.b16 %v7758
  %v7791 = vpack.c.b16 %v7776, %v7775
  %v7792 = vpack.c.b16 %v7778, %v7777
  %v7793 = vpack.c.b16 %v7780, %v7779
  %v7794 = vpack.c.b16 %v7782, %v7781
  %v7795 = vpack.c.b16 %v7784, %v7783
  %v7796 = vpack.c.b16 %v7786, %v7785
  %v7797 = vpack.c.b16 %v7788, %v7787
  %v7798 = vpack.c.b16 %v7790, %v7789
  %7807 = vmatprep.subr.bf16.mxu0 0
  %7808 = vmatpush1.bf16.msra.mxu0 %v7791
  %7809 = vmatprep.subr.bf16.mxu0 0
  %7810 = vmatpush1.bf16.msra.mxu0 %v7792
  %7811 = vmatprep.subr.bf16.mxu0 0
  %7812 = vmatpush1.bf16.msra.mxu0 %v7793
  %7813 = vmatprep.subr.bf16.mxu0 0
  %7814 = vmatpush1.bf16.msra.mxu0 %v7794
  %7815 = vmatprep.subr.bf16.mxu0 0
  %7816 = vmatpush1.bf16.msra.mxu0 %v7795
  %7817 = vmatprep.subr.bf16.mxu0 0
  %7818 = vmatpush1.bf16.msra.mxu0 %v7796
  %7819 = vmatprep.subr.bf16.mxu0 0
  %7820 = vmatpush1.bf16.msra.mxu0 %v7797
  %7821 = vmatprep.subr.bf16.mxu0 0
  %7822 = vmatpush1.bf16.msra.mxu0 %v7798
  %7823 = vmatprep.subr.bf16.mxu0 0
  %7824 = vmatpush1.bf16.msra.mxu0 0
  %7825 = vmatprep.subr.bf16.mxu0 0
  %7826 = vmatpush1.bf16.msra.mxu0 0
  %7827 = vmatprep.subr.bf16.mxu0 0
  %7828 = vmatpush1.bf16.msra.mxu0 0
  %7829 = vmatprep.subr.bf16.mxu0 0
  %7830 = vmatpush1.bf16.msra.mxu0 0
  %7831 = vmatprep.subr.bf16.mxu0 0
  %7832 = vmatpush1.bf16.msra.mxu0 0
  %7833 = vmatprep.subr.bf16.mxu0 0
  %7834 = vmatpush1.bf16.msra.mxu0 0
  %7835 = vmatprep.subr.bf16.mxu0 0
  %7836 = vmatpush1.bf16.msra.mxu0 0
  %7837 = vmatprep.subr.bf16.mxu0 0
  %7838 = vmatpush1.bf16.msra.mxu0 0
  %7839 = vmatprep.mubr.bf16.mxu0 0
  %7840 = vmatmul.mubr.bf16.gmra.mrb[0].mxu0 %v6364
  %v7841 = vpop.f32.mrb[0].mxu0
  %v7842 = vadd.f32 0.0, %v7841
  %v7843 = vpop.f32.mrb[0].mxu0
  %v7844 = vpop.f32.mrb[0].mxu0
  %v7845 = vadd.f32 0.0, %v7844
  %v7846 = vpop.f32.mrb[0].mxu0
  %7847 = vdwg.mxu0
  %s7848 = scalar_lea.vmem %s11, 896
  %v7849 = vld [vmem:[%s7848] sm:$0xf]
  %v7850 = vld [vmem:[%s7848 + $0x4] sm:$0xf]
  %v7851 = vld [vmem:[%s7848 + $0x8] sm:$0xf]
  %v7852 = vld [vmem:[%s7848 + $0xc] sm:$0xf]
  %v7853 = vld [vmem:[%s7848 + $0x10] sm:$0xf]
  %v7854 = vld [vmem:[%s7848 + $0x14] sm:$0xf]
  %v7855 = vld [vmem:[%s7848 + $0x18] sm:$0xf]
  %v7856 = vld [vmem:[%s7848 + $0x1c] sm:$0xf]
  %v7857 = vld [vmem:[%s7848 + $0x20] sm:$0xf]
  %v7858 = vld [vmem:[%s7848 + $0x24] sm:$0xf]
  %v7859 = vld [vmem:[%s7848 + $0x28] sm:$0xf]
  %v7860 = vld [vmem:[%s7848 + $0x2c] sm:$0xf]
  %v7861 = vld [vmem:[%s7848 + $0x30] sm:$0xf]
  %v7862 = vld [vmem:[%s7848 + $0x34] sm:$0xf]
  %v7863 = vld [vmem:[%s7848 + $0x38] sm:$0xf]
  %v7864 = vld [vmem:[%s7848 + $0x3c] sm:$0xf]
  %v7881 = vunpack.c.l.b16 %v7849
  %v7882 = vunpack.c.l.b16 %v7850
  %v7883 = vunpack.c.l.b16 %v7851
  %v7884 = vunpack.c.l.b16 %v7852
  %v7885 = vunpack.c.l.b16 %v7853
  %v7886 = vunpack.c.l.b16 %v7854
  %v7887 = vunpack.c.l.b16 %v7855
  %v7888 = vunpack.c.l.b16 %v7856
  %v7889 = vunpack.c.l.b16 %v7857
  %v7890 = vunpack.c.l.b16 %v7858
  %v7891 = vunpack.c.l.b16 %v7859
  %v7892 = vunpack.c.l.b16 %v7860
  %v7893 = vunpack.c.l.b16 %v7861
  %v7894 = vunpack.c.l.b16 %v7862
  %v7895 = vunpack.c.l.b16 %v7863
  %v7896 = vunpack.c.l.b16 %v7864
  %v7897 = vpack.c.b16 %v7882, %v7881
  %v7898 = vpack.c.b16 %v7884, %v7883
  %v7899 = vpack.c.b16 %v7886, %v7885
  %v7900 = vpack.c.b16 %v7888, %v7887
  %v7901 = vpack.c.b16 %v7890, %v7889
  %v7902 = vpack.c.b16 %v7892, %v7891
  %v7903 = vpack.c.b16 %v7894, %v7893
  %v7904 = vpack.c.b16 %v7896, %v7895
  %7913 = vmatprep.subr.bf16.mxu0 0
  %7914 = vmatpush1.bf16.msra.mxu0 %v7897
  %7915 = vmatprep.subr.bf16.mxu0 0
  %7916 = vmatpush1.bf16.msra.mxu0 %v7898
  %7917 = vmatprep.subr.bf16.mxu0 0
  %7918 = vmatpush1.bf16.msra.mxu0 %v7899
  %7919 = vmatprep.subr.bf16.mxu0 0
  %7920 = vmatpush1.bf16.msra.mxu0 %v7900
  %7921 = vmatprep.subr.bf16.mxu0 0
  %7922 = vmatpush1.bf16.msra.mxu0 %v7901
  %7923 = vmatprep.subr.bf16.mxu0 0
  %7924 = vmatpush1.bf16.msra.mxu0 %v7902
  %7925 = vmatprep.subr.bf16.mxu0 0
  %7926 = vmatpush1.bf16.msra.mxu0 %v7903
  %7927 = vmatprep.subr.bf16.mxu0 0
  %7928 = vmatpush1.bf16.msra.mxu0 %v7904
  %7929 = vmatprep.subr.bf16.mxu0 0
  %7930 = vmatpush1.bf16.msra.mxu0 0
  %7931 = vmatprep.subr.bf16.mxu0 0
  %7932 = vmatpush1.bf16.msra.mxu0 0
  %7933 = vmatprep.subr.bf16.mxu0 0
  %7934 = vmatpush1.bf16.msra.mxu0 0
  %7935 = vmatprep.subr.bf16.mxu0 0
  %7936 = vmatpush1.bf16.msra.mxu0 0
  %7937 = vmatprep.subr.bf16.mxu0 0
  %7938 = vmatpush1.bf16.msra.mxu0 0
  %7939 = vmatprep.subr.bf16.mxu0 0
  %7940 = vmatpush1.bf16.msra.mxu0 0
  %7941 = vmatprep.subr.bf16.mxu0 0
  %7942 = vmatpush1.bf16.msra.mxu0 0
  %7943 = vmatprep.subr.bf16.mxu0 0
  %7944 = vmatpush1.bf16.msra.mxu0 0
  %7945 = vmatprep.mubr.bf16.mxu0 0
  %7946 = vmatmul.mubr.bf16.gmra.mrb[0].mxu0 %v6364
  %v7947 = vpop.f32.mrb[0].mxu0
  %v7948 = vadd.f32 0.0, %v7947
  %v7949 = vpop.f32.mrb[0].mxu0
  %v7950 = vpop.f32.mrb[0].mxu0
  %v7951 = vadd.f32 0.0, %v7950
  %v7952 = vpop.f32.mrb[0].mxu0
  %7953 = vdwg.mxu0
  %s7954 = scalar_lea.vmem %s11, 960
  %v7955 = vld [vmem:[%s7954] sm:$0xf]
  %v7956 = vld [vmem:[%s7954 + $0x4] sm:$0xf]
  %v7957 = vld [vmem:[%s7954 + $0x8] sm:$0xf]
  %v7958 = vld [vmem:[%s7954 + $0xc] sm:$0xf]
  %v7959 = vld [vmem:[%s7954 + $0x10] sm:$0xf]
  %v7960 = vld [vmem:[%s7954 + $0x14] sm:$0xf]
  %v7961 = vld [vmem:[%s7954 + $0x18] sm:$0xf]
  %v7962 = vld [vmem:[%s7954 + $0x1c] sm:$0xf]
  %v7963 = vld [vmem:[%s7954 + $0x20] sm:$0xf]
  %v7964 = vld [vmem:[%s7954 + $0x24] sm:$0xf]
  %v7965 = vld [vmem:[%s7954 + $0x28] sm:$0xf]
  %v7966 = vld [vmem:[%s7954 + $0x2c] sm:$0xf]
  %v7967 = vld [vmem:[%s7954 + $0x30] sm:$0xf]
  %v7968 = vld [vmem:[%s7954 + $0x34] sm:$0xf]
  %v7969 = vld [vmem:[%s7954 + $0x38] sm:$0xf]
  %v7970 = vld [vmem:[%s7954 + $0x3c] sm:$0xf]
  %v7987 = vunpack.c.l.b16 %v7955
  %v7988 = vunpack.c.l.b16 %v7956
  %v7989 = vunpack.c.l.b16 %v7957
  %v7990 = vunpack.c.l.b16 %v7958
  %v7991 = vunpack.c.l.b16 %v7959
  %v7992 = vunpack.c.l.b16 %v7960
  %v7993 = vunpack.c.l.b16 %v7961
  %v7994 = vunpack.c.l.b16 %v7962
  %v7995 = vunpack.c.l.b16 %v7963
  %v7996 = vunpack.c.l.b16 %v7964
  %v7997 = vunpack.c.l.b16 %v7965
  %v7998 = vunpack.c.l.b16 %v7966
  %v7999 = vunpack.c.l.b16 %v7967
  %v8000 = vunpack.c.l.b16 %v7968
  %v8001 = vunpack.c.l.b16 %v7969
  %v8002 = vunpack.c.l.b16 %v7970
  %v8003 = vpack.c.b16 %v7988, %v7987
  %v8004 = vpack.c.b16 %v7990, %v7989
  %v8005 = vpack.c.b16 %v7992, %v7991
  %v8006 = vpack.c.b16 %v7994, %v7993
  %v8007 = vpack.c.b16 %v7996, %v7995
  %v8008 = vpack.c.b16 %v7998, %v7997
  %v8009 = vpack.c.b16 %v8000, %v7999
  %v8010 = vpack.c.b16 %v8002, %v8001
  %8019 = vmatprep.subr.bf16.mxu0 0
  %8020 = vmatpush1.bf16.msra.mxu0 %v8003
  %8021 = vmatprep.subr.bf16.mxu0 0
  %8022 = vmatpush1.bf16.msra.mxu0 %v8004
  %8023 = vmatprep.subr.bf16.mxu0 0
  %8024 = vmatpush1.bf16.msra.mxu0 %v8005
  %8025 = vmatprep.subr.bf16.mxu0 0
  %8026 = vmatpush1.bf16.msra.mxu0 %v8006
  %8027 = vmatprep.subr.bf16.mxu0 0
  %8028 = vmatpush1.bf16.msra.mxu0 %v8007
  %8029 = vmatprep.subr.bf16.mxu0 0
  %8030 = vmatpush1.bf16.msra.mxu0 %v8008
  %8031 = vmatprep.subr.bf16.mxu0 0
  %8032 = vmatpush1.bf16.msra.mxu0 %v8009
  %8033 = vmatprep.subr.bf16.mxu0 0
  %8034 = vmatpush1.bf16.msra.mxu0 %v8010
  %8035 = vmatprep.subr.bf16.mxu0 0
  %8036 = vmatpush1.bf16.msra.mxu0 0
  %8037 = vmatprep.subr.bf16.mxu0 0
  %8038 = vmatpush1.bf16.msra.mxu0 0
  %8039 = vmatprep.subr.bf16.mxu0 0
  %8040 = vmatpush1.bf16.msra.mxu0 0
  %8041 = vmatprep.subr.bf16.mxu0 0
  %8042 = vmatpush1.bf16.msra.mxu0 0
  %8043 = vmatprep.subr.bf16.mxu0 0
  %8044 = vmatpush1.bf16.msra.mxu0 0
  %8045 = vmatprep.subr.bf16.mxu0 0
  %8046 = vmatpush1.bf16.msra.mxu0 0
  %8047 = vmatprep.subr.bf16.mxu0 0
  %8048 = vmatpush1.bf16.msra.mxu0 0
  %8049 = vmatprep.subr.bf16.mxu0 0
  %8050 = vmatpush1.bf16.msra.mxu0 0
  %8051 = vmatprep.mubr.bf16.mxu0 0
  %8052 = vmatmul.mubr.bf16.gmra.mrb[0].mxu0 %v6364
  %v8053 = vpop.f32.mrb[0].mxu0
  %v8054 = vadd.f32 0.0, %v8053
  %v8055 = vpop.f32.mrb[0].mxu0
  %v8056 = vpop.f32.mrb[0].mxu0
  %v8057 = vadd.f32 0.0, %v8056
  %v8058 = vpop.f32.mrb[0].mxu0
  %8059 = vdwg.mxu0
  %v8060 = vpack.c.bf16 %v6467, %v6464
  %v8061 = vpack.c.bf16 %v6573, %v6570
  %v8062 = vpack.c.bf16 %v6679, %v6676
  %v8063 = vpack.c.bf16 %v6785, %v6782
  %v8064 = vpack.c.bf16 %v6891, %v6888
  %v8065 = vpack.c.bf16 %v6997, %v6994
  %v8066 = vpack.c.bf16 %v7103, %v7100
  %v8067 = vpack.c.bf16 %v7209, %v7206
  %v8068 = vpack.c.bf16 %v7315, %v7312
  %v8069 = vpack.c.bf16 %v7421, %v7418
  %v8070 = vpack.c.bf16 %v7527, %v7524
  %v8071 = vpack.c.bf16 %v7633, %v7630
  %v8072 = vpack.c.bf16 %v7739, %v7736
  %v8073 = vpack.c.bf16 %v7845, %v7842
  %v8074 = vpack.c.bf16 %v7951, %v7948
  %v8075 = vpack.c.bf16 %v8057, %v8054
  %v8076 = vld [vmem:[%s8] sm:$0xff]
  %v8077 = vld [vmem:[%s8 + $0x8] sm:$0xff]
  %v8078 = vld [vmem:[%s8 + $0x10] sm:$0xff]
  %v8079 = vld [vmem:[%s8 + $0x18] sm:$0xff]
  %v8084 = vunpack.c.l.b16 %v8076
  %v8085 = vunpack.c.h.b16 %v8076
  %v8086 = vunpack.c.l.b16 %v8077
  %v8087 = vunpack.c.h.b16 %v8077
  %v8088 = vunpack.c.l.b16 %v8078
  %v8089 = vunpack.c.h.b16 %v8078
  %v8090 = vunpack.c.l.b16 %v8079
  %v8091 = vunpack.c.h.b16 %v8079
  %v8092 = vpack.c.b16 %v8086, %v8084
  %v8093 = vpack.c.b16 %v8087, %v8085
  %v8094 = vpack.c.b16 %v8090, %v8088
  %v8095 = vpack.c.b16 %v8091, %v8089
  %8100 = vmatprep.subr.bf16.mxu0 0
  %8101 = vmatpush1.bf16.msra.mxu0 %v8060
  %8102 = vmatprep.subr.bf16.mxu0 0
  %8103 = vmatpush1.bf16.msra.mxu0 %v8061
  %8104 = vmatprep.subr.bf16.mxu0 0
  %8105 = vmatpush1.bf16.msra.mxu0 %v8062
  %8106 = vmatprep.subr.bf16.mxu0 0
  %8107 = vmatpush1.bf16.msra.mxu0 %v8063
  %8108 = vmatprep.subr.bf16.mxu0 0
  %8109 = vmatpush1.bf16.msra.mxu0 %v8064
  %8110 = vmatprep.subr.bf16.mxu0 0
  %8111 = vmatpush1.bf16.msra.mxu0 %v8065
  %8112 = vmatprep.subr.bf16.mxu0 0
  %8113 = vmatpush1.bf16.msra.mxu0 %v8066
  %8114 = vmatprep.subr.bf16.mxu0 0
  %8115 = vmatpush1.bf16.msra.mxu0 %v8067
  %8116 = vmatprep.subr.bf16.mxu0 0
  %8117 = vmatpush1.bf16.msra.mxu0 %v8068
  %8118 = vmatprep.subr.bf16.mxu0 0
  %8119 = vmatpush1.bf16.msra.mxu0 %v8069
  %8120 = vmatprep.subr.bf16.mxu0 0
  %8121 = vmatpush1.bf16.msra.mxu0 %v8070
  %8122 = vmatprep.subr.bf16.mxu0 0
  %8123 = vmatpush1.bf16.msra.mxu0 %v8071
  %8124 = vmatprep.subr.bf16.mxu0 0
  %8125 = vmatpush1.bf16.msra.mxu0 %v8072
  %8126 = vmatprep.subr.bf16.mxu0 0
  %8127 = vmatpush1.bf16.msra.mxu0 %v8073
  %8128 = vmatprep.subr.bf16.mxu0 0
  %8129 = vmatpush1.bf16.msra.mxu0 %v8074
  %8130 = vmatprep.subr.bf16.mxu0 0
  %8131 = vmatpush1.bf16.msra.mxu0 %v8075
  %8132 = vmatprep.mubr.bf16.mxu0 %v8093
  %8133 = vmatmul.mubr.bf16.gmra.mrb[0].mxu0 %v8092
  %v8134 = vpop.f32.mrb[0].mxu0
  %v8135 = vadd.f32 0.0, %v8134
  %v8136 = vpop.f32.mrb[0].mxu0
  %v8137 = vpop.f32.mrb[0].mxu0
  %v8138 = vadd.f32 0.0, %v8137
  %v8139 = vpop.f32.mrb[0].mxu0
  %8140 = vmatprep.mubr.bf16.mxu0 %v8095
  %8141 = vmatmul.mubr.bf16.gmra.mrb[0].mxu0 %v8094
  %v8142 = vpop.f32.mrb[0].mxu0
  %v8143 = vadd.f32 0.0, %v8142
  %v8144 = vpop.f32.mrb[0].mxu0
  %v8145 = vpop.f32.mrb[0].mxu0
  %v8146 = vadd.f32 0.0, %v8145
  %v8147 = vpop.f32.mrb[0].mxu0
  %8148 = vdwg.mxu0
  %v8149 = vld [vmem:[%s9] sm:$0xff]
  %v8150 = vld [vmem:[%s9 + $0x8] sm:$0xff]
  %v8151 = vld [vmem:[%s9 + $0x10] sm:$0xff]
  %v8152 = vld [vmem:[%s9 + $0x18] sm:$0xff]
  %v8153 = vld [vmem:[%s10] sm:$0xff]
  %v8154 = vld [vmem:[%s10 + $0x8] sm:$0xff]
  %v8155 = vld [vmem:[%s10 + $0x10] sm:$0xff]
  %v8156 = vld [vmem:[%s10 + $0x18] sm:$0xff]
  %vm8157 = vcmask 261120
  %v8158 = vsel %vm8157, %v8135, 0.0
  %8159 = vadd.xlane.f32.xlu0 %v8158
  %v8160 = vpop.xlane.xlu0 %8159
  %v8161 = vsel %vm8157, %v8138, 0.0
  %8162 = vadd.xlane.f32.xlu0 %v8161
  %v8163 = vpop.xlane.xlu0 %8162
  %v8164 = vsel %vm8157, %v8143, 0.0
  %8165 = vadd.xlane.f32.xlu0 %v8164
  %v8166 = vpop.xlane.xlu0 %8165
  %v8167 = vsel %vm8157, %v8146, 0.0
  %8168 = vadd.xlane.f32.xlu0 %v8167
  %v8169 = vpop.xlane.xlu0 %8168
  %v8170 = vmul.f32 %v8160, 0.03125
  %v8171 = vmul.f32 %v8163, 0.03125
  %v8172 = vmul.f32 %v8166, 0.03125
  %v8173 = vmul.f32 %v8169, 0.03125
  %v8174 = vsub.f32 %v8135, %v8170
  %v8175 = vsub.f32 %v8138, %v8171
  %v8176 = vsub.f32 %v8143, %v8172
  %v8177 = vsub.f32 %v8146, %v8173
  %v8178 = vmul.f32 %v8174, %v8174
  %v8179 = vmul.f32 %v8175, %v8175
  %v8180 = vmul.f32 %v8176, %v8176
  %v8181 = vmul.f32 %v8177, %v8177
  %v8182 = vsel %vm8157, %v8178, 0.0
  %8183 = vadd.xlane.f32.xlu0 %v8182
  %v8184 = vpop.xlane.xlu0 %8183
  %v8185 = vsel %vm8157, %v8179, 0.0
  %8186 = vadd.xlane.f32.xlu0 %v8185
  %v8187 = vpop.xlane.xlu0 %8186
  %v8188 = vsel %vm8157, %v8180, 0.0
  %8189 = vadd.xlane.f32.xlu0 %v8188
  %v8190 = vpop.xlane.xlu0 %8189
  %v8191 = vsel %vm8157, %v8181, 0.0
  %8192 = vadd.xlane.f32.xlu0 %v8191
  %v8193 = vpop.xlane.xlu0 %8192
  %v8194 = vmul.f32 %v8184, 0.03125
  %v8195 = vmul.f32 %v8187, 0.03125
  %v8196 = vmul.f32 %v8190, 0.03125
  %v8197 = vmul.f32 %v8193, 0.03125
  %v8198 = vadd.f32 %v8194, 1e-05
  %v8199 = vadd.f32 %v8195, 1e-05
  %v8200 = vadd.f32 %v8196, 1e-05
  %v8201 = vadd.f32 %v8197, 1e-05
  %v8202 = vrsqrt.pop %v8198
  %v8203 = vrsqrt.pop %v8199
  %v8204 = vrsqrt.pop %v8200
  %v8205 = vrsqrt.pop %v8201
  %v8206 = vmul.f32 %v8149, %v8202
  %v8207 = vmul.f32 %v8150, %v8203
  %v8208 = vmul.f32 %v8151, %v8204
  %v8209 = vmul.f32 %v8152, %v8205
  %8211 = vset.pattern.permute.xlu0 0
  %8212 = vperm.xlu0 %8211, %v8206
  %v8213 = vpop.permute.xlu0 %8212
  %8216 = vset.pattern.permute.xlu0 0
  %8217 = vperm.xlu0 %8216, %v8207
  %v8218 = vpop.permute.xlu0 %8217
  %8221 = vset.pattern.permute.xlu0 0
  %8222 = vperm.xlu0 %8221, %v8208
  %v8223 = vpop.permute.xlu0 %8222
  %8226 = vset.pattern.permute.xlu0 0
  %8227 = vperm.xlu0 %8226, %v8209
  %v8228 = vpop.permute.xlu0 %8227
  %v8230 = vmul.f32 %v8174, %v8213
  %v8231 = vmul.f32 %v8175, %v8218
  %v8232 = vmul.f32 %v8176, %v8223
  %v8233 = vmul.f32 %v8177, %v8228
  %8235 = vset.pattern.permute.xlu0 0
  %8236 = vperm.xlu0 %8235, %v8153
  %v8237 = vpop.permute.xlu0 %8236
  %8240 = vset.pattern.permute.xlu0 0
  %8241 = vperm.xlu0 %8240, %v8154
  %v8242 = vpop.permute.xlu0 %8241
  %8245 = vset.pattern.permute.xlu0 0
  %8246 = vperm.xlu0 %8245, %v8155
  %v8247 = vpop.permute.xlu0 %8246
  %8250 = vset.pattern.permute.xlu0 0
  %8251 = vperm.xlu0 %8250, %v8156
  %v8252 = vpop.permute.xlu0 %8251
  %v8254 = vadd.f32 %v8230, %v8237
  %v8255 = vadd.f32 %v8231, %v8242
  %v8256 = vadd.f32 %v8232, %v8247
  %v8257 = vadd.f32 %v8233, %v8252
  %vm8258 = vcmp.ge.f32.partialorder %v8254, 0.0
  %vm8259 = vcmp.ge.f32.partialorder %v8255, 0.0
  %vm8260 = vcmp.ge.f32.partialorder %v8256, 0.0
  %vm8261 = vcmp.ge.f32.partialorder %v8257, 0.0
  %v8262 = vmul.f32 %v8254, 0.2
  %v8263 = vmul.f32 %v8255, 0.2
  %v8264 = vmul.f32 %v8256, 0.2
  %v8265 = vmul.f32 %v8257, 0.2
  %v8266 = vsel %vm8258, %v8254, %v8262
  %v8267 = vsel %vm8259, %v8255, %v8263
  %v8268 = vsel %vm8260, %v8256, %v8264
  %v8269 = vsel %vm8261, %v8257, %v8265
  %v8270 = vpack.c.bf16 %v8267, %v8266
  %v8271 = vpack.c.bf16 %v8269, %v8268
  %v8272 = vld [vmem:[%s13] sm:$0xf]
  %v8273 = vld [vmem:[%s13 + $0x4] sm:$0xf]
  %v8274 = vld [vmem:[%s13 + $0x8] sm:$0xf]
  %v8275 = vld [vmem:[%s13 + $0xc] sm:$0xf]
  %v8280 = vunpack.c.l.b16 %v8272
  %v8281 = vunpack.c.l.b16 %v8273
  %v8282 = vunpack.c.l.b16 %v8274
  %v8283 = vunpack.c.l.b16 %v8275
  %v8284 = vpack.c.b16 %v8281, %v8280
  %v8285 = vpack.c.b16 %v8283, %v8282
  %v8289 = vsel %vm8157, %v8270, 0
  %v8292 = vsel %vm8157, %v8271, 0
  %8294 = vmatprep.subr.bf16.mxu0 0
  %8295 = vmatpush1.bf16.msra.mxu0 %v8284
  %8296 = vmatprep.subr.bf16.mxu0 0
  %8297 = vmatpush1.bf16.msra.mxu0 %v8285
  %8298 = vmatprep.subr.bf16.mxu0 0
  %8299 = vmatpush1.bf16.msra.mxu0 0
  %8300 = vmatprep.subr.bf16.mxu0 0
  %8301 = vmatpush1.bf16.msra.mxu0 0
  %8302 = vmatprep.subr.bf16.mxu0 0
  %8303 = vmatpush1.bf16.msra.mxu0 0
  %8304 = vmatprep.subr.bf16.mxu0 0
  %8305 = vmatpush1.bf16.msra.mxu0 0
  %8306 = vmatprep.subr.bf16.mxu0 0
  %8307 = vmatpush1.bf16.msra.mxu0 0
  %8308 = vmatprep.subr.bf16.mxu0 0
  %8309 = vmatpush1.bf16.msra.mxu0 0
  %8310 = vmatprep.subr.bf16.mxu0 0
  %8311 = vmatpush1.bf16.msra.mxu0 0
  %8312 = vmatprep.subr.bf16.mxu0 0
  %8313 = vmatpush1.bf16.msra.mxu0 0
  %8314 = vmatprep.subr.bf16.mxu0 0
  %8315 = vmatpush1.bf16.msra.mxu0 0
  %8316 = vmatprep.subr.bf16.mxu0 0
  %8317 = vmatpush1.bf16.msra.mxu0 0
  %8318 = vmatprep.subr.bf16.mxu0 0
  %8319 = vmatpush1.bf16.msra.mxu0 0
  %8320 = vmatprep.subr.bf16.mxu0 0
  %8321 = vmatpush1.bf16.msra.mxu0 0
  %8322 = vmatprep.subr.bf16.mxu0 0
  %8323 = vmatpush1.bf16.msra.mxu0 0
  %8324 = vmatprep.subr.bf16.mxu0 0
  %8325 = vmatpush1.bf16.msra.mxu0 0
  %8326 = vmatprep.mubr.bf16.mxu0 0
  %8327 = vmatmul.mubr.bf16.gmra.mrb[0].mxu0 %v8289
  %v8328 = vpop.f32.mrb[0].mxu0
  %v8329 = vadd.f32 0.0, %v8328
  %v8330 = vpop.f32.mrb[0].mxu0
  %v8331 = vpop.f32.mrb[0].mxu0
  %v8332 = vadd.f32 0.0, %v8331
  %v8333 = vpop.f32.mrb[0].mxu0
  %8334 = vmatprep.mubr.bf16.mxu0 0
  %8335 = vmatmul.mubr.bf16.gmra.mrb[0].mxu0 %v8292
  %v8336 = vpop.f32.mrb[0].mxu0
  %v8337 = vadd.f32 0.0, %v8336
  %v8338 = vpop.f32.mrb[0].mxu0
  %v8339 = vpop.f32.mrb[0].mxu0
  %v8340 = vadd.f32 0.0, %v8339
  %v8341 = vpop.f32.mrb[0].mxu0
  %8342 = vdwg.mxu0
  %s8343 = scalar_lea.vmem %s13, 16
  %v8344 = vld [vmem:[%s8343] sm:$0xf]
  %v8345 = vld [vmem:[%s8343 + $0x4] sm:$0xf]
  %v8346 = vld [vmem:[%s8343 + $0x8] sm:$0xf]
  %v8347 = vld [vmem:[%s8343 + $0xc] sm:$0xf]
  %v8352 = vunpack.c.l.b16 %v8344
  %v8353 = vunpack.c.l.b16 %v8345
  %v8354 = vunpack.c.l.b16 %v8346
  %v8355 = vunpack.c.l.b16 %v8347
  %v8356 = vpack.c.b16 %v8353, %v8352
  %v8357 = vpack.c.b16 %v8355, %v8354
  %8360 = vmatprep.subr.bf16.mxu0 0
  %8361 = vmatpush1.bf16.msra.mxu0 %v8356
  %8362 = vmatprep.subr.bf16.mxu0 0
  %8363 = vmatpush1.bf16.msra.mxu0 %v8357
  %8364 = vmatprep.subr.bf16.mxu0 0
  %8365 = vmatpush1.bf16.msra.mxu0 0
  %8366 = vmatprep.subr.bf16.mxu0 0
  %8367 = vmatpush1.bf16.msra.mxu0 0
  %8368 = vmatprep.subr.bf16.mxu0 0
  %8369 = vmatpush1.bf16.msra.mxu0 0
  %8370 = vmatprep.subr.bf16.mxu0 0
  %8371 = vmatpush1.bf16.msra.mxu0 0
  %8372 = vmatprep.subr.bf16.mxu0 0
  %8373 = vmatpush1.bf16.msra.mxu0 0
  %8374 = vmatprep.subr.bf16.mxu0 0
  %8375 = vmatpush1.bf16.msra.mxu0 0
  %8376 = vmatprep.subr.bf16.mxu0 0
  %8377 = vmatpush1.bf16.msra.mxu0 0
  %8378 = vmatprep.subr.bf16.mxu0 0
  %8379 = vmatpush1.bf16.msra.mxu0 0
  %8380 = vmatprep.subr.bf16.mxu0 0
  %8381 = vmatpush1.bf16.msra.mxu0 0
  %8382 = vmatprep.subr.bf16.mxu0 0
  %8383 = vmatpush1.bf16.msra.mxu0 0
  %8384 = vmatprep.subr.bf16.mxu0 0
  %8385 = vmatpush1.bf16.msra.mxu0 0
  %8386 = vmatprep.subr.bf16.mxu0 0
  %8387 = vmatpush1.bf16.msra.mxu0 0
  %8388 = vmatprep.subr.bf16.mxu0 0
  %8389 = vmatpush1.bf16.msra.mxu0 0
  %8390 = vmatprep.subr.bf16.mxu0 0
  %8391 = vmatpush1.bf16.msra.mxu0 0
  %8392 = vmatprep.mubr.bf16.mxu0 0
  %8393 = vmatmul.mubr.bf16.gmra.mrb[0].mxu0 %v8289
  %v8394 = vpop.f32.mrb[0].mxu0
  %v8395 = vadd.f32 0.0, %v8394
  %v8396 = vpop.f32.mrb[0].mxu0
  %v8397 = vpop.f32.mrb[0].mxu0
  %v8398 = vadd.f32 0.0, %v8397
  %v8399 = vpop.f32.mrb[0].mxu0
  %8400 = vmatprep.mubr.bf16.mxu0 0
  %8401 = vmatmul.mubr.bf16.gmra.mrb[0].mxu0 %v8292
  %v8402 = vpop.f32.mrb[0].mxu0
  %v8403 = vadd.f32 0.0, %v8402
  %v8404 = vpop.f32.mrb[0].mxu0
  %v8405 = vpop.f32.mrb[0].mxu0
  %v8406 = vadd.f32 0.0, %v8405
  %v8407 = vpop.f32.mrb[0].mxu0
  %8408 = vdwg.mxu0
  %s8409 = scalar_lea.vmem %s13, 32
  %v8410 = vld [vmem:[%s8409] sm:$0xf]
  %v8411 = vld [vmem:[%s8409 + $0x4] sm:$0xf]
  %v8412 = vld [vmem:[%s8409 + $0x8] sm:$0xf]
  %v8413 = vld [vmem:[%s8409 + $0xc] sm:$0xf]
  %v8418 = vunpack.c.l.b16 %v8410
  %v8419 = vunpack.c.l.b16 %v8411
  %v8420 = vunpack.c.l.b16 %v8412
  %v8421 = vunpack.c.l.b16 %v8413
  %v8422 = vpack.c.b16 %v8419, %v8418
  %v8423 = vpack.c.b16 %v8421, %v8420
  %8426 = vmatprep.subr.bf16.mxu0 0
  %8427 = vmatpush1.bf16.msra.mxu0 %v8422
  %8428 = vmatprep.subr.bf16.mxu0 0
  %8429 = vmatpush1.bf16.msra.mxu0 %v8423
  %8430 = vmatprep.subr.bf16.mxu0 0
  %8431 = vmatpush1.bf16.msra.mxu0 0
  %8432 = vmatprep.subr.bf16.mxu0 0
  %8433 = vmatpush1.bf16.msra.mxu0 0
  %8434 = vmatprep.subr.bf16.mxu0 0
  %8435 = vmatpush1.bf16.msra.mxu0 0
  %8436 = vmatprep.subr.bf16.mxu0 0
  %8437 = vmatpush1.bf16.msra.mxu0 0
  %8438 = vmatprep.subr.bf16.mxu0 0
  %8439 = vmatpush1.bf16.msra.mxu0 0
  %8440 = vmatprep.subr.bf16.mxu0 0
  %8441 = vmatpush1.bf16.msra.mxu0 0
  %8442 = vmatprep.subr.bf16.mxu0 0
  %8443 = vmatpush1.bf16.msra.mxu0 0
  %8444 = vmatprep.subr.bf16.mxu0 0
  %8445 = vmatpush1.bf16.msra.mxu0 0
  %8446 = vmatprep.subr.bf16.mxu0 0
  %8447 = vmatpush1.bf16.msra.mxu0 0
  %8448 = vmatprep.subr.bf16.mxu0 0
  %8449 = vmatpush1.bf16.msra.mxu0 0
  %8450 = vmatprep.subr.bf16.mxu0 0
  %8451 = vmatpush1.bf16.msra.mxu0 0
  %8452 = vmatprep.subr.bf16.mxu0 0
  %8453 = vmatpush1.bf16.msra.mxu0 0
  %8454 = vmatprep.subr.bf16.mxu0 0
  %8455 = vmatpush1.bf16.msra.mxu0 0
  %8456 = vmatprep.subr.bf16.mxu0 0
  %8457 = vmatpush1.bf16.msra.mxu0 0
  %8458 = vmatprep.mubr.bf16.mxu0 0
  %8459 = vmatmul.mubr.bf16.gmra.mrb[0].mxu0 %v8289
  %v8460 = vpop.f32.mrb[0].mxu0
  %v8461 = vadd.f32 0.0, %v8460
  %v8462 = vpop.f32.mrb[0].mxu0
  %v8463 = vpop.f32.mrb[0].mxu0
  %v8464 = vadd.f32 0.0, %v8463
  %v8465 = vpop.f32.mrb[0].mxu0
  %8466 = vmatprep.mubr.bf16.mxu0 0
  %8467 = vmatmul.mubr.bf16.gmra.mrb[0].mxu0 %v8292
  %v8468 = vpop.f32.mrb[0].mxu0
  %v8469 = vadd.f32 0.0, %v8468
  %v8470 = vpop.f32.mrb[0].mxu0
  %v8471 = vpop.f32.mrb[0].mxu0
  %v8472 = vadd.f32 0.0, %v8471
  %v8473 = vpop.f32.mrb[0].mxu0
  %8474 = vdwg.mxu0
  %s8475 = scalar_lea.vmem %s13, 48
  %v8476 = vld [vmem:[%s8475] sm:$0xf]
  %v8477 = vld [vmem:[%s8475 + $0x4] sm:$0xf]
  %v8478 = vld [vmem:[%s8475 + $0x8] sm:$0xf]
  %v8479 = vld [vmem:[%s8475 + $0xc] sm:$0xf]
  %v8484 = vunpack.c.l.b16 %v8476
  %v8485 = vunpack.c.l.b16 %v8477
  %v8486 = vunpack.c.l.b16 %v8478
  %v8487 = vunpack.c.l.b16 %v8479
  %v8488 = vpack.c.b16 %v8485, %v8484
  %v8489 = vpack.c.b16 %v8487, %v8486
  %8492 = vmatprep.subr.bf16.mxu0 0
  %8493 = vmatpush1.bf16.msra.mxu0 %v8488
  %8494 = vmatprep.subr.bf16.mxu0 0
  %8495 = vmatpush1.bf16.msra.mxu0 %v8489
  %8496 = vmatprep.subr.bf16.mxu0 0
  %8497 = vmatpush1.bf16.msra.mxu0 0
  %8498 = vmatprep.subr.bf16.mxu0 0
  %8499 = vmatpush1.bf16.msra.mxu0 0
  %8500 = vmatprep.subr.bf16.mxu0 0
  %8501 = vmatpush1.bf16.msra.mxu0 0
  %8502 = vmatprep.subr.bf16.mxu0 0
  %8503 = vmatpush1.bf16.msra.mxu0 0
  %8504 = vmatprep.subr.bf16.mxu0 0
  %8505 = vmatpush1.bf16.msra.mxu0 0
  %8506 = vmatprep.subr.bf16.mxu0 0
  %8507 = vmatpush1.bf16.msra.mxu0 0
  %8508 = vmatprep.subr.bf16.mxu0 0
  %8509 = vmatpush1.bf16.msra.mxu0 0
  %8510 = vmatprep.subr.bf16.mxu0 0
  %8511 = vmatpush1.bf16.msra.mxu0 0
  %8512 = vmatprep.subr.bf16.mxu0 0
  %8513 = vmatpush1.bf16.msra.mxu0 0
  %8514 = vmatprep.subr.bf16.mxu0 0
  %8515 = vmatpush1.bf16.msra.mxu0 0
  %8516 = vmatprep.subr.bf16.mxu0 0
  %8517 = vmatpush1.bf16.msra.mxu0 0
  %8518 = vmatprep.subr.bf16.mxu0 0
  %8519 = vmatpush1.bf16.msra.mxu0 0
  %8520 = vmatprep.subr.bf16.mxu0 0
  %8521 = vmatpush1.bf16.msra.mxu0 0
  %8522 = vmatprep.subr.bf16.mxu0 0
  %8523 = vmatpush1.bf16.msra.mxu0 0
  %8524 = vmatprep.mubr.bf16.mxu0 0
  %8525 = vmatmul.mubr.bf16.gmra.mrb[0].mxu0 %v8289
  %v8526 = vpop.f32.mrb[0].mxu0
  %v8527 = vadd.f32 0.0, %v8526
  %v8528 = vpop.f32.mrb[0].mxu0
  %v8529 = vpop.f32.mrb[0].mxu0
  %v8530 = vadd.f32 0.0, %v8529
  %v8531 = vpop.f32.mrb[0].mxu0
  %8532 = vmatprep.mubr.bf16.mxu0 0
  %8533 = vmatmul.mubr.bf16.gmra.mrb[0].mxu0 %v8292
  %v8534 = vpop.f32.mrb[0].mxu0
  %v8535 = vadd.f32 0.0, %v8534
  %v8536 = vpop.f32.mrb[0].mxu0
  %v8537 = vpop.f32.mrb[0].mxu0
  %v8538 = vadd.f32 0.0, %v8537
  %v8539 = vpop.f32.mrb[0].mxu0
  %8540 = vdwg.mxu0
  %s8541 = scalar_lea.vmem %s13, 64
  %v8542 = vld [vmem:[%s8541] sm:$0xf]
  %v8543 = vld [vmem:[%s8541 + $0x4] sm:$0xf]
  %v8544 = vld [vmem:[%s8541 + $0x8] sm:$0xf]
  %v8545 = vld [vmem:[%s8541 + $0xc] sm:$0xf]
  %v8550 = vunpack.c.l.b16 %v8542
  %v8551 = vunpack.c.l.b16 %v8543
  %v8552 = vunpack.c.l.b16 %v8544
  %v8553 = vunpack.c.l.b16 %v8545
  %v8554 = vpack.c.b16 %v8551, %v8550
  %v8555 = vpack.c.b16 %v8553, %v8552
  %8558 = vmatprep.subr.bf16.mxu0 0
  %8559 = vmatpush1.bf16.msra.mxu0 %v8554
  %8560 = vmatprep.subr.bf16.mxu0 0
  %8561 = vmatpush1.bf16.msra.mxu0 %v8555
  %8562 = vmatprep.subr.bf16.mxu0 0
  %8563 = vmatpush1.bf16.msra.mxu0 0
  %8564 = vmatprep.subr.bf16.mxu0 0
  %8565 = vmatpush1.bf16.msra.mxu0 0
  %8566 = vmatprep.subr.bf16.mxu0 0
  %8567 = vmatpush1.bf16.msra.mxu0 0
  %8568 = vmatprep.subr.bf16.mxu0 0
  %8569 = vmatpush1.bf16.msra.mxu0 0
  %8570 = vmatprep.subr.bf16.mxu0 0
  %8571 = vmatpush1.bf16.msra.mxu0 0
  %8572 = vmatprep.subr.bf16.mxu0 0
  %8573 = vmatpush1.bf16.msra.mxu0 0
  %8574 = vmatprep.subr.bf16.mxu0 0
  %8575 = vmatpush1.bf16.msra.mxu0 0
  %8576 = vmatprep.subr.bf16.mxu0 0
  %8577 = vmatpush1.bf16.msra.mxu0 0
  %8578 = vmatprep.subr.bf16.mxu0 0
  %8579 = vmatpush1.bf16.msra.mxu0 0
  %8580 = vmatprep.subr.bf16.mxu0 0
  %8581 = vmatpush1.bf16.msra.mxu0 0
  %8582 = vmatprep.subr.bf16.mxu0 0
  %8583 = vmatpush1.bf16.msra.mxu0 0
  %8584 = vmatprep.subr.bf16.mxu0 0
  %8585 = vmatpush1.bf16.msra.mxu0 0
  %8586 = vmatprep.subr.bf16.mxu0 0
  %8587 = vmatpush1.bf16.msra.mxu0 0
  %8588 = vmatprep.subr.bf16.mxu0 0
  %8589 = vmatpush1.bf16.msra.mxu0 0
  %8590 = vmatprep.mubr.bf16.mxu0 0
  %8591 = vmatmul.mubr.bf16.gmra.mrb[0].mxu0 %v8289
  %v8592 = vpop.f32.mrb[0].mxu0
  %v8593 = vadd.f32 0.0, %v8592
  %v8594 = vpop.f32.mrb[0].mxu0
  %v8595 = vpop.f32.mrb[0].mxu0
  %v8596 = vadd.f32 0.0, %v8595
  %v8597 = vpop.f32.mrb[0].mxu0
  %8598 = vmatprep.mubr.bf16.mxu0 0
  %8599 = vmatmul.mubr.bf16.gmra.mrb[0].mxu0 %v8292
  %v8600 = vpop.f32.mrb[0].mxu0
  %v8601 = vadd.f32 0.0, %v8600
  %v8602 = vpop.f32.mrb[0].mxu0
  %v8603 = vpop.f32.mrb[0].mxu0
  %v8604 = vadd.f32 0.0, %v8603
  %v8605 = vpop.f32.mrb[0].mxu0
  %8606 = vdwg.mxu0
  %s8607 = scalar_lea.vmem %s13, 80
  %v8608 = vld [vmem:[%s8607] sm:$0xf]
  %v8609 = vld [vmem:[%s8607 + $0x4] sm:$0xf]
  %v8610 = vld [vmem:[%s8607 + $0x8] sm:$0xf]
  %v8611 = vld [vmem:[%s8607 + $0xc] sm:$0xf]
  %v8616 = vunpack.c.l.b16 %v8608
  %v8617 = vunpack.c.l.b16 %v8609
  %v8618 = vunpack.c.l.b16 %v8610
  %v8619 = vunpack.c.l.b16 %v8611
  %v8620 = vpack.c.b16 %v8617, %v8616
  %v8621 = vpack.c.b16 %v8619, %v8618
  %8624 = vmatprep.subr.bf16.mxu0 0
  %8625 = vmatpush1.bf16.msra.mxu0 %v8620
  %8626 = vmatprep.subr.bf16.mxu0 0
  %8627 = vmatpush1.bf16.msra.mxu0 %v8621
  %8628 = vmatprep.subr.bf16.mxu0 0
  %8629 = vmatpush1.bf16.msra.mxu0 0
  %8630 = vmatprep.subr.bf16.mxu0 0
  %8631 = vmatpush1.bf16.msra.mxu0 0
  %8632 = vmatprep.subr.bf16.mxu0 0
  %8633 = vmatpush1.bf16.msra.mxu0 0
  %8634 = vmatprep.subr.bf16.mxu0 0
  %8635 = vmatpush1.bf16.msra.mxu0 0
  %8636 = vmatprep.subr.bf16.mxu0 0
  %8637 = vmatpush1.bf16.msra.mxu0 0
  %8638 = vmatprep.subr.bf16.mxu0 0
  %8639 = vmatpush1.bf16.msra.mxu0 0
  %8640 = vmatprep.subr.bf16.mxu0 0
  %8641 = vmatpush1.bf16.msra.mxu0 0
  %8642 = vmatprep.subr.bf16.mxu0 0
  %8643 = vmatpush1.bf16.msra.mxu0 0
  %8644 = vmatprep.subr.bf16.mxu0 0
  %8645 = vmatpush1.bf16.msra.mxu0 0
  %8646 = vmatprep.subr.bf16.mxu0 0
  %8647 = vmatpush1.bf16.msra.mxu0 0
  %8648 = vmatprep.subr.bf16.mxu0 0
  %8649 = vmatpush1.bf16.msra.mxu0 0
  %8650 = vmatprep.subr.bf16.mxu0 0
  %8651 = vmatpush1.bf16.msra.mxu0 0
  %8652 = vmatprep.subr.bf16.mxu0 0
  %8653 = vmatpush1.bf16.msra.mxu0 0
  %8654 = vmatprep.subr.bf16.mxu0 0
  %8655 = vmatpush1.bf16.msra.mxu0 0
  %8656 = vmatprep.mubr.bf16.mxu0 0
  %8657 = vmatmul.mubr.bf16.gmra.mrb[0].mxu0 %v8289
  %v8658 = vpop.f32.mrb[0].mxu0
  %v8659 = vadd.f32 0.0, %v8658
  %v8660 = vpop.f32.mrb[0].mxu0
  %v8661 = vpop.f32.mrb[0].mxu0
  %v8662 = vadd.f32 0.0, %v8661
  %v8663 = vpop.f32.mrb[0].mxu0
  %8664 = vmatprep.mubr.bf16.mxu0 0
  %8665 = vmatmul.mubr.bf16.gmra.mrb[0].mxu0 %v8292
  %v8666 = vpop.f32.mrb[0].mxu0
  %v8667 = vadd.f32 0.0, %v8666
  %v8668 = vpop.f32.mrb[0].mxu0
  %v8669 = vpop.f32.mrb[0].mxu0
  %v8670 = vadd.f32 0.0, %v8669
  %v8671 = vpop.f32.mrb[0].mxu0
  %8672 = vdwg.mxu0
  %s8673 = scalar_lea.vmem %s13, 96
  %v8674 = vld [vmem:[%s8673] sm:$0xf]
  %v8675 = vld [vmem:[%s8673 + $0x4] sm:$0xf]
  %v8676 = vld [vmem:[%s8673 + $0x8] sm:$0xf]
  %v8677 = vld [vmem:[%s8673 + $0xc] sm:$0xf]
  %v8682 = vunpack.c.l.b16 %v8674
  %v8683 = vunpack.c.l.b16 %v8675
  %v8684 = vunpack.c.l.b16 %v8676
  %v8685 = vunpack.c.l.b16 %v8677
  %v8686 = vpack.c.b16 %v8683, %v8682
  %v8687 = vpack.c.b16 %v8685, %v8684
  %8690 = vmatprep.subr.bf16.mxu0 0
  %8691 = vmatpush1.bf16.msra.mxu0 %v8686
  %8692 = vmatprep.subr.bf16.mxu0 0
  %8693 = vmatpush1.bf16.msra.mxu0 %v8687
  %8694 = vmatprep.subr.bf16.mxu0 0
  %8695 = vmatpush1.bf16.msra.mxu0 0
  %8696 = vmatprep.subr.bf16.mxu0 0
  %8697 = vmatpush1.bf16.msra.mxu0 0
  %8698 = vmatprep.subr.bf16.mxu0 0
  %8699 = vmatpush1.bf16.msra.mxu0 0
  %8700 = vmatprep.subr.bf16.mxu0 0
  %8701 = vmatpush1.bf16.msra.mxu0 0
  %8702 = vmatprep.subr.bf16.mxu0 0
  %8703 = vmatpush1.bf16.msra.mxu0 0
  %8704 = vmatprep.subr.bf16.mxu0 0
  %8705 = vmatpush1.bf16.msra.mxu0 0
  %8706 = vmatprep.subr.bf16.mxu0 0
  %8707 = vmatpush1.bf16.msra.mxu0 0
  %8708 = vmatprep.subr.bf16.mxu0 0
  %8709 = vmatpush1.bf16.msra.mxu0 0
  %8710 = vmatprep.subr.bf16.mxu0 0
  %8711 = vmatpush1.bf16.msra.mxu0 0
  %8712 = vmatprep.subr.bf16.mxu0 0
  %8713 = vmatpush1.bf16.msra.mxu0 0
  %8714 = vmatprep.subr.bf16.mxu0 0
  %8715 = vmatpush1.bf16.msra.mxu0 0
  %8716 = vmatprep.subr.bf16.mxu0 0
  %8717 = vmatpush1.bf16.msra.mxu0 0
  %8718 = vmatprep.subr.bf16.mxu0 0
  %8719 = vmatpush1.bf16.msra.mxu0 0
  %8720 = vmatprep.subr.bf16.mxu0 0
  %8721 = vmatpush1.bf16.msra.mxu0 0
  %8722 = vmatprep.mubr.bf16.mxu0 0
  %8723 = vmatmul.mubr.bf16.gmra.mrb[0].mxu0 %v8289
  %v8724 = vpop.f32.mrb[0].mxu0
  %v8725 = vadd.f32 0.0, %v8724
  %v8726 = vpop.f32.mrb[0].mxu0
  %v8727 = vpop.f32.mrb[0].mxu0
  %v8728 = vadd.f32 0.0, %v8727
  %v8729 = vpop.f32.mrb[0].mxu0
  %8730 = vmatprep.mubr.bf16.mxu0 0
  %8731 = vmatmul.mubr.bf16.gmra.mrb[0].mxu0 %v8292
  %v8732 = vpop.f32.mrb[0].mxu0
  %v8733 = vadd.f32 0.0, %v8732
  %v8734 = vpop.f32.mrb[0].mxu0
  %v8735 = vpop.f32.mrb[0].mxu0
  %v8736 = vadd.f32 0.0, %v8735
  %v8737 = vpop.f32.mrb[0].mxu0
  %8738 = vdwg.mxu0
  %s8739 = scalar_lea.vmem %s13, 112
  %v8740 = vld [vmem:[%s8739] sm:$0xf]
  %v8741 = vld [vmem:[%s8739 + $0x4] sm:$0xf]
  %v8742 = vld [vmem:[%s8739 + $0x8] sm:$0xf]
  %v8743 = vld [vmem:[%s8739 + $0xc] sm:$0xf]
  %v8748 = vunpack.c.l.b16 %v8740
  %v8749 = vunpack.c.l.b16 %v8741
  %v8750 = vunpack.c.l.b16 %v8742
  %v8751 = vunpack.c.l.b16 %v8743
  %v8752 = vpack.c.b16 %v8749, %v8748
  %v8753 = vpack.c.b16 %v8751, %v8750
  %8756 = vmatprep.subr.bf16.mxu0 0
  %8757 = vmatpush1.bf16.msra.mxu0 %v8752
  %8758 = vmatprep.subr.bf16.mxu0 0
  %8759 = vmatpush1.bf16.msra.mxu0 %v8753
  %8760 = vmatprep.subr.bf16.mxu0 0
  %8761 = vmatpush1.bf16.msra.mxu0 0
  %8762 = vmatprep.subr.bf16.mxu0 0
  %8763 = vmatpush1.bf16.msra.mxu0 0
  %8764 = vmatprep.subr.bf16.mxu0 0
  %8765 = vmatpush1.bf16.msra.mxu0 0
  %8766 = vmatprep.subr.bf16.mxu0 0
  %8767 = vmatpush1.bf16.msra.mxu0 0
  %8768 = vmatprep.subr.bf16.mxu0 0
  %8769 = vmatpush1.bf16.msra.mxu0 0
  %8770 = vmatprep.subr.bf16.mxu0 0
  %8771 = vmatpush1.bf16.msra.mxu0 0
  %8772 = vmatprep.subr.bf16.mxu0 0
  %8773 = vmatpush1.bf16.msra.mxu0 0
  %8774 = vmatprep.subr.bf16.mxu0 0
  %8775 = vmatpush1.bf16.msra.mxu0 0
  %8776 = vmatprep.subr.bf16.mxu0 0
  %8777 = vmatpush1.bf16.msra.mxu0 0
  %8778 = vmatprep.subr.bf16.mxu0 0
  %8779 = vmatpush1.bf16.msra.mxu0 0
  %8780 = vmatprep.subr.bf16.mxu0 0
  %8781 = vmatpush1.bf16.msra.mxu0 0
  %8782 = vmatprep.subr.bf16.mxu0 0
  %8783 = vmatpush1.bf16.msra.mxu0 0
  %8784 = vmatprep.subr.bf16.mxu0 0
  %8785 = vmatpush1.bf16.msra.mxu0 0
  %8786 = vmatprep.subr.bf16.mxu0 0
  %8787 = vmatpush1.bf16.msra.mxu0 0
  %8788 = vmatprep.mubr.bf16.mxu0 0
  %8789 = vmatmul.mubr.bf16.gmra.mrb[0].mxu0 %v8289
  %v8790 = vpop.f32.mrb[0].mxu0
  %v8791 = vadd.f32 0.0, %v8790
  %v8792 = vpop.f32.mrb[0].mxu0
  %v8793 = vpop.f32.mrb[0].mxu0
  %v8794 = vadd.f32 0.0, %v8793
  %v8795 = vpop.f32.mrb[0].mxu0
  %8796 = vmatprep.mubr.bf16.mxu0 0
  %8797 = vmatmul.mubr.bf16.gmra.mrb[0].mxu0 %v8292
  %v8798 = vpop.f32.mrb[0].mxu0
  %v8799 = vadd.f32 0.0, %v8798
  %v8800 = vpop.f32.mrb[0].mxu0
  %v8801 = vpop.f32.mrb[0].mxu0
  %v8802 = vadd.f32 0.0, %v8801
  %v8803 = vpop.f32.mrb[0].mxu0
  %8804 = vdwg.mxu0
  %s8805 = scalar_lea.vmem %s13, 128
  %v8806 = vld [vmem:[%s8805] sm:$0xf]
  %v8807 = vld [vmem:[%s8805 + $0x4] sm:$0xf]
  %v8808 = vld [vmem:[%s8805 + $0x8] sm:$0xf]
  %v8809 = vld [vmem:[%s8805 + $0xc] sm:$0xf]
  %v8814 = vunpack.c.l.b16 %v8806
  %v8815 = vunpack.c.l.b16 %v8807
  %v8816 = vunpack.c.l.b16 %v8808
  %v8817 = vunpack.c.l.b16 %v8809
  %v8818 = vpack.c.b16 %v8815, %v8814
  %v8819 = vpack.c.b16 %v8817, %v8816
  %8822 = vmatprep.subr.bf16.mxu0 0
  %8823 = vmatpush1.bf16.msra.mxu0 %v8818
  %8824 = vmatprep.subr.bf16.mxu0 0
  %8825 = vmatpush1.bf16.msra.mxu0 %v8819
  %8826 = vmatprep.subr.bf16.mxu0 0
  %8827 = vmatpush1.bf16.msra.mxu0 0
  %8828 = vmatprep.subr.bf16.mxu0 0
  %8829 = vmatpush1.bf16.msra.mxu0 0
  %8830 = vmatprep.subr.bf16.mxu0 0
  %8831 = vmatpush1.bf16.msra.mxu0 0
  %8832 = vmatprep.subr.bf16.mxu0 0
  %8833 = vmatpush1.bf16.msra.mxu0 0
  %8834 = vmatprep.subr.bf16.mxu0 0
  %8835 = vmatpush1.bf16.msra.mxu0 0
  %8836 = vmatprep.subr.bf16.mxu0 0
  %8837 = vmatpush1.bf16.msra.mxu0 0
  %8838 = vmatprep.subr.bf16.mxu0 0
  %8839 = vmatpush1.bf16.msra.mxu0 0
  %8840 = vmatprep.subr.bf16.mxu0 0
  %8841 = vmatpush1.bf16.msra.mxu0 0
  %8842 = vmatprep.subr.bf16.mxu0 0
  %8843 = vmatpush1.bf16.msra.mxu0 0
  %8844 = vmatprep.subr.bf16.mxu0 0
  %8845 = vmatpush1.bf16.msra.mxu0 0
  %8846 = vmatprep.subr.bf16.mxu0 0
  %8847 = vmatpush1.bf16.msra.mxu0 0
  %8848 = vmatprep.subr.bf16.mxu0 0
  %8849 = vmatpush1.bf16.msra.mxu0 0
  %8850 = vmatprep.subr.bf16.mxu0 0
  %8851 = vmatpush1.bf16.msra.mxu0 0
  %8852 = vmatprep.subr.bf16.mxu0 0
  %8853 = vmatpush1.bf16.msra.mxu0 0
  %8854 = vmatprep.mubr.bf16.mxu0 0
  %8855 = vmatmul.mubr.bf16.gmra.mrb[0].mxu0 %v8289
  %v8856 = vpop.f32.mrb[0].mxu0
  %v8857 = vadd.f32 0.0, %v8856
  %v8858 = vpop.f32.mrb[0].mxu0
  %v8859 = vpop.f32.mrb[0].mxu0
  %v8860 = vadd.f32 0.0, %v8859
  %v8861 = vpop.f32.mrb[0].mxu0
  %8862 = vmatprep.mubr.bf16.mxu0 0
  %8863 = vmatmul.mubr.bf16.gmra.mrb[0].mxu0 %v8292
  %v8864 = vpop.f32.mrb[0].mxu0
  %v8865 = vadd.f32 0.0, %v8864
  %v8866 = vpop.f32.mrb[0].mxu0
  %v8867 = vpop.f32.mrb[0].mxu0
  %v8868 = vadd.f32 0.0, %v8867
  %v8869 = vpop.f32.mrb[0].mxu0
  %8870 = vdwg.mxu0
  %s8871 = scalar_lea.vmem %s13, 144
  %v8872 = vld [vmem:[%s8871] sm:$0xf]
  %v8873 = vld [vmem:[%s8871 + $0x4] sm:$0xf]
  %v8874 = vld [vmem:[%s8871 + $0x8] sm:$0xf]
  %v8875 = vld [vmem:[%s8871 + $0xc] sm:$0xf]
  %v8880 = vunpack.c.l.b16 %v8872
  %v8881 = vunpack.c.l.b16 %v8873
  %v8882 = vunpack.c.l.b16 %v8874
  %v8883 = vunpack.c.l.b16 %v8875
  %v8884 = vpack.c.b16 %v8881, %v8880
  %v8885 = vpack.c.b16 %v8883, %v8882
  %8888 = vmatprep.subr.bf16.mxu0 0
  %8889 = vmatpush1.bf16.msra.mxu0 %v8884
  %8890 = vmatprep.subr.bf16.mxu0 0
  %8891 = vmatpush1.bf16.msra.mxu0 %v8885
  %8892 = vmatprep.subr.bf16.mxu0 0
  %8893 = vmatpush1.bf16.msra.mxu0 0
  %8894 = vmatprep.subr.bf16.mxu0 0
  %8895 = vmatpush1.bf16.msra.mxu0 0
  %8896 = vmatprep.subr.bf16.mxu0 0
  %8897 = vmatpush1.bf16.msra.mxu0 0
  %8898 = vmatprep.subr.bf16.mxu0 0
  %8899 = vmatpush1.bf16.msra.mxu0 0
  %8900 = vmatprep.subr.bf16.mxu0 0
  %8901 = vmatpush1.bf16.msra.mxu0 0
  %8902 = vmatprep.subr.bf16.mxu0 0
  %8903 = vmatpush1.bf16.msra.mxu0 0
  %8904 = vmatprep.subr.bf16.mxu0 0
  %8905 = vmatpush1.bf16.msra.mxu0 0
  %8906 = vmatprep.subr.bf16.mxu0 0
  %8907 = vmatpush1.bf16.msra.mxu0 0
  %8908 = vmatprep.subr.bf16.mxu0 0
  %8909 = vmatpush1.bf16.msra.mxu0 0
  %8910 = vmatprep.subr.bf16.mxu0 0
  %8911 = vmatpush1.bf16.msra.mxu0 0
  %8912 = vmatprep.subr.bf16.mxu0 0
  %8913 = vmatpush1.bf16.msra.mxu0 0
  %8914 = vmatprep.subr.bf16.mxu0 0
  %8915 = vmatpush1.bf16.msra.mxu0 0
  %8916 = vmatprep.subr.bf16.mxu0 0
  %8917 = vmatpush1.bf16.msra.mxu0 0
  %8918 = vmatprep.subr.bf16.mxu0 0
  %8919 = vmatpush1.bf16.msra.mxu0 0
  %8920 = vmatprep.mubr.bf16.mxu0 0
  %8921 = vmatmul.mubr.bf16.gmra.mrb[0].mxu0 %v8289
  %v8922 = vpop.f32.mrb[0].mxu0
  %v8923 = vadd.f32 0.0, %v8922
  %v8924 = vpop.f32.mrb[0].mxu0
  %v8925 = vpop.f32.mrb[0].mxu0
  %v8926 = vadd.f32 0.0, %v8925
  %v8927 = vpop.f32.mrb[0].mxu0
  %8928 = vmatprep.mubr.bf16.mxu0 0
  %8929 = vmatmul.mubr.bf16.gmra.mrb[0].mxu0 %v8292
  %v8930 = vpop.f32.mrb[0].mxu0
  %v8931 = vadd.f32 0.0, %v8930
  %v8932 = vpop.f32.mrb[0].mxu0
  %v8933 = vpop.f32.mrb[0].mxu0
  %v8934 = vadd.f32 0.0, %v8933
  %v8935 = vpop.f32.mrb[0].mxu0
  %8936 = vdwg.mxu0
  %s8937 = scalar_lea.vmem %s13, 160
  %v8938 = vld [vmem:[%s8937] sm:$0xf]
  %v8939 = vld [vmem:[%s8937 + $0x4] sm:$0xf]
  %v8940 = vld [vmem:[%s8937 + $0x8] sm:$0xf]
  %v8941 = vld [vmem:[%s8937 + $0xc] sm:$0xf]
  %v8946 = vunpack.c.l.b16 %v8938
  %v8947 = vunpack.c.l.b16 %v8939
  %v8948 = vunpack.c.l.b16 %v8940
  %v8949 = vunpack.c.l.b16 %v8941
  %v8950 = vpack.c.b16 %v8947, %v8946
  %v8951 = vpack.c.b16 %v8949, %v8948
  %8954 = vmatprep.subr.bf16.mxu0 0
  %8955 = vmatpush1.bf16.msra.mxu0 %v8950
  %8956 = vmatprep.subr.bf16.mxu0 0
  %8957 = vmatpush1.bf16.msra.mxu0 %v8951
  %8958 = vmatprep.subr.bf16.mxu0 0
  %8959 = vmatpush1.bf16.msra.mxu0 0
  %8960 = vmatprep.subr.bf16.mxu0 0
  %8961 = vmatpush1.bf16.msra.mxu0 0
  %8962 = vmatprep.subr.bf16.mxu0 0
  %8963 = vmatpush1.bf16.msra.mxu0 0
  %8964 = vmatprep.subr.bf16.mxu0 0
  %8965 = vmatpush1.bf16.msra.mxu0 0
  %8966 = vmatprep.subr.bf16.mxu0 0
  %8967 = vmatpush1.bf16.msra.mxu0 0
  %8968 = vmatprep.subr.bf16.mxu0 0
  %8969 = vmatpush1.bf16.msra.mxu0 0
  %8970 = vmatprep.subr.bf16.mxu0 0
  %8971 = vmatpush1.bf16.msra.mxu0 0
  %8972 = vmatprep.subr.bf16.mxu0 0
  %8973 = vmatpush1.bf16.msra.mxu0 0
  %8974 = vmatprep.subr.bf16.mxu0 0
  %8975 = vmatpush1.bf16.msra.mxu0 0
  %8976 = vmatprep.subr.bf16.mxu0 0
  %8977 = vmatpush1.bf16.msra.mxu0 0
  %8978 = vmatprep.subr.bf16.mxu0 0
  %8979 = vmatpush1.bf16.msra.mxu0 0
  %8980 = vmatprep.subr.bf16.mxu0 0
  %8981 = vmatpush1.bf16.msra.mxu0 0
  %8982 = vmatprep.subr.bf16.mxu0 0
  %8983 = vmatpush1.bf16.msra.mxu0 0
  %8984 = vmatprep.subr.bf16.mxu0 0
  %8985 = vmatpush1.bf16.msra.mxu0 0
  %8986 = vmatprep.mubr.bf16.mxu0 0
  %8987 = vmatmul.mubr.bf16.gmra.mrb[0].mxu0 %v8289
  %v8988 = vpop.f32.mrb[0].mxu0
  %v8989 = vadd.f32 0.0, %v8988
  %v8990 = vpop.f32.mrb[0].mxu0
  %v8991 = vpop.f32.mrb[0].mxu0
  %v8992 = vadd.f32 0.0, %v8991
  %v8993 = vpop.f32.mrb[0].mxu0
  %8994 = vmatprep.mubr.bf16.mxu0 0
  %8995 = vmatmul.mubr.bf16.gmra.mrb[0].mxu0 %v8292
  %v8996 = vpop.f32.mrb[0].mxu0
  %v8997 = vadd.f32 0.0, %v8996
  %v8998 = vpop.f32.mrb[0].mxu0
  %v8999 = vpop.f32.mrb[0].mxu0
  %v9000 = vadd.f32 0.0, %v8999
  %v9001 = vpop.f32.mrb[0].mxu0
  %9002 = vdwg.mxu0
  %s9003 = scalar_lea.vmem %s13, 176
  %v9004 = vld [vmem:[%s9003] sm:$0xf]
  %v9005 = vld [vmem:[%s9003 + $0x4] sm:$0xf]
  %v9006 = vld [vmem:[%s9003 + $0x8] sm:$0xf]
  %v9007 = vld [vmem:[%s9003 + $0xc] sm:$0xf]
  %v9012 = vunpack.c.l.b16 %v9004
  %v9013 = vunpack.c.l.b16 %v9005
  %v9014 = vunpack.c.l.b16 %v9006
  %v9015 = vunpack.c.l.b16 %v9007
  %v9016 = vpack.c.b16 %v9013, %v9012
  %v9017 = vpack.c.b16 %v9015, %v9014
  %9020 = vmatprep.subr.bf16.mxu0 0
  %9021 = vmatpush1.bf16.msra.mxu0 %v9016
  %9022 = vmatprep.subr.bf16.mxu0 0
  %9023 = vmatpush1.bf16.msra.mxu0 %v9017
  %9024 = vmatprep.subr.bf16.mxu0 0
  %9025 = vmatpush1.bf16.msra.mxu0 0
  %9026 = vmatprep.subr.bf16.mxu0 0
  %9027 = vmatpush1.bf16.msra.mxu0 0
  %9028 = vmatprep.subr.bf16.mxu0 0
  %9029 = vmatpush1.bf16.msra.mxu0 0
  %9030 = vmatprep.subr.bf16.mxu0 0
  %9031 = vmatpush1.bf16.msra.mxu0 0
  %9032 = vmatprep.subr.bf16.mxu0 0
  %9033 = vmatpush1.bf16.msra.mxu0 0
  %9034 = vmatprep.subr.bf16.mxu0 0
  %9035 = vmatpush1.bf16.msra.mxu0 0
  %9036 = vmatprep.subr.bf16.mxu0 0
  %9037 = vmatpush1.bf16.msra.mxu0 0
  %9038 = vmatprep.subr.bf16.mxu0 0
  %9039 = vmatpush1.bf16.msra.mxu0 0
  %9040 = vmatprep.subr.bf16.mxu0 0
  %9041 = vmatpush1.bf16.msra.mxu0 0
  %9042 = vmatprep.subr.bf16.mxu0 0
  %9043 = vmatpush1.bf16.msra.mxu0 0
  %9044 = vmatprep.subr.bf16.mxu0 0
  %9045 = vmatpush1.bf16.msra.mxu0 0
  %9046 = vmatprep.subr.bf16.mxu0 0
  %9047 = vmatpush1.bf16.msra.mxu0 0
  %9048 = vmatprep.subr.bf16.mxu0 0
  %9049 = vmatpush1.bf16.msra.mxu0 0
  %9050 = vmatprep.subr.bf16.mxu0 0
  %9051 = vmatpush1.bf16.msra.mxu0 0
  %9052 = vmatprep.mubr.bf16.mxu0 0
  %9053 = vmatmul.mubr.bf16.gmra.mrb[0].mxu0 %v8289
  %v9054 = vpop.f32.mrb[0].mxu0
  %v9055 = vadd.f32 0.0, %v9054
  %v9056 = vpop.f32.mrb[0].mxu0
  %v9057 = vpop.f32.mrb[0].mxu0
  %v9058 = vadd.f32 0.0, %v9057
  %v9059 = vpop.f32.mrb[0].mxu0
  %9060 = vmatprep.mubr.bf16.mxu0 0
  %9061 = vmatmul.mubr.bf16.gmra.mrb[0].mxu0 %v8292
  %v9062 = vpop.f32.mrb[0].mxu0
  %v9063 = vadd.f32 0.0, %v9062
  %v9064 = vpop.f32.mrb[0].mxu0
  %v9065 = vpop.f32.mrb[0].mxu0
  %v9066 = vadd.f32 0.0, %v9065
  %v9067 = vpop.f32.mrb[0].mxu0
  %9068 = vdwg.mxu0
  %s9069 = scalar_lea.vmem %s13, 192
  %v9070 = vld [vmem:[%s9069] sm:$0xf]
  %v9071 = vld [vmem:[%s9069 + $0x4] sm:$0xf]
  %v9072 = vld [vmem:[%s9069 + $0x8] sm:$0xf]
  %v9073 = vld [vmem:[%s9069 + $0xc] sm:$0xf]
  %v9078 = vunpack.c.l.b16 %v9070
  %v9079 = vunpack.c.l.b16 %v9071
  %v9080 = vunpack.c.l.b16 %v9072
  %v9081 = vunpack.c.l.b16 %v9073
  %v9082 = vpack.c.b16 %v9079, %v9078
  %v9083 = vpack.c.b16 %v9081, %v9080
  %9086 = vmatprep.subr.bf16.mxu0 0
  %9087 = vmatpush1.bf16.msra.mxu0 %v9082
  %9088 = vmatprep.subr.bf16.mxu0 0
  %9089 = vmatpush1.bf16.msra.mxu0 %v9083
  %9090 = vmatprep.subr.bf16.mxu0 0
  %9091 = vmatpush1.bf16.msra.mxu0 0
  %9092 = vmatprep.subr.bf16.mxu0 0
  %9093 = vmatpush1.bf16.msra.mxu0 0
  %9094 = vmatprep.subr.bf16.mxu0 0
  %9095 = vmatpush1.bf16.msra.mxu0 0
  %9096 = vmatprep.subr.bf16.mxu0 0
  %9097 = vmatpush1.bf16.msra.mxu0 0
  %9098 = vmatprep.subr.bf16.mxu0 0
  %9099 = vmatpush1.bf16.msra.mxu0 0
  %9100 = vmatprep.subr.bf16.mxu0 0
  %9101 = vmatpush1.bf16.msra.mxu0 0
  %9102 = vmatprep.subr.bf16.mxu0 0
  %9103 = vmatpush1.bf16.msra.mxu0 0
  %9104 = vmatprep.subr.bf16.mxu0 0
  %9105 = vmatpush1.bf16.msra.mxu0 0
  %9106 = vmatprep.subr.bf16.mxu0 0
  %9107 = vmatpush1.bf16.msra.mxu0 0
  %9108 = vmatprep.subr.bf16.mxu0 0
  %9109 = vmatpush1.bf16.msra.mxu0 0
  %9110 = vmatprep.subr.bf16.mxu0 0
  %9111 = vmatpush1.bf16.msra.mxu0 0
  %9112 = vmatprep.subr.bf16.mxu0 0
  %9113 = vmatpush1.bf16.msra.mxu0 0
  %9114 = vmatprep.subr.bf16.mxu0 0
  %9115 = vmatpush1.bf16.msra.mxu0 0
  %9116 = vmatprep.subr.bf16.mxu0 0
  %9117 = vmatpush1.bf16.msra.mxu0 0
  %9118 = vmatprep.mubr.bf16.mxu0 0
  %9119 = vmatmul.mubr.bf16.gmra.mrb[0].mxu0 %v8289
  %v9120 = vpop.f32.mrb[0].mxu0
  %v9121 = vadd.f32 0.0, %v9120
  %v9122 = vpop.f32.mrb[0].mxu0
  %v9123 = vpop.f32.mrb[0].mxu0
  %v9124 = vadd.f32 0.0, %v9123
  %v9125 = vpop.f32.mrb[0].mxu0
  %9126 = vmatprep.mubr.bf16.mxu0 0
  %9127 = vmatmul.mubr.bf16.gmra.mrb[0].mxu0 %v8292
  %v9128 = vpop.f32.mrb[0].mxu0
  %v9129 = vadd.f32 0.0, %v9128
  %v9130 = vpop.f32.mrb[0].mxu0
  %v9131 = vpop.f32.mrb[0].mxu0
  %v9132 = vadd.f32 0.0, %v9131
  %v9133 = vpop.f32.mrb[0].mxu0
  %9134 = vdwg.mxu0
  %s9135 = scalar_lea.vmem %s13, 208
  %v9136 = vld [vmem:[%s9135] sm:$0xf]
  %v9137 = vld [vmem:[%s9135 + $0x4] sm:$0xf]
  %v9138 = vld [vmem:[%s9135 + $0x8] sm:$0xf]
  %v9139 = vld [vmem:[%s9135 + $0xc] sm:$0xf]
  %v9144 = vunpack.c.l.b16 %v9136
  %v9145 = vunpack.c.l.b16 %v9137
  %v9146 = vunpack.c.l.b16 %v9138
  %v9147 = vunpack.c.l.b16 %v9139
  %v9148 = vpack.c.b16 %v9145, %v9144
  %v9149 = vpack.c.b16 %v9147, %v9146
  %9152 = vmatprep.subr.bf16.mxu0 0
  %9153 = vmatpush1.bf16.msra.mxu0 %v9148
  %9154 = vmatprep.subr.bf16.mxu0 0
  %9155 = vmatpush1.bf16.msra.mxu0 %v9149
  %9156 = vmatprep.subr.bf16.mxu0 0
  %9157 = vmatpush1.bf16.msra.mxu0 0
  %9158 = vmatprep.subr.bf16.mxu0 0
  %9159 = vmatpush1.bf16.msra.mxu0 0
  %9160 = vmatprep.subr.bf16.mxu0 0
  %9161 = vmatpush1.bf16.msra.mxu0 0
  %9162 = vmatprep.subr.bf16.mxu0 0
  %9163 = vmatpush1.bf16.msra.mxu0 0
  %9164 = vmatprep.subr.bf16.mxu0 0
  %9165 = vmatpush1.bf16.msra.mxu0 0
  %9166 = vmatprep.subr.bf16.mxu0 0
  %9167 = vmatpush1.bf16.msra.mxu0 0
  %9168 = vmatprep.subr.bf16.mxu0 0
  %9169 = vmatpush1.bf16.msra.mxu0 0
  %9170 = vmatprep.subr.bf16.mxu0 0
  %9171 = vmatpush1.bf16.msra.mxu0 0
  %9172 = vmatprep.subr.bf16.mxu0 0
  %9173 = vmatpush1.bf16.msra.mxu0 0
  %9174 = vmatprep.subr.bf16.mxu0 0
  %9175 = vmatpush1.bf16.msra.mxu0 0
  %9176 = vmatprep.subr.bf16.mxu0 0
  %9177 = vmatpush1.bf16.msra.mxu0 0
  %9178 = vmatprep.subr.bf16.mxu0 0
  %9179 = vmatpush1.bf16.msra.mxu0 0
  %9180 = vmatprep.subr.bf16.mxu0 0
  %9181 = vmatpush1.bf16.msra.mxu0 0
  %9182 = vmatprep.subr.bf16.mxu0 0
  %9183 = vmatpush1.bf16.msra.mxu0 0
  %9184 = vmatprep.mubr.bf16.mxu0 0
  %9185 = vmatmul.mubr.bf16.gmra.mrb[0].mxu0 %v8289
  %v9186 = vpop.f32.mrb[0].mxu0
  %v9187 = vadd.f32 0.0, %v9186
  %v9188 = vpop.f32.mrb[0].mxu0
  %v9189 = vpop.f32.mrb[0].mxu0
  %v9190 = vadd.f32 0.0, %v9189
  %v9191 = vpop.f32.mrb[0].mxu0
  %9192 = vmatprep.mubr.bf16.mxu0 0
  %9193 = vmatmul.mubr.bf16.gmra.mrb[0].mxu0 %v8292
  %v9194 = vpop.f32.mrb[0].mxu0
  %v9195 = vadd.f32 0.0, %v9194
  %v9196 = vpop.f32.mrb[0].mxu0
  %v9197 = vpop.f32.mrb[0].mxu0
  %v9198 = vadd.f32 0.0, %v9197
  %v9199 = vpop.f32.mrb[0].mxu0
  %9200 = vdwg.mxu0
  %s9201 = scalar_lea.vmem %s13, 224
  %v9202 = vld [vmem:[%s9201] sm:$0xf]
  %v9203 = vld [vmem:[%s9201 + $0x4] sm:$0xf]
  %v9204 = vld [vmem:[%s9201 + $0x8] sm:$0xf]
  %v9205 = vld [vmem:[%s9201 + $0xc] sm:$0xf]
  %v9210 = vunpack.c.l.b16 %v9202
  %v9211 = vunpack.c.l.b16 %v9203
  %v9212 = vunpack.c.l.b16 %v9204
  %v9213 = vunpack.c.l.b16 %v9205
  %v9214 = vpack.c.b16 %v9211, %v9210
  %v9215 = vpack.c.b16 %v9213, %v9212
  %9218 = vmatprep.subr.bf16.mxu0 0
  %9219 = vmatpush1.bf16.msra.mxu0 %v9214
  %9220 = vmatprep.subr.bf16.mxu0 0
  %9221 = vmatpush1.bf16.msra.mxu0 %v9215
  %9222 = vmatprep.subr.bf16.mxu0 0
  %9223 = vmatpush1.bf16.msra.mxu0 0
  %9224 = vmatprep.subr.bf16.mxu0 0
  %9225 = vmatpush1.bf16.msra.mxu0 0
  %9226 = vmatprep.subr.bf16.mxu0 0
  %9227 = vmatpush1.bf16.msra.mxu0 0
  %9228 = vmatprep.subr.bf16.mxu0 0
  %9229 = vmatpush1.bf16.msra.mxu0 0
  %9230 = vmatprep.subr.bf16.mxu0 0
  %9231 = vmatpush1.bf16.msra.mxu0 0
  %9232 = vmatprep.subr.bf16.mxu0 0
  %9233 = vmatpush1.bf16.msra.mxu0 0
  %9234 = vmatprep.subr.bf16.mxu0 0
  %9235 = vmatpush1.bf16.msra.mxu0 0
  %9236 = vmatprep.subr.bf16.mxu0 0
  %9237 = vmatpush1.bf16.msra.mxu0 0
  %9238 = vmatprep.subr.bf16.mxu0 0
  %9239 = vmatpush1.bf16.msra.mxu0 0
  %9240 = vmatprep.subr.bf16.mxu0 0
  %9241 = vmatpush1.bf16.msra.mxu0 0
  %9242 = vmatprep.subr.bf16.mxu0 0
  %9243 = vmatpush1.bf16.msra.mxu0 0
  %9244 = vmatprep.subr.bf16.mxu0 0
  %9245 = vmatpush1.bf16.msra.mxu0 0
  %9246 = vmatprep.subr.bf16.mxu0 0
  %9247 = vmatpush1.bf16.msra.mxu0 0
  %9248 = vmatprep.subr.bf16.mxu0 0
  %9249 = vmatpush1.bf16.msra.mxu0 0
  %9250 = vmatprep.mubr.bf16.mxu0 0
  %9251 = vmatmul.mubr.bf16.gmra.mrb[0].mxu0 %v8289
  %v9252 = vpop.f32.mrb[0].mxu0
  %v9253 = vadd.f32 0.0, %v9252
  %v9254 = vpop.f32.mrb[0].mxu0
  %v9255 = vpop.f32.mrb[0].mxu0
  %v9256 = vadd.f32 0.0, %v9255
  %v9257 = vpop.f32.mrb[0].mxu0
  %9258 = vmatprep.mubr.bf16.mxu0 0
  %9259 = vmatmul.mubr.bf16.gmra.mrb[0].mxu0 %v8292
  %v9260 = vpop.f32.mrb[0].mxu0
  %v9261 = vadd.f32 0.0, %v9260
  %v9262 = vpop.f32.mrb[0].mxu0
  %v9263 = vpop.f32.mrb[0].mxu0
  %v9264 = vadd.f32 0.0, %v9263
  %v9265 = vpop.f32.mrb[0].mxu0
  %9266 = vdwg.mxu0
  %s9267 = scalar_lea.vmem %s13, 240
  %v9268 = vld [vmem:[%s9267] sm:$0xf]
  %v9269 = vld [vmem:[%s9267 + $0x4] sm:$0xf]
  %v9270 = vld [vmem:[%s9267 + $0x8] sm:$0xf]
  %v9271 = vld [vmem:[%s9267 + $0xc] sm:$0xf]
  %v9276 = vunpack.c.l.b16 %v9268
  %v9277 = vunpack.c.l.b16 %v9269
  %v9278 = vunpack.c.l.b16 %v9270
  %v9279 = vunpack.c.l.b16 %v9271
  %v9280 = vpack.c.b16 %v9277, %v9276
  %v9281 = vpack.c.b16 %v9279, %v9278
  %9284 = vmatprep.subr.bf16.mxu0 0
  %9285 = vmatpush1.bf16.msra.mxu0 %v9280
  %9286 = vmatprep.subr.bf16.mxu0 0
  %9287 = vmatpush1.bf16.msra.mxu0 %v9281
  %9288 = vmatprep.subr.bf16.mxu0 0
  %9289 = vmatpush1.bf16.msra.mxu0 0
  %9290 = vmatprep.subr.bf16.mxu0 0
  %9291 = vmatpush1.bf16.msra.mxu0 0
  %9292 = vmatprep.subr.bf16.mxu0 0
  %9293 = vmatpush1.bf16.msra.mxu0 0
  %9294 = vmatprep.subr.bf16.mxu0 0
  %9295 = vmatpush1.bf16.msra.mxu0 0
  %9296 = vmatprep.subr.bf16.mxu0 0
  %9297 = vmatpush1.bf16.msra.mxu0 0
  %9298 = vmatprep.subr.bf16.mxu0 0
  %9299 = vmatpush1.bf16.msra.mxu0 0
  %9300 = vmatprep.subr.bf16.mxu0 0
  %9301 = vmatpush1.bf16.msra.mxu0 0
  %9302 = vmatprep.subr.bf16.mxu0 0
  %9303 = vmatpush1.bf16.msra.mxu0 0
  %9304 = vmatprep.subr.bf16.mxu0 0
  %9305 = vmatpush1.bf16.msra.mxu0 0
  %9306 = vmatprep.subr.bf16.mxu0 0
  %9307 = vmatpush1.bf16.msra.mxu0 0
  %9308 = vmatprep.subr.bf16.mxu0 0
  %9309 = vmatpush1.bf16.msra.mxu0 0
  %9310 = vmatprep.subr.bf16.mxu0 0
  %9311 = vmatpush1.bf16.msra.mxu0 0
  %9312 = vmatprep.subr.bf16.mxu0 0
  %9313 = vmatpush1.bf16.msra.mxu0 0
  %9314 = vmatprep.subr.bf16.mxu0 0
  %9315 = vmatpush1.bf16.msra.mxu0 0
  %9316 = vmatprep.mubr.bf16.mxu0 0
  %9317 = vmatmul.mubr.bf16.gmra.mrb[0].mxu0 %v8289
  %v9318 = vpop.f32.mrb[0].mxu0
  %v9319 = vadd.f32 0.0, %v9318
  %v9320 = vpop.f32.mrb[0].mxu0
  %v9321 = vpop.f32.mrb[0].mxu0
  %v9322 = vadd.f32 0.0, %v9321
  %v9323 = vpop.f32.mrb[0].mxu0
  %9324 = vmatprep.mubr.bf16.mxu0 0
  %9325 = vmatmul.mubr.bf16.gmra.mrb[0].mxu0 %v8292
  %v9326 = vpop.f32.mrb[0].mxu0
  %v9327 = vadd.f32 0.0, %v9326
  %v9328 = vpop.f32.mrb[0].mxu0
  %v9329 = vpop.f32.mrb[0].mxu0
  %v9330 = vadd.f32 0.0, %v9329
  %v9331 = vpop.f32.mrb[0].mxu0
  %9332 = vdwg.mxu0
  %v9333 = vpack.c.bf16 %v8332, %v8329
  %v9334 = vpack.c.bf16 %v8340, %v8337
  %v9335 = vpack.c.bf16 %v8398, %v8395
  %v9336 = vpack.c.bf16 %v8406, %v8403
  %v9337 = vpack.c.bf16 %v8464, %v8461
  %v9338 = vpack.c.bf16 %v8472, %v8469
  %v9339 = vpack.c.bf16 %v8530, %v8527
  %v9340 = vpack.c.bf16 %v8538, %v8535
  %v9341 = vpack.c.bf16 %v8596, %v8593
  %v9342 = vpack.c.bf16 %v8604, %v8601
  %v9343 = vpack.c.bf16 %v8662, %v8659
  %v9344 = vpack.c.bf16 %v8670, %v8667
  %v9345 = vpack.c.bf16 %v8728, %v8725
  %v9346 = vpack.c.bf16 %v8736, %v8733
  %v9347 = vpack.c.bf16 %v8794, %v8791
  %v9348 = vpack.c.bf16 %v8802, %v8799
  %v9349 = vpack.c.bf16 %v8860, %v8857
  %v9350 = vpack.c.bf16 %v8868, %v8865
  %v9351 = vpack.c.bf16 %v8926, %v8923
  %v9352 = vpack.c.bf16 %v8934, %v8931
  %v9353 = vpack.c.bf16 %v8992, %v8989
  %v9354 = vpack.c.bf16 %v9000, %v8997
  %v9355 = vpack.c.bf16 %v9058, %v9055
  %v9356 = vpack.c.bf16 %v9066, %v9063
  %v9357 = vpack.c.bf16 %v9124, %v9121
  %v9358 = vpack.c.bf16 %v9132, %v9129
  %v9359 = vpack.c.bf16 %v9190, %v9187
  %v9360 = vpack.c.bf16 %v9198, %v9195
  %v9361 = vpack.c.bf16 %v9256, %v9253
  %v9362 = vpack.c.bf16 %v9264, %v9261
  %v9363 = vpack.c.bf16 %v9322, %v9319
  %v9364 = vpack.c.bf16 %v9330, %v9327
  %v9365 = vld [vmem:[%s12] sm:$0xff]
  %v9366 = vld [vmem:[%s12 + $0x8] sm:$0xff]
  %v9367 = vld [vmem:[%s12 + $0x10] sm:$0xff]
  %v9368 = vld [vmem:[%s12 + $0x18] sm:$0xff]
  %v9373 = vunpack.c.l.b16 %v9365
  %v9374 = vunpack.c.h.b16 %v9365
  %v9375 = vunpack.c.l.b16 %v9366
  %v9376 = vunpack.c.h.b16 %v9366
  %v9377 = vunpack.c.l.b16 %v9367
  %v9378 = vunpack.c.h.b16 %v9367
  %v9379 = vunpack.c.l.b16 %v9368
  %v9380 = vunpack.c.h.b16 %v9368
  %v9381 = vpack.c.b16 %v9377, %v9373
  %v9382 = vpack.c.b16 %v9378, %v9374
  %v9383 = vpack.c.b16 %v9379, %v9375
  %v9384 = vpack.c.b16 %v9380, %v9376
  %9389 = vmatprep.subr.bf16.mxu0 0
  %9390 = vmatpush1.bf16.msra.mxu0 %v9333
  %9391 = vmatprep.subr.bf16.mxu0 0
  %9392 = vmatpush1.bf16.msra.mxu0 %v9334
  %9393 = vmatprep.subr.bf16.mxu0 0
  %9394 = vmatpush1.bf16.msra.mxu0 %v9335
  %9395 = vmatprep.subr.bf16.mxu0 0
  %9396 = vmatpush1.bf16.msra.mxu0 %v9336
  %9397 = vmatprep.subr.bf16.mxu0 0
  %9398 = vmatpush1.bf16.msra.mxu0 %v9337
  %9399 = vmatprep.subr.bf16.mxu0 0
  %9400 = vmatpush1.bf16.msra.mxu0 %v9338
  %9401 = vmatprep.subr.bf16.mxu0 0
  %9402 = vmatpush1.bf16.msra.mxu0 %v9339
  %9403 = vmatprep.subr.bf16.mxu0 0
  %9404 = vmatpush1.bf16.msra.mxu0 %v9340
  %9405 = vmatprep.subr.bf16.mxu0 0
  %9406 = vmatpush1.bf16.msra.mxu0 %v9341
  %9407 = vmatprep.subr.bf16.mxu0 0
  %9408 = vmatpush1.bf16.msra.mxu0 %v9342
  %9409 = vmatprep.subr.bf16.mxu0 0
  %9410 = vmatpush1.bf16.msra.mxu0 %v9343
  %9411 = vmatprep.subr.bf16.mxu0 0
  %9412 = vmatpush1.bf16.msra.mxu0 %v9344
  %9413 = vmatprep.subr.bf16.mxu0 0
  %9414 = vmatpush1.bf16.msra.mxu0 %v9345
  %9415 = vmatprep.subr.bf16.mxu0 0
  %9416 = vmatpush1.bf16.msra.mxu0 %v9346
  %9417 = vmatprep.subr.bf16.mxu0 0
  %9418 = vmatpush1.bf16.msra.mxu0 %v9347
  %9419 = vmatprep.subr.bf16.mxu0 0
  %9420 = vmatpush1.bf16.msra.mxu0 %v9348
  %9421 = vmatprep.mubr.bf16.mxu0 %v9382
  %9422 = vmatmul.mubr.bf16.gmra.mrb[0].mxu0 %v9381
  %v9423 = vpop.f32.mrb[0].mxu0
  %v9424 = vadd.f32 0.0, %v9423
  %v9425 = vpop.f32.mrb[0].mxu0
  %v9426 = vpop.f32.mrb[0].mxu0
  %v9427 = vadd.f32 0.0, %v9426
  %v9428 = vpop.f32.mrb[0].mxu0
  %9429 = vdwg.mxu0
  %9430 = vmatprep.subr.bf16.mxu0 0
  %9431 = vmatpush1.bf16.msra.mxu0 %v9349
  %9432 = vmatprep.subr.bf16.mxu0 0
  %9433 = vmatpush1.bf16.msra.mxu0 %v9350
  %9434 = vmatprep.subr.bf16.mxu0 0
  %9435 = vmatpush1.bf16.msra.mxu0 %v9351
  %9436 = vmatprep.subr.bf16.mxu0 0
  %9437 = vmatpush1.bf16.msra.mxu0 %v9352
  %9438 = vmatprep.subr.bf16.mxu0 0
  %9439 = vmatpush1.bf16.msra.mxu0 %v9353
  %9440 = vmatprep.subr.bf16.mxu0 0
  %9441 = vmatpush1.bf16.msra.mxu0 %v9354
  %9442 = vmatprep.subr.bf16.mxu0 0
  %9443 = vmatpush1.bf16.msra.mxu0 %v9355
  %9444 = vmatprep.subr.bf16.mxu0 0
  %9445 = vmatpush1.bf16.msra.mxu0 %v9356
  %9446 = vmatprep.subr.bf16.mxu0 0
  %9447 = vmatpush1.bf16.msra.mxu0 %v9357
  %9448 = vmatprep.subr.bf16.mxu0 0
  %9449 = vmatpush1.bf16.msra.mxu0 %v9358
  %9450 = vmatprep.subr.bf16.mxu0 0
  %9451 = vmatpush1.bf16.msra.mxu0 %v9359
  %9452 = vmatprep.subr.bf16.mxu0 0
  %9453 = vmatpush1.bf16.msra.mxu0 %v9360
  %9454 = vmatprep.subr.bf16.mxu0 0
  %9455 = vmatpush1.bf16.msra.mxu0 %v9361
  %9456 = vmatprep.subr.bf16.mxu0 0
  %9457 = vmatpush1.bf16.msra.mxu0 %v9362
  %9458 = vmatprep.subr.bf16.mxu0 0
  %9459 = vmatpush1.bf16.msra.mxu0 %v9363
  %9460 = vmatprep.subr.bf16.mxu0 0
  %9461 = vmatpush1.bf16.msra.mxu0 %v9364
  %9462 = vmatprep.mubr.bf16.mxu0 %v9384
  %9463 = vmatmul.mubr.bf16.gmra.mrb[0].mxu0 %v9383
  %v9464 = vpop.f32.mrb[0].mxu0
  %v9465 = vadd.f32 %v9424, %v9464
  %v9466 = vpop.f32.mrb[0].mxu0
  %v9467 = vpop.f32.mrb[0].mxu0
  %v9468 = vadd.f32 %v9427, %v9467
  %v9469 = vpop.f32.mrb[0].mxu0
  %9470 = vdwg.mxu0
  %vm9471 = vcmask 15360
  %9472 = vst.msk [vmem:[%s14] sm:$0xff] %vm9471, %v9465
  %9473 = vst.msk [vmem:[%s14 + $0x8] sm:$0xff] %vm9471, %v9468
  // Predicated region
  $region58: #{encoder_forward.1} parent=0 // pred_check
    _
  $region59: #{encoder_forward.1} parent=0 // pred_check_branch
    %9475 = sbr.rel (0) target = $region61
  $region60: #{encoder_forward.1} parent=0 // pred_region
    _
  $region61: #{encoder_forward.1} parent=0 // pred_fallthru
    _
  // Predicated region
  $region62: #{encoder_forward.1} parent=0 // pred_check
    _
  $region63: #{encoder_forward.1} parent=0 // pred_check_branch
    %9477 = sbr.rel (0) target = $region65
  $region64: #{encoder_forward.1} parent=0 // pred_region
    _
  $region65: #{encoder_forward.1} parent=0 // pred_fallthru
    _

</llo_original>
